<compile_context>
chip_gen: v7x
topology: tpu7x:2x2x1
jax: 0.10.0
libtpu: 0.0.40
codegen_flags: <defaults>
</compile_context>

<pallas_src>
import functools
import math

import jax
import jax.numpy as jnp
from jax.experimental import pallas as pl
from jax.experimental.pallas import tpu as pltpu

_PARAMS_PER_LAYER = 18  # flat weight tensors per decoder layer (see prepare_flat_params)


# ----------------------------------------------------------------------------- fused kernel

def decoder_kernel(*refs, n_layers, n_heads, head_dim, hidden_dim):
    """One grid step = one batch element; the whole decoder stack runs in VMEM."""
    H = hidden_dim
    PPL = _PARAMS_PER_LAYER

    trg_ref, enc_ref, tmask_ref, smask_ref = refs[0:4]
    out_ref, attn_ref = refs[-2], refs[-1]
    prefs = refs[4:-2]

    def split_heads(x):                      # (L, H) -> (n_heads, L, head_dim)
        L = x.shape[0]
        return x.reshape(L, n_heads, head_dim).transpose(1, 0, 2)

    def mha_core(Q, K, V, mask_bias):
        # Q: (Tq, H), K/V: (S, H), mask_bias: (Tm, S) additive {0, -1e10}, Tm in {1, Tq}.
        # NOTE: the attention scale is already folded into the Q projection weights.
        Tq = Q.shape[0]
        Qh, Kh, Vh = split_heads(Q), split_heads(K), split_heads(V)
        energy = jnp.einsum("hqd,hkd->hqk", Qh, Kh,
                            preferred_element_type=jnp.float32) + mask_bias[None]  # (nh,Tq,S)
        energy = energy - jnp.max(energy, axis=-1, keepdims=True)
        p = jnp.exp(energy)
        attn = p * pl.reciprocal(jnp.sum(p, axis=-1, keepdims=True), approx=True)
        ctx = jnp.einsum("hqk,hkd->qhd", attn, Vh,
                         preferred_element_type=jnp.float32).reshape(Tq, H)
        return ctx, attn

    def add_ln(x, y, g, b):
        # LayerNorm(x + y) over the last dim, eps = 1e-5 (PyTorch default)
        z = x + y
        mean = jnp.mean(z, axis=-1, keepdims=True)
        var = jnp.mean((z - mean) ** 2, axis=-1, keepdims=True)
        return (z - mean) * jax.lax.rsqrt(var + 1e-5) * g + b

    x = trg_ref[0].astype(jnp.float32)       # (T, H)
    enc = enc_ref[0].astype(jnp.float32)     # (S, H)
    # Convert {0,1} masks to additive biases ONCE (shared by every layer).
    tmask_bias = jnp.where(tmask_ref[0, 0] == 0.0, jnp.float32(-1e10), jnp.float32(0.0))  # (T,T)
    smask_bias = jnp.where(smask_ref[0, 0] == 0.0, jnp.float32(-1e10), jnp.float32(0.0))  # (1,S)

    for li in range(n_layers):               # static unroll over layers
        (sa_wqkv, sa_bqkv, sa_wo, sa_bo,
         ea_wq, ea_bq, ea_wkv, ea_bkv, ea_wo, ea_bo,
         a_ln_g, a_ln_b,
         ff_w1, ff_b1, ff_w2, ff_b2,
         f_ln_g, f_ln_b) = [r[...] for r in prefs[li * PPL:(li + 1) * PPL]]

        # ---- decoder self-attention (fused QKV projection) -> dropout(id) -> add+LN ----
        qkv = jnp.dot(x, sa_wqkv, preferred_element_type=jnp.float32) + sa_bqkv   # (T, 3H)
        ctx, _ = mha_core(qkv[:, :H], qkv[:, H:2 * H], qkv[:, 2 * H:], tmask_bias)
        sa_out = jnp.dot(ctx, sa_wo, preferred_element_type=jnp.float32) + sa_bo
        x = add_ln(x, sa_out, a_ln_g, a_ln_b)

        # ---- encoder-decoder attention (fused KV projection) -> dropout(id) -> add+LN ----
        q = jnp.dot(x, ea_wq, preferred_element_type=jnp.float32) + ea_bq         # (T, H)
        kv = jnp.dot(enc, ea_wkv, preferred_element_type=jnp.float32) + ea_bkv    # (S, 2H)
        ctx, attn = mha_core(q, kv[:, :H], kv[:, H:], smask_bias)
        if li == n_layers - 1:
            # only the last layer's cross-attention is returned by the module
            attn_ref[0] = attn.astype(attn_ref.dtype)
        ea_out = jnp.dot(ctx, ea_wo, preferred_element_type=jnp.float32) + ea_bo
        # reference reuses attn_layer_norm here (not enc_attn_layer_norm) -- reproduced
        x = add_ln(x, ea_out, a_ln_g, a_ln_b)

        # ---- positionwise feedforward -> dropout(id) -> add+LN ----
        h1 = jnp.maximum(jnp.dot(x, ff_w1, preferred_element_type=jnp.float32) + ff_b1, 0.0)
        ff = jnp.dot(h1, ff_w2, preferred_element_type=jnp.float32) + ff_b2
        x = add_ln(x, ff, f_ln_g, f_ln_b)

    # ---- final vocab projection ----
    fc_w = prefs[n_layers * PPL][...]
    fc_b = prefs[n_layers * PPL + 1][...]
    out_ref[0] = (jnp.dot(x, fc_w, preferred_element_type=jnp.float32) + fc_b
                  ).astype(out_ref.dtype)


# ----------------------------------------------------------------------------- param prep

def _init_linear(key, in_dim, out_dim):
    kw, kb = jax.random.split(key)
    return (jax.random.normal(kw, (in_dim, out_dim), jnp.float32) * 0.05,
            jax.random.normal(kb, (1, out_dim), jnp.float32) * 0.05)


def _init_mha(key, hidden_dim):
    ks = jax.random.split(key, 4)
    wq, bq = _init_linear(ks[0], hidden_dim, hidden_dim)
    wk, bk = _init_linear(ks[1], hidden_dim, hidden_dim)
    wv, bv = _init_linear(ks[2], hidden_dim, hidden_dim)
    wo, bo = _init_linear(ks[3], hidden_dim, hidden_dim)
    return dict(wq=wq, bq=bq, wk=wk, bk=bk, wv=wv, bv=bv, wo=wo, bo=bo)


def init_decoder_params(key, output_dim, hidden_dim, n_layers, n_heads,
                        posff_dim, max_length=50):
    keys = jax.random.split(key, 3 + n_layers)
    params = {
        "embedding": jax.random.normal(keys[0], (output_dim, hidden_dim), jnp.float32) * 0.05,
        "pos_embedding": jax.random.normal(keys[1], (max_length, hidden_dim), jnp.float32) * 0.05,
        "layers": [],
    }
    fw, fb = _init_linear(keys[2], hidden_dim, output_dim)
    params["fc_out_w"], params["fc_out_b"] = fw, fb
    for li in range(n_layers):
        lk = jax.random.split(keys[3 + li], 3)
        layer = {
            "self_attn": _init_mha(lk[0], hidden_dim),
            "enc_attn": _init_mha(lk[1], hidden_dim),
            "attn_ln_g": jnp.ones((1, hidden_dim), jnp.float32),
            "attn_ln_b": jnp.zeros((1, hidden_dim), jnp.float32),
            # enc_attn_layer_norm exists in the reference __init__ but is never used in
            # forward (bug reproduced faithfully) -- params kept for shape parity only.
            "enc_attn_ln_g": jnp.ones((1, hidden_dim), jnp.float32),
            "enc_attn_ln_b": jnp.zeros((1, hidden_dim), jnp.float32),
            "ff_ln_g": jnp.ones((1, hidden_dim), jnp.float32),
            "ff_ln_b": jnp.zeros((1, hidden_dim), jnp.float32),
        }
        w1, b1 = _init_linear(jax.random.fold_in(lk[2], 0), hidden_dim, posff_dim)
        w2, b2 = _init_linear(jax.random.fold_in(lk[2], 1), posff_dim, hidden_dim)
        layer["ff"] = dict(w1=w1, b1=b1, w2=w2, b2=b2)
        params["layers"].append(layer)
    return params


def prepare_flat_params(params, n_heads):
    """Fuse QKV / KV projections, fold the 1/sqrt(head_dim) scale into the Q projections,
    and flatten to the kernel's positional layout."""
    hidden_dim = params["embedding"].shape[1]
    inv_scale = 1.0 / math.sqrt(hidden_dim // n_heads)
    flat = []
    for layer in params["layers"]:
        sa = layer["self_attn"]
        flat += [jnp.concatenate([sa["wq"] * inv_scale, sa["wk"], sa["wv"]], axis=1),  # (H, 3H)
                 jnp.concatenate([sa["bq"] * inv_scale, sa["bk"], sa["bv"]], axis=1),  # (1, 3H)
                 sa["wo"], sa["bo"]]
        ea = layer["enc_attn"]
        flat += [ea["wq"] * inv_scale, ea["bq"] * inv_scale,
                 jnp.concatenate([ea["wk"], ea["wv"]], axis=1),                        # (H, 2H)
                 jnp.concatenate([ea["bk"], ea["bv"]], axis=1),                        # (1, 2H)
                 ea["wo"], ea["bo"]]
        flat += [layer["attn_ln_g"], layer["attn_ln_b"]]
        flat += [layer["ff"]["w1"], layer["ff"]["b1"], layer["ff"]["w2"], layer["ff"]["b2"]]
        flat += [layer["ff_ln_g"], layer["ff_ln_b"]]
    flat += [params["fc_out_w"], params["fc_out_b"]]
    return flat


# ----------------------------------------------------------------------------- forward

def decoder_forward(params, trg_ids, enc_src, trg_mask, src_mask, n_heads):
    B, T = trg_ids.shape
    H = params["embedding"].shape[1]
    S = enc_src.shape[1]
    V = params["fc_out_w"].shape[1]
    n_layers = len(params["layers"])
    head_dim = H // n_heads

    # Embedding gather + scale + positional add (dropout = identity) stays in plain JAX;
    # XLA fuses this into the gather, no dedicated kernel launch needed.
    tok_emb = jnp.take(params["embedding"], trg_ids, axis=0)          # (B, T, H)
    pos_emb = params["pos_embedding"][:T][None]                       # (1, T, H)
    trg_emb = tok_emb * math.sqrt(H) + pos_emb                        # (B, T, H)

    flat = prepare_flat_params(params, n_heads)

    kernel = functools.partial(decoder_kernel, n_layers=n_layers, n_heads=n_heads,
                               head_dim=head_dim, hidden_dim=H)

    data_specs = [
        pl.BlockSpec((1, T, H), lambda b: (b, 0, 0)),                         # trg_emb
        pl.BlockSpec((1, S, H), lambda b: (b, 0, 0)),                         # enc_src
        pl.BlockSpec((1, 1) + trg_mask.shape[2:], lambda b: (b, 0, 0, 0)),    # trg_mask
        pl.BlockSpec((1, 1, 1, S), lambda b: (b, 0, 0, 0)),                   # src_mask
    ]
    # Weights: full-array blocks with a constant index_map -> stay resident in VMEM
    # across the whole (parallel) batch grid; no per-step re-DMA.
    param_specs = [pl.BlockSpec(p.shape, (lambda nd: (lambda b: (0,) * nd))(p.ndim))
                   for p in flat]

    out, attn = pl.pallas_call(
        kernel,
        out_shape=(jax.ShapeDtypeStruct((B, T, V), jnp.float32),
                   jax.ShapeDtypeStruct((B, n_heads, T, S), jnp.float32)),
        grid=(B,),
        in_specs=data_specs + param_specs,
        out_specs=(pl.BlockSpec((1, T, V), lambda b: (b, 0, 0)),
                   pl.BlockSpec((1, n_heads, T, S), lambda b: (b, 0, 0, 0))),
        compiler_params=pltpu.CompilerParams(dimension_semantics=("parallel",)),
    )(trg_emb, enc_src, trg_mask, src_mask, *flat)
    return out, attn


# ----------------------------------------------------------------------------- main

if __name__ == "__main__":
    OUTPUT_DIM = 50     # vocab size
    HIDDEN_DIM = 32
    N_LAYERS = 2
    N_HEADS = 4
    POSFF_DIM = 64
    B, TRG_LEN, SRC_LEN = 2, 8, 12

    key = jax.random.PRNGKey(0)
    kp, kt, ke = jax.random.split(key, 3)

    params = init_decoder_params(kp, OUTPUT_DIM, HIDDEN_DIM, N_LAYERS, N_HEADS, POSFF_DIM)

    trg_ids = jax.random.randint(kt, (B, TRG_LEN), 0, OUTPUT_DIM, dtype=jnp.int32)
    enc_src = jax.random.normal(ke, (B, SRC_LEN, HIDDEN_DIM), jnp.float32)

    # target mask: causal lower-triangular (B, 1, T, T)
    trg_mask = jnp.tril(jnp.ones((TRG_LEN, TRG_LEN), jnp.float32))[None, None]
    trg_mask = jnp.broadcast_to(trg_mask, (B, 1, TRG_LEN, TRG_LEN))
    # source mask: (B, 1, 1, S), batch 1 has its last 3 source tokens PAD-masked
    src_mask = jnp.ones((B, 1, 1, SRC_LEN), jnp.float32)
    src_mask = src_mask.at[1, 0, 0, -3:].set(0.0)

    fwd = jax.jit(functools.partial(decoder_forward, n_heads=N_HEADS))
    output, attention = fwd(params, trg_ids, enc_src, trg_mask, src_mask)
    output = jax.block_until_ready(output)
    attention = jax.block_until_ready(attention)

    assert output.shape == (B, TRG_LEN, OUTPUT_DIM)
    assert attention.shape == (B, N_HEADS, TRG_LEN, SRC_LEN)
    assert bool(jnp.all(jnp.isfinite(output)))
    # attention rows must sum to 1 (softmax; approx-reciprocal -> loose tolerance)
    assert bool(jnp.allclose(attention.sum(-1), 1.0, atol=5e-3))
    # padded source positions (batch 1, last 3) must receive ~zero cross-attention weight
    assert bool(jnp.all(attention[1, :, :, -3:] < 1e-6))
    print("KERNEL_OK")
</pallas_src>

<mosaic_0001>
module attributes {stable_mosaic.version = 11 : i64} {
  func.func @decoder_kernel(%arg0: i32, %arg1: memref<1x8x32xf32, #tpu.memory_space<vmem>>, %arg2: memref<1x12x32xf32, #tpu.memory_space<vmem>>, %arg3: memref<1x1x8x8xf32, #tpu.memory_space<vmem>>, %arg4: memref<1x1x1x12xf32, #tpu.memory_space<vmem>>, %arg5: memref<32x96xf32, #tpu.memory_space<vmem>>, %arg6: memref<1x96xf32, #tpu.memory_space<vmem>>, %arg7: memref<32x32xf32, #tpu.memory_space<vmem>>, %arg8: memref<1x32xf32, #tpu.memory_space<vmem>>, %arg9: memref<32x32xf32, #tpu.memory_space<vmem>>, %arg10: memref<1x32xf32, #tpu.memory_space<vmem>>, %arg11: memref<32x64xf32, #tpu.memory_space<vmem>>, %arg12: memref<1x64xf32, #tpu.memory_space<vmem>>, %arg13: memref<32x32xf32, #tpu.memory_space<vmem>>, %arg14: memref<1x32xf32, #tpu.memory_space<vmem>>, %arg15: memref<1x32xf32, #tpu.memory_space<vmem>>, %arg16: memref<1x32xf32, #tpu.memory_space<vmem>>, %arg17: memref<32x64xf32, #tpu.memory_space<vmem>>, %arg18: memref<1x64xf32, #tpu.memory_space<vmem>>, %arg19: memref<64x32xf32, #tpu.memory_space<vmem>>, %arg20: memref<1x32xf32, #tpu.memory_space<vmem>>, %arg21: memref<1x32xf32, #tpu.memory_space<vmem>>, %arg22: memref<1x32xf32, #tpu.memory_space<vmem>>, %arg23: memref<32x96xf32, #tpu.memory_space<vmem>>, %arg24: memref<1x96xf32, #tpu.memory_space<vmem>>, %arg25: memref<32x32xf32, #tpu.memory_space<vmem>>, %arg26: memref<1x32xf32, #tpu.memory_space<vmem>>, %arg27: memref<32x32xf32, #tpu.memory_space<vmem>>, %arg28: memref<1x32xf32, #tpu.memory_space<vmem>>, %arg29: memref<32x64xf32, #tpu.memory_space<vmem>>, %arg30: memref<1x64xf32, #tpu.memory_space<vmem>>, %arg31: memref<32x32xf32, #tpu.memory_space<vmem>>, %arg32: memref<1x32xf32, #tpu.memory_space<vmem>>, %arg33: memref<1x32xf32, #tpu.memory_space<vmem>>, %arg34: memref<1x32xf32, #tpu.memory_space<vmem>>, %arg35: memref<32x64xf32, #tpu.memory_space<vmem>>, %arg36: memref<1x64xf32, #tpu.memory_space<vmem>>, %arg37: memref<64x32xf32, #tpu.memory_space<vmem>>, %arg38: memref<1x32xf32, #tpu.memory_space<vmem>>, %arg39: memref<1x32xf32, #tpu.memory_space<vmem>>, %arg40: memref<1x32xf32, #tpu.memory_space<vmem>>, %arg41: memref<32x50xf32, #tpu.memory_space<vmem>>, %arg42: memref<1x50xf32, #tpu.memory_space<vmem>>, %arg43: memref<1x8x50xf32, #tpu.memory_space<vmem>>, %arg44: memref<1x4x8x12xf32, #tpu.memory_space<vmem>>) attributes {dimension_semantics = [#tpu.dimension_semantics<parallel>], iteration_bounds = array<i64: 2>, scalar_prefetch = 0 : i64, scratch_operands = 0 : i64, tpu.core_type = #tpu.core_type<tc>, window_params = [{transform_indices = @transform_0, window_bounds = array<i64: 1, 8, 32>}, {transform_indices = @transform_1, window_bounds = array<i64: 1, 12, 32>}, {transform_indices = @transform_2, window_bounds = array<i64: 1, 1, 8, 8>}, {transform_indices = @transform_3, window_bounds = array<i64: 1, 1, 1, 12>}, {pipeline_mode = #tpu.pipeline_mode<synchronous>, transform_indices = @transform_4, window_bounds = array<i64: 32, 96>}, {pipeline_mode = #tpu.pipeline_mode<synchronous>, transform_indices = @transform_5, window_bounds = array<i64: 1, 96>}, {pipeline_mode = #tpu.pipeline_mode<synchronous>, transform_indices = @transform_6, window_bounds = array<i64: 32, 32>}, {pipeline_mode = #tpu.pipeline_mode<synchronous>, transform_indices = @transform_7, window_bounds = array<i64: 1, 32>}, {pipeline_mode = #tpu.pipeline_mode<synchronous>, transform_indices = @transform_8, window_bounds = array<i64: 32, 32>}, {pipeline_mode = #tpu.pipeline_mode<synchronous>, transform_indices = @transform_9, window_bounds = array<i64: 1, 32>}, {pipeline_mode = #tpu.pipeline_mode<synchronous>, transform_indices = @transform_10, window_bounds = array<i64: 32, 64>}, {pipeline_mode = #tpu.pipeline_mode<synchronous>, transform_indices = @transform_11, window_bounds = array<i64: 1, 64>}, {pipeline_mode = #tpu.pipeline_mode<synchronous>, transform_indices = @transform_12, window_bounds = array<i64: 32, 32>}, {pipeline_mode = #tpu.pipeline_mode<synchronous>, transform_indices = @transform_13, window_bounds = array<i64: 1, 32>}, {pipeline_mode = #tpu.pipeline_mode<synchronous>, transform_indices = @transform_14, window_bounds = array<i64: 1, 32>}, {pipeline_mode = #tpu.pipeline_mode<synchronous>, transform_indices = @transform_15, window_bounds = array<i64: 1, 32>}, {pipeline_mode = #tpu.pipeline_mode<synchronous>, transform_indices = @transform_16, window_bounds = array<i64: 32, 64>}, {pipeline_mode = #tpu.pipeline_mode<synchronous>, transform_indices = @transform_17, window_bounds = array<i64: 1, 64>}, {pipeline_mode = #tpu.pipeline_mode<synchronous>, transform_indices = @transform_18, window_bounds = array<i64: 64, 32>}, {pipeline_mode = #tpu.pipeline_mode<synchronous>, transform_indices = @transform_19, window_bounds = array<i64: 1, 32>}, {pipeline_mode = #tpu.pipeline_mode<synchronous>, transform_indices = @transform_20, window_bounds = array<i64: 1, 32>}, {pipeline_mode = #tpu.pipeline_mode<synchronous>, transform_indices = @transform_21, window_bounds = array<i64: 1, 32>}, {pipeline_mode = #tpu.pipeline_mode<synchronous>, transform_indices = @transform_22, window_bounds = array<i64: 32, 96>}, {pipeline_mode = #tpu.pipeline_mode<synchronous>, transform_indices = @transform_23, window_bounds = array<i64: 1, 96>}, {pipeline_mode = #tpu.pipeline_mode<synchronous>, transform_indices = @transform_24, window_bounds = array<i64: 32, 32>}, {pipeline_mode = #tpu.pipeline_mode<synchronous>, transform_indices = @transform_25, window_bounds = array<i64: 1, 32>}, {pipeline_mode = #tpu.pipeline_mode<synchronous>, transform_indices = @transform_26, window_bounds = array<i64: 32, 32>}, {pipeline_mode = #tpu.pipeline_mode<synchronous>, transform_indices = @transform_27, window_bounds = array<i64: 1, 32>}, {pipeline_mode = #tpu.pipeline_mode<synchronous>, transform_indices = @transform_28, window_bounds = array<i64: 32, 64>}, {pipeline_mode = #tpu.pipeline_mode<synchronous>, transform_indices = @transform_29, window_bounds = array<i64: 1, 64>}, {pipeline_mode = #tpu.pipeline_mode<synchronous>, transform_indices = @transform_30, window_bounds = array<i64: 32, 32>}, {pipeline_mode = #tpu.pipeline_mode<synchronous>, transform_indices = @transform_31, window_bounds = array<i64: 1, 32>}, {pipeline_mode = #tpu.pipeline_mode<synchronous>, transform_indices = @transform_32, window_bounds = array<i64: 1, 32>}, {pipeline_mode = #tpu.pipeline_mode<synchronous>, transform_indices = @transform_33, window_bounds = array<i64: 1, 32>}, {pipeline_mode = #tpu.pipeline_mode<synchronous>, transform_indices = @transform_34, window_bounds = array<i64: 32, 64>}, {pipeline_mode = #tpu.pipeline_mode<synchronous>, transform_indices = @transform_35, window_bounds = array<i64: 1, 64>}, {pipeline_mode = #tpu.pipeline_mode<synchronous>, transform_indices = @transform_36, window_bounds = array<i64: 64, 32>}, {pipeline_mode = #tpu.pipeline_mode<synchronous>, transform_indices = @transform_37, window_bounds = array<i64: 1, 32>}, {pipeline_mode = #tpu.pipeline_mode<synchronous>, transform_indices = @transform_38, window_bounds = array<i64: 1, 32>}, {pipeline_mode = #tpu.pipeline_mode<synchronous>, transform_indices = @transform_39, window_bounds = array<i64: 1, 32>}, {pipeline_mode = #tpu.pipeline_mode<synchronous>, transform_indices = @transform_40, window_bounds = array<i64: 32, 50>}, {pipeline_mode = #tpu.pipeline_mode<synchronous>, transform_indices = @transform_41, window_bounds = array<i64: 1, 50>}, {transform_indices = @transform_42, window_bounds = array<i64: 1, 8, 50>}, {transform_indices = @transform_43, window_bounds = array<i64: 1, 4, 8, 12>}]} {
    %c0 = arith.constant 0 : index
    %c0_0 = arith.constant 0 : index
    %c0_1 = arith.constant 0 : index
    %0 = vector.load %arg1[%c0, %c0_0, %c0_1] : memref<1x8x32xf32, #tpu.memory_space<vmem>>, vector<1x8x32xf32>
    %1 = vector.shape_cast %0 : vector<1x8x32xf32> to vector<8x32xf32>
    %c0_2 = arith.constant 0 : index
    %c0_3 = arith.constant 0 : index
    %c0_4 = arith.constant 0 : index
    %2 = vector.load %arg2[%c0_2, %c0_3, %c0_4] : memref<1x12x32xf32, #tpu.memory_space<vmem>>, vector<1x12x32xf32>
    %3 = vector.shape_cast %2 : vector<1x12x32xf32> to vector<12x32xf32>
    %c0_5 = arith.constant 0 : index
    %c0_6 = arith.constant 0 : index
    %c0_7 = arith.constant 0 : index
    %c0_8 = arith.constant 0 : index
    %4 = vector.load %arg3[%c0_5, %c0_6, %c0_7, %c0_8] : memref<1x1x8x8xf32, #tpu.memory_space<vmem>>, vector<1x1x8x8xf32>
    %5 = vector.shape_cast %4 : vector<1x1x8x8xf32> to vector<8x8xf32>
    %cst = arith.constant 0.000000e+00 : f32
    %6 = vector.broadcast %cst : f32 to vector<8x8xf32>
    %7 = arith.cmpf oeq, %5, %6 : vector<8x8xf32>
    %cst_9 = arith.constant -1.000000e+10 : f32
    %cst_10 = arith.constant 0.000000e+00 : f32
    %8 = vector.broadcast %cst_9 : f32 to vector<8x8xf32>
    %9 = vector.broadcast %cst_10 : f32 to vector<8x8xf32>
    %10 = arith.select %7, %8, %9 : vector<8x8xi1>, vector<8x8xf32>
    %c0_11 = arith.constant 0 : index
    %c0_12 = arith.constant 0 : index
    %c0_13 = arith.constant 0 : index
    %c0_14 = arith.constant 0 : index
    %11 = vector.load %arg4[%c0_11, %c0_12, %c0_13, %c0_14] : memref<1x1x1x12xf32, #tpu.memory_space<vmem>>, vector<1x1x1x12xf32>
    %12 = vector.shape_cast %11 : vector<1x1x1x12xf32> to vector<1x12xf32>
    %cst_15 = arith.constant 0.000000e+00 : f32
    %13 = vector.broadcast %cst_15 : f32 to vector<1x12xf32>
    %14 = arith.cmpf oeq, %12, %13 : vector<1x12xf32>
    %cst_16 = arith.constant -1.000000e+10 : f32
    %cst_17 = arith.constant 0.000000e+00 : f32
    %15 = vector.broadcast %cst_16 : f32 to vector<1x12xf32>
    %16 = vector.broadcast %cst_17 : f32 to vector<1x12xf32>
    %17 = arith.select %14, %15, %16 : vector<1x12xi1>, vector<1x12xf32>
    %c0_18 = arith.constant 0 : index
    %c0_19 = arith.constant 0 : index
    %18 = vector.load %arg5[%c0_18, %c0_19] : memref<32x96xf32, #tpu.memory_space<vmem>>, vector<32x96xf32>
    %c0_20 = arith.constant 0 : index
    %c0_21 = arith.constant 0 : index
    %19 = vector.load %arg6[%c0_20, %c0_21] : memref<1x96xf32, #tpu.memory_space<vmem>>, vector<1x96xf32>
    %c0_22 = arith.constant 0 : index
    %c0_23 = arith.constant 0 : index
    %20 = vector.load %arg7[%c0_22, %c0_23] : memref<32x32xf32, #tpu.memory_space<vmem>>, vector<32x32xf32>
    %c0_24 = arith.constant 0 : index
    %c0_25 = arith.constant 0 : index
    %21 = vector.load %arg8[%c0_24, %c0_25] : memref<1x32xf32, #tpu.memory_space<vmem>>, vector<1x32xf32>
    %c0_26 = arith.constant 0 : index
    %c0_27 = arith.constant 0 : index
    %22 = vector.load %arg9[%c0_26, %c0_27] : memref<32x32xf32, #tpu.memory_space<vmem>>, vector<32x32xf32>
    %c0_28 = arith.constant 0 : index
    %c0_29 = arith.constant 0 : index
    %23 = vector.load %arg10[%c0_28, %c0_29] : memref<1x32xf32, #tpu.memory_space<vmem>>, vector<1x32xf32>
    %c0_30 = arith.constant 0 : index
    %c0_31 = arith.constant 0 : index
    %24 = vector.load %arg11[%c0_30, %c0_31] : memref<32x64xf32, #tpu.memory_space<vmem>>, vector<32x64xf32>
    %c0_32 = arith.constant 0 : index
    %c0_33 = arith.constant 0 : index
    %25 = vector.load %arg12[%c0_32, %c0_33] : memref<1x64xf32, #tpu.memory_space<vmem>>, vector<1x64xf32>
    %c0_34 = arith.constant 0 : index
    %c0_35 = arith.constant 0 : index
    %26 = vector.load %arg13[%c0_34, %c0_35] : memref<32x32xf32, #tpu.memory_space<vmem>>, vector<32x32xf32>
    %c0_36 = arith.constant 0 : index
    %c0_37 = arith.constant 0 : index
    %27 = vector.load %arg14[%c0_36, %c0_37] : memref<1x32xf32, #tpu.memory_space<vmem>>, vector<1x32xf32>
    %c0_38 = arith.constant 0 : index
    %c0_39 = arith.constant 0 : index
    %28 = vector.load %arg15[%c0_38, %c0_39] : memref<1x32xf32, #tpu.memory_space<vmem>>, vector<1x32xf32>
    %c0_40 = arith.constant 0 : index
    %c0_41 = arith.constant 0 : index
    %29 = vector.load %arg16[%c0_40, %c0_41] : memref<1x32xf32, #tpu.memory_space<vmem>>, vector<1x32xf32>
    %c0_42 = arith.constant 0 : index
    %c0_43 = arith.constant 0 : index
    %30 = vector.load %arg17[%c0_42, %c0_43] : memref<32x64xf32, #tpu.memory_space<vmem>>, vector<32x64xf32>
    %c0_44 = arith.constant 0 : index
    %c0_45 = arith.constant 0 : index
    %31 = vector.load %arg18[%c0_44, %c0_45] : memref<1x64xf32, #tpu.memory_space<vmem>>, vector<1x64xf32>
    %c0_46 = arith.constant 0 : index
    %c0_47 = arith.constant 0 : index
    %32 = vector.load %arg19[%c0_46, %c0_47] : memref<64x32xf32, #tpu.memory_space<vmem>>, vector<64x32xf32>
    %c0_48 = arith.constant 0 : index
    %c0_49 = arith.constant 0 : index
    %33 = vector.load %arg20[%c0_48, %c0_49] : memref<1x32xf32, #tpu.memory_space<vmem>>, vector<1x32xf32>
    %c0_50 = arith.constant 0 : index
    %c0_51 = arith.constant 0 : index
    %34 = vector.load %arg21[%c0_50, %c0_51] : memref<1x32xf32, #tpu.memory_space<vmem>>, vector<1x32xf32>
    %c0_52 = arith.constant 0 : index
    %c0_53 = arith.constant 0 : index
    %35 = vector.load %arg22[%c0_52, %c0_53] : memref<1x32xf32, #tpu.memory_space<vmem>>, vector<1x32xf32>
    %cst_54 = arith.constant dense<0.000000e+00> : vector<8x96xf32>
    %36 = tpu.matmul %1, %18, %cst_54 {dimension_numbers = #tpu.dot_dimension_numbers<[1], [0], [0], [1], [0, 0, 1, 1], [], []>} : vector<8x32xf32>, vector<32x96xf32>, vector<8x96xf32> -> vector<8x96xf32>
    %37 = vector.broadcast %19 : vector<1x96xf32> to vector<8x96xf32>
    %38 = arith.addf %36, %37 : vector<8x96xf32>
    %39 = vector.extract_strided_slice %38 {offsets = [0, 0], sizes = [8, 32], strides = [1, 1]} : vector<8x96xf32> to vector<8x32xf32>
    %40 = vector.extract_strided_slice %38 {offsets = [0, 32], sizes = [8, 32], strides = [1, 1]} : vector<8x96xf32> to vector<8x32xf32>
    %41 = vector.extract_strided_slice %38 {offsets = [0, 64], sizes = [8, 32], strides = [1, 1]} : vector<8x96xf32> to vector<8x32xf32>
    %42 = vector.shape_cast %39 : vector<8x32xf32> to vector<8x4x8xf32>
    %43 = tpu.transpose %42, [1, 0, 2] : vector<8x4x8xf32> -> vector<4x8x8xf32>
    %44 = vector.shape_cast %40 : vector<8x32xf32> to vector<8x4x8xf32>
    %45 = tpu.transpose %44, [1, 0, 2] : vector<8x4x8xf32> -> vector<4x8x8xf32>
    %46 = vector.shape_cast %41 : vector<8x32xf32> to vector<8x4x8xf32>
    %47 = tpu.transpose %46, [1, 0, 2] : vector<8x4x8xf32> -> vector<4x8x8xf32>
    "tpu.trace_start"() <{level = 10 : i32, message = "hqd,hkd->hqk"}> : () -> ()
    %cst_55 = arith.constant dense<0.000000e+00> : vector<4x8x8xf32>
    %48 = tpu.matmul %43, %45, %cst_55 {dimension_numbers = #tpu.dot_dimension_numbers<[2], [2], [1], [1], [0, 0, 0, 1, 1, 1], [0], [0]>} : vector<4x8x8xf32>, vector<4x8x8xf32>, vector<4x8x8xf32> -> vector<4x8x8xf32>
    "tpu.trace_stop"() : () -> ()
    %49 = vector.shape_cast %10 : vector<8x8xf32> to vector<1x8x8xf32>
    %50 = vector.broadcast %49 : vector<1x8x8xf32> to vector<4x8x8xf32>
    %51 = arith.addf %48, %50 : vector<4x8x8xf32>
    %cst_56 = arith.constant dense<0xFF800000> : vector<4x8xf32>
    %52 = vector.multi_reduction <maximumf>, %51, %cst_56 [2] : vector<4x8x8xf32> to vector<4x8xf32>
    %53 = vector.shape_cast %52 : vector<4x8xf32> to vector<4x8x1xf32>
    %54 = vector.broadcast %53 : vector<4x8x1xf32> to vector<4x8x8xf32>
    %55 = arith.subf %51, %54 : vector<4x8x8xf32>
    %56 = math.exp %55 : vector<4x8x8xf32>
    %cst_57 = arith.constant dense<0.000000e+00> : vector<4x8xf32>
    %57 = vector.multi_reduction <add>, %56, %cst_57 [2] : vector<4x8x8xf32> to vector<4x8xf32>
    %58 = vector.shape_cast %57 : vector<4x8xf32> to vector<4x8x1xf32>
    %59 = tpu.reciprocal %58 {approx = true} : vector<4x8x1xf32> -> vector<4x8x1xf32>
    %60 = vector.broadcast %59 : vector<4x8x1xf32> to vector<4x8x8xf32>
    %61 = arith.mulf %56, %60 : vector<4x8x8xf32>
    "tpu.trace_start"() <{level = 10 : i32, message = "hqk,hkd->qhd"}> : () -> ()
    %cst_58 = arith.constant dense<0.000000e+00> : vector<4x8x8xf32>
    %62 = tpu.matmul %47, %61, %cst_58 {dimension_numbers = #tpu.dot_dimension_numbers<[1], [2], [2], [1], [0, 0, 0, 2, 1, 1], [0], [0]>} : vector<4x8x8xf32>, vector<4x8x8xf32>, vector<4x8x8xf32> -> vector<4x8x8xf32>
    %63 = tpu.transpose %62, [2, 0, 1] : vector<4x8x8xf32> -> vector<8x4x8xf32>
    "tpu.trace_stop"() : () -> ()
    %64 = vector.shape_cast %63 : vector<8x4x8xf32> to vector<8x32xf32>
    %cst_59 = arith.constant dense<0.000000e+00> : vector<8x32xf32>
    %65 = tpu.matmul %64, %20, %cst_59 {dimension_numbers = #tpu.dot_dimension_numbers<[1], [0], [0], [1], [0, 0, 1, 1], [], []>} : vector<8x32xf32>, vector<32x32xf32>, vector<8x32xf32> -> vector<8x32xf32>
    %66 = vector.broadcast %21 : vector<1x32xf32> to vector<8x32xf32>
    %67 = arith.addf %65, %66 : vector<8x32xf32>
    %68 = arith.addf %1, %67 : vector<8x32xf32>
    %cst_60 = arith.constant dense<0.000000e+00> : vector<8xf32>
    %69 = vector.multi_reduction <add>, %68, %cst_60 [1] : vector<8x32xf32> to vector<8xf32>
    %70 = vector.shape_cast %69 : vector<8xf32> to vector<8x1xf32>
    %cst_61 = arith.constant 3.200000e+01 : f32
    %71 = vector.broadcast %cst_61 : f32 to vector<8x1xf32>
    %72 = arith.divf %70, %71 : vector<8x1xf32>
    %73 = vector.broadcast %72 : vector<8x1xf32> to vector<8x32xf32>
    %74 = arith.subf %68, %73 : vector<8x32xf32>
    %75 = arith.mulf %74, %74 : vector<8x32xf32>
    %cst_62 = arith.constant dense<0.000000e+00> : vector<8xf32>
    %76 = vector.multi_reduction <add>, %75, %cst_62 [1] : vector<8x32xf32> to vector<8xf32>
    %77 = vector.shape_cast %76 : vector<8xf32> to vector<8x1xf32>
    %cst_63 = arith.constant 3.200000e+01 : f32
    %78 = vector.broadcast %cst_63 : f32 to vector<8x1xf32>
    %79 = arith.divf %77, %78 : vector<8x1xf32>
    %80 = vector.broadcast %72 : vector<8x1xf32> to vector<8x32xf32>
    %81 = arith.subf %68, %80 : vector<8x32xf32>
    %cst_64 = arith.constant 9.99999974E-6 : f32
    %82 = vector.broadcast %cst_64 : f32 to vector<8x1xf32>
    %83 = arith.addf %79, %82 : vector<8x1xf32>
    %84 = math.rsqrt %83 : vector<8x1xf32>
    %85 = vector.broadcast %84 : vector<8x1xf32> to vector<8x32xf32>
    %86 = arith.mulf %81, %85 : vector<8x32xf32>
    %87 = vector.broadcast %28 : vector<1x32xf32> to vector<8x32xf32>
    %88 = arith.mulf %86, %87 : vector<8x32xf32>
    %89 = vector.broadcast %29 : vector<1x32xf32> to vector<8x32xf32>
    %90 = arith.addf %88, %89 : vector<8x32xf32>
    %cst_65 = arith.constant dense<0.000000e+00> : vector<8x32xf32>
    %91 = tpu.matmul %90, %22, %cst_65 {dimension_numbers = #tpu.dot_dimension_numbers<[1], [0], [0], [1], [0, 0, 1, 1], [], []>} : vector<8x32xf32>, vector<32x32xf32>, vector<8x32xf32> -> vector<8x32xf32>
    %92 = vector.broadcast %23 : vector<1x32xf32> to vector<8x32xf32>
    %93 = arith.addf %91, %92 : vector<8x32xf32>
    %cst_66 = arith.constant dense<0.000000e+00> : vector<12x64xf32>
    %94 = tpu.matmul %3, %24, %cst_66 {dimension_numbers = #tpu.dot_dimension_numbers<[1], [0], [0], [1], [0, 0, 1, 1], [], []>} : vector<12x32xf32>, vector<32x64xf32>, vector<12x64xf32> -> vector<12x64xf32>
    %95 = vector.broadcast %25 : vector<1x64xf32> to vector<12x64xf32>
    %96 = arith.addf %94, %95 : vector<12x64xf32>
    %97 = vector.extract_strided_slice %96 {offsets = [0, 0], sizes = [12, 32], strides = [1, 1]} : vector<12x64xf32> to vector<12x32xf32>
    %98 = vector.extract_strided_slice %96 {offsets = [0, 32], sizes = [12, 32], strides = [1, 1]} : vector<12x64xf32> to vector<12x32xf32>
    %99 = vector.shape_cast %93 : vector<8x32xf32> to vector<8x4x8xf32>
    %100 = tpu.transpose %99, [1, 0, 2] : vector<8x4x8xf32> -> vector<4x8x8xf32>
    %101 = vector.shape_cast %97 : vector<12x32xf32> to vector<12x4x8xf32>
    %102 = tpu.transpose %101, [1, 0, 2] : vector<12x4x8xf32> -> vector<4x12x8xf32>
    %103 = vector.shape_cast %98 : vector<12x32xf32> to vector<12x4x8xf32>
    %104 = tpu.transpose %103, [1, 0, 2] : vector<12x4x8xf32> -> vector<4x12x8xf32>
    "tpu.trace_start"() <{level = 10 : i32, message = "hqd,hkd->hqk"}> : () -> ()
    %cst_67 = arith.constant dense<0.000000e+00> : vector<4x8x12xf32>
    %105 = tpu.matmul %100, %102, %cst_67 {dimension_numbers = #tpu.dot_dimension_numbers<[2], [2], [1], [1], [0, 0, 0, 1, 1, 1], [0], [0]>} : vector<4x8x8xf32>, vector<4x12x8xf32>, vector<4x8x12xf32> -> vector<4x8x12xf32>
    "tpu.trace_stop"() : () -> ()
    %106 = vector.shape_cast %17 : vector<1x12xf32> to vector<1x1x12xf32>
    %107 = vector.broadcast %106 : vector<1x1x12xf32> to vector<4x8x12xf32>
    %108 = arith.addf %105, %107 : vector<4x8x12xf32>
    %cst_68 = arith.constant dense<0xFF800000> : vector<4x8xf32>
    %109 = vector.multi_reduction <maximumf>, %108, %cst_68 [2] : vector<4x8x12xf32> to vector<4x8xf32>
    %110 = vector.shape_cast %109 : vector<4x8xf32> to vector<4x8x1xf32>
    %111 = vector.broadcast %110 : vector<4x8x1xf32> to vector<4x8x12xf32>
    %112 = arith.subf %108, %111 : vector<4x8x12xf32>
    %113 = math.exp %112 : vector<4x8x12xf32>
    %cst_69 = arith.constant dense<0.000000e+00> : vector<4x8xf32>
    %114 = vector.multi_reduction <add>, %113, %cst_69 [2] : vector<4x8x12xf32> to vector<4x8xf32>
    %115 = vector.shape_cast %114 : vector<4x8xf32> to vector<4x8x1xf32>
    %116 = tpu.reciprocal %115 {approx = true} : vector<4x8x1xf32> -> vector<4x8x1xf32>
    %117 = vector.broadcast %116 : vector<4x8x1xf32> to vector<4x8x12xf32>
    %118 = arith.mulf %113, %117 : vector<4x8x12xf32>
    "tpu.trace_start"() <{level = 10 : i32, message = "hqk,hkd->qhd"}> : () -> ()
    %cst_70 = arith.constant dense<0.000000e+00> : vector<4x8x8xf32>
    %119 = tpu.matmul %104, %118, %cst_70 {dimension_numbers = #tpu.dot_dimension_numbers<[1], [2], [2], [1], [0, 0, 0, 2, 1, 1], [0], [0]>} : vector<4x12x8xf32>, vector<4x8x12xf32>, vector<4x8x8xf32> -> vector<4x8x8xf32>
    %120 = tpu.transpose %119, [2, 0, 1] : vector<4x8x8xf32> -> vector<8x4x8xf32>
    "tpu.trace_stop"() : () -> ()
    %121 = vector.shape_cast %120 : vector<8x4x8xf32> to vector<8x32xf32>
    %cst_71 = arith.constant dense<0.000000e+00> : vector<8x32xf32>
    %122 = tpu.matmul %121, %26, %cst_71 {dimension_numbers = #tpu.dot_dimension_numbers<[1], [0], [0], [1], [0, 0, 1, 1], [], []>} : vector<8x32xf32>, vector<32x32xf32>, vector<8x32xf32> -> vector<8x32xf32>
    %123 = vector.broadcast %27 : vector<1x32xf32> to vector<8x32xf32>
    %124 = arith.addf %122, %123 : vector<8x32xf32>
    %125 = arith.addf %90, %124 : vector<8x32xf32>
    %cst_72 = arith.constant dense<0.000000e+00> : vector<8xf32>
    %126 = vector.multi_reduction <add>, %125, %cst_72 [1] : vector<8x32xf32> to vector<8xf32>
    %127 = vector.shape_cast %126 : vector<8xf32> to vector<8x1xf32>
    %cst_73 = arith.constant 3.200000e+01 : f32
    %128 = vector.broadcast %cst_73 : f32 to vector<8x1xf32>
    %129 = arith.divf %127, %128 : vector<8x1xf32>
    %130 = vector.broadcast %129 : vector<8x1xf32> to vector<8x32xf32>
    %131 = arith.subf %125, %130 : vector<8x32xf32>
    %132 = arith.mulf %131, %131 : vector<8x32xf32>
    %cst_74 = arith.constant dense<0.000000e+00> : vector<8xf32>
    %133 = vector.multi_reduction <add>, %132, %cst_74 [1] : vector<8x32xf32> to vector<8xf32>
    %134 = vector.shape_cast %133 : vector<8xf32> to vector<8x1xf32>
    %cst_75 = arith.constant 3.200000e+01 : f32
    %135 = vector.broadcast %cst_75 : f32 to vector<8x1xf32>
    %136 = arith.divf %134, %135 : vector<8x1xf32>
    %137 = vector.broadcast %129 : vector<8x1xf32> to vector<8x32xf32>
    %138 = arith.subf %125, %137 : vector<8x32xf32>
    %cst_76 = arith.constant 9.99999974E-6 : f32
    %139 = vector.broadcast %cst_76 : f32 to vector<8x1xf32>
    %140 = arith.addf %136, %139 : vector<8x1xf32>
    %141 = math.rsqrt %140 : vector<8x1xf32>
    %142 = vector.broadcast %141 : vector<8x1xf32> to vector<8x32xf32>
    %143 = arith.mulf %138, %142 : vector<8x32xf32>
    %144 = vector.broadcast %28 : vector<1x32xf32> to vector<8x32xf32>
    %145 = arith.mulf %143, %144 : vector<8x32xf32>
    %146 = vector.broadcast %29 : vector<1x32xf32> to vector<8x32xf32>
    %147 = arith.addf %145, %146 : vector<8x32xf32>
    %cst_77 = arith.constant dense<0.000000e+00> : vector<8x64xf32>
    %148 = tpu.matmul %147, %30, %cst_77 {dimension_numbers = #tpu.dot_dimension_numbers<[1], [0], [0], [1], [0, 0, 1, 1], [], []>} : vector<8x32xf32>, vector<32x64xf32>, vector<8x64xf32> -> vector<8x64xf32>
    %149 = vector.broadcast %31 : vector<1x64xf32> to vector<8x64xf32>
    %150 = arith.addf %148, %149 : vector<8x64xf32>
    %cst_78 = arith.constant 0.000000e+00 : f32
    %151 = vector.broadcast %cst_78 : f32 to vector<8x64xf32>
    %152 = arith.maximumf %150, %151 : vector<8x64xf32>
    %cst_79 = arith.constant dense<0.000000e+00> : vector<8x32xf32>
    %153 = tpu.matmul %152, %32, %cst_79 {dimension_numbers = #tpu.dot_dimension_numbers<[1], [0], [0], [1], [0, 0, 1, 1], [], []>} : vector<8x64xf32>, vector<64x32xf32>, vector<8x32xf32> -> vector<8x32xf32>
    %154 = vector.broadcast %33 : vector<1x32xf32> to vector<8x32xf32>
    %155 = arith.addf %153, %154 : vector<8x32xf32>
    %156 = arith.addf %147, %155 : vector<8x32xf32>
    %cst_80 = arith.constant dense<0.000000e+00> : vector<8xf32>
    %157 = vector.multi_reduction <add>, %156, %cst_80 [1] : vector<8x32xf32> to vector<8xf32>
    %158 = vector.shape_cast %157 : vector<8xf32> to vector<8x1xf32>
    %cst_81 = arith.constant 3.200000e+01 : f32
    %159 = vector.broadcast %cst_81 : f32 to vector<8x1xf32>
    %160 = arith.divf %158, %159 : vector<8x1xf32>
    %161 = vector.broadcast %160 : vector<8x1xf32> to vector<8x32xf32>
    %162 = arith.subf %156, %161 : vector<8x32xf32>
    %163 = arith.mulf %162, %162 : vector<8x32xf32>
    %cst_82 = arith.constant dense<0.000000e+00> : vector<8xf32>
    %164 = vector.multi_reduction <add>, %163, %cst_82 [1] : vector<8x32xf32> to vector<8xf32>
    %165 = vector.shape_cast %164 : vector<8xf32> to vector<8x1xf32>
    %cst_83 = arith.constant 3.200000e+01 : f32
    %166 = vector.broadcast %cst_83 : f32 to vector<8x1xf32>
    %167 = arith.divf %165, %166 : vector<8x1xf32>
    %168 = vector.broadcast %160 : vector<8x1xf32> to vector<8x32xf32>
    %169 = arith.subf %156, %168 : vector<8x32xf32>
    %cst_84 = arith.constant 9.99999974E-6 : f32
    %170 = vector.broadcast %cst_84 : f32 to vector<8x1xf32>
    %171 = arith.addf %167, %170 : vector<8x1xf32>
    %172 = math.rsqrt %171 : vector<8x1xf32>
    %173 = vector.broadcast %172 : vector<8x1xf32> to vector<8x32xf32>
    %174 = arith.mulf %169, %173 : vector<8x32xf32>
    %175 = vector.broadcast %34 : vector<1x32xf32> to vector<8x32xf32>
    %176 = arith.mulf %174, %175 : vector<8x32xf32>
    %177 = vector.broadcast %35 : vector<1x32xf32> to vector<8x32xf32>
    %178 = arith.addf %176, %177 : vector<8x32xf32>
    %c0_85 = arith.constant 0 : index
    %c0_86 = arith.constant 0 : index
    %179 = vector.load %arg23[%c0_85, %c0_86] : memref<32x96xf32, #tpu.memory_space<vmem>>, vector<32x96xf32>
    %c0_87 = arith.constant 0 : index
    %c0_88 = arith.constant 0 : index
    %180 = vector.load %arg24[%c0_87, %c0_88] : memref<1x96xf32, #tpu.memory_space<vmem>>, vector<1x96xf32>
    %c0_89 = arith.constant 0 : index
    %c0_90 = arith.constant 0 : index
    %181 = vector.load %arg25[%c0_89, %c0_90] : memref<32x32xf32, #tpu.memory_space<vmem>>, vector<32x32xf32>
    %c0_91 = arith.constant 0 : index
    %c0_92 = arith.constant 0 : index
    %182 = vector.load %arg26[%c0_91, %c0_92] : memref<1x32xf32, #tpu.memory_space<vmem>>, vector<1x32xf32>
    %c0_93 = arith.constant 0 : index
    %c0_94 = arith.constant 0 : index
    %183 = vector.load %arg27[%c0_93, %c0_94] : memref<32x32xf32, #tpu.memory_space<vmem>>, vector<32x32xf32>
    %c0_95 = arith.constant 0 : index
    %c0_96 = arith.constant 0 : index
    %184 = vector.load %arg28[%c0_95, %c0_96] : memref<1x32xf32, #tpu.memory_space<vmem>>, vector<1x32xf32>
    %c0_97 = arith.constant 0 : index
    %c0_98 = arith.constant 0 : index
    %185 = vector.load %arg29[%c0_97, %c0_98] : memref<32x64xf32, #tpu.memory_space<vmem>>, vector<32x64xf32>
    %c0_99 = arith.constant 0 : index
    %c0_100 = arith.constant 0 : index
    %186 = vector.load %arg30[%c0_99, %c0_100] : memref<1x64xf32, #tpu.memory_space<vmem>>, vector<1x64xf32>
    %c0_101 = arith.constant 0 : index
    %c0_102 = arith.constant 0 : index
    %187 = vector.load %arg31[%c0_101, %c0_102] : memref<32x32xf32, #tpu.memory_space<vmem>>, vector<32x32xf32>
    %c0_103 = arith.constant 0 : index
    %c0_104 = arith.constant 0 : index
    %188 = vector.load %arg32[%c0_103, %c0_104] : memref<1x32xf32, #tpu.memory_space<vmem>>, vector<1x32xf32>
    %c0_105 = arith.constant 0 : index
    %c0_106 = arith.constant 0 : index
    %189 = vector.load %arg33[%c0_105, %c0_106] : memref<1x32xf32, #tpu.memory_space<vmem>>, vector<1x32xf32>
    %c0_107 = arith.constant 0 : index
    %c0_108 = arith.constant 0 : index
    %190 = vector.load %arg34[%c0_107, %c0_108] : memref<1x32xf32, #tpu.memory_space<vmem>>, vector<1x32xf32>
    %c0_109 = arith.constant 0 : index
    %c0_110 = arith.constant 0 : index
    %191 = vector.load %arg35[%c0_109, %c0_110] : memref<32x64xf32, #tpu.memory_space<vmem>>, vector<32x64xf32>
    %c0_111 = arith.constant 0 : index
    %c0_112 = arith.constant 0 : index
    %192 = vector.load %arg36[%c0_111, %c0_112] : memref<1x64xf32, #tpu.memory_space<vmem>>, vector<1x64xf32>
    %c0_113 = arith.constant 0 : index
    %c0_114 = arith.constant 0 : index
    %193 = vector.load %arg37[%c0_113, %c0_114] : memref<64x32xf32, #tpu.memory_space<vmem>>, vector<64x32xf32>
    %c0_115 = arith.constant 0 : index
    %c0_116 = arith.constant 0 : index
    %194 = vector.load %arg38[%c0_115, %c0_116] : memref<1x32xf32, #tpu.memory_space<vmem>>, vector<1x32xf32>
    %c0_117 = arith.constant 0 : index
    %c0_118 = arith.constant 0 : index
    %195 = vector.load %arg39[%c0_117, %c0_118] : memref<1x32xf32, #tpu.memory_space<vmem>>, vector<1x32xf32>
    %c0_119 = arith.constant 0 : index
    %c0_120 = arith.constant 0 : index
    %196 = vector.load %arg40[%c0_119, %c0_120] : memref<1x32xf32, #tpu.memory_space<vmem>>, vector<1x32xf32>
    %cst_121 = arith.constant dense<0.000000e+00> : vector<8x96xf32>
    %197 = tpu.matmul %178, %179, %cst_121 {dimension_numbers = #tpu.dot_dimension_numbers<[1], [0], [0], [1], [0, 0, 1, 1], [], []>} : vector<8x32xf32>, vector<32x96xf32>, vector<8x96xf32> -> vector<8x96xf32>
    %198 = vector.broadcast %180 : vector<1x96xf32> to vector<8x96xf32>
    %199 = arith.addf %197, %198 : vector<8x96xf32>
    %200 = vector.extract_strided_slice %199 {offsets = [0, 0], sizes = [8, 32], strides = [1, 1]} : vector<8x96xf32> to vector<8x32xf32>
    %201 = vector.extract_strided_slice %199 {offsets = [0, 32], sizes = [8, 32], strides = [1, 1]} : vector<8x96xf32> to vector<8x32xf32>
    %202 = vector.extract_strided_slice %199 {offsets = [0, 64], sizes = [8, 32], strides = [1, 1]} : vector<8x96xf32> to vector<8x32xf32>
    %203 = vector.shape_cast %200 : vector<8x32xf32> to vector<8x4x8xf32>
    %204 = tpu.transpose %203, [1, 0, 2] : vector<8x4x8xf32> -> vector<4x8x8xf32>
    %205 = vector.shape_cast %201 : vector<8x32xf32> to vector<8x4x8xf32>
    %206 = tpu.transpose %205, [1, 0, 2] : vector<8x4x8xf32> -> vector<4x8x8xf32>
    %207 = vector.shape_cast %202 : vector<8x32xf32> to vector<8x4x8xf32>
    %208 = tpu.transpose %207, [1, 0, 2] : vector<8x4x8xf32> -> vector<4x8x8xf32>
    "tpu.trace_start"() <{level = 10 : i32, message = "hqd,hkd->hqk"}> : () -> ()
    %cst_122 = arith.constant dense<0.000000e+00> : vector<4x8x8xf32>
    %209 = tpu.matmul %204, %206, %cst_122 {dimension_numbers = #tpu.dot_dimension_numbers<[2], [2], [1], [1], [0, 0, 0, 1, 1, 1], [0], [0]>} : vector<4x8x8xf32>, vector<4x8x8xf32>, vector<4x8x8xf32> -> vector<4x8x8xf32>
    "tpu.trace_stop"() : () -> ()
    %210 = vector.shape_cast %10 : vector<8x8xf32> to vector<1x8x8xf32>
    %211 = vector.broadcast %210 : vector<1x8x8xf32> to vector<4x8x8xf32>
    %212 = arith.addf %209, %211 : vector<4x8x8xf32>
    %cst_123 = arith.constant dense<0xFF800000> : vector<4x8xf32>
    %213 = vector.multi_reduction <maximumf>, %212, %cst_123 [2] : vector<4x8x8xf32> to vector<4x8xf32>
    %214 = vector.shape_cast %213 : vector<4x8xf32> to vector<4x8x1xf32>
    %215 = vector.broadcast %214 : vector<4x8x1xf32> to vector<4x8x8xf32>
    %216 = arith.subf %212, %215 : vector<4x8x8xf32>
    %217 = math.exp %216 : vector<4x8x8xf32>
    %cst_124 = arith.constant dense<0.000000e+00> : vector<4x8xf32>
    %218 = vector.multi_reduction <add>, %217, %cst_124 [2] : vector<4x8x8xf32> to vector<4x8xf32>
    %219 = vector.shape_cast %218 : vector<4x8xf32> to vector<4x8x1xf32>
    %220 = tpu.reciprocal %219 {approx = true} : vector<4x8x1xf32> -> vector<4x8x1xf32>
    %221 = vector.broadcast %220 : vector<4x8x1xf32> to vector<4x8x8xf32>
    %222 = arith.mulf %217, %221 : vector<4x8x8xf32>
    "tpu.trace_start"() <{level = 10 : i32, message = "hqk,hkd->qhd"}> : () -> ()
    %cst_125 = arith.constant dense<0.000000e+00> : vector<4x8x8xf32>
    %223 = tpu.matmul %208, %222, %cst_125 {dimension_numbers = #tpu.dot_dimension_numbers<[1], [2], [2], [1], [0, 0, 0, 2, 1, 1], [0], [0]>} : vector<4x8x8xf32>, vector<4x8x8xf32>, vector<4x8x8xf32> -> vector<4x8x8xf32>
    %224 = tpu.transpose %223, [2, 0, 1] : vector<4x8x8xf32> -> vector<8x4x8xf32>
    "tpu.trace_stop"() : () -> ()
    %225 = vector.shape_cast %224 : vector<8x4x8xf32> to vector<8x32xf32>
    %cst_126 = arith.constant dense<0.000000e+00> : vector<8x32xf32>
    %226 = tpu.matmul %225, %181, %cst_126 {dimension_numbers = #tpu.dot_dimension_numbers<[1], [0], [0], [1], [0, 0, 1, 1], [], []>} : vector<8x32xf32>, vector<32x32xf32>, vector<8x32xf32> -> vector<8x32xf32>
    %227 = vector.broadcast %182 : vector<1x32xf32> to vector<8x32xf32>
    %228 = arith.addf %226, %227 : vector<8x32xf32>
    %229 = arith.addf %178, %228 : vector<8x32xf32>
    %cst_127 = arith.constant dense<0.000000e+00> : vector<8xf32>
    %230 = vector.multi_reduction <add>, %229, %cst_127 [1] : vector<8x32xf32> to vector<8xf32>
    %231 = vector.shape_cast %230 : vector<8xf32> to vector<8x1xf32>
    %cst_128 = arith.constant 3.200000e+01 : f32
    %232 = vector.broadcast %cst_128 : f32 to vector<8x1xf32>
    %233 = arith.divf %231, %232 : vector<8x1xf32>
    %234 = vector.broadcast %233 : vector<8x1xf32> to vector<8x32xf32>
    %235 = arith.subf %229, %234 : vector<8x32xf32>
    %236 = arith.mulf %235, %235 : vector<8x32xf32>
    %cst_129 = arith.constant dense<0.000000e+00> : vector<8xf32>
    %237 = vector.multi_reduction <add>, %236, %cst_129 [1] : vector<8x32xf32> to vector<8xf32>
    %238 = vector.shape_cast %237 : vector<8xf32> to vector<8x1xf32>
    %cst_130 = arith.constant 3.200000e+01 : f32
    %239 = vector.broadcast %cst_130 : f32 to vector<8x1xf32>
    %240 = arith.divf %238, %239 : vector<8x1xf32>
    %241 = vector.broadcast %233 : vector<8x1xf32> to vector<8x32xf32>
    %242 = arith.subf %229, %241 : vector<8x32xf32>
    %cst_131 = arith.constant 9.99999974E-6 : f32
    %243 = vector.broadcast %cst_131 : f32 to vector<8x1xf32>
    %244 = arith.addf %240, %243 : vector<8x1xf32>
    %245 = math.rsqrt %244 : vector<8x1xf32>
    %246 = vector.broadcast %245 : vector<8x1xf32> to vector<8x32xf32>
    %247 = arith.mulf %242, %246 : vector<8x32xf32>
    %248 = vector.broadcast %189 : vector<1x32xf32> to vector<8x32xf32>
    %249 = arith.mulf %247, %248 : vector<8x32xf32>
    %250 = vector.broadcast %190 : vector<1x32xf32> to vector<8x32xf32>
    %251 = arith.addf %249, %250 : vector<8x32xf32>
    %cst_132 = arith.constant dense<0.000000e+00> : vector<8x32xf32>
    %252 = tpu.matmul %251, %183, %cst_132 {dimension_numbers = #tpu.dot_dimension_numbers<[1], [0], [0], [1], [0, 0, 1, 1], [], []>} : vector<8x32xf32>, vector<32x32xf32>, vector<8x32xf32> -> vector<8x32xf32>
    %253 = vector.broadcast %184 : vector<1x32xf32> to vector<8x32xf32>
    %254 = arith.addf %252, %253 : vector<8x32xf32>
    %cst_133 = arith.constant dense<0.000000e+00> : vector<12x64xf32>
    %255 = tpu.matmul %3, %185, %cst_133 {dimension_numbers = #tpu.dot_dimension_numbers<[1], [0], [0], [1], [0, 0, 1, 1], [], []>} : vector<12x32xf32>, vector<32x64xf32>, vector<12x64xf32> -> vector<12x64xf32>
    %256 = vector.broadcast %186 : vector<1x64xf32> to vector<12x64xf32>
    %257 = arith.addf %255, %256 : vector<12x64xf32>
    %258 = vector.extract_strided_slice %257 {offsets = [0, 0], sizes = [12, 32], strides = [1, 1]} : vector<12x64xf32> to vector<12x32xf32>
    %259 = vector.extract_strided_slice %257 {offsets = [0, 32], sizes = [12, 32], strides = [1, 1]} : vector<12x64xf32> to vector<12x32xf32>
    %260 = vector.shape_cast %254 : vector<8x32xf32> to vector<8x4x8xf32>
    %261 = tpu.transpose %260, [1, 0, 2] : vector<8x4x8xf32> -> vector<4x8x8xf32>
    %262 = vector.shape_cast %258 : vector<12x32xf32> to vector<12x4x8xf32>
    %263 = tpu.transpose %262, [1, 0, 2] : vector<12x4x8xf32> -> vector<4x12x8xf32>
    %264 = vector.shape_cast %259 : vector<12x32xf32> to vector<12x4x8xf32>
    %265 = tpu.transpose %264, [1, 0, 2] : vector<12x4x8xf32> -> vector<4x12x8xf32>
    "tpu.trace_start"() <{level = 10 : i32, message = "hqd,hkd->hqk"}> : () -> ()
    %cst_134 = arith.constant dense<0.000000e+00> : vector<4x8x12xf32>
    %266 = tpu.matmul %261, %263, %cst_134 {dimension_numbers = #tpu.dot_dimension_numbers<[2], [2], [1], [1], [0, 0, 0, 1, 1, 1], [0], [0]>} : vector<4x8x8xf32>, vector<4x12x8xf32>, vector<4x8x12xf32> -> vector<4x8x12xf32>
    "tpu.trace_stop"() : () -> ()
    %267 = vector.shape_cast %17 : vector<1x12xf32> to vector<1x1x12xf32>
    %268 = vector.broadcast %267 : vector<1x1x12xf32> to vector<4x8x12xf32>
    %269 = arith.addf %266, %268 : vector<4x8x12xf32>
    %cst_135 = arith.constant dense<0xFF800000> : vector<4x8xf32>
    %270 = vector.multi_reduction <maximumf>, %269, %cst_135 [2] : vector<4x8x12xf32> to vector<4x8xf32>
    %271 = vector.shape_cast %270 : vector<4x8xf32> to vector<4x8x1xf32>
    %272 = vector.broadcast %271 : vector<4x8x1xf32> to vector<4x8x12xf32>
    %273 = arith.subf %269, %272 : vector<4x8x12xf32>
    %274 = math.exp %273 : vector<4x8x12xf32>
    %cst_136 = arith.constant dense<0.000000e+00> : vector<4x8xf32>
    %275 = vector.multi_reduction <add>, %274, %cst_136 [2] : vector<4x8x12xf32> to vector<4x8xf32>
    %276 = vector.shape_cast %275 : vector<4x8xf32> to vector<4x8x1xf32>
    %277 = tpu.reciprocal %276 {approx = true} : vector<4x8x1xf32> -> vector<4x8x1xf32>
    %278 = vector.broadcast %277 : vector<4x8x1xf32> to vector<4x8x12xf32>
    %279 = arith.mulf %274, %278 : vector<4x8x12xf32>
    "tpu.trace_start"() <{level = 10 : i32, message = "hqk,hkd->qhd"}> : () -> ()
    %cst_137 = arith.constant dense<0.000000e+00> : vector<4x8x8xf32>
    %280 = tpu.matmul %265, %279, %cst_137 {dimension_numbers = #tpu.dot_dimension_numbers<[1], [2], [2], [1], [0, 0, 0, 2, 1, 1], [0], [0]>} : vector<4x12x8xf32>, vector<4x8x12xf32>, vector<4x8x8xf32> -> vector<4x8x8xf32>
    %281 = tpu.transpose %280, [2, 0, 1] : vector<4x8x8xf32> -> vector<8x4x8xf32>
    "tpu.trace_stop"() : () -> ()
    %282 = vector.shape_cast %281 : vector<8x4x8xf32> to vector<8x32xf32>
    %c0_138 = arith.constant 0 : index
    %c0_139 = arith.constant 0 : index
    %c0_140 = arith.constant 0 : index
    %c0_141 = arith.constant 0 : index
    %283 = vector.load %arg44[%c0_138, %c0_139, %c0_140, %c0_141] : memref<1x4x8x12xf32, #tpu.memory_space<vmem>>, vector<1x4x8x12xf32>
    %284 = vector.shape_cast %283 : vector<1x4x8x12xf32> to vector<4x8x12xf32>
    %285 = vector.shape_cast %279 : vector<4x8x12xf32> to vector<1x4x8x12xf32>
    tpu.vector_store %arg44[%c0_138, %c0_139, %c0_140, %c0_141], %285 {strides = array<i32>} : memref<1x4x8x12xf32, #tpu.memory_space<vmem>>, vector<1x4x8x12xf32>,
    %cst_142 = arith.constant dense<0.000000e+00> : vector<8x32xf32>
    %286 = tpu.matmul %282, %187, %cst_142 {dimension_numbers = #tpu.dot_dimension_numbers<[1], [0], [0], [1], [0, 0, 1, 1], [], []>} : vector<8x32xf32>, vector<32x32xf32>, vector<8x32xf32> -> vector<8x32xf32>
    %287 = vector.broadcast %188 : vector<1x32xf32> to vector<8x32xf32>
    %288 = arith.addf %286, %287 : vector<8x32xf32>
    %289 = arith.addf %251, %288 : vector<8x32xf32>
    %cst_143 = arith.constant dense<0.000000e+00> : vector<8xf32>
    %290 = vector.multi_reduction <add>, %289, %cst_143 [1] : vector<8x32xf32> to vector<8xf32>
    %291 = vector.shape_cast %290 : vector<8xf32> to vector<8x1xf32>
    %cst_144 = arith.constant 3.200000e+01 : f32
    %292 = vector.broadcast %cst_144 : f32 to vector<8x1xf32>
    %293 = arith.divf %291, %292 : vector<8x1xf32>
    %294 = vector.broadcast %293 : vector<8x1xf32> to vector<8x32xf32>
    %295 = arith.subf %289, %294 : vector<8x32xf32>
    %296 = arith.mulf %295, %295 : vector<8x32xf32>
    %cst_145 = arith.constant dense<0.000000e+00> : vector<8xf32>
    %297 = vector.multi_reduction <add>, %296, %cst_145 [1] : vector<8x32xf32> to vector<8xf32>
    %298 = vector.shape_cast %297 : vector<8xf32> to vector<8x1xf32>
    %cst_146 = arith.constant 3.200000e+01 : f32
    %299 = vector.broadcast %cst_146 : f32 to vector<8x1xf32>
    %300 = arith.divf %298, %299 : vector<8x1xf32>
    %301 = vector.broadcast %293 : vector<8x1xf32> to vector<8x32xf32>
    %302 = arith.subf %289, %301 : vector<8x32xf32>
    %cst_147 = arith.constant 9.99999974E-6 : f32
    %303 = vector.broadcast %cst_147 : f32 to vector<8x1xf32>
    %304 = arith.addf %300, %303 : vector<8x1xf32>
    %305 = math.rsqrt %304 : vector<8x1xf32>
    %306 = vector.broadcast %305 : vector<8x1xf32> to vector<8x32xf32>
    %307 = arith.mulf %302, %306 : vector<8x32xf32>
    %308 = vector.broadcast %189 : vector<1x32xf32> to vector<8x32xf32>
    %309 = arith.mulf %307, %308 : vector<8x32xf32>
    %310 = vector.broadcast %190 : vector<1x32xf32> to vector<8x32xf32>
    %311 = arith.addf %309, %310 : vector<8x32xf32>
    %cst_148 = arith.constant dense<0.000000e+00> : vector<8x64xf32>
    %312 = tpu.matmul %311, %191, %cst_148 {dimension_numbers = #tpu.dot_dimension_numbers<[1], [0], [0], [1], [0, 0, 1, 1], [], []>} : vector<8x32xf32>, vector<32x64xf32>, vector<8x64xf32> -> vector<8x64xf32>
    %313 = vector.broadcast %192 : vector<1x64xf32> to vector<8x64xf32>
    %314 = arith.addf %312, %313 : vector<8x64xf32>
    %cst_149 = arith.constant 0.000000e+00 : f32
    %315 = vector.broadcast %cst_149 : f32 to vector<8x64xf32>
    %316 = arith.maximumf %314, %315 : vector<8x64xf32>
    %cst_150 = arith.constant dense<0.000000e+00> : vector<8x32xf32>
    %317 = tpu.matmul %316, %193, %cst_150 {dimension_numbers = #tpu.dot_dimension_numbers<[1], [0], [0], [1], [0, 0, 1, 1], [], []>} : vector<8x64xf32>, vector<64x32xf32>, vector<8x32xf32> -> vector<8x32xf32>
    %318 = vector.broadcast %194 : vector<1x32xf32> to vector<8x32xf32>
    %319 = arith.addf %317, %318 : vector<8x32xf32>
    %320 = arith.addf %311, %319 : vector<8x32xf32>
    %cst_151 = arith.constant dense<0.000000e+00> : vector<8xf32>
    %321 = vector.multi_reduction <add>, %320, %cst_151 [1] : vector<8x32xf32> to vector<8xf32>
    %322 = vector.shape_cast %321 : vector<8xf32> to vector<8x1xf32>
    %cst_152 = arith.constant 3.200000e+01 : f32
    %323 = vector.broadcast %cst_152 : f32 to vector<8x1xf32>
    %324 = arith.divf %322, %323 : vector<8x1xf32>
    %325 = vector.broadcast %324 : vector<8x1xf32> to vector<8x32xf32>
    %326 = arith.subf %320, %325 : vector<8x32xf32>
    %327 = arith.mulf %326, %326 : vector<8x32xf32>
    %cst_153 = arith.constant dense<0.000000e+00> : vector<8xf32>
    %328 = vector.multi_reduction <add>, %327, %cst_153 [1] : vector<8x32xf32> to vector<8xf32>
    %329 = vector.shape_cast %328 : vector<8xf32> to vector<8x1xf32>
    %cst_154 = arith.constant 3.200000e+01 : f32
    %330 = vector.broadcast %cst_154 : f32 to vector<8x1xf32>
    %331 = arith.divf %329, %330 : vector<8x1xf32>
    %332 = vector.broadcast %324 : vector<8x1xf32> to vector<8x32xf32>
    %333 = arith.subf %320, %332 : vector<8x32xf32>
    %cst_155 = arith.constant 9.99999974E-6 : f32
    %334 = vector.broadcast %cst_155 : f32 to vector<8x1xf32>
    %335 = arith.addf %331, %334 : vector<8x1xf32>
    %336 = math.rsqrt %335 : vector<8x1xf32>
    %337 = vector.broadcast %336 : vector<8x1xf32> to vector<8x32xf32>
    %338 = arith.mulf %333, %337 : vector<8x32xf32>
    %339 = vector.broadcast %195 : vector<1x32xf32> to vector<8x32xf32>
    %340 = arith.mulf %338, %339 : vector<8x32xf32>
    %341 = vector.broadcast %196 : vector<1x32xf32> to vector<8x32xf32>
    %342 = arith.addf %340, %341 : vector<8x32xf32>
    %c0_156 = arith.constant 0 : index
    %c0_157 = arith.constant 0 : index
    %343 = vector.load %arg41[%c0_156, %c0_157] : memref<32x50xf32, #tpu.memory_space<vmem>>, vector<32x50xf32>
    %c0_158 = arith.constant 0 : index
    %c0_159 = arith.constant 0 : index
    %344 = vector.load %arg42[%c0_158, %c0_159] : memref<1x50xf32, #tpu.memory_space<vmem>>, vector<1x50xf32>
    %cst_160 = arith.constant dense<0.000000e+00> : vector<8x50xf32>
    %345 = tpu.matmul %342, %343, %cst_160 {dimension_numbers = #tpu.dot_dimension_numbers<[1], [0], [0], [1], [0, 0, 1, 1], [], []>} : vector<8x32xf32>, vector<32x50xf32>, vector<8x50xf32> -> vector<8x50xf32>
    %346 = vector.broadcast %344 : vector<1x50xf32> to vector<8x50xf32>
    %347 = arith.addf %345, %346 : vector<8x50xf32>
    %c0_161 = arith.constant 0 : index
    %c0_162 = arith.constant 0 : index
    %c0_163 = arith.constant 0 : index
    %348 = vector.load %arg43[%c0_161, %c0_162, %c0_163] : memref<1x8x50xf32, #tpu.memory_space<vmem>>, vector<1x8x50xf32>
    %349 = vector.shape_cast %348 : vector<1x8x50xf32> to vector<8x50xf32>
    %350 = vector.shape_cast %347 : vector<8x50xf32> to vector<1x8x50xf32>
    tpu.vector_store %arg43[%c0_161, %c0_162, %c0_163], %350 {strides = array<i32>} : memref<1x8x50xf32, #tpu.memory_space<vmem>>, vector<1x8x50xf32>,
    return
  }
  func.func @transform_0(%arg0: i32) -> (i32, i32, i32) {
    %c0_i32 = arith.constant 0 : i32
    %c0_i32_0 = arith.constant 0 : i32
    %c0_i32_1 = arith.constant 0 : i32
    return %arg0, %c0_i32, %c0_i32_0 : i32, i32, i32
  }
  func.func @transform_1(%arg0: i32) -> (i32, i32, i32) {
    %c0_i32 = arith.constant 0 : i32
    %c0_i32_0 = arith.constant 0 : i32
    %c0_i32_1 = arith.constant 0 : i32
    return %arg0, %c0_i32, %c0_i32_0 : i32, i32, i32
  }
  func.func @transform_2(%arg0: i32) -> (i32, i32, i32, i32) {
    %c0_i32 = arith.constant 0 : i32
    %c0_i32_0 = arith.constant 0 : i32
    %c0_i32_1 = arith.constant 0 : i32
    %c0_i32_2 = arith.constant 0 : i32
    return %arg0, %c0_i32, %c0_i32_0, %c0_i32_1 : i32, i32, i32, i32
  }
  func.func @transform_3(%arg0: i32) -> (i32, i32, i32, i32) {
    %c0_i32 = arith.constant 0 : i32
    %c0_i32_0 = arith.constant 0 : i32
    %c0_i32_1 = arith.constant 0 : i32
    %c0_i32_2 = arith.constant 0 : i32
    return %arg0, %c0_i32, %c0_i32_0, %c0_i32_1 : i32, i32, i32, i32
  }
  func.func @transform_4(%arg0: i32) -> (i32, i32) {
    %c0_i32 = arith.constant 0 : i32
    %c0_i32_0 = arith.constant 0 : i32
    %c0_i32_1 = arith.constant 0 : i32
    return %c0_i32, %c0_i32_0 : i32, i32
  }
  func.func @transform_5(%arg0: i32) -> (i32, i32) {
    %c0_i32 = arith.constant 0 : i32
    %c0_i32_0 = arith.constant 0 : i32
    %c0_i32_1 = arith.constant 0 : i32
    return %c0_i32, %c0_i32_0 : i32, i32
  }
  func.func @transform_6(%arg0: i32) -> (i32, i32) {
    %c0_i32 = arith.constant 0 : i32
    %c0_i32_0 = arith.constant 0 : i32
    %c0_i32_1 = arith.constant 0 : i32
    return %c0_i32, %c0_i32_0 : i32, i32
  }
  func.func @transform_7(%arg0: i32) -> (i32, i32) {
    %c0_i32 = arith.constant 0 : i32
    %c0_i32_0 = arith.constant 0 : i32
    %c0_i32_1 = arith.constant 0 : i32
    return %c0_i32, %c0_i32_0 : i32, i32
  }
  func.func @transform_8(%arg0: i32) -> (i32, i32) {
    %c0_i32 = arith.constant 0 : i32
    %c0_i32_0 = arith.constant 0 : i32
    %c0_i32_1 = arith.constant 0 : i32
    return %c0_i32, %c0_i32_0 : i32, i32
  }
  func.func @transform_9(%arg0: i32) -> (i32, i32) {
    %c0_i32 = arith.constant 0 : i32
    %c0_i32_0 = arith.constant 0 : i32
    %c0_i32_1 = arith.constant 0 : i32
    return %c0_i32, %c0_i32_0 : i32, i32
  }
  func.func @transform_10(%arg0: i32) -> (i32, i32) {
    %c0_i32 = arith.constant 0 : i32
    %c0_i32_0 = arith.constant 0 : i32
    %c0_i32_1 = arith.constant 0 : i32
    return %c0_i32, %c0_i32_0 : i32, i32
  }
  func.func @transform_11(%arg0: i32) -> (i32, i32) {
    %c0_i32 = arith.constant 0 : i32
    %c0_i32_0 = arith.constant 0 : i32
    %c0_i32_1 = arith.constant 0 : i32
    return %c0_i32, %c0_i32_0 : i32, i32
  }
  func.func @transform_12(%arg0: i32) -> (i32, i32) {
    %c0_i32 = arith.constant 0 : i32
    %c0_i32_0 = arith.constant 0 : i32
    %c0_i32_1 = arith.constant 0 : i32
    return %c0_i32, %c0_i32_0 : i32, i32
  }
  func.func @transform_13(%arg0: i32) -> (i32, i32) {
    %c0_i32 = arith.constant 0 : i32
    %c0_i32_0 = arith.constant 0 : i32
    %c0_i32_1 = arith.constant 0 : i32
    return %c0_i32, %c0_i32_0 : i32, i32
  }
  func.func @transform_14(%arg0: i32) -> (i32, i32) {
    %c0_i32 = arith.constant 0 : i32
    %c0_i32_0 = arith.constant 0 : i32
    %c0_i32_1 = arith.constant 0 : i32
    return %c0_i32, %c0_i32_0 : i32, i32
  }
  func.func @transform_15(%arg0: i32) -> (i32, i32) {
    %c0_i32 = arith.constant 0 : i32
    %c0_i32_0 = arith.constant 0 : i32
    %c0_i32_1 = arith.constant 0 : i32
    return %c0_i32, %c0_i32_0 : i32, i32
  }
  func.func @transform_16(%arg0: i32) -> (i32, i32) {
    %c0_i32 = arith.constant 0 : i32
    %c0_i32_0 = arith.constant 0 : i32
    %c0_i32_1 = arith.constant 0 : i32
    return %c0_i32, %c0_i32_0 : i32, i32
  }
  func.func @transform_17(%arg0: i32) -> (i32, i32) {
    %c0_i32 = arith.constant 0 : i32
    %c0_i32_0 = arith.constant 0 : i32
    %c0_i32_1 = arith.constant 0 : i32
    return %c0_i32, %c0_i32_0 : i32, i32
  }
  func.func @transform_18(%arg0: i32) -> (i32, i32) {
    %c0_i32 = arith.constant 0 : i32
    %c0_i32_0 = arith.constant 0 : i32
    %c0_i32_1 = arith.constant 0 : i32
    return %c0_i32, %c0_i32_0 : i32, i32
  }
  func.func @transform_19(%arg0: i32) -> (i32, i32) {
    %c0_i32 = arith.constant 0 : i32
    %c0_i32_0 = arith.constant 0 : i32
    %c0_i32_1 = arith.constant 0 : i32
    return %c0_i32, %c0_i32_0 : i32, i32
  }
  func.func @transform_20(%arg0: i32) -> (i32, i32) {
    %c0_i32 = arith.constant 0 : i32
    %c0_i32_0 = arith.constant 0 : i32
    %c0_i32_1 = arith.constant 0 : i32
    return %c0_i32, %c0_i32_0 : i32, i32
  }
  func.func @transform_21(%arg0: i32) -> (i32, i32) {
    %c0_i32 = arith.constant 0 : i32
    %c0_i32_0 = arith.constant 0 : i32
    %c0_i32_1 = arith.constant 0 : i32
    return %c0_i32, %c0_i32_0 : i32, i32
  }
  func.func @transform_22(%arg0: i32) -> (i32, i32) {
    %c0_i32 = arith.constant 0 : i32
    %c0_i32_0 = arith.constant 0 : i32
    %c0_i32_1 = arith.constant 0 : i32
    return %c0_i32, %c0_i32_0 : i32, i32
  }
  func.func @transform_23(%arg0: i32) -> (i32, i32) {
    %c0_i32 = arith.constant 0 : i32
    %c0_i32_0 = arith.constant 0 : i32
    %c0_i32_1 = arith.constant 0 : i32
    return %c0_i32, %c0_i32_0 : i32, i32
  }
  func.func @transform_24(%arg0: i32) -> (i32, i32) {
    %c0_i32 = arith.constant 0 : i32
    %c0_i32_0 = arith.constant 0 : i32
    %c0_i32_1 = arith.constant 0 : i32
    return %c0_i32, %c0_i32_0 : i32, i32
  }
  func.func @transform_25(%arg0: i32) -> (i32, i32) {
    %c0_i32 = arith.constant 0 : i32
    %c0_i32_0 = arith.constant 0 : i32
    %c0_i32_1 = arith.constant 0 : i32
    return %c0_i32, %c0_i32_0 : i32, i32
  }
  func.func @transform_26(%arg0: i32) -> (i32, i32) {
    %c0_i32 = arith.constant 0 : i32
    %c0_i32_0 = arith.constant 0 : i32
    %c0_i32_1 = arith.constant 0 : i32
    return %c0_i32, %c0_i32_0 : i32, i32
  }
  func.func @transform_27(%arg0: i32) -> (i32, i32) {
    %c0_i32 = arith.constant 0 : i32
    %c0_i32_0 = arith.constant 0 : i32
    %c0_i32_1 = arith.constant 0 : i32
    return %c0_i32, %c0_i32_0 : i32, i32
  }
  func.func @transform_28(%arg0: i32) -> (i32, i32) {
    %c0_i32 = arith.constant 0 : i32
    %c0_i32_0 = arith.constant 0 : i32
    %c0_i32_1 = arith.constant 0 : i32
    return %c0_i32, %c0_i32_0 : i32, i32
  }
  func.func @transform_29(%arg0: i32) -> (i32, i32) {
    %c0_i32 = arith.constant 0 : i32
    %c0_i32_0 = arith.constant 0 : i32
    %c0_i32_1 = arith.constant 0 : i32
    return %c0_i32, %c0_i32_0 : i32, i32
  }
  func.func @transform_30(%arg0: i32) -> (i32, i32) {
    %c0_i32 = arith.constant 0 : i32
    %c0_i32_0 = arith.constant 0 : i32
    %c0_i32_1 = arith.constant 0 : i32
    return %c0_i32, %c0_i32_0 : i32, i32
  }
  func.func @transform_31(%arg0: i32) -> (i32, i32) {
    %c0_i32 = arith.constant 0 : i32
    %c0_i32_0 = arith.constant 0 : i32
    %c0_i32_1 = arith.constant 0 : i32
    return %c0_i32, %c0_i32_0 : i32, i32
  }
  func.func @transform_32(%arg0: i32) -> (i32, i32) {
    %c0_i32 = arith.constant 0 : i32
    %c0_i32_0 = arith.constant 0 : i32
    %c0_i32_1 = arith.constant 0 : i32
    return %c0_i32, %c0_i32_0 : i32, i32
  }
  func.func @transform_33(%arg0: i32) -> (i32, i32) {
    %c0_i32 = arith.constant 0 : i32
    %c0_i32_0 = arith.constant 0 : i32
    %c0_i32_1 = arith.constant 0 : i32
    return %c0_i32, %c0_i32_0 : i32, i32
  }
  func.func @transform_34(%arg0: i32) -> (i32, i32) {
    %c0_i32 = arith.constant 0 : i32
    %c0_i32_0 = arith.constant 0 : i32
    %c0_i32_1 = arith.constant 0 : i32
    return %c0_i32, %c0_i32_0 : i32, i32
  }
  func.func @transform_35(%arg0: i32) -> (i32, i32) {
    %c0_i32 = arith.constant 0 : i32
    %c0_i32_0 = arith.constant 0 : i32
    %c0_i32_1 = arith.constant 0 : i32
    return %c0_i32, %c0_i32_0 : i32, i32
  }
  func.func @transform_36(%arg0: i32) -> (i32, i32) {
    %c0_i32 = arith.constant 0 : i32
    %c0_i32_0 = arith.constant 0 : i32
    %c0_i32_1 = arith.constant 0 : i32
    return %c0_i32, %c0_i32_0 : i32, i32
  }
  func.func @transform_37(%arg0: i32) -> (i32, i32) {
    %c0_i32 = arith.constant 0 : i32
    %c0_i32_0 = arith.constant 0 : i32
    %c0_i32_1 = arith.constant 0 : i32
    return %c0_i32, %c0_i32_0 : i32, i32
  }
  func.func @transform_38(%arg0: i32) -> (i32, i32) {
    %c0_i32 = arith.constant 0 : i32
    %c0_i32_0 = arith.constant 0 : i32
    %c0_i32_1 = arith.constant 0 : i32
    return %c0_i32, %c0_i32_0 : i32, i32
  }
  func.func @transform_39(%arg0: i32) -> (i32, i32) {
    %c0_i32 = arith.constant 0 : i32
    %c0_i32_0 = arith.constant 0 : i32
    %c0_i32_1 = arith.constant 0 : i32
    return %c0_i32, %c0_i32_0 : i32, i32
  }
  func.func @transform_40(%arg0: i32) -> (i32, i32) {
    %c0_i32 = arith.constant 0 : i32
    %c0_i32_0 = arith.constant 0 : i32
    %c0_i32_1 = arith.constant 0 : i32
    return %c0_i32, %c0_i32_0 : i32, i32
  }
  func.func @transform_41(%arg0: i32) -> (i32, i32) {
    %c0_i32 = arith.constant 0 : i32
    %c0_i32_0 = arith.constant 0 : i32
    %c0_i32_1 = arith.constant 0 : i32
    return %c0_i32, %c0_i32_0 : i32, i32
  }
  func.func @transform_42(%arg0: i32) -> (i32, i32, i32) {
    %c0_i32 = arith.constant 0 : i32
    %c0_i32_0 = arith.constant 0 : i32
    %c0_i32_1 = arith.constant 0 : i32
    return %arg0, %c0_i32, %c0_i32_0 : i32, i32, i32
  }
  func.func @transform_43(%arg0: i32) -> (i32, i32, i32, i32) {
    %c0_i32 = arith.constant 0 : i32
    %c0_i32_0 = arith.constant 0 : i32
    %c0_i32_1 = arith.constant 0 : i32
    %c0_i32_2 = arith.constant 0 : i32
    return %arg0, %c0_i32, %c0_i32_0, %c0_i32_1 : i32, i32, i32, i32
  }
}

</mosaic_0001>

<llo_original>
// kernel: decoder_forward.1
$region0: #{decoder_forward.1}
  #allocation0 [shape = 'u32[]', space=smem, size = 0x4, offset = 0x4, fixed_abs, tag = 'smem constant byte address 0x4 - core index']
  #allocation1 [shape = 'u32[144,128]{1,0:T(1,128)}', space=vmem, size = 0x12000, scoped, tag = 'internal scratch']
  %s0 = inlined_call_operand.smem [shape: u32[44], index: -1, kind: input, shape index: {}]
  %s1 = sld [smem:[%s0]]
  %s2 = scalar_lea.smem %s0, 1
  %s3 = sld [smem:[%s2]]
  %s4 = scalar_lea.smem %s0, 2
  %s5 = sld [smem:[%s4]]
  %s6 = scalar_lea.smem %s0, 3
  %s7 = sld [smem:[%s6]]
  %s8 = scalar_lea.smem %s0, 4
  %s9 = sld [smem:[%s8]]
  %s10 = scalar_lea.smem %s0, 5
  %s11 = sld [smem:[%s10]]
  %s12 = scalar_lea.smem %s0, 6
  %s13 = sld [smem:[%s12]]
  %s14 = scalar_lea.smem %s0, 7
  %s15 = sld [smem:[%s14]]
  %s16 = scalar_lea.smem %s0, 8
  %s17 = sld [smem:[%s16]]
  %s18 = scalar_lea.smem %s0, 9
  %s19 = sld [smem:[%s18]]
  %s20 = scalar_lea.smem %s0, 10
  %s21 = sld [smem:[%s20]]
  %s22 = scalar_lea.smem %s0, 11
  %s23 = sld [smem:[%s22]]
  %s24 = scalar_lea.smem %s0, 12
  %s25 = sld [smem:[%s24]]
  %s26 = scalar_lea.smem %s0, 13
  %s27 = sld [smem:[%s26]]
  %s28 = scalar_lea.smem %s0, 14
  %s29 = sld [smem:[%s28]]
  %s30 = scalar_lea.smem %s0, 15
  %s31 = sld [smem:[%s30]]
  %s32 = scalar_lea.smem %s0, 16
  %s33 = sld [smem:[%s32]]
  %s34 = scalar_lea.smem %s0, 17
  %s35 = sld [smem:[%s34]]
  %s36 = scalar_lea.smem %s0, 18
  %s37 = sld [smem:[%s36]]
  %s38 = scalar_lea.smem %s0, 19
  %s39 = sld [smem:[%s38]]
  %s40 = scalar_lea.smem %s0, 20
  %s41 = sld [smem:[%s40]]
  %s42 = scalar_lea.smem %s0, 21
  %s43 = sld [smem:[%s42]]
  %s44 = scalar_lea.smem %s0, 22
  %s45 = sld [smem:[%s44]]
  %s46 = scalar_lea.smem %s0, 23
  %s47 = sld [smem:[%s46]]
  %s48 = scalar_lea.smem %s0, 24
  %s49 = sld [smem:[%s48]]
  %s50 = scalar_lea.smem %s0, 25
  %s51 = sld [smem:[%s50]]
  %s52 = scalar_lea.smem %s0, 26
  %s53 = sld [smem:[%s52]]
  %s54 = scalar_lea.smem %s0, 27
  %s55 = sld [smem:[%s54]]
  %s56 = scalar_lea.smem %s0, 28
  %s57 = sld [smem:[%s56]]
  %s58 = scalar_lea.smem %s0, 29
  %s59 = sld [smem:[%s58]]
  %s60 = scalar_lea.smem %s0, 30
  %s61 = sld [smem:[%s60]]
  %s62 = scalar_lea.smem %s0, 31
  %s63 = sld [smem:[%s62]]
  %s64 = scalar_lea.smem %s0, 32
  %s65 = sld [smem:[%s64]]
  %s66 = scalar_lea.smem %s0, 33
  %s67 = sld [smem:[%s66]]
  %s68 = scalar_lea.smem %s0, 34
  %s69 = sld [smem:[%s68]]
  %s70 = scalar_lea.smem %s0, 35
  %s71 = sld [smem:[%s70]]
  %s72 = scalar_lea.smem %s0, 36
  %s73 = sld [smem:[%s72]]
  %s74 = scalar_lea.smem %s0, 37
  %s75 = sld [smem:[%s74]]
  %s76 = scalar_lea.smem %s0, 38
  %s77 = sld [smem:[%s76]]
  %s78 = scalar_lea.smem %s0, 39
  %s79 = sld [smem:[%s78]]
  %s80 = scalar_lea.smem %s0, 40
  %s81 = sld [smem:[%s80]]
  %s82 = scalar_lea.smem %s0, 41
  %s83 = sld [smem:[%s82]]
  %s84 = scalar_lea.smem %s0, 42
  %s85 = sld [smem:[%s84]]
  %s86 = scalar_lea.smem %s0, 43
  %s87 = sld [smem:[%s86]]
  %88 = xla_tuple %s85, %s87
  %s89 = sld [smem:[#allocation0]]
  $region209: #{decoder_forward.1} parent=0
    _
  %s91 = ssub.s32 1, %s89
  %s92 = scalar_select 0, %s91, %s89
  $region1: #{decoder_forward.1} parent=0
    #allocation2 [shape = 'u8[8192]{0}', space=vmem, size = 0x2000, scoped, tag = 'output window, operand 0']
    #allocation3 [shape = 's32[2]{0}', space=sflag, size = 0x8, scoped, tag = 'scoped memory for decoder_forward.1']
    #allocation4 [shape = 'u8[32768]{0}', space=vmem, size = 0x8000, scoped, tag = 'output window, operand 1']
    #allocation5 [shape = 's32[2]{0}', space=sflag, size = 0x8, scoped, tag = 'scoped memory for decoder_forward.1']
    %93 = vsyncpa [#allocation3], 0
    %s94 = scalar_lea.sflag [#allocation3], 1
    %95 = vsyncpa %s94, 0
    %96 = vsyncpa [#allocation5], 0
    %s97 = scalar_lea.sflag [#allocation5], 1
    %98 = vsyncpa %s97, 0
    loop: start=0, step=1, limit=4
    $region2: #{decoder_forward.1} parent=1 // loop_pre_header
      _
    $region3: #{decoder_forward.1} parent=1 // loop_header
      %s100 = sphi 0, %s104
      %p101 = scmp.ge.s32.totalorder %s100, 4
      %s110 = sphi 0, %s112
      %s113 = sphi 0, %s110
      %s114 = sphi 0, %s113
      %s130 = sphi 0, %s114
      %s136 = sphi 0, %s138
      %s139 = sphi 0, %s136
      %s140 = sphi 0, %s139
      %s156 = sphi 0, %s140
      %s162 = sphi 0, %s164
      %s165 = sphi 0, %s162
      %s166 = sphi 0, %s165
      %s182 = sphi 0, %s166
      %s188 = sphi 0, %s190
      %s191 = sphi 0, %s188
      %s192 = sphi 0, %s191
      %s208 = sphi 0, %s192
      %s212 = sphi 0, %s212
      %s214 = sphi 0, %s212
      %s215 = sphi 0, %s214
      %s229 = sphi 0, %s215
      %s233 = sphi 0, %s233
      %s235 = sphi 0, %s233
      %s236 = sphi 0, %s235
      %s250 = sphi 0, %s236
      %s254 = sphi 0, %s254
      %s256 = sphi 0, %s254
      %s257 = sphi 0, %s256
      %s271 = sphi 0, %s257
      %s275 = sphi 0, %s275
      %s277 = sphi 0, %s275
      %s278 = sphi 0, %s277
      %s292 = sphi 0, %s278
      %s296 = sphi 0, %s296
      %s298 = sphi 0, %s296
      %s299 = sphi 0, %s298
      %s313 = sphi 0, %s299
      %s317 = sphi 0, %s317
      %s319 = sphi 0, %s317
      %s320 = sphi 0, %s319
      %s334 = sphi 0, %s320
      %s338 = sphi 0, %s338
      %s340 = sphi 0, %s338
      %s341 = sphi 0, %s340
      %s355 = sphi 0, %s341
      %s359 = sphi 0, %s359
      %s361 = sphi 0, %s359
      %s362 = sphi 0, %s361
      %s376 = sphi 0, %s362
      %s380 = sphi 0, %s380
      %s382 = sphi 0, %s380
      %s383 = sphi 0, %s382
      %s397 = sphi 0, %s383
      %s401 = sphi 0, %s401
      %s403 = sphi 0, %s401
      %s404 = sphi 0, %s403
      %s418 = sphi 0, %s404
      %s422 = sphi 0, %s422
      %s424 = sphi 0, %s422
      %s425 = sphi 0, %s424
      %s439 = sphi 0, %s425
      %s443 = sphi 0, %s443
      %s445 = sphi 0, %s443
      %s446 = sphi 0, %s445
      %s460 = sphi 0, %s446
      %s464 = sphi 0, %s464
      %s466 = sphi 0, %s464
      %s467 = sphi 0, %s466
      %s481 = sphi 0, %s467
      %s485 = sphi 0, %s485
      %s487 = sphi 0, %s485
      %s488 = sphi 0, %s487
      %s502 = sphi 0, %s488
      %s506 = sphi 0, %s506
      %s508 = sphi 0, %s506
      %s509 = sphi 0, %s508
      %s523 = sphi 0, %s509
      %s527 = sphi 0, %s527
      %s529 = sphi 0, %s527
      %s530 = sphi 0, %s529
      %s544 = sphi 0, %s530
      %s548 = sphi 0, %s548
      %s550 = sphi 0, %s548
      %s551 = sphi 0, %s550
      %s565 = sphi 0, %s551
      %s569 = sphi 0, %s569
      %s571 = sphi 0, %s569
      %s572 = sphi 0, %s571
      %s586 = sphi 0, %s572
      %s590 = sphi 0, %s590
      %s592 = sphi 0, %s590
      %s593 = sphi 0, %s592
      %s607 = sphi 0, %s593
      %s611 = sphi 0, %s611
      %s613 = sphi 0, %s611
      %s614 = sphi 0, %s613
      %s628 = sphi 0, %s614
      %s632 = sphi 0, %s632
      %s634 = sphi 0, %s632
      %s635 = sphi 0, %s634
      %s649 = sphi 0, %s635
      %s653 = sphi 0, %s653
      %s655 = sphi 0, %s653
      %s656 = sphi 0, %s655
      %s670 = sphi 0, %s656
      %s674 = sphi 0, %s674
      %s676 = sphi 0, %s674
      %s677 = sphi 0, %s676
      %s691 = sphi 0, %s677
      %s695 = sphi 0, %s695
      %s697 = sphi 0, %s695
      %s698 = sphi 0, %s697
      %s712 = sphi 0, %s698
      %s716 = sphi 0, %s716
      %s718 = sphi 0, %s716
      %s719 = sphi 0, %s718
      %s733 = sphi 0, %s719
      %s737 = sphi 0, %s737
      %s739 = sphi 0, %s737
      %s740 = sphi 0, %s739
      %s754 = sphi 0, %s740
      %s758 = sphi 0, %s758
      %s760 = sphi 0, %s758
      %s761 = sphi 0, %s760
      %s775 = sphi 0, %s761
      %s779 = sphi 0, %s779
      %s781 = sphi 0, %s779
      %s782 = sphi 0, %s781
      %s796 = sphi 0, %s782
      %s800 = sphi 0, %s800
      %s802 = sphi 0, %s800
      %s803 = sphi 0, %s802
      %s817 = sphi 0, %s803
      %s821 = sphi 0, %s821
      %s823 = sphi 0, %s821
      %s824 = sphi 0, %s823
      %s838 = sphi 0, %s824
      %s842 = sphi 0, %s842
      %s844 = sphi 0, %s842
      %s845 = sphi 0, %s844
      %s859 = sphi 0, %s845
      %s863 = sphi 0, %s863
      %s865 = sphi 0, %s863
      %s866 = sphi 0, %s865
      %s880 = sphi 0, %s866
      %s884 = sphi 0, %s884
      %s886 = sphi 0, %s884
      %s887 = sphi 0, %s886
      %s901 = sphi 0, %s887
      %s905 = sphi 0, %s905
      %s907 = sphi 0, %s905
      %s908 = sphi 0, %s907
      %s922 = sphi 0, %s908
      %s926 = sphi 0, %s926
      %s928 = sphi 0, %s926
      %s929 = sphi 0, %s928
      %s943 = sphi 0, %s929
      %s947 = sphi 0, %s947
      %s949 = sphi 0, %s947
      %s950 = sphi 0, %s949
      %s964 = sphi 0, %s950
      %s968 = sphi 0, %s968
      %s970 = sphi 0, %s968
      %s971 = sphi 0, %s970
      %s985 = sphi 0, %s971
      %s989 = sphi 0, %s989
      %s991 = sphi 0, %s989
      %s992 = sphi 0, %s991
      %s1006 = sphi 0, %s992
      %s1012 = sphi 0, %s1014
      %s1015 = sphi 0, %s1012
      %s1016 = sphi 0, %s1015
      %s1032 = sphi 0, %s1016
      %s1038 = sphi 0, %s1040
      %s1041 = sphi 0, %s1038
      %s1042 = sphi 0, %s1041
      %s1058 = sphi 0, %s1042
    $region4: #{decoder_forward.1} parent=1 // loop_header_branch
      %103 = sbr.rel (%p101) target = $region8
    $region5: #{decoder_forward.1} parent=1 // loop_body
      %s105 = ssub.s32 %s100, 1
      %s106 = ssub.s32 %s100, 2
      %s107 = sadd.s32 %s100, 1
      %s108 = ssub.s32 %s100, %s107
      %p109 = scmp.eq.s32.totalorder %s108, 0
      %s111 = sadd.s32 %s110, 1
      %s112 = scalar_select %p109, %s110, %s111
      %p115 = pneg %p109
      %p116 = scmp.eq.s32.totalorder %s100, 1
      %p117 = por %p115, %p116
      %p118 = scmp.ne.s32.totalorder %s110, %s113
      %p119 = scmp.eq.s32.totalorder %s100, 0
      %p120 = por %p118, %p119
      %p121 = scmp.ne.s32.totalorder %s110, %s113
      %p122 = scmp.eq.s32.totalorder %s105, 1
      %p123 = por %p121, %p122
      %p124 = scmp.ne.s32.totalorder %s113, %s114
      %p125 = scmp.eq.s32.totalorder %s105, 0
      %p126 = por %p124, %p125
      %p127 = scmp.ne.s32.totalorder %s113, %s114
      %p128 = scmp.eq.s32.totalorder %s106, 1
      %p129 = por %p127, %p128
      %p131 = scmp.ne.s32.totalorder %s114, %s130
      %p132 = scmp.eq.s32.totalorder %s106, 0
      %p133 = por %p131, %p132
      %s134 = ssub.s32 %s100, %s107
      %p135 = scmp.eq.s32.totalorder %s134, 0
      %s137 = sadd.s32 %s136, 1
      %s138 = scalar_select %p135, %s136, %s137
      %p141 = pneg %p135
      %p142 = scmp.eq.s32.totalorder %s100, 1
      %p143 = por %p141, %p142
      %p144 = scmp.ne.s32.totalorder %s136, %s139
      %p145 = scmp.eq.s32.totalorder %s100, 0
      %p146 = por %p144, %p145
      %p147 = scmp.ne.s32.totalorder %s136, %s139
      %p148 = scmp.eq.s32.totalorder %s105, 1
      %p149 = por %p147, %p148
      %p150 = scmp.ne.s32.totalorder %s139, %s140
      %p151 = scmp.eq.s32.totalorder %s105, 0
      %p152 = por %p150, %p151
      %p153 = scmp.ne.s32.totalorder %s139, %s140
      %p154 = scmp.eq.s32.totalorder %s106, 1
      %p155 = por %p153, %p154
      %p157 = scmp.ne.s32.totalorder %s140, %s156
      %p158 = scmp.eq.s32.totalorder %s106, 0
      %p159 = por %p157, %p158
      %s160 = ssub.s32 %s100, %s107
      %p161 = scmp.eq.s32.totalorder %s160, 0
      %s163 = sadd.s32 %s162, 1
      %s164 = scalar_select %p161, %s162, %s163
      %p167 = pneg %p161
      %p168 = scmp.eq.s32.totalorder %s100, 1
      %p169 = por %p167, %p168
      %p170 = scmp.ne.s32.totalorder %s162, %s165
      %p171 = scmp.eq.s32.totalorder %s100, 0
      %p172 = por %p170, %p171
      %p173 = scmp.ne.s32.totalorder %s162, %s165
      %p174 = scmp.eq.s32.totalorder %s105, 1
      %p175 = por %p173, %p174
      %p176 = scmp.ne.s32.totalorder %s165, %s166
      %p177 = scmp.eq.s32.totalorder %s105, 0
      %p178 = por %p176, %p177
      %p179 = scmp.ne.s32.totalorder %s165, %s166
      %p180 = scmp.eq.s32.totalorder %s106, 1
      %p181 = por %p179, %p180
      %p183 = scmp.ne.s32.totalorder %s166, %s182
      %p184 = scmp.eq.s32.totalorder %s106, 0
      %p185 = por %p183, %p184
      %s186 = ssub.s32 %s100, %s107
      %p187 = scmp.eq.s32.totalorder %s186, 0
      %s189 = sadd.s32 %s188, 1
      %s190 = scalar_select %p187, %s188, %s189
      %p193 = pneg %p187
      %p194 = scmp.eq.s32.totalorder %s100, 1
      %p195 = por %p193, %p194
      %p196 = scmp.ne.s32.totalorder %s188, %s191
      %p197 = scmp.eq.s32.totalorder %s100, 0
      %p198 = por %p196, %p197
      %p199 = scmp.ne.s32.totalorder %s188, %s191
      %p200 = scmp.eq.s32.totalorder %s105, 1
      %p201 = por %p199, %p200
      %p202 = scmp.ne.s32.totalorder %s191, %s192
      %p203 = scmp.eq.s32.totalorder %s105, 0
      %p204 = por %p202, %p203
      %p205 = scmp.ne.s32.totalorder %s191, %s192
      %p206 = scmp.eq.s32.totalorder %s106, 1
      %p207 = por %p205, %p206
      %p209 = scmp.ne.s32.totalorder %s192, %s208
      %p210 = scmp.eq.s32.totalorder %s106, 0
      %p211 = por %p209, %p210
      %s213 = sadd.s32 %s212, 1
      %p216 = scmp.eq.s32.totalorder %s100, 1
      %p217 = scmp.ne.s32.totalorder %s212, %s214
      %p218 = scmp.eq.s32.totalorder %s100, 0
      %p219 = por %p217, %p218
      %p220 = scmp.ne.s32.totalorder %s212, %s214
      %p221 = scmp.eq.s32.totalorder %s105, 1
      %p222 = por %p220, %p221
      %p223 = scmp.ne.s32.totalorder %s214, %s215
      %p224 = scmp.eq.s32.totalorder %s105, 0
      %p225 = por %p223, %p224
      %p226 = scmp.ne.s32.totalorder %s214, %s215
      %p227 = scmp.eq.s32.totalorder %s106, 1
      %p228 = por %p226, %p227
      %p230 = scmp.ne.s32.totalorder %s215, %s229
      %p231 = scmp.eq.s32.totalorder %s106, 0
      %p232 = por %p230, %p231
      %s234 = sadd.s32 %s233, 1
      %p237 = scmp.eq.s32.totalorder %s100, 1
      %p238 = scmp.ne.s32.totalorder %s233, %s235
      %p239 = scmp.eq.s32.totalorder %s100, 0
      %p240 = por %p238, %p239
      %p241 = scmp.ne.s32.totalorder %s233, %s235
      %p242 = scmp.eq.s32.totalorder %s105, 1
      %p243 = por %p241, %p242
      %p244 = scmp.ne.s32.totalorder %s235, %s236
      %p245 = scmp.eq.s32.totalorder %s105, 0
      %p246 = por %p244, %p245
      %p247 = scmp.ne.s32.totalorder %s235, %s236
      %p248 = scmp.eq.s32.totalorder %s106, 1
      %p249 = por %p247, %p248
      %p251 = scmp.ne.s32.totalorder %s236, %s250
      %p252 = scmp.eq.s32.totalorder %s106, 0
      %p253 = por %p251, %p252
      %s255 = sadd.s32 %s254, 1
      %p258 = scmp.eq.s32.totalorder %s100, 1
      %p259 = scmp.ne.s32.totalorder %s254, %s256
      %p260 = scmp.eq.s32.totalorder %s100, 0
      %p261 = por %p259, %p260
      %p262 = scmp.ne.s32.totalorder %s254, %s256
      %p263 = scmp.eq.s32.totalorder %s105, 1
      %p264 = por %p262, %p263
      %p265 = scmp.ne.s32.totalorder %s256, %s257
      %p266 = scmp.eq.s32.totalorder %s105, 0
      %p267 = por %p265, %p266
      %p268 = scmp.ne.s32.totalorder %s256, %s257
      %p269 = scmp.eq.s32.totalorder %s106, 1
      %p270 = por %p268, %p269
      %p272 = scmp.ne.s32.totalorder %s257, %s271
      %p273 = scmp.eq.s32.totalorder %s106, 0
      %p274 = por %p272, %p273
      %s276 = sadd.s32 %s275, 1
      %p279 = scmp.eq.s32.totalorder %s100, 1
      %p280 = scmp.ne.s32.totalorder %s275, %s277
      %p281 = scmp.eq.s32.totalorder %s100, 0
      %p282 = por %p280, %p281
      %p283 = scmp.ne.s32.totalorder %s275, %s277
      %p284 = scmp.eq.s32.totalorder %s105, 1
      %p285 = por %p283, %p284
      %p286 = scmp.ne.s32.totalorder %s277, %s278
      %p287 = scmp.eq.s32.totalorder %s105, 0
      %p288 = por %p286, %p287
      %p289 = scmp.ne.s32.totalorder %s277, %s278
      %p290 = scmp.eq.s32.totalorder %s106, 1
      %p291 = por %p289, %p290
      %p293 = scmp.ne.s32.totalorder %s278, %s292
      %p294 = scmp.eq.s32.totalorder %s106, 0
      %p295 = por %p293, %p294
      %s297 = sadd.s32 %s296, 1
      %p300 = scmp.eq.s32.totalorder %s100, 1
      %p301 = scmp.ne.s32.totalorder %s296, %s298
      %p302 = scmp.eq.s32.totalorder %s100, 0
      %p303 = por %p301, %p302
      %p304 = scmp.ne.s32.totalorder %s296, %s298
      %p305 = scmp.eq.s32.totalorder %s105, 1
      %p306 = por %p304, %p305
      %p307 = scmp.ne.s32.totalorder %s298, %s299
      %p308 = scmp.eq.s32.totalorder %s105, 0
      %p309 = por %p307, %p308
      %p310 = scmp.ne.s32.totalorder %s298, %s299
      %p311 = scmp.eq.s32.totalorder %s106, 1
      %p312 = por %p310, %p311
      %p314 = scmp.ne.s32.totalorder %s299, %s313
      %p315 = scmp.eq.s32.totalorder %s106, 0
      %p316 = por %p314, %p315
      %s318 = sadd.s32 %s317, 1
      %p321 = scmp.eq.s32.totalorder %s100, 1
      %p322 = scmp.ne.s32.totalorder %s317, %s319
      %p323 = scmp.eq.s32.totalorder %s100, 0
      %p324 = por %p322, %p323
      %p325 = scmp.ne.s32.totalorder %s317, %s319
      %p326 = scmp.eq.s32.totalorder %s105, 1
      %p327 = por %p325, %p326
      %p328 = scmp.ne.s32.totalorder %s319, %s320
      %p329 = scmp.eq.s32.totalorder %s105, 0
      %p330 = por %p328, %p329
      %p331 = scmp.ne.s32.totalorder %s319, %s320
      %p332 = scmp.eq.s32.totalorder %s106, 1
      %p333 = por %p331, %p332
      %p335 = scmp.ne.s32.totalorder %s320, %s334
      %p336 = scmp.eq.s32.totalorder %s106, 0
      %p337 = por %p335, %p336
      %s339 = sadd.s32 %s338, 1
      %p342 = scmp.eq.s32.totalorder %s100, 1
      %p343 = scmp.ne.s32.totalorder %s338, %s340
      %p344 = scmp.eq.s32.totalorder %s100, 0
      %p345 = por %p343, %p344
      %p346 = scmp.ne.s32.totalorder %s338, %s340
      %p347 = scmp.eq.s32.totalorder %s105, 1
      %p348 = por %p346, %p347
      %p349 = scmp.ne.s32.totalorder %s340, %s341
      %p350 = scmp.eq.s32.totalorder %s105, 0
      %p351 = por %p349, %p350
      %p352 = scmp.ne.s32.totalorder %s340, %s341
      %p353 = scmp.eq.s32.totalorder %s106, 1
      %p354 = por %p352, %p353
      %p356 = scmp.ne.s32.totalorder %s341, %s355
      %p357 = scmp.eq.s32.totalorder %s106, 0
      %p358 = por %p356, %p357
      %s360 = sadd.s32 %s359, 1
      %p363 = scmp.eq.s32.totalorder %s100, 1
      %p364 = scmp.ne.s32.totalorder %s359, %s361
      %p365 = scmp.eq.s32.totalorder %s100, 0
      %p366 = por %p364, %p365
      %p367 = scmp.ne.s32.totalorder %s359, %s361
      %p368 = scmp.eq.s32.totalorder %s105, 1
      %p369 = por %p367, %p368
      %p370 = scmp.ne.s32.totalorder %s361, %s362
      %p371 = scmp.eq.s32.totalorder %s105, 0
      %p372 = por %p370, %p371
      %p373 = scmp.ne.s32.totalorder %s361, %s362
      %p374 = scmp.eq.s32.totalorder %s106, 1
      %p375 = por %p373, %p374
      %p377 = scmp.ne.s32.totalorder %s362, %s376
      %p378 = scmp.eq.s32.totalorder %s106, 0
      %p379 = por %p377, %p378
      %s381 = sadd.s32 %s380, 1
      %p384 = scmp.eq.s32.totalorder %s100, 1
      %p385 = scmp.ne.s32.totalorder %s380, %s382
      %p386 = scmp.eq.s32.totalorder %s100, 0
      %p387 = por %p385, %p386
      %p388 = scmp.ne.s32.totalorder %s380, %s382
      %p389 = scmp.eq.s32.totalorder %s105, 1
      %p390 = por %p388, %p389
      %p391 = scmp.ne.s32.totalorder %s382, %s383
      %p392 = scmp.eq.s32.totalorder %s105, 0
      %p393 = por %p391, %p392
      %p394 = scmp.ne.s32.totalorder %s382, %s383
      %p395 = scmp.eq.s32.totalorder %s106, 1
      %p396 = por %p394, %p395
      %p398 = scmp.ne.s32.totalorder %s383, %s397
      %p399 = scmp.eq.s32.totalorder %s106, 0
      %p400 = por %p398, %p399
      %s402 = sadd.s32 %s401, 1
      %p405 = scmp.eq.s32.totalorder %s100, 1
      %p406 = scmp.ne.s32.totalorder %s401, %s403
      %p407 = scmp.eq.s32.totalorder %s100, 0
      %p408 = por %p406, %p407
      %p409 = scmp.ne.s32.totalorder %s401, %s403
      %p410 = scmp.eq.s32.totalorder %s105, 1
      %p411 = por %p409, %p410
      %p412 = scmp.ne.s32.totalorder %s403, %s404
      %p413 = scmp.eq.s32.totalorder %s105, 0
      %p414 = por %p412, %p413
      %p415 = scmp.ne.s32.totalorder %s403, %s404
      %p416 = scmp.eq.s32.totalorder %s106, 1
      %p417 = por %p415, %p416
      %p419 = scmp.ne.s32.totalorder %s404, %s418
      %p420 = scmp.eq.s32.totalorder %s106, 0
      %p421 = por %p419, %p420
      %s423 = sadd.s32 %s422, 1
      %p426 = scmp.eq.s32.totalorder %s100, 1
      %p427 = scmp.ne.s32.totalorder %s422, %s424
      %p428 = scmp.eq.s32.totalorder %s100, 0
      %p429 = por %p427, %p428
      %p430 = scmp.ne.s32.totalorder %s422, %s424
      %p431 = scmp.eq.s32.totalorder %s105, 1
      %p432 = por %p430, %p431
      %p433 = scmp.ne.s32.totalorder %s424, %s425
      %p434 = scmp.eq.s32.totalorder %s105, 0
      %p435 = por %p433, %p434
      %p436 = scmp.ne.s32.totalorder %s424, %s425
      %p437 = scmp.eq.s32.totalorder %s106, 1
      %p438 = por %p436, %p437
      %p440 = scmp.ne.s32.totalorder %s425, %s439
      %p441 = scmp.eq.s32.totalorder %s106, 0
      %p442 = por %p440, %p441
      %s444 = sadd.s32 %s443, 1
      %p447 = scmp.eq.s32.totalorder %s100, 1
      %p448 = scmp.ne.s32.totalorder %s443, %s445
      %p449 = scmp.eq.s32.totalorder %s100, 0
      %p450 = por %p448, %p449
      %p451 = scmp.ne.s32.totalorder %s443, %s445
      %p452 = scmp.eq.s32.totalorder %s105, 1
      %p453 = por %p451, %p452
      %p454 = scmp.ne.s32.totalorder %s445, %s446
      %p455 = scmp.eq.s32.totalorder %s105, 0
      %p456 = por %p454, %p455
      %p457 = scmp.ne.s32.totalorder %s445, %s446
      %p458 = scmp.eq.s32.totalorder %s106, 1
      %p459 = por %p457, %p458
      %p461 = scmp.ne.s32.totalorder %s446, %s460
      %p462 = scmp.eq.s32.totalorder %s106, 0
      %p463 = por %p461, %p462
      %s465 = sadd.s32 %s464, 1
      %p468 = scmp.eq.s32.totalorder %s100, 1
      %p469 = scmp.ne.s32.totalorder %s464, %s466
      %p470 = scmp.eq.s32.totalorder %s100, 0
      %p471 = por %p469, %p470
      %p472 = scmp.ne.s32.totalorder %s464, %s466
      %p473 = scmp.eq.s32.totalorder %s105, 1
      %p474 = por %p472, %p473
      %p475 = scmp.ne.s32.totalorder %s466, %s467
      %p476 = scmp.eq.s32.totalorder %s105, 0
      %p477 = por %p475, %p476
      %p478 = scmp.ne.s32.totalorder %s466, %s467
      %p479 = scmp.eq.s32.totalorder %s106, 1
      %p480 = por %p478, %p479
      %p482 = scmp.ne.s32.totalorder %s467, %s481
      %p483 = scmp.eq.s32.totalorder %s106, 0
      %p484 = por %p482, %p483
      %s486 = sadd.s32 %s485, 1
      %p489 = scmp.eq.s32.totalorder %s100, 1
      %p490 = scmp.ne.s32.totalorder %s485, %s487
      %p491 = scmp.eq.s32.totalorder %s100, 0
      %p492 = por %p490, %p491
      %p493 = scmp.ne.s32.totalorder %s485, %s487
      %p494 = scmp.eq.s32.totalorder %s105, 1
      %p495 = por %p493, %p494
      %p496 = scmp.ne.s32.totalorder %s487, %s488
      %p497 = scmp.eq.s32.totalorder %s105, 0
      %p498 = por %p496, %p497
      %p499 = scmp.ne.s32.totalorder %s487, %s488
      %p500 = scmp.eq.s32.totalorder %s106, 1
      %p501 = por %p499, %p500
      %p503 = scmp.ne.s32.totalorder %s488, %s502
      %p504 = scmp.eq.s32.totalorder %s106, 0
      %p505 = por %p503, %p504
      %s507 = sadd.s32 %s506, 1
      %p510 = scmp.eq.s32.totalorder %s100, 1
      %p511 = scmp.ne.s32.totalorder %s506, %s508
      %p512 = scmp.eq.s32.totalorder %s100, 0
      %p513 = por %p511, %p512
      %p514 = scmp.ne.s32.totalorder %s506, %s508
      %p515 = scmp.eq.s32.totalorder %s105, 1
      %p516 = por %p514, %p515
      %p517 = scmp.ne.s32.totalorder %s508, %s509
      %p518 = scmp.eq.s32.totalorder %s105, 0
      %p519 = por %p517, %p518
      %p520 = scmp.ne.s32.totalorder %s508, %s509
      %p521 = scmp.eq.s32.totalorder %s106, 1
      %p522 = por %p520, %p521
      %p524 = scmp.ne.s32.totalorder %s509, %s523
      %p525 = scmp.eq.s32.totalorder %s106, 0
      %p526 = por %p524, %p525
      %s528 = sadd.s32 %s527, 1
      %p531 = scmp.eq.s32.totalorder %s100, 1
      %p532 = scmp.ne.s32.totalorder %s527, %s529
      %p533 = scmp.eq.s32.totalorder %s100, 0
      %p534 = por %p532, %p533
      %p535 = scmp.ne.s32.totalorder %s527, %s529
      %p536 = scmp.eq.s32.totalorder %s105, 1
      %p537 = por %p535, %p536
      %p538 = scmp.ne.s32.totalorder %s529, %s530
      %p539 = scmp.eq.s32.totalorder %s105, 0
      %p540 = por %p538, %p539
      %p541 = scmp.ne.s32.totalorder %s529, %s530
      %p542 = scmp.eq.s32.totalorder %s106, 1
      %p543 = por %p541, %p542
      %p545 = scmp.ne.s32.totalorder %s530, %s544
      %p546 = scmp.eq.s32.totalorder %s106, 0
      %p547 = por %p545, %p546
      %s549 = sadd.s32 %s548, 1
      %p552 = scmp.eq.s32.totalorder %s100, 1
      %p553 = scmp.ne.s32.totalorder %s548, %s550
      %p554 = scmp.eq.s32.totalorder %s100, 0
      %p555 = por %p553, %p554
      %p556 = scmp.ne.s32.totalorder %s548, %s550
      %p557 = scmp.eq.s32.totalorder %s105, 1
      %p558 = por %p556, %p557
      %p559 = scmp.ne.s32.totalorder %s550, %s551
      %p560 = scmp.eq.s32.totalorder %s105, 0
      %p561 = por %p559, %p560
      %p562 = scmp.ne.s32.totalorder %s550, %s551
      %p563 = scmp.eq.s32.totalorder %s106, 1
      %p564 = por %p562, %p563
      %p566 = scmp.ne.s32.totalorder %s551, %s565
      %p567 = scmp.eq.s32.totalorder %s106, 0
      %p568 = por %p566, %p567
      %s570 = sadd.s32 %s569, 1
      %p573 = scmp.eq.s32.totalorder %s100, 1
      %p574 = scmp.ne.s32.totalorder %s569, %s571
      %p575 = scmp.eq.s32.totalorder %s100, 0
      %p576 = por %p574, %p575
      %p577 = scmp.ne.s32.totalorder %s569, %s571
      %p578 = scmp.eq.s32.totalorder %s105, 1
      %p579 = por %p577, %p578
      %p580 = scmp.ne.s32.totalorder %s571, %s572
      %p581 = scmp.eq.s32.totalorder %s105, 0
      %p582 = por %p580, %p581
      %p583 = scmp.ne.s32.totalorder %s571, %s572
      %p584 = scmp.eq.s32.totalorder %s106, 1
      %p585 = por %p583, %p584
      %p587 = scmp.ne.s32.totalorder %s572, %s586
      %p588 = scmp.eq.s32.totalorder %s106, 0
      %p589 = por %p587, %p588
      %s591 = sadd.s32 %s590, 1
      %p594 = scmp.eq.s32.totalorder %s100, 1
      %p595 = scmp.ne.s32.totalorder %s590, %s592
      %p596 = scmp.eq.s32.totalorder %s100, 0
      %p597 = por %p595, %p596
      %p598 = scmp.ne.s32.totalorder %s590, %s592
      %p599 = scmp.eq.s32.totalorder %s105, 1
      %p600 = por %p598, %p599
      %p601 = scmp.ne.s32.totalorder %s592, %s593
      %p602 = scmp.eq.s32.totalorder %s105, 0
      %p603 = por %p601, %p602
      %p604 = scmp.ne.s32.totalorder %s592, %s593
      %p605 = scmp.eq.s32.totalorder %s106, 1
      %p606 = por %p604, %p605
      %p608 = scmp.ne.s32.totalorder %s593, %s607
      %p609 = scmp.eq.s32.totalorder %s106, 0
      %p610 = por %p608, %p609
      %s612 = sadd.s32 %s611, 1
      %p615 = scmp.eq.s32.totalorder %s100, 1
      %p616 = scmp.ne.s32.totalorder %s611, %s613
      %p617 = scmp.eq.s32.totalorder %s100, 0
      %p618 = por %p616, %p617
      %p619 = scmp.ne.s32.totalorder %s611, %s613
      %p620 = scmp.eq.s32.totalorder %s105, 1
      %p621 = por %p619, %p620
      %p622 = scmp.ne.s32.totalorder %s613, %s614
      %p623 = scmp.eq.s32.totalorder %s105, 0
      %p624 = por %p622, %p623
      %p625 = scmp.ne.s32.totalorder %s613, %s614
      %p626 = scmp.eq.s32.totalorder %s106, 1
      %p627 = por %p625, %p626
      %p629 = scmp.ne.s32.totalorder %s614, %s628
      %p630 = scmp.eq.s32.totalorder %s106, 0
      %p631 = por %p629, %p630
      %s633 = sadd.s32 %s632, 1
      %p636 = scmp.eq.s32.totalorder %s100, 1
      %p637 = scmp.ne.s32.totalorder %s632, %s634
      %p638 = scmp.eq.s32.totalorder %s100, 0
      %p639 = por %p637, %p638
      %p640 = scmp.ne.s32.totalorder %s632, %s634
      %p641 = scmp.eq.s32.totalorder %s105, 1
      %p642 = por %p640, %p641
      %p643 = scmp.ne.s32.totalorder %s634, %s635
      %p644 = scmp.eq.s32.totalorder %s105, 0
      %p645 = por %p643, %p644
      %p646 = scmp.ne.s32.totalorder %s634, %s635
      %p647 = scmp.eq.s32.totalorder %s106, 1
      %p648 = por %p646, %p647
      %p650 = scmp.ne.s32.totalorder %s635, %s649
      %p651 = scmp.eq.s32.totalorder %s106, 0
      %p652 = por %p650, %p651
      %s654 = sadd.s32 %s653, 1
      %p657 = scmp.eq.s32.totalorder %s100, 1
      %p658 = scmp.ne.s32.totalorder %s653, %s655
      %p659 = scmp.eq.s32.totalorder %s100, 0
      %p660 = por %p658, %p659
      %p661 = scmp.ne.s32.totalorder %s653, %s655
      %p662 = scmp.eq.s32.totalorder %s105, 1
      %p663 = por %p661, %p662
      %p664 = scmp.ne.s32.totalorder %s655, %s656
      %p665 = scmp.eq.s32.totalorder %s105, 0
      %p666 = por %p664, %p665
      %p667 = scmp.ne.s32.totalorder %s655, %s656
      %p668 = scmp.eq.s32.totalorder %s106, 1
      %p669 = por %p667, %p668
      %p671 = scmp.ne.s32.totalorder %s656, %s670
      %p672 = scmp.eq.s32.totalorder %s106, 0
      %p673 = por %p671, %p672
      %s675 = sadd.s32 %s674, 1
      %p678 = scmp.eq.s32.totalorder %s100, 1
      %p679 = scmp.ne.s32.totalorder %s674, %s676
      %p680 = scmp.eq.s32.totalorder %s100, 0
      %p681 = por %p679, %p680
      %p682 = scmp.ne.s32.totalorder %s674, %s676
      %p683 = scmp.eq.s32.totalorder %s105, 1
      %p684 = por %p682, %p683
      %p685 = scmp.ne.s32.totalorder %s676, %s677
      %p686 = scmp.eq.s32.totalorder %s105, 0
      %p687 = por %p685, %p686
      %p688 = scmp.ne.s32.totalorder %s676, %s677
      %p689 = scmp.eq.s32.totalorder %s106, 1
      %p690 = por %p688, %p689
      %p692 = scmp.ne.s32.totalorder %s677, %s691
      %p693 = scmp.eq.s32.totalorder %s106, 0
      %p694 = por %p692, %p693
      %s696 = sadd.s32 %s695, 1
      %p699 = scmp.eq.s32.totalorder %s100, 1
      %p700 = scmp.ne.s32.totalorder %s695, %s697
      %p701 = scmp.eq.s32.totalorder %s100, 0
      %p702 = por %p700, %p701
      %p703 = scmp.ne.s32.totalorder %s695, %s697
      %p704 = scmp.eq.s32.totalorder %s105, 1
      %p705 = por %p703, %p704
      %p706 = scmp.ne.s32.totalorder %s697, %s698
      %p707 = scmp.eq.s32.totalorder %s105, 0
      %p708 = por %p706, %p707
      %p709 = scmp.ne.s32.totalorder %s697, %s698
      %p710 = scmp.eq.s32.totalorder %s106, 1
      %p711 = por %p709, %p710
      %p713 = scmp.ne.s32.totalorder %s698, %s712
      %p714 = scmp.eq.s32.totalorder %s106, 0
      %p715 = por %p713, %p714
      %s717 = sadd.s32 %s716, 1
      %p720 = scmp.eq.s32.totalorder %s100, 1
      %p721 = scmp.ne.s32.totalorder %s716, %s718
      %p722 = scmp.eq.s32.totalorder %s100, 0
      %p723 = por %p721, %p722
      %p724 = scmp.ne.s32.totalorder %s716, %s718
      %p725 = scmp.eq.s32.totalorder %s105, 1
      %p726 = por %p724, %p725
      %p727 = scmp.ne.s32.totalorder %s718, %s719
      %p728 = scmp.eq.s32.totalorder %s105, 0
      %p729 = por %p727, %p728
      %p730 = scmp.ne.s32.totalorder %s718, %s719
      %p731 = scmp.eq.s32.totalorder %s106, 1
      %p732 = por %p730, %p731
      %p734 = scmp.ne.s32.totalorder %s719, %s733
      %p735 = scmp.eq.s32.totalorder %s106, 0
      %p736 = por %p734, %p735
      %s738 = sadd.s32 %s737, 1
      %p741 = scmp.eq.s32.totalorder %s100, 1
      %p742 = scmp.ne.s32.totalorder %s737, %s739
      %p743 = scmp.eq.s32.totalorder %s100, 0
      %p744 = por %p742, %p743
      %p745 = scmp.ne.s32.totalorder %s737, %s739
      %p746 = scmp.eq.s32.totalorder %s105, 1
      %p747 = por %p745, %p746
      %p748 = scmp.ne.s32.totalorder %s739, %s740
      %p749 = scmp.eq.s32.totalorder %s105, 0
      %p750 = por %p748, %p749
      %p751 = scmp.ne.s32.totalorder %s739, %s740
      %p752 = scmp.eq.s32.totalorder %s106, 1
      %p753 = por %p751, %p752
      %p755 = scmp.ne.s32.totalorder %s740, %s754
      %p756 = scmp.eq.s32.totalorder %s106, 0
      %p757 = por %p755, %p756
      %s759 = sadd.s32 %s758, 1
      %p762 = scmp.eq.s32.totalorder %s100, 1
      %p763 = scmp.ne.s32.totalorder %s758, %s760
      %p764 = scmp.eq.s32.totalorder %s100, 0
      %p765 = por %p763, %p764
      %p766 = scmp.ne.s32.totalorder %s758, %s760
      %p767 = scmp.eq.s32.totalorder %s105, 1
      %p768 = por %p766, %p767
      %p769 = scmp.ne.s32.totalorder %s760, %s761
      %p770 = scmp.eq.s32.totalorder %s105, 0
      %p771 = por %p769, %p770
      %p772 = scmp.ne.s32.totalorder %s760, %s761
      %p773 = scmp.eq.s32.totalorder %s106, 1
      %p774 = por %p772, %p773
      %p776 = scmp.ne.s32.totalorder %s761, %s775
      %p777 = scmp.eq.s32.totalorder %s106, 0
      %p778 = por %p776, %p777
      %s780 = sadd.s32 %s779, 1
      %p783 = scmp.eq.s32.totalorder %s100, 1
      %p784 = scmp.ne.s32.totalorder %s779, %s781
      %p785 = scmp.eq.s32.totalorder %s100, 0
      %p786 = por %p784, %p785
      %p787 = scmp.ne.s32.totalorder %s779, %s781
      %p788 = scmp.eq.s32.totalorder %s105, 1
      %p789 = por %p787, %p788
      %p790 = scmp.ne.s32.totalorder %s781, %s782
      %p791 = scmp.eq.s32.totalorder %s105, 0
      %p792 = por %p790, %p791
      %p793 = scmp.ne.s32.totalorder %s781, %s782
      %p794 = scmp.eq.s32.totalorder %s106, 1
      %p795 = por %p793, %p794
      %p797 = scmp.ne.s32.totalorder %s782, %s796
      %p798 = scmp.eq.s32.totalorder %s106, 0
      %p799 = por %p797, %p798
      %s801 = sadd.s32 %s800, 1
      %p804 = scmp.eq.s32.totalorder %s100, 1
      %p805 = scmp.ne.s32.totalorder %s800, %s802
      %p806 = scmp.eq.s32.totalorder %s100, 0
      %p807 = por %p805, %p806
      %p808 = scmp.ne.s32.totalorder %s800, %s802
      %p809 = scmp.eq.s32.totalorder %s105, 1
      %p810 = por %p808, %p809
      %p811 = scmp.ne.s32.totalorder %s802, %s803
      %p812 = scmp.eq.s32.totalorder %s105, 0
      %p813 = por %p811, %p812
      %p814 = scmp.ne.s32.totalorder %s802, %s803
      %p815 = scmp.eq.s32.totalorder %s106, 1
      %p816 = por %p814, %p815
      %p818 = scmp.ne.s32.totalorder %s803, %s817
      %p819 = scmp.eq.s32.totalorder %s106, 0
      %p820 = por %p818, %p819
      %s822 = sadd.s32 %s821, 1
      %p825 = scmp.eq.s32.totalorder %s100, 1
      %p826 = scmp.ne.s32.totalorder %s821, %s823
      %p827 = scmp.eq.s32.totalorder %s100, 0
      %p828 = por %p826, %p827
      %p829 = scmp.ne.s32.totalorder %s821, %s823
      %p830 = scmp.eq.s32.totalorder %s105, 1
      %p831 = por %p829, %p830
      %p832 = scmp.ne.s32.totalorder %s823, %s824
      %p833 = scmp.eq.s32.totalorder %s105, 0
      %p834 = por %p832, %p833
      %p835 = scmp.ne.s32.totalorder %s823, %s824
      %p836 = scmp.eq.s32.totalorder %s106, 1
      %p837 = por %p835, %p836
      %p839 = scmp.ne.s32.totalorder %s824, %s838
      %p840 = scmp.eq.s32.totalorder %s106, 0
      %p841 = por %p839, %p840
      %s843 = sadd.s32 %s842, 1
      %p846 = scmp.eq.s32.totalorder %s100, 1
      %p847 = scmp.ne.s32.totalorder %s842, %s844
      %p848 = scmp.eq.s32.totalorder %s100, 0
      %p849 = por %p847, %p848
      %p850 = scmp.ne.s32.totalorder %s842, %s844
      %p851 = scmp.eq.s32.totalorder %s105, 1
      %p852 = por %p850, %p851
      %p853 = scmp.ne.s32.totalorder %s844, %s845
      %p854 = scmp.eq.s32.totalorder %s105, 0
      %p855 = por %p853, %p854
      %p856 = scmp.ne.s32.totalorder %s844, %s845
      %p857 = scmp.eq.s32.totalorder %s106, 1
      %p858 = por %p856, %p857
      %p860 = scmp.ne.s32.totalorder %s845, %s859
      %p861 = scmp.eq.s32.totalorder %s106, 0
      %p862 = por %p860, %p861
      %s864 = sadd.s32 %s863, 1
      %p867 = scmp.eq.s32.totalorder %s100, 1
      %p868 = scmp.ne.s32.totalorder %s863, %s865
      %p869 = scmp.eq.s32.totalorder %s100, 0
      %p870 = por %p868, %p869
      %p871 = scmp.ne.s32.totalorder %s863, %s865
      %p872 = scmp.eq.s32.totalorder %s105, 1
      %p873 = por %p871, %p872
      %p874 = scmp.ne.s32.totalorder %s865, %s866
      %p875 = scmp.eq.s32.totalorder %s105, 0
      %p876 = por %p874, %p875
      %p877 = scmp.ne.s32.totalorder %s865, %s866
      %p878 = scmp.eq.s32.totalorder %s106, 1
      %p879 = por %p877, %p878
      %p881 = scmp.ne.s32.totalorder %s866, %s880
      %p882 = scmp.eq.s32.totalorder %s106, 0
      %p883 = por %p881, %p882
      %s885 = sadd.s32 %s884, 1
      %p888 = scmp.eq.s32.totalorder %s100, 1
      %p889 = scmp.ne.s32.totalorder %s884, %s886
      %p890 = scmp.eq.s32.totalorder %s100, 0
      %p891 = por %p889, %p890
      %p892 = scmp.ne.s32.totalorder %s884, %s886
      %p893 = scmp.eq.s32.totalorder %s105, 1
      %p894 = por %p892, %p893
      %p895 = scmp.ne.s32.totalorder %s886, %s887
      %p896 = scmp.eq.s32.totalorder %s105, 0
      %p897 = por %p895, %p896
      %p898 = scmp.ne.s32.totalorder %s886, %s887
      %p899 = scmp.eq.s32.totalorder %s106, 1
      %p900 = por %p898, %p899
      %p902 = scmp.ne.s32.totalorder %s887, %s901
      %p903 = scmp.eq.s32.totalorder %s106, 0
      %p904 = por %p902, %p903
      %s906 = sadd.s32 %s905, 1
      %p909 = scmp.eq.s32.totalorder %s100, 1
      %p910 = scmp.ne.s32.totalorder %s905, %s907
      %p911 = scmp.eq.s32.totalorder %s100, 0
      %p912 = por %p910, %p911
      %p913 = scmp.ne.s32.totalorder %s905, %s907
      %p914 = scmp.eq.s32.totalorder %s105, 1
      %p915 = por %p913, %p914
      %p916 = scmp.ne.s32.totalorder %s907, %s908
      %p917 = scmp.eq.s32.totalorder %s105, 0
      %p918 = por %p916, %p917
      %p919 = scmp.ne.s32.totalorder %s907, %s908
      %p920 = scmp.eq.s32.totalorder %s106, 1
      %p921 = por %p919, %p920
      %p923 = scmp.ne.s32.totalorder %s908, %s922
      %p924 = scmp.eq.s32.totalorder %s106, 0
      %p925 = por %p923, %p924
      %s927 = sadd.s32 %s926, 1
      %p930 = scmp.eq.s32.totalorder %s100, 1
      %p931 = scmp.ne.s32.totalorder %s926, %s928
      %p932 = scmp.eq.s32.totalorder %s100, 0
      %p933 = por %p931, %p932
      %p934 = scmp.ne.s32.totalorder %s926, %s928
      %p935 = scmp.eq.s32.totalorder %s105, 1
      %p936 = por %p934, %p935
      %p937 = scmp.ne.s32.totalorder %s928, %s929
      %p938 = scmp.eq.s32.totalorder %s105, 0
      %p939 = por %p937, %p938
      %p940 = scmp.ne.s32.totalorder %s928, %s929
      %p941 = scmp.eq.s32.totalorder %s106, 1
      %p942 = por %p940, %p941
      %p944 = scmp.ne.s32.totalorder %s929, %s943
      %p945 = scmp.eq.s32.totalorder %s106, 0
      %p946 = por %p944, %p945
      %s948 = sadd.s32 %s947, 1
      %p951 = scmp.eq.s32.totalorder %s100, 1
      %p952 = scmp.ne.s32.totalorder %s947, %s949
      %p953 = scmp.eq.s32.totalorder %s100, 0
      %p954 = por %p952, %p953
      %p955 = scmp.ne.s32.totalorder %s947, %s949
      %p956 = scmp.eq.s32.totalorder %s105, 1
      %p957 = por %p955, %p956
      %p958 = scmp.ne.s32.totalorder %s949, %s950
      %p959 = scmp.eq.s32.totalorder %s105, 0
      %p960 = por %p958, %p959
      %p961 = scmp.ne.s32.totalorder %s949, %s950
      %p962 = scmp.eq.s32.totalorder %s106, 1
      %p963 = por %p961, %p962
      %p965 = scmp.ne.s32.totalorder %s950, %s964
      %p966 = scmp.eq.s32.totalorder %s106, 0
      %p967 = por %p965, %p966
      %s969 = sadd.s32 %s968, 1
      %p972 = scmp.eq.s32.totalorder %s100, 1
      %p973 = scmp.ne.s32.totalorder %s968, %s970
      %p974 = scmp.eq.s32.totalorder %s100, 0
      %p975 = por %p973, %p974
      %p976 = scmp.ne.s32.totalorder %s968, %s970
      %p977 = scmp.eq.s32.totalorder %s105, 1
      %p978 = por %p976, %p977
      %p979 = scmp.ne.s32.totalorder %s970, %s971
      %p980 = scmp.eq.s32.totalorder %s105, 0
      %p981 = por %p979, %p980
      %p982 = scmp.ne.s32.totalorder %s970, %s971
      %p983 = scmp.eq.s32.totalorder %s106, 1
      %p984 = por %p982, %p983
      %p986 = scmp.ne.s32.totalorder %s971, %s985
      %p987 = scmp.eq.s32.totalorder %s106, 0
      %p988 = por %p986, %p987
      %s990 = sadd.s32 %s989, 1
      %p993 = scmp.eq.s32.totalorder %s100, 1
      %p994 = scmp.ne.s32.totalorder %s989, %s991
      %p995 = scmp.eq.s32.totalorder %s100, 0
      %p996 = por %p994, %p995
      %p997 = scmp.ne.s32.totalorder %s989, %s991
      %p998 = scmp.eq.s32.totalorder %s105, 1
      %p999 = por %p997, %p998
      %p1000 = scmp.ne.s32.totalorder %s991, %s992
      %p1001 = scmp.eq.s32.totalorder %s105, 0
      %p1002 = por %p1000, %p1001
      %p1003 = scmp.ne.s32.totalorder %s991, %s992
      %p1004 = scmp.eq.s32.totalorder %s106, 1
      %p1005 = por %p1003, %p1004
      %p1007 = scmp.ne.s32.totalorder %s992, %s1006
      %p1008 = scmp.eq.s32.totalorder %s106, 0
      %p1009 = por %p1007, %p1008
      %s1010 = ssub.s32 %s100, %s107
      %p1011 = scmp.eq.s32.totalorder %s1010, 0
      %s1013 = sadd.s32 %s1012, 1
      %s1014 = scalar_select %p1011, %s1012, %s1013
      %p1017 = pneg %p1011
      %p1018 = scmp.eq.s32.totalorder %s100, 1
      %p1019 = por %p1017, %p1018
      %p1020 = scmp.ne.s32.totalorder %s1012, %s1015
      %p1021 = scmp.eq.s32.totalorder %s100, 0
      %p1022 = por %p1020, %p1021
      %p1023 = scmp.ne.s32.totalorder %s1012, %s1015
      %p1024 = scmp.eq.s32.totalorder %s105, 1
      %p1025 = por %p1023, %p1024
      %p1026 = scmp.ne.s32.totalorder %s1015, %s1016
      %p1027 = scmp.eq.s32.totalorder %s105, 0
      %p1028 = por %p1026, %p1027
      %p1029 = scmp.ne.s32.totalorder %s1015, %s1016
      %p1030 = scmp.eq.s32.totalorder %s106, 1
      %p1031 = por %p1029, %p1030
      %p1033 = scmp.ne.s32.totalorder %s1016, %s1032
      %p1034 = scmp.eq.s32.totalorder %s106, 0
      %p1035 = por %p1033, %p1034
      %s1036 = ssub.s32 %s100, %s107
      %p1037 = scmp.eq.s32.totalorder %s1036, 0
      %s1039 = sadd.s32 %s1038, 1
      %s1040 = scalar_select %p1037, %s1038, %s1039
      %p1043 = pneg %p1037
      %p1044 = scmp.eq.s32.totalorder %s100, 1
      %p1045 = por %p1043, %p1044
      %p1046 = scmp.ne.s32.totalorder %s1038, %s1041
      %p1047 = scmp.eq.s32.totalorder %s100, 0
      %p1048 = por %p1046, %p1047
      %p1049 = scmp.ne.s32.totalorder %s1038, %s1041
      %p1050 = scmp.eq.s32.totalorder %s105, 1
      %p1051 = por %p1049, %p1050
      %p1052 = scmp.ne.s32.totalorder %s1041, %s1042
      %p1053 = scmp.eq.s32.totalorder %s105, 0
      %p1054 = por %p1052, %p1053
      %p1055 = scmp.ne.s32.totalorder %s1041, %s1042
      %p1056 = scmp.eq.s32.totalorder %s106, 1
      %p1057 = por %p1055, %p1056
      %p1059 = scmp.ne.s32.totalorder %s1042, %s1058
      %p1060 = scmp.eq.s32.totalorder %s106, 0
      %p1061 = por %p1059, %p1060
      %p1062 = scmp.le.s32.totalorder 1, %s100
      %p1063 = scmp.lt.s32.totalorder %s100, 3
      %p1064 = pnand %p1062, %p1063
      %p1065 = pneg %p1064
      // Predicated region
      $region9: #{decoder_forward.1} parent=5 // pred_check
        _
      $region10: #{decoder_forward.1} parent=5 // pred_check_branch
        %1067 = sbr.rel (%p1064) target = $region12
      $region11: #{decoder_forward.1} parent=5 // pred_region
        %s1068 = ssub.s32 %s100, 1
        // Predicated region
        $region13: #{decoder_forward.1} parent=11 // pred_check
          %p1069 = pneg %p225
        $region14: #{decoder_forward.1} parent=11 // pred_check_branch
          %1071 = sbr.rel (%p1069) target = $region16
        $region15: #{decoder_forward.1} parent=11 // pred_region
          _
        $region16: #{decoder_forward.1} parent=11 // pred_fallthru
          _
        // Predicated region
        $region17: #{decoder_forward.1} parent=11 // pred_check
          %p1072 = pneg %p246
        $region18: #{decoder_forward.1} parent=11 // pred_check_branch
          %1074 = sbr.rel (%p1072) target = $region20
        $region19: #{decoder_forward.1} parent=11 // pred_region
          _
        $region20: #{decoder_forward.1} parent=11 // pred_fallthru
          _
        // Predicated region
        $region21: #{decoder_forward.1} parent=11 // pred_check
          %p1075 = pneg %p267
        $region22: #{decoder_forward.1} parent=11 // pred_check_branch
          %1077 = sbr.rel (%p1075) target = $region24
        $region23: #{decoder_forward.1} parent=11 // pred_region
          _
        $region24: #{decoder_forward.1} parent=11 // pred_fallthru
          _
        // Predicated region
        $region25: #{decoder_forward.1} parent=11 // pred_check
          %p1078 = pneg %p288
        $region26: #{decoder_forward.1} parent=11 // pred_check_branch
          %1080 = sbr.rel (%p1078) target = $region28
        $region27: #{decoder_forward.1} parent=11 // pred_region
          _
        $region28: #{decoder_forward.1} parent=11 // pred_fallthru
          _
        // Predicated region
        $region29: #{decoder_forward.1} parent=11 // pred_check
          %p1081 = pneg %p309
        $region30: #{decoder_forward.1} parent=11 // pred_check_branch
          %1083 = sbr.rel (%p1081) target = $region32
        $region31: #{decoder_forward.1} parent=11 // pred_region
          _
        $region32: #{decoder_forward.1} parent=11 // pred_fallthru
          _
        // Predicated region
        $region33: #{decoder_forward.1} parent=11 // pred_check
          %p1084 = pneg %p330
        $region34: #{decoder_forward.1} parent=11 // pred_check_branch
          %1086 = sbr.rel (%p1084) target = $region36
        $region35: #{decoder_forward.1} parent=11 // pred_region
          _
        $region36: #{decoder_forward.1} parent=11 // pred_fallthru
          _
        // Predicated region
        $region37: #{decoder_forward.1} parent=11 // pred_check
          %p1087 = pneg %p351
        $region38: #{decoder_forward.1} parent=11 // pred_check_branch
          %1089 = sbr.rel (%p1087) target = $region40
        $region39: #{decoder_forward.1} parent=11 // pred_region
          _
        $region40: #{decoder_forward.1} parent=11 // pred_fallthru
          _
        // Predicated region
        $region41: #{decoder_forward.1} parent=11 // pred_check
          %p1090 = pneg %p372
        $region42: #{decoder_forward.1} parent=11 // pred_check_branch
          %1092 = sbr.rel (%p1090) target = $region44
        $region43: #{decoder_forward.1} parent=11 // pred_region
          _
        $region44: #{decoder_forward.1} parent=11 // pred_fallthru
          _
        // Predicated region
        $region45: #{decoder_forward.1} parent=11 // pred_check
          %p1093 = pneg %p393
        $region46: #{decoder_forward.1} parent=11 // pred_check_branch
          %1095 = sbr.rel (%p1093) target = $region48
        $region47: #{decoder_forward.1} parent=11 // pred_region
          _
        $region48: #{decoder_forward.1} parent=11 // pred_fallthru
          _
        // Predicated region
        $region49: #{decoder_forward.1} parent=11 // pred_check
          %p1096 = pneg %p414
        $region50: #{decoder_forward.1} parent=11 // pred_check_branch
          %1098 = sbr.rel (%p1096) target = $region52
        $region51: #{decoder_forward.1} parent=11 // pred_region
          _
        $region52: #{decoder_forward.1} parent=11 // pred_fallthru
          _
        // Predicated region
        $region53: #{decoder_forward.1} parent=11 // pred_check
          %p1099 = pneg %p435
        $region54: #{decoder_forward.1} parent=11 // pred_check_branch
          %1101 = sbr.rel (%p1099) target = $region56
        $region55: #{decoder_forward.1} parent=11 // pred_region
          _
        $region56: #{decoder_forward.1} parent=11 // pred_fallthru
          _
        // Predicated region
        $region57: #{decoder_forward.1} parent=11 // pred_check
          %p1102 = pneg %p456
        $region58: #{decoder_forward.1} parent=11 // pred_check_branch
          %1104 = sbr.rel (%p1102) target = $region60
        $region59: #{decoder_forward.1} parent=11 // pred_region
          _
        $region60: #{decoder_forward.1} parent=11 // pred_fallthru
          _
        // Predicated region
        $region61: #{decoder_forward.1} parent=11 // pred_check
          %p1105 = pneg %p477
        $region62: #{decoder_forward.1} parent=11 // pred_check_branch
          %1107 = sbr.rel (%p1105) target = $region64
        $region63: #{decoder_forward.1} parent=11 // pred_region
          _
        $region64: #{decoder_forward.1} parent=11 // pred_fallthru
          _
        // Predicated region
        $region65: #{decoder_forward.1} parent=11 // pred_check
          %p1108 = pneg %p498
        $region66: #{decoder_forward.1} parent=11 // pred_check_branch
          %1110 = sbr.rel (%p1108) target = $region68
        $region67: #{decoder_forward.1} parent=11 // pred_region
          _
        $region68: #{decoder_forward.1} parent=11 // pred_fallthru
          _
        // Predicated region
        $region69: #{decoder_forward.1} parent=11 // pred_check
          %p1111 = pneg %p519
        $region70: #{decoder_forward.1} parent=11 // pred_check_branch
          %1113 = sbr.rel (%p1111) target = $region72
        $region71: #{decoder_forward.1} parent=11 // pred_region
          _
        $region72: #{decoder_forward.1} parent=11 // pred_fallthru
          _
        // Predicated region
        $region73: #{decoder_forward.1} parent=11 // pred_check
          %p1114 = pneg %p540
        $region74: #{decoder_forward.1} parent=11 // pred_check_branch
          %1116 = sbr.rel (%p1114) target = $region76
        $region75: #{decoder_forward.1} parent=11 // pred_region
          _
        $region76: #{decoder_forward.1} parent=11 // pred_fallthru
          _
        // Predicated region
        $region77: #{decoder_forward.1} parent=11 // pred_check
          %p1117 = pneg %p561
        $region78: #{decoder_forward.1} parent=11 // pred_check_branch
          %1119 = sbr.rel (%p1117) target = $region80
        $region79: #{decoder_forward.1} parent=11 // pred_region
          _
        $region80: #{decoder_forward.1} parent=11 // pred_fallthru
          _
        // Predicated region
        $region81: #{decoder_forward.1} parent=11 // pred_check
          %p1120 = pneg %p582
        $region82: #{decoder_forward.1} parent=11 // pred_check_branch
          %1122 = sbr.rel (%p1120) target = $region84
        $region83: #{decoder_forward.1} parent=11 // pred_region
          _
        $region84: #{decoder_forward.1} parent=11 // pred_fallthru
          _
        // Predicated region
        $region85: #{decoder_forward.1} parent=11 // pred_check
          %p1123 = pneg %p603
        $region86: #{decoder_forward.1} parent=11 // pred_check_branch
          %1125 = sbr.rel (%p1123) target = $region88
        $region87: #{decoder_forward.1} parent=11 // pred_region
          _
        $region88: #{decoder_forward.1} parent=11 // pred_fallthru
          _
        // Predicated region
        $region89: #{decoder_forward.1} parent=11 // pred_check
          %p1126 = pneg %p624
        $region90: #{decoder_forward.1} parent=11 // pred_check_branch
          %1128 = sbr.rel (%p1126) target = $region92
        $region91: #{decoder_forward.1} parent=11 // pred_region
          _
        $region92: #{decoder_forward.1} parent=11 // pred_fallthru
          _
        // Predicated region
        $region93: #{decoder_forward.1} parent=11 // pred_check
          %p1129 = pneg %p645
        $region94: #{decoder_forward.1} parent=11 // pred_check_branch
          %1131 = sbr.rel (%p1129) target = $region96
        $region95: #{decoder_forward.1} parent=11 // pred_region
          _
        $region96: #{decoder_forward.1} parent=11 // pred_fallthru
          _
        // Predicated region
        $region97: #{decoder_forward.1} parent=11 // pred_check
          %p1132 = pneg %p666
        $region98: #{decoder_forward.1} parent=11 // pred_check_branch
          %1134 = sbr.rel (%p1132) target = $region100
        $region99: #{decoder_forward.1} parent=11 // pred_region
          _
        $region100: #{decoder_forward.1} parent=11 // pred_fallthru
          _
        // Predicated region
        $region101: #{decoder_forward.1} parent=11 // pred_check
          %p1135 = pneg %p687
        $region102: #{decoder_forward.1} parent=11 // pred_check_branch
          %1137 = sbr.rel (%p1135) target = $region104
        $region103: #{decoder_forward.1} parent=11 // pred_region
          _
        $region104: #{decoder_forward.1} parent=11 // pred_fallthru
          _
        // Predicated region
        $region105: #{decoder_forward.1} parent=11 // pred_check
          %p1138 = pneg %p708
        $region106: #{decoder_forward.1} parent=11 // pred_check_branch
          %1140 = sbr.rel (%p1138) target = $region108
        $region107: #{decoder_forward.1} parent=11 // pred_region
          _
        $region108: #{decoder_forward.1} parent=11 // pred_fallthru
          _
        // Predicated region
        $region109: #{decoder_forward.1} parent=11 // pred_check
          %p1141 = pneg %p729
        $region110: #{decoder_forward.1} parent=11 // pred_check_branch
          %1143 = sbr.rel (%p1141) target = $region112
        $region111: #{decoder_forward.1} parent=11 // pred_region
          _
        $region112: #{decoder_forward.1} parent=11 // pred_fallthru
          _
        // Predicated region
        $region113: #{decoder_forward.1} parent=11 // pred_check
          %p1144 = pneg %p750
        $region114: #{decoder_forward.1} parent=11 // pred_check_branch
          %1146 = sbr.rel (%p1144) target = $region116
        $region115: #{decoder_forward.1} parent=11 // pred_region
          _
        $region116: #{decoder_forward.1} parent=11 // pred_fallthru
          _
        // Predicated region
        $region117: #{decoder_forward.1} parent=11 // pred_check
          %p1147 = pneg %p771
        $region118: #{decoder_forward.1} parent=11 // pred_check_branch
          %1149 = sbr.rel (%p1147) target = $region120
        $region119: #{decoder_forward.1} parent=11 // pred_region
          _
        $region120: #{decoder_forward.1} parent=11 // pred_fallthru
          _
        // Predicated region
        $region121: #{decoder_forward.1} parent=11 // pred_check
          %p1150 = pneg %p792
        $region122: #{decoder_forward.1} parent=11 // pred_check_branch
          %1152 = sbr.rel (%p1150) target = $region124
        $region123: #{decoder_forward.1} parent=11 // pred_region
          _
        $region124: #{decoder_forward.1} parent=11 // pred_fallthru
          _
        // Predicated region
        $region125: #{decoder_forward.1} parent=11 // pred_check
          %p1153 = pneg %p813
        $region126: #{decoder_forward.1} parent=11 // pred_check_branch
          %1155 = sbr.rel (%p1153) target = $region128
        $region127: #{decoder_forward.1} parent=11 // pred_region
          _
        $region128: #{decoder_forward.1} parent=11 // pred_fallthru
          _
        // Predicated region
        $region129: #{decoder_forward.1} parent=11 // pred_check
          %p1156 = pneg %p834
        $region130: #{decoder_forward.1} parent=11 // pred_check_branch
          %1158 = sbr.rel (%p1156) target = $region132
        $region131: #{decoder_forward.1} parent=11 // pred_region
          _
        $region132: #{decoder_forward.1} parent=11 // pred_fallthru
          _
        // Predicated region
        $region133: #{decoder_forward.1} parent=11 // pred_check
          %p1159 = pneg %p855
        $region134: #{decoder_forward.1} parent=11 // pred_check_branch
          %1161 = sbr.rel (%p1159) target = $region136
        $region135: #{decoder_forward.1} parent=11 // pred_region
          _
        $region136: #{decoder_forward.1} parent=11 // pred_fallthru
          _
        // Predicated region
        $region137: #{decoder_forward.1} parent=11 // pred_check
          %p1162 = pneg %p876
        $region138: #{decoder_forward.1} parent=11 // pred_check_branch
          %1164 = sbr.rel (%p1162) target = $region140
        $region139: #{decoder_forward.1} parent=11 // pred_region
          _
        $region140: #{decoder_forward.1} parent=11 // pred_fallthru
          _
        // Predicated region
        $region141: #{decoder_forward.1} parent=11 // pred_check
          %p1165 = pneg %p897
        $region142: #{decoder_forward.1} parent=11 // pred_check_branch
          %1167 = sbr.rel (%p1165) target = $region144
        $region143: #{decoder_forward.1} parent=11 // pred_region
          _
        $region144: #{decoder_forward.1} parent=11 // pred_fallthru
          _
        // Predicated region
        $region145: #{decoder_forward.1} parent=11 // pred_check
          %p1168 = pneg %p918
        $region146: #{decoder_forward.1} parent=11 // pred_check_branch
          %1170 = sbr.rel (%p1168) target = $region148
        $region147: #{decoder_forward.1} parent=11 // pred_region
          _
        $region148: #{decoder_forward.1} parent=11 // pred_fallthru
          _
        // Predicated region
        $region149: #{decoder_forward.1} parent=11 // pred_check
          %p1171 = pneg %p939
        $region150: #{decoder_forward.1} parent=11 // pred_check_branch
          %1173 = sbr.rel (%p1171) target = $region152
        $region151: #{decoder_forward.1} parent=11 // pred_region
          _
        $region152: #{decoder_forward.1} parent=11 // pred_fallthru
          _
        // Predicated region
        $region153: #{decoder_forward.1} parent=11 // pred_check
          %p1174 = pneg %p960
        $region154: #{decoder_forward.1} parent=11 // pred_check_branch
          %1176 = sbr.rel (%p1174) target = $region156
        $region155: #{decoder_forward.1} parent=11 // pred_region
          _
        $region156: #{decoder_forward.1} parent=11 // pred_fallthru
          _
        // Predicated region
        $region157: #{decoder_forward.1} parent=11 // pred_check
          %p1177 = pneg %p981
        $region158: #{decoder_forward.1} parent=11 // pred_check_branch
          %1179 = sbr.rel (%p1177) target = $region160
        $region159: #{decoder_forward.1} parent=11 // pred_region
          _
        $region160: #{decoder_forward.1} parent=11 // pred_fallthru
          _
        // Predicated region
        $region161: #{decoder_forward.1} parent=11 // pred_check
          %p1180 = pneg %p1002
        $region162: #{decoder_forward.1} parent=11 // pred_check_branch
          %1182 = sbr.rel (%p1180) target = $region164
        $region163: #{decoder_forward.1} parent=11 // pred_region
          _
        $region164: #{decoder_forward.1} parent=11 // pred_fallthru
          _
      $region12: #{decoder_forward.1} parent=5 // pred_fallthru
        _
      %p1183 = scmp.lt.s32.totalorder %s100, 2
      // Predicated region
      $region165: #{decoder_forward.1} parent=5 // pred_check
        %p1184 = pneg %p1183
      $region166: #{decoder_forward.1} parent=5 // pred_check_branch
        %1186 = sbr.rel (%p1184) target = $region168
      $region167: #{decoder_forward.1} parent=5 // pred_region
        // Predicated region
        $region169: #{decoder_forward.1} parent=167 // pred_check
          %p1187 = pneg %p120
        $region170: #{decoder_forward.1} parent=167 // pred_check_branch
          %1189 = sbr.rel (%p1187) target = $region172
        $region171: #{decoder_forward.1} parent=167 // pred_region
          %p1190 = scmp.lt.s32.totalorder %s100, 1
          %s1191 = scalar_select %p1190, %s100, 1
          %s1192 = smul.addr %s1191, 8
          %s1193 = scalar_lea.vmem %s1, %s1192
        $region172: #{decoder_forward.1} parent=167 // pred_fallthru
          _
        // Predicated region
        $region173: #{decoder_forward.1} parent=167 // pred_check
          %p1194 = pneg %p146
        $region174: #{decoder_forward.1} parent=167 // pred_check_branch
          %1196 = sbr.rel (%p1194) target = $region176
        $region175: #{decoder_forward.1} parent=167 // pred_region
          %p1197 = scmp.lt.s32.totalorder %s100, 1
          %s1198 = scalar_select %p1197, %s100, 1
          %s1199 = smul.addr %s1198, 2
          %s1200 = smul.addr %s1199, 8
          %s1201 = scalar_lea.vmem %s3, %s1200
        $region176: #{decoder_forward.1} parent=167 // pred_fallthru
          _
        // Predicated region
        $region177: #{decoder_forward.1} parent=167 // pred_check
          %p1202 = pneg %p172
        $region178: #{decoder_forward.1} parent=167 // pred_check_branch
          %1204 = sbr.rel (%p1202) target = $region180
        $region179: #{decoder_forward.1} parent=167 // pred_region
          %p1205 = scmp.lt.s32.totalorder %s100, 1
          %s1206 = scalar_select %p1205, %s100, 1
          %s1207 = smul.addr %s1206, 8
          %s1208 = scalar_lea.vmem %s5, %s1207
        $region180: #{decoder_forward.1} parent=167 // pred_fallthru
          _
        // Predicated region
        $region181: #{decoder_forward.1} parent=167 // pred_check
          %p1209 = pneg %p198
        $region182: #{decoder_forward.1} parent=167 // pred_check_branch
          %1211 = sbr.rel (%p1209) target = $region184
        $region183: #{decoder_forward.1} parent=167 // pred_region
          %p1212 = scmp.lt.s32.totalorder %s100, 1
          %s1213 = scalar_select %p1212, %s100, 1
          %s1214 = scalar_lea.vmem %s7, %s1213
        $region184: #{decoder_forward.1} parent=167 // pred_fallthru
          _
      $region168: #{decoder_forward.1} parent=5 // pred_fallthru
        _
      %p1215 = scmp.le.s32.totalorder 1, %s100
      %p1216 = scmp.lt.s32.totalorder %s100, 3
      %p1217 = pnand %p1215, %p1216
      %p1218 = pneg %p1217
      // Predicated region
      $region185: #{decoder_forward.1} parent=5 // pred_check
        _
      $region186: #{decoder_forward.1} parent=5 // pred_check_branch
        %1220 = sbr.rel (%p1217) target = $region188
      $region187: #{decoder_forward.1} parent=5 // pred_region
        %s1221 = ssub.s32 %s100, 1
        %p1222 = scmp.lt.s32.totalorder %s105, 1
        %s1223 = scalar_select %p1222, %s105, 1
        %s1224 = smul.addr %s1223, 8
        %s1225 = scalar_lea.vmem %s1, %s1224
        %p1226 = pneg %p126
        %p1227 = pneg %p123
        %p1228 = scmp.lt.s32.totalorder %s105, 1
        %s1229 = scalar_select %p1228, %s105, 1
        %s1230 = smul.addr %s1229, 2
        %s1231 = smul.addr %s1230, 8
        %s1232 = scalar_lea.vmem %s3, %s1231
        %p1233 = pneg %p152
        %p1234 = pneg %p149
        %p1235 = scmp.lt.s32.totalorder %s105, 1
        %s1236 = scalar_select %p1235, %s105, 1
        %s1237 = smul.addr %s1236, 8
        %s1238 = scalar_lea.vmem %s5, %s1237
        %p1239 = pneg %p178
        %p1240 = pneg %p175
        %p1241 = scmp.lt.s32.totalorder %s105, 1
        %s1242 = scalar_select %p1241, %s105, 1
        %s1243 = scalar_lea.vmem %s7, %s1242
        %p1244 = pneg %p204
        %p1245 = pneg %p201
        %p1246 = pneg %p225
        %p1247 = pneg %p222
        %p1248 = pneg %p246
        %p1249 = pneg %p243
        %p1250 = pneg %p267
        %p1251 = pneg %p264
        %p1252 = pneg %p288
        %p1253 = pneg %p285
        %p1254 = pneg %p309
        %p1255 = pneg %p306
        %p1256 = pneg %p330
        %p1257 = pneg %p327
        %p1258 = pneg %p351
        %p1259 = pneg %p348
        %p1260 = pneg %p372
        %p1261 = pneg %p369
        %p1262 = pneg %p393
        %p1263 = pneg %p390
        %p1264 = pneg %p414
        %p1265 = pneg %p411
        %p1266 = pneg %p435
        %p1267 = pneg %p432
        %p1268 = pneg %p456
        %p1269 = pneg %p453
        %p1270 = pneg %p477
        %p1271 = pneg %p474
        %p1272 = pneg %p498
        %p1273 = pneg %p495
        %p1274 = pneg %p519
        %p1275 = pneg %p516
        %p1276 = pneg %p540
        %p1277 = pneg %p537
        %p1278 = pneg %p561
        %p1279 = pneg %p558
        %p1280 = pneg %p582
        %p1281 = pneg %p579
        %p1282 = pneg %p603
        %p1283 = pneg %p600
        %p1284 = pneg %p624
        %p1285 = pneg %p621
        %p1286 = pneg %p645
        %p1287 = pneg %p642
        %p1288 = pneg %p666
        %p1289 = pneg %p663
        %p1290 = pneg %p687
        %p1291 = pneg %p684
        %p1292 = pneg %p708
        %p1293 = pneg %p705
        %p1294 = pneg %p729
        %p1295 = pneg %p726
        %p1296 = pneg %p750
        %p1297 = pneg %p747
        %p1298 = pneg %p771
        %p1299 = pneg %p768
        %p1300 = pneg %p792
        %p1301 = pneg %p789
        %p1302 = pneg %p813
        %p1303 = pneg %p810
        %p1304 = pneg %p834
        %p1305 = pneg %p831
        %p1306 = pneg %p855
        %p1307 = pneg %p852
        %p1308 = pneg %p876
        %p1309 = pneg %p873
        %p1310 = pneg %p897
        %p1311 = pneg %p894
        %p1312 = pneg %p918
        %p1313 = pneg %p915
        %p1314 = pneg %p939
        %p1315 = pneg %p936
        %p1316 = pneg %p960
        %p1317 = pneg %p957
        %p1318 = pneg %p981
        %p1319 = pneg %p978
        %p1320 = pneg %p1002
        %p1321 = pneg %p999
        %p1322 = pneg %p1028
        %p1323 = pneg %p1025
        %s1324 = sand.u32 %s1015, 1
        %s1325 = scalar_lea.sflag [#allocation3], %s1324
        %s1326 = sand.u32 %s1015, 1
        %s1327 = smul.addr %s1326, 8
        %s1328 = scalar_lea.vmem [#allocation2], %s1327
        %p1329 = pneg %p1054
        %p1330 = pneg %p1051
        %s1331 = sand.u32 %s1041, 1
        %s1332 = scalar_lea.sflag [#allocation5], %s1331
        %s1333 = sand.u32 %s1041, 1
        %s1334 = smul.addr %s1333, 32
        %s1335 = scalar_lea.vmem [#allocation4], %s1334
        %p1336 = scmp.lt.s32.totalorder %s105, 1
        %s1337 = scalar_select %p1336, %s105, 1
        %s1338 = smul.addr %s1337, 8
        %s1339 = scalar_lea.vmem %s1, %s1338
        %p1340 = scmp.lt.s32.totalorder %s105, 1
        %s1341 = scalar_select %p1340, %s105, 1
        %s1342 = smul.addr %s1341, 2
        %s1343 = smul.addr %s1342, 8
        %s1344 = scalar_lea.vmem %s3, %s1343
        %p1345 = scmp.lt.s32.totalorder %s105, 1
        %s1346 = scalar_select %p1345, %s105, 1
        %s1347 = smul.addr %s1346, 8
        %s1348 = scalar_lea.vmem %s5, %s1347
        %p1349 = scmp.lt.s32.totalorder %s105, 1
        %s1350 = scalar_select %p1349, %s105, 1
        %s1351 = scalar_lea.vmem %s7, %s1350
        %v1352 = vld [vmem:[%s1339] sm:$0xff]
        %v1353 = vld [vmem:[%s1344] sm:$0xff]
        %v1354 = vld [vmem:[%s1344 + $0x8] sm:$0xf]
        %v1355 = vld [vmem:[%s1348] sm:$0xff]
        %vm1356 = vcmp.eq.f32.partialorder %v1355, 0.0
        %v1357 = vsel %vm1356, -1e+10, 0.0
        %v1358 = vld [vmem:[%s1351] sm:$0x1]
        %vm1359 = vcmp.eq.f32.partialorder %v1358, 0.0
        %v1360 = vsel %vm1359, -1e+10, 0.0
        %v1361 = vld [vmem:[%s9] sm:$0xff]
        %v1362 = vld [vmem:[%s9 + $0x8] sm:$0xff]
        %v1363 = vld [vmem:[%s9 + $0x10] sm:$0xff]
        %v1364 = vld [vmem:[%s9 + $0x18] sm:$0xff]
        %v1365 = vld [vmem:[%s11] sm:$0x1]
        %v1366 = vld [vmem:[%s13] sm:$0xff]
        %v1367 = vld [vmem:[%s13 + $0x8] sm:$0xff]
        %v1368 = vld [vmem:[%s13 + $0x10] sm:$0xff]
        %v1369 = vld [vmem:[%s13 + $0x18] sm:$0xff]
        %v1370 = vld [vmem:[%s15] sm:$0x1]
        %v1371 = vld [vmem:[%s17] sm:$0xff]
        %v1372 = vld [vmem:[%s17 + $0x8] sm:$0xff]
        %v1373 = vld [vmem:[%s17 + $0x10] sm:$0xff]
        %v1374 = vld [vmem:[%s17 + $0x18] sm:$0xff]
        %v1375 = vld [vmem:[%s19] sm:$0x1]
        %v1376 = vld [vmem:[%s21] sm:$0xff]
        %v1377 = vld [vmem:[%s21 + $0x8] sm:$0xff]
        %v1378 = vld [vmem:[%s21 + $0x10] sm:$0xff]
        %v1379 = vld [vmem:[%s21 + $0x18] sm:$0xff]
        %v1380 = vld [vmem:[%s23] sm:$0x1]
        %v1381 = vld [vmem:[%s25] sm:$0xff]
        %v1382 = vld [vmem:[%s25 + $0x8] sm:$0xff]
        %v1383 = vld [vmem:[%s25 + $0x10] sm:$0xff]
        %v1384 = vld [vmem:[%s25 + $0x18] sm:$0xff]
        %v1385 = vld [vmem:[%s27] sm:$0x1]
        %v1386 = vld [vmem:[%s29] sm:$0x1]
        %v1387 = vld [vmem:[%s31] sm:$0x1]
        %v1388 = vld [vmem:[%s33] sm:$0xff]
        %v1389 = vld [vmem:[%s33 + $0x8] sm:$0xff]
        %v1390 = vld [vmem:[%s33 + $0x10] sm:$0xff]
        %v1391 = vld [vmem:[%s33 + $0x18] sm:$0xff]
        %v1392 = vld [vmem:[%s35] sm:$0x1]
        %v1393 = vld [vmem:[%s37] sm:$0xff]
        %v1394 = vld [vmem:[%s37 + $0x8] sm:$0xff]
        %v1395 = vld [vmem:[%s37 + $0x10] sm:$0xff]
        %v1396 = vld [vmem:[%s37 + $0x18] sm:$0xff]
        %v1397 = vld [vmem:[%s37 + $0x20] sm:$0xff]
        %v1398 = vld [vmem:[%s37 + $0x28] sm:$0xff]
        %v1399 = vld [vmem:[%s37 + $0x30] sm:$0xff]
        %v1400 = vld [vmem:[%s37 + $0x38] sm:$0xff]
        %v1401 = vld [vmem:[%s39] sm:$0x1]
        %v1402 = vld [vmem:[%s41] sm:$0x1]
        %v1403 = vld [vmem:[%s43] sm:$0x1]
        %v1405 = vlaneseq
        %v1406 = vshrl.u32 %v1405, 7
        %v1407 = vsub.s32 0, %v1406
        %v1408 = vrot.slane %v1365, %v1407
        %vm1410 = vcmask 261120
        %v1412 = vsel %vm1410, %v1352, 0
        %1414 = vmatprep.subr.mxu0 0.0
        %1415 = vmatpush1.msra.mxu0 %v1361
        %1416 = vmatprep.subr.mxu0 0.0
        %1417 = vmatpush1.msra.mxu0 %v1362
        %1418 = vmatprep.subr.mxu0 0.0
        %1419 = vmatpush1.msra.mxu0 %v1363
        %1420 = vmatprep.subr.mxu0 0.0
        %1421 = vmatpush1.msra.mxu0 %v1364
        %1422 = vmatprep.subr.mxu0 0.0
        %1423 = vmatpush1.msra.mxu0 0.0
        %1424 = vmatprep.subr.mxu0 0.0
        %1425 = vmatpush1.msra.mxu0 0.0
        %1426 = vmatprep.subr.mxu0 0.0
        %1427 = vmatpush1.msra.mxu0 0.0
        %1428 = vmatprep.subr.mxu0 0.0
        %1429 = vmatpush1.msra.mxu0 0.0
        %1430 = vmatprep.subr.mxu0 0.0
        %1431 = vmatpush1.msra.mxu0 0.0
        %1432 = vmatprep.subr.mxu0 0.0
        %1433 = vmatpush1.msra.mxu0 0.0
        %1434 = vmatprep.subr.mxu0 0.0
        %1435 = vmatpush1.msra.mxu0 0.0
        %1436 = vmatprep.subr.mxu0 0.0
        %1437 = vmatpush1.msra.mxu0 0.0
        %1438 = vmatprep.subr.mxu0 0.0
        %1439 = vmatpush1.msra.mxu0 0.0
        %1440 = vmatprep.subr.mxu0 0.0
        %1441 = vmatpush1.msra.mxu0 0.0
        %1442 = vmatprep.subr.mxu0 0.0
        %1443 = vmatpush1.msra.mxu0 0.0
        %1444 = vmatprep.subr.mxu0 0.0
        %1445 = vmatpush1.msra.mxu0 0.0
        %1446 = vmatprep.subr.mxu0 0.0
        %1447 = vmatpush1.msra.mxu0 0.0
        %1448 = vmatprep.subr.mxu0 0.0
        %1449 = vmatpush1.msra.mxu0 0.0
        %1450 = vmatprep.subr.mxu0 0.0
        %1451 = vmatpush1.msra.mxu0 0.0
        %1452 = vmatprep.subr.mxu0 0.0
        %1453 = vmatpush1.msra.mxu0 0.0
        %1454 = vmatprep.subr.mxu0 0.0
        %1455 = vmatpush1.msra.mxu0 0.0
        %1456 = vmatprep.subr.mxu0 0.0
        %1457 = vmatpush1.msra.mxu0 0.0
        %1458 = vmatprep.subr.mxu0 0.0
        %1459 = vmatpush1.msra.mxu0 0.0
        %1460 = vmatprep.subr.mxu0 0.0
        %1461 = vmatpush1.msra.mxu0 0.0
        %1462 = vmatprep.subr.mxu0 0.0
        %1463 = vmatpush1.msra.mxu0 0.0
        %1464 = vmatprep.subr.mxu0 0.0
        %1465 = vmatpush1.msra.mxu0 0.0
        %1466 = vmatprep.subr.mxu0 0.0
        %1467 = vmatpush1.msra.mxu0 0.0
        %1468 = vmatprep.subr.mxu0 0.0
        %1469 = vmatpush1.msra.mxu0 0.0
        %1470 = vmatprep.subr.mxu0 0.0
        %1471 = vmatpush1.msra.mxu0 0.0
        %1472 = vmatprep.subr.mxu0 0.0
        %1473 = vmatpush1.msra.mxu0 0.0
        %1474 = vmatprep.subr.mxu0 0.0
        %1475 = vmatpush1.msra.mxu0 0.0
        %1476 = vmatprep.subr.mxu0 0.0
        %1477 = vmatpush1.msra.mxu0 0.0
        %1478 = vmatprep.mubr.f32.mxu0 0.0
        %1479 = vmatmul.mubr.f32.gmra.mrb[0].mxu0 %v1412
        %v1480 = vpop.f32.mrb[0].mxu0
        %v1481 = vadd.f32 %v1408, %v1480
        %v1482 = vpop.f32.mrb[0].mxu0
        %1483 = vdwg.mxu0
        %1485 = vrot.lane.b32.xlu0 %v1481, 120
        %v1486 = vpop.permute.xlu0 %1485
        %1488 = vrot.lane.b32.xlu0 %v1481, 112
        %v1489 = vpop.permute.xlu0 %1488
        %1491 = vrot.lane.b32.xlu0 %v1481, 104
        %v1492 = vpop.permute.xlu0 %1491
        %v1494 = vcombine.low %v1481, %v1489
        %v1495 = vcombine.high %v1481, %v1489
        %v1497 = vunpack.c.l.s4 1983009808
        %v1498 = vunpack.c.0.s8 %v1497
        %v1499 = vlaneseq
        %v1500 = vshrl.u32 %v1499, 7
        %v1501 = vsub.s32 %v1498, %v1500
        %v1502 = vrot.slane %v1494, %v1501
        %v1504 = vunpack.c.l.s4 1983009808
        %v1505 = vunpack.c.0.s8 %v1504
        %v1506 = vlaneseq
        %v1507 = vshrl.u32 %v1506, 7
        %v1508 = vsub.s32 %v1505, %v1507
        %v1509 = vrot.slane %v1495, %v1508
        %v1510 = vcombine.low %v1486, %v1492
        %v1511 = vcombine.high %v1486, %v1492
        %v1513 = vunpack.c.l.s4 1983009808
        %v1514 = vunpack.c.0.s8 %v1513
        %v1515 = vlaneseq
        %v1516 = vshrl.u32 %v1515, 7
        %v1517 = vsub.s32 %v1514, %v1516
        %v1518 = vrot.slane %v1510, %v1517
        %v1520 = vunpack.c.l.s4 1983009808
        %v1521 = vunpack.c.0.s8 %v1520
        %v1522 = vlaneseq
        %v1523 = vshrl.u32 %v1522, 7
        %v1524 = vsub.s32 %v1521, %v1523
        %v1525 = vrot.slane %v1511, %v1524
        %v1526 = vcombine.low %v1502, %v1518
        %v1527 = vcombine.high %v1502, %v1518
        %v1529 = vunpack.c.l.s4 1934713408
        %v1530 = vunpack.c.0.s8 %v1529
        %v1531 = vlaneseq
        %v1532 = vshrl.u32 %v1531, 7
        %v1533 = vsub.s32 %v1530, %v1532
        %v1534 = vrot.slane %v1526, %v1533
        %v1536 = vunpack.c.l.s4 1934713408
        %v1537 = vunpack.c.0.s8 %v1536
        %v1538 = vlaneseq
        %v1539 = vshrl.u32 %v1538, 7
        %v1540 = vsub.s32 %v1537, %v1539
        %v1541 = vrot.slane %v1527, %v1540
        %v1542 = vcombine.low %v1509, %v1525
        %v1543 = vcombine.high %v1509, %v1525
        %v1545 = vunpack.c.l.s4 1934713408
        %v1546 = vunpack.c.0.s8 %v1545
        %v1547 = vlaneseq
        %v1548 = vshrl.u32 %v1547, 7
        %v1549 = vsub.s32 %v1546, %v1548
        %v1550 = vrot.slane %v1542, %v1549
        %v1552 = vunpack.c.l.s4 1934713408
        %v1553 = vunpack.c.0.s8 %v1552
        %v1554 = vlaneseq
        %v1555 = vshrl.u32 %v1554, 7
        %v1556 = vsub.s32 %v1553, %v1555
        %v1557 = vrot.slane %v1543, %v1556
        %v1558 = vcombine.high %v1534, 0.0
        %v1559 = vcombine.high %v1541, 0.0
        %v1560 = vcombine.high %v1550, 0.0
        %v1561 = vcombine.high %v1557, 0.0
        %v1562 = vcombine.low %v1534, %v1541
        %v1564 = vunpack.c.l.s4 1983009808
        %v1565 = vunpack.c.0.s8 %v1564
        %v1566 = vlaneseq
        %v1567 = vshrl.u32 %v1566, 7
        %v1568 = vsub.s32 %v1565, %v1567
        %v1569 = vrot.slane %v1562, %v1568
        %v1570 = vcombine.low %v1558, %v1559
        %v1572 = vunpack.c.l.s4 1983009808
        %v1573 = vunpack.c.0.s8 %v1572
        %v1574 = vlaneseq
        %v1575 = vshrl.u32 %v1574, 7
        %v1576 = vsub.s32 %v1573, %v1575
        %v1577 = vrot.slane %v1570, %v1576
        %v1578 = vcombine.low %v1550, %v1557
        %v1580 = vunpack.c.l.s4 1983009808
        %v1581 = vunpack.c.0.s8 %v1580
        %v1582 = vlaneseq
        %v1583 = vshrl.u32 %v1582, 7
        %v1584 = vsub.s32 %v1581, %v1583
        %v1585 = vrot.slane %v1578, %v1584
        %v1586 = vcombine.low %v1560, %v1561
        %v1588 = vunpack.c.l.s4 1983009808
        %v1589 = vunpack.c.0.s8 %v1588
        %v1590 = vlaneseq
        %v1591 = vshrl.u32 %v1590, 7
        %v1592 = vsub.s32 %v1589, %v1591
        %v1593 = vrot.slane %v1586, %v1592
        %v1594 = vcombine.low %v1569, %v1577
        %v1595 = vcombine.high %v1569, %v1577
        %v1597 = vunpack.c.l.s4 1934713408
        %v1598 = vunpack.c.0.s8 %v1597
        %v1599 = vlaneseq
        %v1600 = vshrl.u32 %v1599, 7
        %v1601 = vsub.s32 %v1598, %v1600
        %v1602 = vrot.slane %v1594, %v1601
        %v1604 = vunpack.c.l.s4 1934713408
        %v1605 = vunpack.c.0.s8 %v1604
        %v1606 = vlaneseq
        %v1607 = vshrl.u32 %v1606, 7
        %v1608 = vsub.s32 %v1605, %v1607
        %v1609 = vrot.slane %v1595, %v1608
        %v1610 = vcombine.low %v1585, %v1593
        %v1611 = vcombine.high %v1585, %v1593
        %v1613 = vunpack.c.l.s4 1934713408
        %v1614 = vunpack.c.0.s8 %v1613
        %v1615 = vlaneseq
        %v1616 = vshrl.u32 %v1615, 7
        %v1617 = vsub.s32 %v1614, %v1616
        %v1618 = vrot.slane %v1610, %v1617
        %v1620 = vunpack.c.l.s4 1934713408
        %v1621 = vunpack.c.0.s8 %v1620
        %v1622 = vlaneseq
        %v1623 = vshrl.u32 %v1622, 7
        %v1624 = vsub.s32 %v1621, %v1623
        %v1625 = vrot.slane %v1611, %v1624
        %v1626 = vcombine.low %v1602, %v1618
        %v1627 = vcombine.high %v1602, %v1618
        %v1628 = vcombine.low %v1609, %v1625
        %v1629 = vcombine.high %v1609, %v1625
        %1630 = vrot.lane.b32.xlu0 %v1481, 96
        %v1631 = vpop.permute.xlu0 %1630
        %1632 = vrot.lane.b32.xlu0 %v1486, 96
        %v1633 = vpop.permute.xlu0 %1632
        %1634 = vrot.lane.b32.xlu0 %v1489, 96
        %v1635 = vpop.permute.xlu0 %1634
        %1636 = vrot.lane.b32.xlu0 %v1492, 96
        %v1637 = vpop.permute.xlu0 %1636
        %v1642 = vcombine.low %v1631, %v1635
        %v1643 = vcombine.high %v1631, %v1635
        %v1645 = vunpack.c.l.s4 1983009808
        %v1646 = vunpack.c.0.s8 %v1645
        %v1647 = vlaneseq
        %v1648 = vshrl.u32 %v1647, 7
        %v1649 = vsub.s32 %v1646, %v1648
        %v1650 = vrot.slane %v1642, %v1649
        %v1652 = vunpack.c.l.s4 1983009808
        %v1653 = vunpack.c.0.s8 %v1652
        %v1654 = vlaneseq
        %v1655 = vshrl.u32 %v1654, 7
        %v1656 = vsub.s32 %v1653, %v1655
        %v1657 = vrot.slane %v1643, %v1656
        %v1658 = vcombine.low %v1633, %v1637
        %v1659 = vcombine.high %v1633, %v1637
        %v1661 = vunpack.c.l.s4 1983009808
        %v1662 = vunpack.c.0.s8 %v1661
        %v1663 = vlaneseq
        %v1664 = vshrl.u32 %v1663, 7
        %v1665 = vsub.s32 %v1662, %v1664
        %v1666 = vrot.slane %v1658, %v1665
        %v1668 = vunpack.c.l.s4 1983009808
        %v1669 = vunpack.c.0.s8 %v1668
        %v1670 = vlaneseq
        %v1671 = vshrl.u32 %v1670, 7
        %v1672 = vsub.s32 %v1669, %v1671
        %v1673 = vrot.slane %v1659, %v1672
        %v1674 = vcombine.low %v1650, %v1666
        %v1675 = vcombine.high %v1650, %v1666
        %v1677 = vunpack.c.l.s4 1934713408
        %v1678 = vunpack.c.0.s8 %v1677
        %v1679 = vlaneseq
        %v1680 = vshrl.u32 %v1679, 7
        %v1681 = vsub.s32 %v1678, %v1680
        %v1682 = vrot.slane %v1674, %v1681
        %v1684 = vunpack.c.l.s4 1934713408
        %v1685 = vunpack.c.0.s8 %v1684
        %v1686 = vlaneseq
        %v1687 = vshrl.u32 %v1686, 7
        %v1688 = vsub.s32 %v1685, %v1687
        %v1689 = vrot.slane %v1675, %v1688
        %v1690 = vcombine.low %v1657, %v1673
        %v1691 = vcombine.high %v1657, %v1673
        %v1693 = vunpack.c.l.s4 1934713408
        %v1694 = vunpack.c.0.s8 %v1693
        %v1695 = vlaneseq
        %v1696 = vshrl.u32 %v1695, 7
        %v1697 = vsub.s32 %v1694, %v1696
        %v1698 = vrot.slane %v1690, %v1697
        %v1700 = vunpack.c.l.s4 1934713408
        %v1701 = vunpack.c.0.s8 %v1700
        %v1702 = vlaneseq
        %v1703 = vshrl.u32 %v1702, 7
        %v1704 = vsub.s32 %v1701, %v1703
        %v1705 = vrot.slane %v1691, %v1704
        %v1706 = vcombine.high %v1682, 0.0
        %v1707 = vcombine.high %v1689, 0.0
        %v1708 = vcombine.high %v1698, 0.0
        %v1709 = vcombine.high %v1705, 0.0
        %v1710 = vcombine.low %v1682, %v1689
        %v1712 = vunpack.c.l.s4 1983009808
        %v1713 = vunpack.c.0.s8 %v1712
        %v1714 = vlaneseq
        %v1715 = vshrl.u32 %v1714, 7
        %v1716 = vsub.s32 %v1713, %v1715
        %v1717 = vrot.slane %v1710, %v1716
        %v1718 = vcombine.low %v1706, %v1707
        %v1720 = vunpack.c.l.s4 1983009808
        %v1721 = vunpack.c.0.s8 %v1720
        %v1722 = vlaneseq
        %v1723 = vshrl.u32 %v1722, 7
        %v1724 = vsub.s32 %v1721, %v1723
        %v1725 = vrot.slane %v1718, %v1724
        %v1726 = vcombine.low %v1698, %v1705
        %v1728 = vunpack.c.l.s4 1983009808
        %v1729 = vunpack.c.0.s8 %v1728
        %v1730 = vlaneseq
        %v1731 = vshrl.u32 %v1730, 7
        %v1732 = vsub.s32 %v1729, %v1731
        %v1733 = vrot.slane %v1726, %v1732
        %v1734 = vcombine.low %v1708, %v1709
        %v1736 = vunpack.c.l.s4 1983009808
        %v1737 = vunpack.c.0.s8 %v1736
        %v1738 = vlaneseq
        %v1739 = vshrl.u32 %v1738, 7
        %v1740 = vsub.s32 %v1737, %v1739
        %v1741 = vrot.slane %v1734, %v1740
        %v1742 = vcombine.low %v1717, %v1725
        %v1743 = vcombine.high %v1717, %v1725
        %v1745 = vunpack.c.l.s4 1934713408
        %v1746 = vunpack.c.0.s8 %v1745
        %v1747 = vlaneseq
        %v1748 = vshrl.u32 %v1747, 7
        %v1749 = vsub.s32 %v1746, %v1748
        %v1750 = vrot.slane %v1742, %v1749
        %v1752 = vunpack.c.l.s4 1934713408
        %v1753 = vunpack.c.0.s8 %v1752
        %v1754 = vlaneseq
        %v1755 = vshrl.u32 %v1754, 7
        %v1756 = vsub.s32 %v1753, %v1755
        %v1757 = vrot.slane %v1743, %v1756
        %v1758 = vcombine.low %v1733, %v1741
        %v1759 = vcombine.high %v1733, %v1741
        %v1761 = vunpack.c.l.s4 1934713408
        %v1762 = vunpack.c.0.s8 %v1761
        %v1763 = vlaneseq
        %v1764 = vshrl.u32 %v1763, 7
        %v1765 = vsub.s32 %v1762, %v1764
        %v1766 = vrot.slane %v1758, %v1765
        %v1768 = vunpack.c.l.s4 1934713408
        %v1769 = vunpack.c.0.s8 %v1768
        %v1770 = vlaneseq
        %v1771 = vshrl.u32 %v1770, 7
        %v1772 = vsub.s32 %v1769, %v1771
        %v1773 = vrot.slane %v1759, %v1772
        %v1774 = vcombine.low %v1750, %v1766
        %v1775 = vcombine.high %v1750, %v1766
        %v1776 = vcombine.low %v1757, %v1773
        %v1777 = vcombine.high %v1757, %v1773
        %1778 = vrot.lane.b32.xlu0 %v1481, 64
        %v1779 = vpop.permute.xlu0 %1778
        %1780 = vrot.lane.b32.xlu0 %v1486, 64
        %v1781 = vpop.permute.xlu0 %1780
        %1782 = vrot.lane.b32.xlu0 %v1489, 64
        %v1783 = vpop.permute.xlu0 %1782
        %1784 = vrot.lane.b32.xlu0 %v1492, 64
        %v1785 = vpop.permute.xlu0 %1784
        %v1790 = vcombine.low %v1779, %v1783
        %v1791 = vcombine.high %v1779, %v1783
        %v1793 = vunpack.c.l.s4 1983009808
        %v1794 = vunpack.c.0.s8 %v1793
        %v1795 = vlaneseq
        %v1796 = vshrl.u32 %v1795, 7
        %v1797 = vsub.s32 %v1794, %v1796
        %v1798 = vrot.slane %v1790, %v1797
        %v1800 = vunpack.c.l.s4 1983009808
        %v1801 = vunpack.c.0.s8 %v1800
        %v1802 = vlaneseq
        %v1803 = vshrl.u32 %v1802, 7
        %v1804 = vsub.s32 %v1801, %v1803
        %v1805 = vrot.slane %v1791, %v1804
        %v1806 = vcombine.low %v1781, %v1785
        %v1807 = vcombine.high %v1781, %v1785
        %v1809 = vunpack.c.l.s4 1983009808
        %v1810 = vunpack.c.0.s8 %v1809
        %v1811 = vlaneseq
        %v1812 = vshrl.u32 %v1811, 7
        %v1813 = vsub.s32 %v1810, %v1812
        %v1814 = vrot.slane %v1806, %v1813
        %v1816 = vunpack.c.l.s4 1983009808
        %v1817 = vunpack.c.0.s8 %v1816
        %v1818 = vlaneseq
        %v1819 = vshrl.u32 %v1818, 7
        %v1820 = vsub.s32 %v1817, %v1819
        %v1821 = vrot.slane %v1807, %v1820
        %v1822 = vcombine.low %v1798, %v1814
        %v1823 = vcombine.high %v1798, %v1814
        %v1825 = vunpack.c.l.s4 1934713408
        %v1826 = vunpack.c.0.s8 %v1825
        %v1827 = vlaneseq
        %v1828 = vshrl.u32 %v1827, 7
        %v1829 = vsub.s32 %v1826, %v1828
        %v1830 = vrot.slane %v1822, %v1829
        %v1832 = vunpack.c.l.s4 1934713408
        %v1833 = vunpack.c.0.s8 %v1832
        %v1834 = vlaneseq
        %v1835 = vshrl.u32 %v1834, 7
        %v1836 = vsub.s32 %v1833, %v1835
        %v1837 = vrot.slane %v1823, %v1836
        %v1838 = vcombine.low %v1805, %v1821
        %v1839 = vcombine.high %v1805, %v1821
        %v1841 = vunpack.c.l.s4 1934713408
        %v1842 = vunpack.c.0.s8 %v1841
        %v1843 = vlaneseq
        %v1844 = vshrl.u32 %v1843, 7
        %v1845 = vsub.s32 %v1842, %v1844
        %v1846 = vrot.slane %v1838, %v1845
        %v1848 = vunpack.c.l.s4 1934713408
        %v1849 = vunpack.c.0.s8 %v1848
        %v1850 = vlaneseq
        %v1851 = vshrl.u32 %v1850, 7
        %v1852 = vsub.s32 %v1849, %v1851
        %v1853 = vrot.slane %v1839, %v1852
        %v1854 = vcombine.high %v1830, 0.0
        %v1855 = vcombine.high %v1837, 0.0
        %v1856 = vcombine.high %v1846, 0.0
        %v1857 = vcombine.high %v1853, 0.0
        %v1858 = vcombine.low %v1830, %v1837
        %v1860 = vunpack.c.l.s4 1983009808
        %v1861 = vunpack.c.0.s8 %v1860
        %v1862 = vlaneseq
        %v1863 = vshrl.u32 %v1862, 7
        %v1864 = vsub.s32 %v1861, %v1863
        %v1865 = vrot.slane %v1858, %v1864
        %v1866 = vcombine.low %v1854, %v1855
        %v1868 = vunpack.c.l.s4 1983009808
        %v1869 = vunpack.c.0.s8 %v1868
        %v1870 = vlaneseq
        %v1871 = vshrl.u32 %v1870, 7
        %v1872 = vsub.s32 %v1869, %v1871
        %v1873 = vrot.slane %v1866, %v1872
        %v1874 = vcombine.low %v1846, %v1853
        %v1876 = vunpack.c.l.s4 1983009808
        %v1877 = vunpack.c.0.s8 %v1876
        %v1878 = vlaneseq
        %v1879 = vshrl.u32 %v1878, 7
        %v1880 = vsub.s32 %v1877, %v1879
        %v1881 = vrot.slane %v1874, %v1880
        %v1882 = vcombine.low %v1856, %v1857
        %v1884 = vunpack.c.l.s4 1983009808
        %v1885 = vunpack.c.0.s8 %v1884
        %v1886 = vlaneseq
        %v1887 = vshrl.u32 %v1886, 7
        %v1888 = vsub.s32 %v1885, %v1887
        %v1889 = vrot.slane %v1882, %v1888
        %v1890 = vcombine.low %v1865, %v1873
        %v1891 = vcombine.high %v1865, %v1873
        %v1893 = vunpack.c.l.s4 1934713408
        %v1894 = vunpack.c.0.s8 %v1893
        %v1895 = vlaneseq
        %v1896 = vshrl.u32 %v1895, 7
        %v1897 = vsub.s32 %v1894, %v1896
        %v1898 = vrot.slane %v1890, %v1897
        %v1900 = vunpack.c.l.s4 1934713408
        %v1901 = vunpack.c.0.s8 %v1900
        %v1902 = vlaneseq
        %v1903 = vshrl.u32 %v1902, 7
        %v1904 = vsub.s32 %v1901, %v1903
        %v1905 = vrot.slane %v1891, %v1904
        %v1906 = vcombine.low %v1881, %v1889
        %v1907 = vcombine.high %v1881, %v1889
        %v1909 = vunpack.c.l.s4 1934713408
        %v1910 = vunpack.c.0.s8 %v1909
        %v1911 = vlaneseq
        %v1912 = vshrl.u32 %v1911, 7
        %v1913 = vsub.s32 %v1910, %v1912
        %v1914 = vrot.slane %v1906, %v1913
        %v1916 = vunpack.c.l.s4 1934713408
        %v1917 = vunpack.c.0.s8 %v1916
        %v1918 = vlaneseq
        %v1919 = vshrl.u32 %v1918, 7
        %v1920 = vsub.s32 %v1917, %v1919
        %v1921 = vrot.slane %v1907, %v1920
        %v1922 = vcombine.low %v1898, %v1914
        %v1923 = vcombine.high %v1898, %v1914
        %v1924 = vcombine.low %v1905, %v1921
        %v1925 = vcombine.high %v1905, %v1921
        %vm1926 = vcmask 64512
        %v1928 = vsel %vm1926, %v1626, 0
        %v1931 = vsel %vm1926, %v1774, 0
        %1933 = vmatprep.subr.mxu0 0.0
        %1934 = vmatpush1.xpose.msra.mxu0 %v1931
        %1935 = vmatprep.subr.mxu0 0.0
        %1936 = vmatpush1.xpose.msra.mxu0 0.0
        %1937 = vmatprep.subr.mxu0 0.0
        %1938 = vmatpush1.xpose.msra.mxu0 0.0
        %1939 = vmatprep.subr.mxu0 0.0
        %1940 = vmatpush1.xpose.msra.mxu0 0.0
        %1941 = vmatprep.subr.mxu0 0.0
        %1942 = vmatpush1.xpose.msra.mxu0 0.0
        %1943 = vmatprep.subr.mxu0 0.0
        %1944 = vmatpush1.xpose.msra.mxu0 0.0
        %1945 = vmatprep.subr.mxu0 0.0
        %1946 = vmatpush1.xpose.msra.mxu0 0.0
        %1947 = vmatprep.subr.mxu0 0.0
        %1948 = vmatpush1.xpose.msra.mxu0 0.0
        %1949 = vmatprep.subr.mxu0 0.0
        %1950 = vmatpush1.xpose.msra.mxu0 0.0
        %1951 = vmatprep.subr.mxu0 0.0
        %1952 = vmatpush1.xpose.msra.mxu0 0.0
        %1953 = vmatprep.subr.mxu0 0.0
        %1954 = vmatpush1.xpose.msra.mxu0 0.0
        %1955 = vmatprep.subr.mxu0 0.0
        %1956 = vmatpush1.xpose.msra.mxu0 0.0
        %1957 = vmatprep.subr.mxu0 0.0
        %1958 = vmatpush1.xpose.msra.mxu0 0.0
        %1959 = vmatprep.subr.mxu0 0.0
        %1960 = vmatpush1.xpose.msra.mxu0 0.0
        %1961 = vmatprep.subr.mxu0 0.0
        %1962 = vmatpush1.xpose.msra.mxu0 0.0
        %1963 = vmatprep.subr.mxu0 0.0
        %1964 = vmatpush1.xpose.msra.mxu0 0.0
        %1965 = vmatprep.subr.mxu0 0.0
        %1966 = vmatpush1.xpose.msra.mxu0 0.0
        %1967 = vmatprep.subr.mxu0 0.0
        %1968 = vmatpush1.xpose.msra.mxu0 0.0
        %1969 = vmatprep.subr.mxu0 0.0
        %1970 = vmatpush1.xpose.msra.mxu0 0.0
        %1971 = vmatprep.subr.mxu0 0.0
        %1972 = vmatpush1.xpose.msra.mxu0 0.0
        %1973 = vmatprep.subr.mxu0 0.0
        %1974 = vmatpush1.xpose.msra.mxu0 0.0
        %1975 = vmatprep.subr.mxu0 0.0
        %1976 = vmatpush1.xpose.msra.mxu0 0.0
        %1977 = vmatprep.subr.mxu0 0.0
        %1978 = vmatpush1.xpose.msra.mxu0 0.0
        %1979 = vmatprep.subr.mxu0 0.0
        %1980 = vmatpush1.xpose.msra.mxu0 0.0
        %1981 = vmatprep.subr.mxu0 0.0
        %1982 = vmatpush1.xpose.msra.mxu0 0.0
        %1983 = vmatprep.subr.mxu0 0.0
        %1984 = vmatpush1.xpose.msra.mxu0 0.0
        %1985 = vmatprep.subr.mxu0 0.0
        %1986 = vmatpush1.xpose.msra.mxu0 0.0
        %1987 = vmatprep.subr.mxu0 0.0
        %1988 = vmatpush1.xpose.msra.mxu0 0.0
        %1989 = vmatprep.subr.mxu0 0.0
        %1990 = vmatpush1.xpose.msra.mxu0 0.0
        %1991 = vmatprep.subr.mxu0 0.0
        %1992 = vmatpush1.xpose.msra.mxu0 0.0
        %1993 = vmatprep.subr.mxu0 0.0
        %1994 = vmatpush1.xpose.msra.mxu0 0.0
        %1995 = vmatprep.subr.mxu0 0.0
        %1996 = vmatpush1.xpose.msra.mxu0 0.0
        %1997 = vmatprep.mubr.f32.mxu0 0.0
        %1998 = vmatmul.mubr.f32.gmra.mrb[0].mxu0 %v1928
        %v1999 = vpop.f32.mrb[0].mxu0
        %v2000 = vadd.f32 %v1357, %v1999
        %v2001 = vpop.f32.mrb[0].mxu0
        %2002 = vdwg.mxu0
        %v2004 = vsel %vm1926, %v1627, 0
        %v2007 = vsel %vm1926, %v1775, 0
        %2009 = vmatprep.subr.mxu0 0.0
        %2010 = vmatpush1.xpose.msra.mxu0 %v2007
        %2011 = vmatprep.subr.mxu0 0.0
        %2012 = vmatpush1.xpose.msra.mxu0 0.0
        %2013 = vmatprep.subr.mxu0 0.0
        %2014 = vmatpush1.xpose.msra.mxu0 0.0
        %2015 = vmatprep.subr.mxu0 0.0
        %2016 = vmatpush1.xpose.msra.mxu0 0.0
        %2017 = vmatprep.subr.mxu0 0.0
        %2018 = vmatpush1.xpose.msra.mxu0 0.0
        %2019 = vmatprep.subr.mxu0 0.0
        %2020 = vmatpush1.xpose.msra.mxu0 0.0
        %2021 = vmatprep.subr.mxu0 0.0
        %2022 = vmatpush1.xpose.msra.mxu0 0.0
        %2023 = vmatprep.subr.mxu0 0.0
        %2024 = vmatpush1.xpose.msra.mxu0 0.0
        %2025 = vmatprep.subr.mxu0 0.0
        %2026 = vmatpush1.xpose.msra.mxu0 0.0
        %2027 = vmatprep.subr.mxu0 0.0
        %2028 = vmatpush1.xpose.msra.mxu0 0.0
        %2029 = vmatprep.subr.mxu0 0.0
        %2030 = vmatpush1.xpose.msra.mxu0 0.0
        %2031 = vmatprep.subr.mxu0 0.0
        %2032 = vmatpush1.xpose.msra.mxu0 0.0
        %2033 = vmatprep.subr.mxu0 0.0
        %2034 = vmatpush1.xpose.msra.mxu0 0.0
        %2035 = vmatprep.subr.mxu0 0.0
        %2036 = vmatpush1.xpose.msra.mxu0 0.0
        %2037 = vmatprep.subr.mxu0 0.0
        %2038 = vmatpush1.xpose.msra.mxu0 0.0
        %2039 = vmatprep.subr.mxu0 0.0
        %2040 = vmatpush1.xpose.msra.mxu0 0.0
        %2041 = vmatprep.subr.mxu0 0.0
        %2042 = vmatpush1.xpose.msra.mxu0 0.0
        %2043 = vmatprep.subr.mxu0 0.0
        %2044 = vmatpush1.xpose.msra.mxu0 0.0
        %2045 = vmatprep.subr.mxu0 0.0
        %2046 = vmatpush1.xpose.msra.mxu0 0.0
        %2047 = vmatprep.subr.mxu0 0.0
        %2048 = vmatpush1.xpose.msra.mxu0 0.0
        %2049 = vmatprep.subr.mxu0 0.0
        %2050 = vmatpush1.xpose.msra.mxu0 0.0
        %2051 = vmatprep.subr.mxu0 0.0
        %2052 = vmatpush1.xpose.msra.mxu0 0.0
        %2053 = vmatprep.subr.mxu0 0.0
        %2054 = vmatpush1.xpose.msra.mxu0 0.0
        %2055 = vmatprep.subr.mxu0 0.0
        %2056 = vmatpush1.xpose.msra.mxu0 0.0
        %2057 = vmatprep.subr.mxu0 0.0
        %2058 = vmatpush1.xpose.msra.mxu0 0.0
        %2059 = vmatprep.subr.mxu0 0.0
        %2060 = vmatpush1.xpose.msra.mxu0 0.0
        %2061 = vmatprep.subr.mxu0 0.0
        %2062 = vmatpush1.xpose.msra.mxu0 0.0
        %2063 = vmatprep.subr.mxu0 0.0
        %2064 = vmatpush1.xpose.msra.mxu0 0.0
        %2065 = vmatprep.subr.mxu0 0.0
        %2066 = vmatpush1.xpose.msra.mxu0 0.0
        %2067 = vmatprep.subr.mxu0 0.0
        %2068 = vmatpush1.xpose.msra.mxu0 0.0
        %2069 = vmatprep.subr.mxu0 0.0
        %2070 = vmatpush1.xpose.msra.mxu0 0.0
        %2071 = vmatprep.subr.mxu0 0.0
        %2072 = vmatpush1.xpose.msra.mxu0 0.0
        %2073 = vmatprep.mubr.f32.mxu0 0.0
        %2074 = vmatmul.mubr.f32.gmra.mrb[0].mxu0 %v2004
        %v2075 = vpop.f32.mrb[0].mxu0
        %v2076 = vadd.f32 %v1357, %v2075
        %v2077 = vpop.f32.mrb[0].mxu0
        %2078 = vdwg.mxu0
        %v2080 = vsel %vm1926, %v1628, 0
        %v2083 = vsel %vm1926, %v1776, 0
        %2085 = vmatprep.subr.mxu0 0.0
        %2086 = vmatpush1.xpose.msra.mxu0 %v2083
        %2087 = vmatprep.subr.mxu0 0.0
        %2088 = vmatpush1.xpose.msra.mxu0 0.0
        %2089 = vmatprep.subr.mxu0 0.0
        %2090 = vmatpush1.xpose.msra.mxu0 0.0
        %2091 = vmatprep.subr.mxu0 0.0
        %2092 = vmatpush1.xpose.msra.mxu0 0.0
        %2093 = vmatprep.subr.mxu0 0.0
        %2094 = vmatpush1.xpose.msra.mxu0 0.0
        %2095 = vmatprep.subr.mxu0 0.0
        %2096 = vmatpush1.xpose.msra.mxu0 0.0
        %2097 = vmatprep.subr.mxu0 0.0
        %2098 = vmatpush1.xpose.msra.mxu0 0.0
        %2099 = vmatprep.subr.mxu0 0.0
        %2100 = vmatpush1.xpose.msra.mxu0 0.0
        %2101 = vmatprep.subr.mxu0 0.0
        %2102 = vmatpush1.xpose.msra.mxu0 0.0
        %2103 = vmatprep.subr.mxu0 0.0
        %2104 = vmatpush1.xpose.msra.mxu0 0.0
        %2105 = vmatprep.subr.mxu0 0.0
        %2106 = vmatpush1.xpose.msra.mxu0 0.0
        %2107 = vmatprep.subr.mxu0 0.0
        %2108 = vmatpush1.xpose.msra.mxu0 0.0
        %2109 = vmatprep.subr.mxu0 0.0
        %2110 = vmatpush1.xpose.msra.mxu0 0.0
        %2111 = vmatprep.subr.mxu0 0.0
        %2112 = vmatpush1.xpose.msra.mxu0 0.0
        %2113 = vmatprep.subr.mxu0 0.0
        %2114 = vmatpush1.xpose.msra.mxu0 0.0
        %2115 = vmatprep.subr.mxu0 0.0
        %2116 = vmatpush1.xpose.msra.mxu0 0.0
        %2117 = vmatprep.subr.mxu0 0.0
        %2118 = vmatpush1.xpose.msra.mxu0 0.0
        %2119 = vmatprep.subr.mxu0 0.0
        %2120 = vmatpush1.xpose.msra.mxu0 0.0
        %2121 = vmatprep.subr.mxu0 0.0
        %2122 = vmatpush1.xpose.msra.mxu0 0.0
        %2123 = vmatprep.subr.mxu0 0.0
        %2124 = vmatpush1.xpose.msra.mxu0 0.0
        %2125 = vmatprep.subr.mxu0 0.0
        %2126 = vmatpush1.xpose.msra.mxu0 0.0
        %2127 = vmatprep.subr.mxu0 0.0
        %2128 = vmatpush1.xpose.msra.mxu0 0.0
        %2129 = vmatprep.subr.mxu0 0.0
        %2130 = vmatpush1.xpose.msra.mxu0 0.0
        %2131 = vmatprep.subr.mxu0 0.0
        %2132 = vmatpush1.xpose.msra.mxu0 0.0
        %2133 = vmatprep.subr.mxu0 0.0
        %2134 = vmatpush1.xpose.msra.mxu0 0.0
        %2135 = vmatprep.subr.mxu0 0.0
        %2136 = vmatpush1.xpose.msra.mxu0 0.0
        %2137 = vmatprep.subr.mxu0 0.0
        %2138 = vmatpush1.xpose.msra.mxu0 0.0
        %2139 = vmatprep.subr.mxu0 0.0
        %2140 = vmatpush1.xpose.msra.mxu0 0.0
        %2141 = vmatprep.subr.mxu0 0.0
        %2142 = vmatpush1.xpose.msra.mxu0 0.0
        %2143 = vmatprep.subr.mxu0 0.0
        %2144 = vmatpush1.xpose.msra.mxu0 0.0
        %2145 = vmatprep.subr.mxu0 0.0
        %2146 = vmatpush1.xpose.msra.mxu0 0.0
        %2147 = vmatprep.subr.mxu0 0.0
        %2148 = vmatpush1.xpose.msra.mxu0 0.0
        %2149 = vmatprep.mubr.f32.mxu0 0.0
        %2150 = vmatmul.mubr.f32.gmra.mrb[0].mxu0 %v2080
        %v2151 = vpop.f32.mrb[0].mxu0
        %v2152 = vadd.f32 %v1357, %v2151
        %v2153 = vpop.f32.mrb[0].mxu0
        %2154 = vdwg.mxu0
        %v2156 = vsel %vm1926, %v1629, 0
        %v2159 = vsel %vm1926, %v1777, 0
        %2161 = vmatprep.subr.mxu0 0.0
        %2162 = vmatpush1.xpose.msra.mxu0 %v2159
        %2163 = vmatprep.subr.mxu0 0.0
        %2164 = vmatpush1.xpose.msra.mxu0 0.0
        %2165 = vmatprep.subr.mxu0 0.0
        %2166 = vmatpush1.xpose.msra.mxu0 0.0
        %2167 = vmatprep.subr.mxu0 0.0
        %2168 = vmatpush1.xpose.msra.mxu0 0.0
        %2169 = vmatprep.subr.mxu0 0.0
        %2170 = vmatpush1.xpose.msra.mxu0 0.0
        %2171 = vmatprep.subr.mxu0 0.0
        %2172 = vmatpush1.xpose.msra.mxu0 0.0
        %2173 = vmatprep.subr.mxu0 0.0
        %2174 = vmatpush1.xpose.msra.mxu0 0.0
        %2175 = vmatprep.subr.mxu0 0.0
        %2176 = vmatpush1.xpose.msra.mxu0 0.0
        %2177 = vmatprep.subr.mxu0 0.0
        %2178 = vmatpush1.xpose.msra.mxu0 0.0
        %2179 = vmatprep.subr.mxu0 0.0
        %2180 = vmatpush1.xpose.msra.mxu0 0.0
        %2181 = vmatprep.subr.mxu0 0.0
        %2182 = vmatpush1.xpose.msra.mxu0 0.0
        %2183 = vmatprep.subr.mxu0 0.0
        %2184 = vmatpush1.xpose.msra.mxu0 0.0
        %2185 = vmatprep.subr.mxu0 0.0
        %2186 = vmatpush1.xpose.msra.mxu0 0.0
        %2187 = vmatprep.subr.mxu0 0.0
        %2188 = vmatpush1.xpose.msra.mxu0 0.0
        %2189 = vmatprep.subr.mxu0 0.0
        %2190 = vmatpush1.xpose.msra.mxu0 0.0
        %2191 = vmatprep.subr.mxu0 0.0
        %2192 = vmatpush1.xpose.msra.mxu0 0.0
        %2193 = vmatprep.subr.mxu0 0.0
        %2194 = vmatpush1.xpose.msra.mxu0 0.0
        %2195 = vmatprep.subr.mxu0 0.0
        %2196 = vmatpush1.xpose.msra.mxu0 0.0
        %2197 = vmatprep.subr.mxu0 0.0
        %2198 = vmatpush1.xpose.msra.mxu0 0.0
        %2199 = vmatprep.subr.mxu0 0.0
        %2200 = vmatpush1.xpose.msra.mxu0 0.0
        %2201 = vmatprep.subr.mxu0 0.0
        %2202 = vmatpush1.xpose.msra.mxu0 0.0
        %2203 = vmatprep.subr.mxu0 0.0
        %2204 = vmatpush1.xpose.msra.mxu0 0.0
        %2205 = vmatprep.subr.mxu0 0.0
        %2206 = vmatpush1.xpose.msra.mxu0 0.0
        %2207 = vmatprep.subr.mxu0 0.0
        %2208 = vmatpush1.xpose.msra.mxu0 0.0
        %2209 = vmatprep.subr.mxu0 0.0
        %2210 = vmatpush1.xpose.msra.mxu0 0.0
        %2211 = vmatprep.subr.mxu0 0.0
        %2212 = vmatpush1.xpose.msra.mxu0 0.0
        %2213 = vmatprep.subr.mxu0 0.0
        %2214 = vmatpush1.xpose.msra.mxu0 0.0
        %2215 = vmatprep.subr.mxu0 0.0
        %2216 = vmatpush1.xpose.msra.mxu0 0.0
        %2217 = vmatprep.subr.mxu0 0.0
        %2218 = vmatpush1.xpose.msra.mxu0 0.0
        %2219 = vmatprep.subr.mxu0 0.0
        %2220 = vmatpush1.xpose.msra.mxu0 0.0
        %2221 = vmatprep.subr.mxu0 0.0
        %2222 = vmatpush1.xpose.msra.mxu0 0.0
        %2223 = vmatprep.subr.mxu0 0.0
        %2224 = vmatpush1.xpose.msra.mxu0 0.0
        %2225 = vmatprep.mubr.f32.mxu0 0.0
        %2226 = vmatmul.mubr.f32.gmra.mrb[0].mxu0 %v2156
        %v2227 = vpop.f32.mrb[0].mxu0
        %v2228 = vadd.f32 %v1357, %v2227
        %v2229 = vpop.f32.mrb[0].mxu0
        %2230 = vdwg.mxu0
        %v2231 = vsel %vm1926, %v2000, -inf
        %2232 = vmax.xlane.f32.xlu0 %v2231
        %v2233 = vpop.xlane.xlu0 %2232
        %v2234 = vsel %vm1926, %v2076, -inf
        %2235 = vmax.xlane.f32.xlu0 %v2234
        %v2236 = vpop.xlane.xlu0 %2235
        %v2237 = vsel %vm1926, %v2152, -inf
        %2238 = vmax.xlane.f32.xlu0 %v2237
        %v2239 = vpop.xlane.xlu0 %2238
        %v2240 = vsel %vm1926, %v2228, -inf
        %2241 = vmax.xlane.f32.xlu0 %v2240
        %v2242 = vpop.xlane.xlu0 %2241
        %v2243 = vsub.f32 %v2000, %v2233
        %v2244 = vsub.f32 %v2076, %v2236
        %v2245 = vsub.f32 %v2152, %v2239
        %v2246 = vsub.f32 %v2228, %v2242
        %v2247 = vmul.f32 %v2243, 1.442695
        %v2248 = vpow.pop %v2247
        %v2249 = vmul.f32 %v2244, 1.442695
        %v2250 = vpow.pop %v2249
        %v2251 = vmul.f32 %v2245, 1.442695
        %v2252 = vpow.pop %v2251
        %v2253 = vmul.f32 %v2246, 1.442695
        %v2254 = vpow.pop %v2253
        %v2255 = vsel %vm1926, %v2248, 0.0
        %2256 = vadd.xlane.f32.xlu0 %v2255
        %v2257 = vpop.xlane.xlu0 %2256
        %v2258 = vsel %vm1926, %v2250, 0.0
        %2259 = vadd.xlane.f32.xlu0 %v2258
        %v2260 = vpop.xlane.xlu0 %2259
        %v2261 = vsel %vm1926, %v2252, 0.0
        %2262 = vadd.xlane.f32.xlu0 %v2261
        %v2263 = vpop.xlane.xlu0 %2262
        %v2264 = vsel %vm1926, %v2254, 0.0
        %2265 = vadd.xlane.f32.xlu0 %v2264
        %v2266 = vpop.xlane.xlu0 %2265
        %v2267 = vrcp.pop %v2257
        %v2268 = vrcp.pop %v2260
        %v2269 = vrcp.pop %v2263
        %v2270 = vrcp.pop %v2266
        %v2271 = vmul.f32 %v2248, %v2267
        %v2272 = vmul.f32 %v2250, %v2268
        %v2273 = vmul.f32 %v2252, %v2269
        %v2274 = vmul.f32 %v2254, %v2270
        %2275 = vxpose.xlu0.b32.start [1/16] %v1922, 128
        %2276 = vxpose.xlu0.b32.cont [2/16] 0.0, 128
        %2277 = vxpose.xlu0.b32.cont [3/16] 0.0, 128
        %2278 = vxpose.xlu0.b32.cont [4/16] 0.0, 128
        %2279 = vxpose.xlu0.b32.cont [5/16] 0.0, 128
        %2280 = vxpose.xlu0.b32.cont [6/16] 0.0, 128
        %2281 = vxpose.xlu0.b32.cont [7/16] 0.0, 128
        %2282 = vxpose.xlu0.b32.cont [8/16] 0.0, 128
        %2283 = vxpose.xlu0.b32.cont [9/16] 0.0, 128
        %2284 = vxpose.xlu0.b32.cont [10/16] 0.0, 128
        %2285 = vxpose.xlu0.b32.cont [11/16] 0.0, 128
        %2286 = vxpose.xlu0.b32.cont [12/16] 0.0, 128
        %2287 = vxpose.xlu0.b32.cont [13/16] 0.0, 128
        %2288 = vxpose.xlu0.b32.cont [14/16] 0.0, 128
        %2289 = vxpose.xlu0.b32.cont [15/16] 0.0, 128
        %2290 = vxpose.xlu0.b32.end [16/16] 0.0, 128
        %v2291 = vpop.trf.xlu0
        %v2292 = vpop.trf.xlu0
        %v2293 = vpop.trf.xlu0
        %v2294 = vpop.trf.xlu0
        %v2295 = vpop.trf.xlu0
        %v2296 = vpop.trf.xlu0
        %v2297 = vpop.trf.xlu0
        %v2298 = vpop.trf.xlu0
        %v2299 = vpop.trf.xlu0
        %v2300 = vpop.trf.xlu0
        %v2301 = vpop.trf.xlu0
        %v2302 = vpop.trf.xlu0
        %v2303 = vpop.trf.xlu0
        %v2304 = vpop.trf.xlu0
        %v2305 = vpop.trf.xlu0
        %v2306 = vpop.trf.xlu0
        %v2308 = vsel %vm1926, %v2291, 0
        %v2311 = vsel %vm1926, %v2271, 0
        %2313 = vmatprep.subr.mxu0 0.0
        %2314 = vmatpush1.xpose.msra.mxu0 %v2311
        %2315 = vmatprep.subr.mxu0 0.0
        %2316 = vmatpush1.xpose.msra.mxu0 0.0
        %2317 = vmatprep.subr.mxu0 0.0
        %2318 = vmatpush1.xpose.msra.mxu0 0.0
        %2319 = vmatprep.subr.mxu0 0.0
        %2320 = vmatpush1.xpose.msra.mxu0 0.0
        %2321 = vmatprep.subr.mxu0 0.0
        %2322 = vmatpush1.xpose.msra.mxu0 0.0
        %2323 = vmatprep.subr.mxu0 0.0
        %2324 = vmatpush1.xpose.msra.mxu0 0.0
        %2325 = vmatprep.subr.mxu0 0.0
        %2326 = vmatpush1.xpose.msra.mxu0 0.0
        %2327 = vmatprep.subr.mxu0 0.0
        %2328 = vmatpush1.xpose.msra.mxu0 0.0
        %2329 = vmatprep.subr.mxu0 0.0
        %2330 = vmatpush1.xpose.msra.mxu0 0.0
        %2331 = vmatprep.subr.mxu0 0.0
        %2332 = vmatpush1.xpose.msra.mxu0 0.0
        %2333 = vmatprep.subr.mxu0 0.0
        %2334 = vmatpush1.xpose.msra.mxu0 0.0
        %2335 = vmatprep.subr.mxu0 0.0
        %2336 = vmatpush1.xpose.msra.mxu0 0.0
        %2337 = vmatprep.subr.mxu0 0.0
        %2338 = vmatpush1.xpose.msra.mxu0 0.0
        %2339 = vmatprep.subr.mxu0 0.0
        %2340 = vmatpush1.xpose.msra.mxu0 0.0
        %2341 = vmatprep.subr.mxu0 0.0
        %2342 = vmatpush1.xpose.msra.mxu0 0.0
        %2343 = vmatprep.subr.mxu0 0.0
        %2344 = vmatpush1.xpose.msra.mxu0 0.0
        %2345 = vmatprep.subr.mxu0 0.0
        %2346 = vmatpush1.xpose.msra.mxu0 0.0
        %2347 = vmatprep.subr.mxu0 0.0
        %2348 = vmatpush1.xpose.msra.mxu0 0.0
        %2349 = vmatprep.subr.mxu0 0.0
        %2350 = vmatpush1.xpose.msra.mxu0 0.0
        %2351 = vmatprep.subr.mxu0 0.0
        %2352 = vmatpush1.xpose.msra.mxu0 0.0
        %2353 = vmatprep.subr.mxu0 0.0
        %2354 = vmatpush1.xpose.msra.mxu0 0.0
        %2355 = vmatprep.subr.mxu0 0.0
        %2356 = vmatpush1.xpose.msra.mxu0 0.0
        %2357 = vmatprep.subr.mxu0 0.0
        %2358 = vmatpush1.xpose.msra.mxu0 0.0
        %2359 = vmatprep.subr.mxu0 0.0
        %2360 = vmatpush1.xpose.msra.mxu0 0.0
        %2361 = vmatprep.subr.mxu0 0.0
        %2362 = vmatpush1.xpose.msra.mxu0 0.0
        %2363 = vmatprep.subr.mxu0 0.0
        %2364 = vmatpush1.xpose.msra.mxu0 0.0
        %2365 = vmatprep.subr.mxu0 0.0
        %2366 = vmatpush1.xpose.msra.mxu0 0.0
        %2367 = vmatprep.subr.mxu0 0.0
        %2368 = vmatpush1.xpose.msra.mxu0 0.0
        %2369 = vmatprep.subr.mxu0 0.0
        %2370 = vmatpush1.xpose.msra.mxu0 0.0
        %2371 = vmatprep.subr.mxu0 0.0
        %2372 = vmatpush1.xpose.msra.mxu0 0.0
        %2373 = vmatprep.subr.mxu0 0.0
        %2374 = vmatpush1.xpose.msra.mxu0 0.0
        %2375 = vmatprep.subr.mxu0 0.0
        %2376 = vmatpush1.xpose.msra.mxu0 0.0
        %2377 = vmatprep.mubr.f32.mxu0 0.0
        %2378 = vmatmul.mubr.f32.gmra.mrb[0].mxu0 %v2308
        %v2379 = vpop.f32.mrb[0].mxu0
        %v2380 = vadd.f32 0.0, %v2379
        %v2381 = vpop.f32.mrb[0].mxu0
        %2382 = vdwg.mxu0
        %2383 = vxpose.xlu0.b32.start [1/16] %v1923, 128
        %2384 = vxpose.xlu0.b32.cont [2/16] 0.0, 128
        %2385 = vxpose.xlu0.b32.cont [3/16] 0.0, 128
        %2386 = vxpose.xlu0.b32.cont [4/16] 0.0, 128
        %2387 = vxpose.xlu0.b32.cont [5/16] 0.0, 128
        %2388 = vxpose.xlu0.b32.cont [6/16] 0.0, 128
        %2389 = vxpose.xlu0.b32.cont [7/16] 0.0, 128
        %2390 = vxpose.xlu0.b32.cont [8/16] 0.0, 128
        %2391 = vxpose.xlu0.b32.cont [9/16] 0.0, 128
        %2392 = vxpose.xlu0.b32.cont [10/16] 0.0, 128
        %2393 = vxpose.xlu0.b32.cont [11/16] 0.0, 128
        %2394 = vxpose.xlu0.b32.cont [12/16] 0.0, 128
        %2395 = vxpose.xlu0.b32.cont [13/16] 0.0, 128
        %2396 = vxpose.xlu0.b32.cont [14/16] 0.0, 128
        %2397 = vxpose.xlu0.b32.cont [15/16] 0.0, 128
        %2398 = vxpose.xlu0.b32.end [16/16] 0.0, 128
        %v2399 = vpop.trf.xlu0
        %v2400 = vpop.trf.xlu0
        %v2401 = vpop.trf.xlu0
        %v2402 = vpop.trf.xlu0
        %v2403 = vpop.trf.xlu0
        %v2404 = vpop.trf.xlu0
        %v2405 = vpop.trf.xlu0
        %v2406 = vpop.trf.xlu0
        %v2407 = vpop.trf.xlu0
        %v2408 = vpop.trf.xlu0
        %v2409 = vpop.trf.xlu0
        %v2410 = vpop.trf.xlu0
        %v2411 = vpop.trf.xlu0
        %v2412 = vpop.trf.xlu0
        %v2413 = vpop.trf.xlu0
        %v2414 = vpop.trf.xlu0
        %v2416 = vsel %vm1926, %v2399, 0
        %v2419 = vsel %vm1926, %v2272, 0
        %2421 = vmatprep.subr.mxu0 0.0
        %2422 = vmatpush1.xpose.msra.mxu0 %v2419
        %2423 = vmatprep.subr.mxu0 0.0
        %2424 = vmatpush1.xpose.msra.mxu0 0.0
        %2425 = vmatprep.subr.mxu0 0.0
        %2426 = vmatpush1.xpose.msra.mxu0 0.0
        %2427 = vmatprep.subr.mxu0 0.0
        %2428 = vmatpush1.xpose.msra.mxu0 0.0
        %2429 = vmatprep.subr.mxu0 0.0
        %2430 = vmatpush1.xpose.msra.mxu0 0.0
        %2431 = vmatprep.subr.mxu0 0.0
        %2432 = vmatpush1.xpose.msra.mxu0 0.0
        %2433 = vmatprep.subr.mxu0 0.0
        %2434 = vmatpush1.xpose.msra.mxu0 0.0
        %2435 = vmatprep.subr.mxu0 0.0
        %2436 = vmatpush1.xpose.msra.mxu0 0.0
        %2437 = vmatprep.subr.mxu0 0.0
        %2438 = vmatpush1.xpose.msra.mxu0 0.0
        %2439 = vmatprep.subr.mxu0 0.0
        %2440 = vmatpush1.xpose.msra.mxu0 0.0
        %2441 = vmatprep.subr.mxu0 0.0
        %2442 = vmatpush1.xpose.msra.mxu0 0.0
        %2443 = vmatprep.subr.mxu0 0.0
        %2444 = vmatpush1.xpose.msra.mxu0 0.0
        %2445 = vmatprep.subr.mxu0 0.0
        %2446 = vmatpush1.xpose.msra.mxu0 0.0
        %2447 = vmatprep.subr.mxu0 0.0
        %2448 = vmatpush1.xpose.msra.mxu0 0.0
        %2449 = vmatprep.subr.mxu0 0.0
        %2450 = vmatpush1.xpose.msra.mxu0 0.0
        %2451 = vmatprep.subr.mxu0 0.0
        %2452 = vmatpush1.xpose.msra.mxu0 0.0
        %2453 = vmatprep.subr.mxu0 0.0
        %2454 = vmatpush1.xpose.msra.mxu0 0.0
        %2455 = vmatprep.subr.mxu0 0.0
        %2456 = vmatpush1.xpose.msra.mxu0 0.0
        %2457 = vmatprep.subr.mxu0 0.0
        %2458 = vmatpush1.xpose.msra.mxu0 0.0
        %2459 = vmatprep.subr.mxu0 0.0
        %2460 = vmatpush1.xpose.msra.mxu0 0.0
        %2461 = vmatprep.subr.mxu0 0.0
        %2462 = vmatpush1.xpose.msra.mxu0 0.0
        %2463 = vmatprep.subr.mxu0 0.0
        %2464 = vmatpush1.xpose.msra.mxu0 0.0
        %2465 = vmatprep.subr.mxu0 0.0
        %2466 = vmatpush1.xpose.msra.mxu0 0.0
        %2467 = vmatprep.subr.mxu0 0.0
        %2468 = vmatpush1.xpose.msra.mxu0 0.0
        %2469 = vmatprep.subr.mxu0 0.0
        %2470 = vmatpush1.xpose.msra.mxu0 0.0
        %2471 = vmatprep.subr.mxu0 0.0
        %2472 = vmatpush1.xpose.msra.mxu0 0.0
        %2473 = vmatprep.subr.mxu0 0.0
        %2474 = vmatpush1.xpose.msra.mxu0 0.0
        %2475 = vmatprep.subr.mxu0 0.0
        %2476 = vmatpush1.xpose.msra.mxu0 0.0
        %2477 = vmatprep.subr.mxu0 0.0
        %2478 = vmatpush1.xpose.msra.mxu0 0.0
        %2479 = vmatprep.subr.mxu0 0.0
        %2480 = vmatpush1.xpose.msra.mxu0 0.0
        %2481 = vmatprep.subr.mxu0 0.0
        %2482 = vmatpush1.xpose.msra.mxu0 0.0
        %2483 = vmatprep.subr.mxu0 0.0
        %2484 = vmatpush1.xpose.msra.mxu0 0.0
        %2485 = vmatprep.mubr.f32.mxu0 0.0
        %2486 = vmatmul.mubr.f32.gmra.mrb[0].mxu0 %v2416
        %v2487 = vpop.f32.mrb[0].mxu0
        %v2488 = vadd.f32 0.0, %v2487
        %v2489 = vpop.f32.mrb[0].mxu0
        %2490 = vdwg.mxu0
        %2491 = vxpose.xlu0.b32.start [1/16] %v1924, 128
        %2492 = vxpose.xlu0.b32.cont [2/16] 0.0, 128
        %2493 = vxpose.xlu0.b32.cont [3/16] 0.0, 128
        %2494 = vxpose.xlu0.b32.cont [4/16] 0.0, 128
        %2495 = vxpose.xlu0.b32.cont [5/16] 0.0, 128
        %2496 = vxpose.xlu0.b32.cont [6/16] 0.0, 128
        %2497 = vxpose.xlu0.b32.cont [7/16] 0.0, 128
        %2498 = vxpose.xlu0.b32.cont [8/16] 0.0, 128
        %2499 = vxpose.xlu0.b32.cont [9/16] 0.0, 128
        %2500 = vxpose.xlu0.b32.cont [10/16] 0.0, 128
        %2501 = vxpose.xlu0.b32.cont [11/16] 0.0, 128
        %2502 = vxpose.xlu0.b32.cont [12/16] 0.0, 128
        %2503 = vxpose.xlu0.b32.cont [13/16] 0.0, 128
        %2504 = vxpose.xlu0.b32.cont [14/16] 0.0, 128
        %2505 = vxpose.xlu0.b32.cont [15/16] 0.0, 128
        %2506 = vxpose.xlu0.b32.end [16/16] 0.0, 128
        %v2507 = vpop.trf.xlu0
        %v2508 = vpop.trf.xlu0
        %v2509 = vpop.trf.xlu0
        %v2510 = vpop.trf.xlu0
        %v2511 = vpop.trf.xlu0
        %v2512 = vpop.trf.xlu0
        %v2513 = vpop.trf.xlu0
        %v2514 = vpop.trf.xlu0
        %v2515 = vpop.trf.xlu0
        %v2516 = vpop.trf.xlu0
        %v2517 = vpop.trf.xlu0
        %v2518 = vpop.trf.xlu0
        %v2519 = vpop.trf.xlu0
        %v2520 = vpop.trf.xlu0
        %v2521 = vpop.trf.xlu0
        %v2522 = vpop.trf.xlu0
        %v2524 = vsel %vm1926, %v2507, 0
        %v2527 = vsel %vm1926, %v2273, 0
        %2529 = vmatprep.subr.mxu0 0.0
        %2530 = vmatpush1.xpose.msra.mxu0 %v2527
        %2531 = vmatprep.subr.mxu0 0.0
        %2532 = vmatpush1.xpose.msra.mxu0 0.0
        %2533 = vmatprep.subr.mxu0 0.0
        %2534 = vmatpush1.xpose.msra.mxu0 0.0
        %2535 = vmatprep.subr.mxu0 0.0
        %2536 = vmatpush1.xpose.msra.mxu0 0.0
        %2537 = vmatprep.subr.mxu0 0.0
        %2538 = vmatpush1.xpose.msra.mxu0 0.0
        %2539 = vmatprep.subr.mxu0 0.0
        %2540 = vmatpush1.xpose.msra.mxu0 0.0
        %2541 = vmatprep.subr.mxu0 0.0
        %2542 = vmatpush1.xpose.msra.mxu0 0.0
        %2543 = vmatprep.subr.mxu0 0.0
        %2544 = vmatpush1.xpose.msra.mxu0 0.0
        %2545 = vmatprep.subr.mxu0 0.0
        %2546 = vmatpush1.xpose.msra.mxu0 0.0
        %2547 = vmatprep.subr.mxu0 0.0
        %2548 = vmatpush1.xpose.msra.mxu0 0.0
        %2549 = vmatprep.subr.mxu0 0.0
        %2550 = vmatpush1.xpose.msra.mxu0 0.0
        %2551 = vmatprep.subr.mxu0 0.0
        %2552 = vmatpush1.xpose.msra.mxu0 0.0
        %2553 = vmatprep.subr.mxu0 0.0
        %2554 = vmatpush1.xpose.msra.mxu0 0.0
        %2555 = vmatprep.subr.mxu0 0.0
        %2556 = vmatpush1.xpose.msra.mxu0 0.0
        %2557 = vmatprep.subr.mxu0 0.0
        %2558 = vmatpush1.xpose.msra.mxu0 0.0
        %2559 = vmatprep.subr.mxu0 0.0
        %2560 = vmatpush1.xpose.msra.mxu0 0.0
        %2561 = vmatprep.subr.mxu0 0.0
        %2562 = vmatpush1.xpose.msra.mxu0 0.0
        %2563 = vmatprep.subr.mxu0 0.0
        %2564 = vmatpush1.xpose.msra.mxu0 0.0
        %2565 = vmatprep.subr.mxu0 0.0
        %2566 = vmatpush1.xpose.msra.mxu0 0.0
        %2567 = vmatprep.subr.mxu0 0.0
        %2568 = vmatpush1.xpose.msra.mxu0 0.0
        %2569 = vmatprep.subr.mxu0 0.0
        %2570 = vmatpush1.xpose.msra.mxu0 0.0
        %2571 = vmatprep.subr.mxu0 0.0
        %2572 = vmatpush1.xpose.msra.mxu0 0.0
        %2573 = vmatprep.subr.mxu0 0.0
        %2574 = vmatpush1.xpose.msra.mxu0 0.0
        %2575 = vmatprep.subr.mxu0 0.0
        %2576 = vmatpush1.xpose.msra.mxu0 0.0
        %2577 = vmatprep.subr.mxu0 0.0
        %2578 = vmatpush1.xpose.msra.mxu0 0.0
        %2579 = vmatprep.subr.mxu0 0.0
        %2580 = vmatpush1.xpose.msra.mxu0 0.0
        %2581 = vmatprep.subr.mxu0 0.0
        %2582 = vmatpush1.xpose.msra.mxu0 0.0
        %2583 = vmatprep.subr.mxu0 0.0
        %2584 = vmatpush1.xpose.msra.mxu0 0.0
        %2585 = vmatprep.subr.mxu0 0.0
        %2586 = vmatpush1.xpose.msra.mxu0 0.0
        %2587 = vmatprep.subr.mxu0 0.0
        %2588 = vmatpush1.xpose.msra.mxu0 0.0
        %2589 = vmatprep.subr.mxu0 0.0
        %2590 = vmatpush1.xpose.msra.mxu0 0.0
        %2591 = vmatprep.subr.mxu0 0.0
        %2592 = vmatpush1.xpose.msra.mxu0 0.0
        %2593 = vmatprep.mubr.f32.mxu0 0.0
        %2594 = vmatmul.mubr.f32.gmra.mrb[0].mxu0 %v2524
        %v2595 = vpop.f32.mrb[0].mxu0
        %v2596 = vadd.f32 0.0, %v2595
        %v2597 = vpop.f32.mrb[0].mxu0
        %2598 = vdwg.mxu0
        %2599 = vxpose.xlu0.b32.start [1/16] %v1925, 128
        %2600 = vxpose.xlu0.b32.cont [2/16] 0.0, 128
        %2601 = vxpose.xlu0.b32.cont [3/16] 0.0, 128
        %2602 = vxpose.xlu0.b32.cont [4/16] 0.0, 128
        %2603 = vxpose.xlu0.b32.cont [5/16] 0.0, 128
        %2604 = vxpose.xlu0.b32.cont [6/16] 0.0, 128
        %2605 = vxpose.xlu0.b32.cont [7/16] 0.0, 128
        %2606 = vxpose.xlu0.b32.cont [8/16] 0.0, 128
        %2607 = vxpose.xlu0.b32.cont [9/16] 0.0, 128
        %2608 = vxpose.xlu0.b32.cont [10/16] 0.0, 128
        %2609 = vxpose.xlu0.b32.cont [11/16] 0.0, 128
        %2610 = vxpose.xlu0.b32.cont [12/16] 0.0, 128
        %2611 = vxpose.xlu0.b32.cont [13/16] 0.0, 128
        %2612 = vxpose.xlu0.b32.cont [14/16] 0.0, 128
        %2613 = vxpose.xlu0.b32.cont [15/16] 0.0, 128
        %2614 = vxpose.xlu0.b32.end [16/16] 0.0, 128
        %v2615 = vpop.trf.xlu0
        %v2616 = vpop.trf.xlu0
        %v2617 = vpop.trf.xlu0
        %v2618 = vpop.trf.xlu0
        %v2619 = vpop.trf.xlu0
        %v2620 = vpop.trf.xlu0
        %v2621 = vpop.trf.xlu0
        %v2622 = vpop.trf.xlu0
        %v2623 = vpop.trf.xlu0
        %v2624 = vpop.trf.xlu0
        %v2625 = vpop.trf.xlu0
        %v2626 = vpop.trf.xlu0
        %v2627 = vpop.trf.xlu0
        %v2628 = vpop.trf.xlu0
        %v2629 = vpop.trf.xlu0
        %v2630 = vpop.trf.xlu0
        %v2632 = vsel %vm1926, %v2615, 0
        %v2635 = vsel %vm1926, %v2274, 0
        %2637 = vmatprep.subr.mxu0 0.0
        %2638 = vmatpush1.xpose.msra.mxu0 %v2635
        %2639 = vmatprep.subr.mxu0 0.0
        %2640 = vmatpush1.xpose.msra.mxu0 0.0
        %2641 = vmatprep.subr.mxu0 0.0
        %2642 = vmatpush1.xpose.msra.mxu0 0.0
        %2643 = vmatprep.subr.mxu0 0.0
        %2644 = vmatpush1.xpose.msra.mxu0 0.0
        %2645 = vmatprep.subr.mxu0 0.0
        %2646 = vmatpush1.xpose.msra.mxu0 0.0
        %2647 = vmatprep.subr.mxu0 0.0
        %2648 = vmatpush1.xpose.msra.mxu0 0.0
        %2649 = vmatprep.subr.mxu0 0.0
        %2650 = vmatpush1.xpose.msra.mxu0 0.0
        %2651 = vmatprep.subr.mxu0 0.0
        %2652 = vmatpush1.xpose.msra.mxu0 0.0
        %2653 = vmatprep.subr.mxu0 0.0
        %2654 = vmatpush1.xpose.msra.mxu0 0.0
        %2655 = vmatprep.subr.mxu0 0.0
        %2656 = vmatpush1.xpose.msra.mxu0 0.0
        %2657 = vmatprep.subr.mxu0 0.0
        %2658 = vmatpush1.xpose.msra.mxu0 0.0
        %2659 = vmatprep.subr.mxu0 0.0
        %2660 = vmatpush1.xpose.msra.mxu0 0.0
        %2661 = vmatprep.subr.mxu0 0.0
        %2662 = vmatpush1.xpose.msra.mxu0 0.0
        %2663 = vmatprep.subr.mxu0 0.0
        %2664 = vmatpush1.xpose.msra.mxu0 0.0
        %2665 = vmatprep.subr.mxu0 0.0
        %2666 = vmatpush1.xpose.msra.mxu0 0.0
        %2667 = vmatprep.subr.mxu0 0.0
        %2668 = vmatpush1.xpose.msra.mxu0 0.0
        %2669 = vmatprep.subr.mxu0 0.0
        %2670 = vmatpush1.xpose.msra.mxu0 0.0
        %2671 = vmatprep.subr.mxu0 0.0
        %2672 = vmatpush1.xpose.msra.mxu0 0.0
        %2673 = vmatprep.subr.mxu0 0.0
        %2674 = vmatpush1.xpose.msra.mxu0 0.0
        %2675 = vmatprep.subr.mxu0 0.0
        %2676 = vmatpush1.xpose.msra.mxu0 0.0
        %2677 = vmatprep.subr.mxu0 0.0
        %2678 = vmatpush1.xpose.msra.mxu0 0.0
        %2679 = vmatprep.subr.mxu0 0.0
        %2680 = vmatpush1.xpose.msra.mxu0 0.0
        %2681 = vmatprep.subr.mxu0 0.0
        %2682 = vmatpush1.xpose.msra.mxu0 0.0
        %2683 = vmatprep.subr.mxu0 0.0
        %2684 = vmatpush1.xpose.msra.mxu0 0.0
        %2685 = vmatprep.subr.mxu0 0.0
        %2686 = vmatpush1.xpose.msra.mxu0 0.0
        %2687 = vmatprep.subr.mxu0 0.0
        %2688 = vmatpush1.xpose.msra.mxu0 0.0
        %2689 = vmatprep.subr.mxu0 0.0
        %2690 = vmatpush1.xpose.msra.mxu0 0.0
        %2691 = vmatprep.subr.mxu0 0.0
        %2692 = vmatpush1.xpose.msra.mxu0 0.0
        %2693 = vmatprep.subr.mxu0 0.0
        %2694 = vmatpush1.xpose.msra.mxu0 0.0
        %2695 = vmatprep.subr.mxu0 0.0
        %2696 = vmatpush1.xpose.msra.mxu0 0.0
        %2697 = vmatprep.subr.mxu0 0.0
        %2698 = vmatpush1.xpose.msra.mxu0 0.0
        %2699 = vmatprep.subr.mxu0 0.0
        %2700 = vmatpush1.xpose.msra.mxu0 0.0
        %2701 = vmatprep.mubr.f32.mxu0 0.0
        %2702 = vmatmul.mubr.f32.gmra.mrb[0].mxu0 %v2632
        %v2703 = vpop.f32.mrb[0].mxu0
        %v2704 = vadd.f32 0.0, %v2703
        %v2705 = vpop.f32.mrb[0].mxu0
        %2706 = vdwg.mxu0
        %2707 = vxpose.xlu0.b32.start [1/16] %v2380, 128
        %2708 = vxpose.xlu0.b32.cont [2/16] 0.0, 128
        %2709 = vxpose.xlu0.b32.cont [3/16] 0.0, 128
        %2710 = vxpose.xlu0.b32.cont [4/16] 0.0, 128
        %2711 = vxpose.xlu0.b32.cont [5/16] 0.0, 128
        %2712 = vxpose.xlu0.b32.cont [6/16] 0.0, 128
        %2713 = vxpose.xlu0.b32.cont [7/16] 0.0, 128
        %2714 = vxpose.xlu0.b32.cont [8/16] 0.0, 128
        %2715 = vxpose.xlu0.b32.cont [9/16] 0.0, 128
        %2716 = vxpose.xlu0.b32.cont [10/16] 0.0, 128
        %2717 = vxpose.xlu0.b32.cont [11/16] 0.0, 128
        %2718 = vxpose.xlu0.b32.cont [12/16] 0.0, 128
        %2719 = vxpose.xlu0.b32.cont [13/16] 0.0, 128
        %2720 = vxpose.xlu0.b32.cont [14/16] 0.0, 128
        %2721 = vxpose.xlu0.b32.cont [15/16] 0.0, 128
        %2722 = vxpose.xlu0.b32.end [16/16] 0.0, 128
        %v2723 = vpop.trf.xlu0
        %v2724 = vpop.trf.xlu0
        %v2725 = vpop.trf.xlu0
        %v2726 = vpop.trf.xlu0
        %v2727 = vpop.trf.xlu0
        %v2728 = vpop.trf.xlu0
        %v2729 = vpop.trf.xlu0
        %v2730 = vpop.trf.xlu0
        %v2731 = vpop.trf.xlu0
        %v2732 = vpop.trf.xlu0
        %v2733 = vpop.trf.xlu0
        %v2734 = vpop.trf.xlu0
        %v2735 = vpop.trf.xlu0
        %v2736 = vpop.trf.xlu0
        %v2737 = vpop.trf.xlu0
        %v2738 = vpop.trf.xlu0
        %2739 = vxpose.xlu0.b32.start [1/16] %v2488, 128
        %2740 = vxpose.xlu0.b32.cont [2/16] 0.0, 128
        %2741 = vxpose.xlu0.b32.cont [3/16] 0.0, 128
        %2742 = vxpose.xlu0.b32.cont [4/16] 0.0, 128
        %2743 = vxpose.xlu0.b32.cont [5/16] 0.0, 128
        %2744 = vxpose.xlu0.b32.cont [6/16] 0.0, 128
        %2745 = vxpose.xlu0.b32.cont [7/16] 0.0, 128
        %2746 = vxpose.xlu0.b32.cont [8/16] 0.0, 128
        %2747 = vxpose.xlu0.b32.cont [9/16] 0.0, 128
        %2748 = vxpose.xlu0.b32.cont [10/16] 0.0, 128
        %2749 = vxpose.xlu0.b32.cont [11/16] 0.0, 128
        %2750 = vxpose.xlu0.b32.cont [12/16] 0.0, 128
        %2751 = vxpose.xlu0.b32.cont [13/16] 0.0, 128
        %2752 = vxpose.xlu0.b32.cont [14/16] 0.0, 128
        %2753 = vxpose.xlu0.b32.cont [15/16] 0.0, 128
        %2754 = vxpose.xlu0.b32.end [16/16] 0.0, 128
        %v2755 = vpop.trf.xlu0
        %v2756 = vpop.trf.xlu0
        %v2757 = vpop.trf.xlu0
        %v2758 = vpop.trf.xlu0
        %v2759 = vpop.trf.xlu0
        %v2760 = vpop.trf.xlu0
        %v2761 = vpop.trf.xlu0
        %v2762 = vpop.trf.xlu0
        %v2763 = vpop.trf.xlu0
        %v2764 = vpop.trf.xlu0
        %v2765 = vpop.trf.xlu0
        %v2766 = vpop.trf.xlu0
        %v2767 = vpop.trf.xlu0
        %v2768 = vpop.trf.xlu0
        %v2769 = vpop.trf.xlu0
        %v2770 = vpop.trf.xlu0
        %2771 = vxpose.xlu0.b32.start [1/16] %v2596, 128
        %2772 = vxpose.xlu0.b32.cont [2/16] 0.0, 128
        %2773 = vxpose.xlu0.b32.cont [3/16] 0.0, 128
        %2774 = vxpose.xlu0.b32.cont [4/16] 0.0, 128
        %2775 = vxpose.xlu0.b32.cont [5/16] 0.0, 128
        %2776 = vxpose.xlu0.b32.cont [6/16] 0.0, 128
        %2777 = vxpose.xlu0.b32.cont [7/16] 0.0, 128
        %2778 = vxpose.xlu0.b32.cont [8/16] 0.0, 128
        %2779 = vxpose.xlu0.b32.cont [9/16] 0.0, 128
        %2780 = vxpose.xlu0.b32.cont [10/16] 0.0, 128
        %2781 = vxpose.xlu0.b32.cont [11/16] 0.0, 128
        %2782 = vxpose.xlu0.b32.cont [12/16] 0.0, 128
        %2783 = vxpose.xlu0.b32.cont [13/16] 0.0, 128
        %2784 = vxpose.xlu0.b32.cont [14/16] 0.0, 128
        %2785 = vxpose.xlu0.b32.cont [15/16] 0.0, 128
        %2786 = vxpose.xlu0.b32.end [16/16] 0.0, 128
        %v2787 = vpop.trf.xlu0
        %v2788 = vpop.trf.xlu0
        %v2789 = vpop.trf.xlu0
        %v2790 = vpop.trf.xlu0
        %v2791 = vpop.trf.xlu0
        %v2792 = vpop.trf.xlu0
        %v2793 = vpop.trf.xlu0
        %v2794 = vpop.trf.xlu0
        %v2795 = vpop.trf.xlu0
        %v2796 = vpop.trf.xlu0
        %v2797 = vpop.trf.xlu0
        %v2798 = vpop.trf.xlu0
        %v2799 = vpop.trf.xlu0
        %v2800 = vpop.trf.xlu0
        %v2801 = vpop.trf.xlu0
        %v2802 = vpop.trf.xlu0
        %2803 = vxpose.xlu0.b32.start [1/16] %v2704, 128
        %2804 = vxpose.xlu0.b32.cont [2/16] 0.0, 128
        %2805 = vxpose.xlu0.b32.cont [3/16] 0.0, 128
        %2806 = vxpose.xlu0.b32.cont [4/16] 0.0, 128
        %2807 = vxpose.xlu0.b32.cont [5/16] 0.0, 128
        %2808 = vxpose.xlu0.b32.cont [6/16] 0.0, 128
        %2809 = vxpose.xlu0.b32.cont [7/16] 0.0, 128
        %2810 = vxpose.xlu0.b32.cont [8/16] 0.0, 128
        %2811 = vxpose.xlu0.b32.cont [9/16] 0.0, 128
        %2812 = vxpose.xlu0.b32.cont [10/16] 0.0, 128
        %2813 = vxpose.xlu0.b32.cont [11/16] 0.0, 128
        %2814 = vxpose.xlu0.b32.cont [12/16] 0.0, 128
        %2815 = vxpose.xlu0.b32.cont [13/16] 0.0, 128
        %2816 = vxpose.xlu0.b32.cont [14/16] 0.0, 128
        %2817 = vxpose.xlu0.b32.cont [15/16] 0.0, 128
        %2818 = vxpose.xlu0.b32.end [16/16] 0.0, 128
        %v2819 = vpop.trf.xlu0
        %v2820 = vpop.trf.xlu0
        %v2821 = vpop.trf.xlu0
        %v2822 = vpop.trf.xlu0
        %v2823 = vpop.trf.xlu0
        %v2824 = vpop.trf.xlu0
        %v2825 = vpop.trf.xlu0
        %v2826 = vpop.trf.xlu0
        %v2827 = vpop.trf.xlu0
        %v2828 = vpop.trf.xlu0
        %v2829 = vpop.trf.xlu0
        %v2830 = vpop.trf.xlu0
        %v2831 = vpop.trf.xlu0
        %v2832 = vpop.trf.xlu0
        %v2833 = vpop.trf.xlu0
        %v2834 = vpop.trf.xlu0
        %v2835 = vcombine.low %v2723, %v2787
        %v2836 = vcombine.high %v2723, %v2787
        %v2838 = vunpack.c.l.s4 1983009808
        %v2839 = vunpack.c.0.s8 %v2838
        %v2840 = vlaneseq
        %v2841 = vshrl.u32 %v2840, 7
        %v2842 = vsub.s32 %v2839, %v2841
        %v2843 = vrot.slane %v2835, %v2842
        %v2845 = vunpack.c.l.s4 1983009808
        %v2846 = vunpack.c.0.s8 %v2845
        %v2847 = vlaneseq
        %v2848 = vshrl.u32 %v2847, 7
        %v2849 = vsub.s32 %v2846, %v2848
        %v2850 = vrot.slane %v2836, %v2849
        %v2851 = vcombine.low %v2755, %v2819
        %v2852 = vcombine.high %v2755, %v2819
        %v2854 = vunpack.c.l.s4 1983009808
        %v2855 = vunpack.c.0.s8 %v2854
        %v2856 = vlaneseq
        %v2857 = vshrl.u32 %v2856, 7
        %v2858 = vsub.s32 %v2855, %v2857
        %v2859 = vrot.slane %v2851, %v2858
        %v2861 = vunpack.c.l.s4 1983009808
        %v2862 = vunpack.c.0.s8 %v2861
        %v2863 = vlaneseq
        %v2864 = vshrl.u32 %v2863, 7
        %v2865 = vsub.s32 %v2862, %v2864
        %v2866 = vrot.slane %v2852, %v2865
        %v2867 = vcombine.low %v2843, %v2859
        %v2868 = vcombine.high %v2843, %v2859
        %v2870 = vunpack.c.l.s4 1934713408
        %v2871 = vunpack.c.0.s8 %v2870
        %v2872 = vlaneseq
        %v2873 = vshrl.u32 %v2872, 7
        %v2874 = vsub.s32 %v2871, %v2873
        %v2875 = vrot.slane %v2867, %v2874
        %v2877 = vunpack.c.l.s4 1934713408
        %v2878 = vunpack.c.0.s8 %v2877
        %v2879 = vlaneseq
        %v2880 = vshrl.u32 %v2879, 7
        %v2881 = vsub.s32 %v2878, %v2880
        %v2882 = vrot.slane %v2868, %v2881
        %v2883 = vcombine.low %v2850, %v2866
        %v2884 = vcombine.high %v2850, %v2866
        %v2886 = vunpack.c.l.s4 1934713408
        %v2887 = vunpack.c.0.s8 %v2886
        %v2888 = vlaneseq
        %v2889 = vshrl.u32 %v2888, 7
        %v2890 = vsub.s32 %v2887, %v2889
        %v2891 = vrot.slane %v2883, %v2890
        %v2893 = vunpack.c.l.s4 1934713408
        %v2894 = vunpack.c.0.s8 %v2893
        %v2895 = vlaneseq
        %v2896 = vshrl.u32 %v2895, 7
        %v2897 = vsub.s32 %v2894, %v2896
        %v2898 = vrot.slane %v2884, %v2897
        %v2899 = vcombine.high %v2875, 0.0
        %v2900 = vcombine.high %v2882, 0.0
        %v2901 = vcombine.high %v2891, 0.0
        %v2902 = vcombine.high %v2898, 0.0
        %v2903 = vcombine.low %v2875, %v2882
        %v2905 = vunpack.c.l.s4 1983009808
        %v2906 = vunpack.c.0.s8 %v2905
        %v2907 = vlaneseq
        %v2908 = vshrl.u32 %v2907, 7
        %v2909 = vsub.s32 %v2906, %v2908
        %v2910 = vrot.slane %v2903, %v2909
        %v2911 = vcombine.low %v2899, %v2900
        %v2913 = vunpack.c.l.s4 1983009808
        %v2914 = vunpack.c.0.s8 %v2913
        %v2915 = vlaneseq
        %v2916 = vshrl.u32 %v2915, 7
        %v2917 = vsub.s32 %v2914, %v2916
        %v2918 = vrot.slane %v2911, %v2917
        %v2919 = vcombine.low %v2891, %v2898
        %v2921 = vunpack.c.l.s4 1983009808
        %v2922 = vunpack.c.0.s8 %v2921
        %v2923 = vlaneseq
        %v2924 = vshrl.u32 %v2923, 7
        %v2925 = vsub.s32 %v2922, %v2924
        %v2926 = vrot.slane %v2919, %v2925
        %v2927 = vcombine.low %v2901, %v2902
        %v2929 = vunpack.c.l.s4 1983009808
        %v2930 = vunpack.c.0.s8 %v2929
        %v2931 = vlaneseq
        %v2932 = vshrl.u32 %v2931, 7
        %v2933 = vsub.s32 %v2930, %v2932
        %v2934 = vrot.slane %v2927, %v2933
        %v2935 = vcombine.low %v2910, %v2918
        %v2936 = vcombine.high %v2910, %v2918
        %v2938 = vunpack.c.l.s4 1934713408
        %v2939 = vunpack.c.0.s8 %v2938
        %v2940 = vlaneseq
        %v2941 = vshrl.u32 %v2940, 7
        %v2942 = vsub.s32 %v2939, %v2941
        %v2943 = vrot.slane %v2935, %v2942
        %v2945 = vunpack.c.l.s4 1934713408
        %v2946 = vunpack.c.0.s8 %v2945
        %v2947 = vlaneseq
        %v2948 = vshrl.u32 %v2947, 7
        %v2949 = vsub.s32 %v2946, %v2948
        %v2950 = vrot.slane %v2936, %v2949
        %v2951 = vcombine.low %v2926, %v2934
        %v2952 = vcombine.high %v2926, %v2934
        %v2954 = vunpack.c.l.s4 1934713408
        %v2955 = vunpack.c.0.s8 %v2954
        %v2956 = vlaneseq
        %v2957 = vshrl.u32 %v2956, 7
        %v2958 = vsub.s32 %v2955, %v2957
        %v2959 = vrot.slane %v2951, %v2958
        %v2961 = vunpack.c.l.s4 1934713408
        %v2962 = vunpack.c.0.s8 %v2961
        %v2963 = vlaneseq
        %v2964 = vshrl.u32 %v2963, 7
        %v2965 = vsub.s32 %v2962, %v2964
        %v2966 = vrot.slane %v2952, %v2965
        %v2967 = vcombine.low %v2943, %v2959
        %v2968 = vcombine.high %v2943, %v2959
        %v2969 = vcombine.low %v2950, %v2966
        %v2970 = vcombine.high %v2950, %v2966
        %2972 = vrot.lane.b32.xlu0 %v2968, 8
        %v2973 = vpop.permute.xlu0 %2972
        %2976 = vrot.lane.b32.xlu0 %v2969, 16
        %v2977 = vpop.permute.xlu0 %2976
        %2980 = vrot.lane.b32.xlu0 %v2970, 24
        %v2981 = vpop.permute.xlu0 %2980
        %v2983 = vsel %vm1926, %v2967, %v2973
        %vm2984 = vcmask 130048
        %v2985 = vsel %vm2984, %v2983, %v2977
        %vm2986 = vcmask 195584
        %v2987 = vsel %vm2986, %v2985, %v2981
        %v2989 = vlaneseq
        %v2990 = vshrl.u32 %v2989, 7
        %v2991 = vsub.s32 0, %v2990
        %v2992 = vrot.slane %v1370, %v2991
        %v2995 = vsel %vm1410, %v2987, 0
        %2997 = vmatprep.subr.mxu0 0.0
        %2998 = vmatpush1.msra.mxu0 %v1366
        %2999 = vmatprep.subr.mxu0 0.0
        %3000 = vmatpush1.msra.mxu0 %v1367
        %3001 = vmatprep.subr.mxu0 0.0
        %3002 = vmatpush1.msra.mxu0 %v1368
        %3003 = vmatprep.subr.mxu0 0.0
        %3004 = vmatpush1.msra.mxu0 %v1369
        %3005 = vmatprep.subr.mxu0 0.0
        %3006 = vmatpush1.msra.mxu0 0.0
        %3007 = vmatprep.subr.mxu0 0.0
        %3008 = vmatpush1.msra.mxu0 0.0
        %3009 = vmatprep.subr.mxu0 0.0
        %3010 = vmatpush1.msra.mxu0 0.0
        %3011 = vmatprep.subr.mxu0 0.0
        %3012 = vmatpush1.msra.mxu0 0.0
        %3013 = vmatprep.subr.mxu0 0.0
        %3014 = vmatpush1.msra.mxu0 0.0
        %3015 = vmatprep.subr.mxu0 0.0
        %3016 = vmatpush1.msra.mxu0 0.0
        %3017 = vmatprep.subr.mxu0 0.0
        %3018 = vmatpush1.msra.mxu0 0.0
        %3019 = vmatprep.subr.mxu0 0.0
        %3020 = vmatpush1.msra.mxu0 0.0
        %3021 = vmatprep.subr.mxu0 0.0
        %3022 = vmatpush1.msra.mxu0 0.0
        %3023 = vmatprep.subr.mxu0 0.0
        %3024 = vmatpush1.msra.mxu0 0.0
        %3025 = vmatprep.subr.mxu0 0.0
        %3026 = vmatpush1.msra.mxu0 0.0
        %3027 = vmatprep.subr.mxu0 0.0
        %3028 = vmatpush1.msra.mxu0 0.0
        %3029 = vmatprep.subr.mxu0 0.0
        %3030 = vmatpush1.msra.mxu0 0.0
        %3031 = vmatprep.subr.mxu0 0.0
        %3032 = vmatpush1.msra.mxu0 0.0
        %3033 = vmatprep.subr.mxu0 0.0
        %3034 = vmatpush1.msra.mxu0 0.0
        %3035 = vmatprep.subr.mxu0 0.0
        %3036 = vmatpush1.msra.mxu0 0.0
        %3037 = vmatprep.subr.mxu0 0.0
        %3038 = vmatpush1.msra.mxu0 0.0
        %3039 = vmatprep.subr.mxu0 0.0
        %3040 = vmatpush1.msra.mxu0 0.0
        %3041 = vmatprep.subr.mxu0 0.0
        %3042 = vmatpush1.msra.mxu0 0.0
        %3043 = vmatprep.subr.mxu0 0.0
        %3044 = vmatpush1.msra.mxu0 0.0
        %3045 = vmatprep.subr.mxu0 0.0
        %3046 = vmatpush1.msra.mxu0 0.0
        %3047 = vmatprep.subr.mxu0 0.0
        %3048 = vmatpush1.msra.mxu0 0.0
        %3049 = vmatprep.subr.mxu0 0.0
        %3050 = vmatpush1.msra.mxu0 0.0
        %3051 = vmatprep.subr.mxu0 0.0
        %3052 = vmatpush1.msra.mxu0 0.0
        %3053 = vmatprep.subr.mxu0 0.0
        %3054 = vmatpush1.msra.mxu0 0.0
        %3055 = vmatprep.subr.mxu0 0.0
        %3056 = vmatpush1.msra.mxu0 0.0
        %3057 = vmatprep.subr.mxu0 0.0
        %3058 = vmatpush1.msra.mxu0 0.0
        %3059 = vmatprep.subr.mxu0 0.0
        %3060 = vmatpush1.msra.mxu0 0.0
        %3061 = vmatprep.mubr.f32.mxu0 0.0
        %3062 = vmatmul.mubr.f32.gmra.mrb[0].mxu0 %v2995
        %v3063 = vpop.f32.mrb[0].mxu0
        %v3064 = vadd.f32 %v2992, %v3063
        %v3065 = vpop.f32.mrb[0].mxu0
        %3066 = vdwg.mxu0
        %v3067 = vadd.f32 %v1352, %v3064
        %v3068 = vsel %vm1410, %v3067, 0.0
        %3069 = vadd.xlane.f32.xlu0 %v3068
        %v3070 = vpop.xlane.xlu0 %3069
        %v3071 = vrcp.pop 32.0
        %v3072 = vmul.f32 %v3070, %v3071
        %v3073 = vsub.f32 %v3067, %v3072
        %v3074 = vmul.f32 %v3073, %v3073
        %v3075 = vsel %vm1410, %v3074, 0.0
        %3076 = vadd.xlane.f32.xlu0 %v3075
        %v3077 = vpop.xlane.xlu0 %3076
        %v3078 = vmul.f32 %v3077, %v3071
        %v3079 = vadd.f32 %v3078, 1e-05
        %v3080 = vrsqrt.pop %v3079
        %v3081 = vmul.f32 %v3073, %v3080
        %v3083 = vlaneseq
        %v3084 = vshrl.u32 %v3083, 7
        %v3085 = vsub.s32 0, %v3084
        %v3086 = vrot.slane %v1386, %v3085
        %v3088 = vmul.f32 %v3081, %v3086
        %v3090 = vlaneseq
        %v3091 = vshrl.u32 %v3090, 7
        %v3092 = vsub.s32 0, %v3091
        %v3093 = vrot.slane %v1387, %v3092
        %v3095 = vadd.f32 %v3088, %v3093
        %v3097 = vlaneseq
        %v3098 = vshrl.u32 %v3097, 7
        %v3099 = vsub.s32 0, %v3098
        %v3100 = vrot.slane %v1375, %v3099
        %v3103 = vsel %vm1410, %v3095, 0
        %3105 = vmatprep.subr.mxu0 0.0
        %3106 = vmatpush1.msra.mxu0 %v1371
        %3107 = vmatprep.subr.mxu0 0.0
        %3108 = vmatpush1.msra.mxu0 %v1372
        %3109 = vmatprep.subr.mxu0 0.0
        %3110 = vmatpush1.msra.mxu0 %v1373
        %3111 = vmatprep.subr.mxu0 0.0
        %3112 = vmatpush1.msra.mxu0 %v1374
        %3113 = vmatprep.subr.mxu0 0.0
        %3114 = vmatpush1.msra.mxu0 0.0
        %3115 = vmatprep.subr.mxu0 0.0
        %3116 = vmatpush1.msra.mxu0 0.0
        %3117 = vmatprep.subr.mxu0 0.0
        %3118 = vmatpush1.msra.mxu0 0.0
        %3119 = vmatprep.subr.mxu0 0.0
        %3120 = vmatpush1.msra.mxu0 0.0
        %3121 = vmatprep.subr.mxu0 0.0
        %3122 = vmatpush1.msra.mxu0 0.0
        %3123 = vmatprep.subr.mxu0 0.0
        %3124 = vmatpush1.msra.mxu0 0.0
        %3125 = vmatprep.subr.mxu0 0.0
        %3126 = vmatpush1.msra.mxu0 0.0
        %3127 = vmatprep.subr.mxu0 0.0
        %3128 = vmatpush1.msra.mxu0 0.0
        %3129 = vmatprep.subr.mxu0 0.0
        %3130 = vmatpush1.msra.mxu0 0.0
        %3131 = vmatprep.subr.mxu0 0.0
        %3132 = vmatpush1.msra.mxu0 0.0
        %3133 = vmatprep.subr.mxu0 0.0
        %3134 = vmatpush1.msra.mxu0 0.0
        %3135 = vmatprep.subr.mxu0 0.0
        %3136 = vmatpush1.msra.mxu0 0.0
        %3137 = vmatprep.subr.mxu0 0.0
        %3138 = vmatpush1.msra.mxu0 0.0
        %3139 = vmatprep.subr.mxu0 0.0
        %3140 = vmatpush1.msra.mxu0 0.0
        %3141 = vmatprep.subr.mxu0 0.0
        %3142 = vmatpush1.msra.mxu0 0.0
        %3143 = vmatprep.subr.mxu0 0.0
        %3144 = vmatpush1.msra.mxu0 0.0
        %3145 = vmatprep.subr.mxu0 0.0
        %3146 = vmatpush1.msra.mxu0 0.0
        %3147 = vmatprep.subr.mxu0 0.0
        %3148 = vmatpush1.msra.mxu0 0.0
        %3149 = vmatprep.subr.mxu0 0.0
        %3150 = vmatpush1.msra.mxu0 0.0
        %3151 = vmatprep.subr.mxu0 0.0
        %3152 = vmatpush1.msra.mxu0 0.0
        %3153 = vmatprep.subr.mxu0 0.0
        %3154 = vmatpush1.msra.mxu0 0.0
        %3155 = vmatprep.subr.mxu0 0.0
        %3156 = vmatpush1.msra.mxu0 0.0
        %3157 = vmatprep.subr.mxu0 0.0
        %3158 = vmatpush1.msra.mxu0 0.0
        %3159 = vmatprep.subr.mxu0 0.0
        %3160 = vmatpush1.msra.mxu0 0.0
        %3161 = vmatprep.subr.mxu0 0.0
        %3162 = vmatpush1.msra.mxu0 0.0
        %3163 = vmatprep.subr.mxu0 0.0
        %3164 = vmatpush1.msra.mxu0 0.0
        %3165 = vmatprep.subr.mxu0 0.0
        %3166 = vmatpush1.msra.mxu0 0.0
        %3167 = vmatprep.subr.mxu0 0.0
        %3168 = vmatpush1.msra.mxu0 0.0
        %3169 = vmatprep.mubr.f32.mxu0 0.0
        %3170 = vmatmul.mubr.f32.gmra.mrb[0].mxu0 %v3103
        %v3171 = vpop.f32.mrb[0].mxu0
        %v3172 = vadd.f32 %v3100, %v3171
        %v3173 = vpop.f32.mrb[0].mxu0
        %3174 = vdwg.mxu0
        %v3176 = vlaneseq
        %v3177 = vshrl.u32 %v3176, 7
        %v3178 = vsub.s32 0, %v3177
        %v3179 = vrot.slane %v1380, %v3178
        %v3182 = vsel %vm1410, %v1353, 0
        %v3185 = vsel %vm1410, %v1354, 0
        %3187 = vmatprep.subr.mxu0 0.0
        %3188 = vmatpush1.msra.mxu0 %v1376
        %3189 = vmatprep.subr.mxu0 0.0
        %3190 = vmatpush1.msra.mxu0 %v1377
        %3191 = vmatprep.subr.mxu0 0.0
        %3192 = vmatpush1.msra.mxu0 %v1378
        %3193 = vmatprep.subr.mxu0 0.0
        %3194 = vmatpush1.msra.mxu0 %v1379
        %3195 = vmatprep.subr.mxu0 0.0
        %3196 = vmatpush1.msra.mxu0 0.0
        %3197 = vmatprep.subr.mxu0 0.0
        %3198 = vmatpush1.msra.mxu0 0.0
        %3199 = vmatprep.subr.mxu0 0.0
        %3200 = vmatpush1.msra.mxu0 0.0
        %3201 = vmatprep.subr.mxu0 0.0
        %3202 = vmatpush1.msra.mxu0 0.0
        %3203 = vmatprep.subr.mxu0 0.0
        %3204 = vmatpush1.msra.mxu0 0.0
        %3205 = vmatprep.subr.mxu0 0.0
        %3206 = vmatpush1.msra.mxu0 0.0
        %3207 = vmatprep.subr.mxu0 0.0
        %3208 = vmatpush1.msra.mxu0 0.0
        %3209 = vmatprep.subr.mxu0 0.0
        %3210 = vmatpush1.msra.mxu0 0.0
        %3211 = vmatprep.subr.mxu0 0.0
        %3212 = vmatpush1.msra.mxu0 0.0
        %3213 = vmatprep.subr.mxu0 0.0
        %3214 = vmatpush1.msra.mxu0 0.0
        %3215 = vmatprep.subr.mxu0 0.0
        %3216 = vmatpush1.msra.mxu0 0.0
        %3217 = vmatprep.subr.mxu0 0.0
        %3218 = vmatpush1.msra.mxu0 0.0
        %3219 = vmatprep.subr.mxu0 0.0
        %3220 = vmatpush1.msra.mxu0 0.0
        %3221 = vmatprep.subr.mxu0 0.0
        %3222 = vmatpush1.msra.mxu0 0.0
        %3223 = vmatprep.subr.mxu0 0.0
        %3224 = vmatpush1.msra.mxu0 0.0
        %3225 = vmatprep.subr.mxu0 0.0
        %3226 = vmatpush1.msra.mxu0 0.0
        %3227 = vmatprep.subr.mxu0 0.0
        %3228 = vmatpush1.msra.mxu0 0.0
        %3229 = vmatprep.subr.mxu0 0.0
        %3230 = vmatpush1.msra.mxu0 0.0
        %3231 = vmatprep.subr.mxu0 0.0
        %3232 = vmatpush1.msra.mxu0 0.0
        %3233 = vmatprep.subr.mxu0 0.0
        %3234 = vmatpush1.msra.mxu0 0.0
        %3235 = vmatprep.subr.mxu0 0.0
        %3236 = vmatpush1.msra.mxu0 0.0
        %3237 = vmatprep.subr.mxu0 0.0
        %3238 = vmatpush1.msra.mxu0 0.0
        %3239 = vmatprep.subr.mxu0 0.0
        %3240 = vmatpush1.msra.mxu0 0.0
        %3241 = vmatprep.subr.mxu0 0.0
        %3242 = vmatpush1.msra.mxu0 0.0
        %3243 = vmatprep.subr.mxu0 0.0
        %3244 = vmatpush1.msra.mxu0 0.0
        %3245 = vmatprep.subr.mxu0 0.0
        %3246 = vmatpush1.msra.mxu0 0.0
        %3247 = vmatprep.subr.mxu0 0.0
        %3248 = vmatpush1.msra.mxu0 0.0
        %3249 = vmatprep.subr.mxu0 0.0
        %3250 = vmatpush1.msra.mxu0 0.0
        %3251 = vmatprep.mubr.f32.mxu0 0.0
        %3252 = vmatmul.mubr.f32.gmra.mrb[0].mxu0 %v3182
        %v3253 = vpop.f32.mrb[0].mxu0
        %v3254 = vadd.f32 %v3179, %v3253
        %v3255 = vpop.f32.mrb[0].mxu0
        %3256 = vmatprep.mubr.f32.mxu0 0.0
        %3257 = vmatmul.mubr.f32.gmra.mrb[0].mxu0 %v3185
        %v3258 = vpop.f32.mrb[0].mxu0
        %v3259 = vadd.f32 %v3179, %v3258
        %v3260 = vpop.f32.mrb[0].mxu0
        %3261 = vdwg.mxu0
        %3263 = vrot.lane.b32.xlu0 %v3172, 120
        %v3264 = vpop.permute.xlu0 %3263
        %3266 = vrot.lane.b32.xlu0 %v3172, 112
        %v3267 = vpop.permute.xlu0 %3266
        %3269 = vrot.lane.b32.xlu0 %v3172, 104
        %v3270 = vpop.permute.xlu0 %3269
        %v3272 = vcombine.low %v3172, %v3267
        %v3273 = vcombine.high %v3172, %v3267
        %v3275 = vunpack.c.l.s4 1983009808
        %v3276 = vunpack.c.0.s8 %v3275
        %v3277 = vlaneseq
        %v3278 = vshrl.u32 %v3277, 7
        %v3279 = vsub.s32 %v3276, %v3278
        %v3280 = vrot.slane %v3272, %v3279
        %v3282 = vunpack.c.l.s4 1983009808
        %v3283 = vunpack.c.0.s8 %v3282
        %v3284 = vlaneseq
        %v3285 = vshrl.u32 %v3284, 7
        %v3286 = vsub.s32 %v3283, %v3285
        %v3287 = vrot.slane %v3273, %v3286
        %v3288 = vcombine.low %v3264, %v3270
        %v3289 = vcombine.high %v3264, %v3270
        %v3291 = vunpack.c.l.s4 1983009808
        %v3292 = vunpack.c.0.s8 %v3291
        %v3293 = vlaneseq
        %v3294 = vshrl.u32 %v3293, 7
        %v3295 = vsub.s32 %v3292, %v3294
        %v3296 = vrot.slane %v3288, %v3295
        %v3298 = vunpack.c.l.s4 1983009808
        %v3299 = vunpack.c.0.s8 %v3298
        %v3300 = vlaneseq
        %v3301 = vshrl.u32 %v3300, 7
        %v3302 = vsub.s32 %v3299, %v3301
        %v3303 = vrot.slane %v3289, %v3302
        %v3304 = vcombine.low %v3280, %v3296
        %v3305 = vcombine.high %v3280, %v3296
        %v3307 = vunpack.c.l.s4 1934713408
        %v3308 = vunpack.c.0.s8 %v3307
        %v3309 = vlaneseq
        %v3310 = vshrl.u32 %v3309, 7
        %v3311 = vsub.s32 %v3308, %v3310
        %v3312 = vrot.slane %v3304, %v3311
        %v3314 = vunpack.c.l.s4 1934713408
        %v3315 = vunpack.c.0.s8 %v3314
        %v3316 = vlaneseq
        %v3317 = vshrl.u32 %v3316, 7
        %v3318 = vsub.s32 %v3315, %v3317
        %v3319 = vrot.slane %v3305, %v3318
        %v3320 = vcombine.low %v3287, %v3303
        %v3321 = vcombine.high %v3287, %v3303
        %v3323 = vunpack.c.l.s4 1934713408
        %v3324 = vunpack.c.0.s8 %v3323
        %v3325 = vlaneseq
        %v3326 = vshrl.u32 %v3325, 7
        %v3327 = vsub.s32 %v3324, %v3326
        %v3328 = vrot.slane %v3320, %v3327
        %v3330 = vunpack.c.l.s4 1934713408
        %v3331 = vunpack.c.0.s8 %v3330
        %v3332 = vlaneseq
        %v3333 = vshrl.u32 %v3332, 7
        %v3334 = vsub.s32 %v3331, %v3333
        %v3335 = vrot.slane %v3321, %v3334
        %v3336 = vcombine.high %v3312, 0.0
        %v3337 = vcombine.high %v3319, 0.0
        %v3338 = vcombine.high %v3328, 0.0
        %v3339 = vcombine.high %v3335, 0.0
        %v3340 = vcombine.low %v3312, %v3319
        %v3342 = vunpack.c.l.s4 1983009808
        %v3343 = vunpack.c.0.s8 %v3342
        %v3344 = vlaneseq
        %v3345 = vshrl.u32 %v3344, 7
        %v3346 = vsub.s32 %v3343, %v3345
        %v3347 = vrot.slane %v3340, %v3346
        %v3348 = vcombine.low %v3336, %v3337
        %v3350 = vunpack.c.l.s4 1983009808
        %v3351 = vunpack.c.0.s8 %v3350
        %v3352 = vlaneseq
        %v3353 = vshrl.u32 %v3352, 7
        %v3354 = vsub.s32 %v3351, %v3353
        %v3355 = vrot.slane %v3348, %v3354
        %v3356 = vcombine.low %v3328, %v3335
        %v3358 = vunpack.c.l.s4 1983009808
        %v3359 = vunpack.c.0.s8 %v3358
        %v3360 = vlaneseq
        %v3361 = vshrl.u32 %v3360, 7
        %v3362 = vsub.s32 %v3359, %v3361
        %v3363 = vrot.slane %v3356, %v3362
        %v3364 = vcombine.low %v3338, %v3339
        %v3366 = vunpack.c.l.s4 1983009808
        %v3367 = vunpack.c.0.s8 %v3366
        %v3368 = vlaneseq
        %v3369 = vshrl.u32 %v3368, 7
        %v3370 = vsub.s32 %v3367, %v3369
        %v3371 = vrot.slane %v3364, %v3370
        %v3372 = vcombine.low %v3347, %v3355
        %v3373 = vcombine.high %v3347, %v3355
        %v3375 = vunpack.c.l.s4 1934713408
        %v3376 = vunpack.c.0.s8 %v3375
        %v3377 = vlaneseq
        %v3378 = vshrl.u32 %v3377, 7
        %v3379 = vsub.s32 %v3376, %v3378
        %v3380 = vrot.slane %v3372, %v3379
        %v3382 = vunpack.c.l.s4 1934713408
        %v3383 = vunpack.c.0.s8 %v3382
        %v3384 = vlaneseq
        %v3385 = vshrl.u32 %v3384, 7
        %v3386 = vsub.s32 %v3383, %v3385
        %v3387 = vrot.slane %v3373, %v3386
        %v3388 = vcombine.low %v3363, %v3371
        %v3389 = vcombine.high %v3363, %v3371
        %v3391 = vunpack.c.l.s4 1934713408
        %v3392 = vunpack.c.0.s8 %v3391
        %v3393 = vlaneseq
        %v3394 = vshrl.u32 %v3393, 7
        %v3395 = vsub.s32 %v3392, %v3394
        %v3396 = vrot.slane %v3388, %v3395
        %v3398 = vunpack.c.l.s4 1934713408
        %v3399 = vunpack.c.0.s8 %v3398
        %v3400 = vlaneseq
        %v3401 = vshrl.u32 %v3400, 7
        %v3402 = vsub.s32 %v3399, %v3401
        %v3403 = vrot.slane %v3389, %v3402
        %v3404 = vcombine.low %v3380, %v3396
        %v3405 = vcombine.high %v3380, %v3396
        %v3406 = vcombine.low %v3387, %v3403
        %v3407 = vcombine.high %v3387, %v3403
        %3410 = vrot.lane.b32.xlu0 %v3254, 120
        %v3411 = vpop.permute.xlu0 %3410
        %3412 = vrot.lane.b32.xlu0 %v3259, 120
        %v3413 = vpop.permute.xlu0 %3412
        %3416 = vrot.lane.b32.xlu0 %v3254, 112
        %v3417 = vpop.permute.xlu0 %3416
        %3418 = vrot.lane.b32.xlu0 %v3259, 112
        %v3419 = vpop.permute.xlu0 %3418
        %3422 = vrot.lane.b32.xlu0 %v3254, 104
        %v3423 = vpop.permute.xlu0 %3422
        %3424 = vrot.lane.b32.xlu0 %v3259, 104
        %v3425 = vpop.permute.xlu0 %3424
        %v3428 = vcombine.low %v3254, %v3417
        %v3429 = vcombine.high %v3254, %v3417
        %v3431 = vunpack.c.l.s4 1983009808
        %v3432 = vunpack.c.0.s8 %v3431
        %v3433 = vlaneseq
        %v3434 = vshrl.u32 %v3433, 7
        %v3435 = vsub.s32 %v3432, %v3434
        %v3436 = vrot.slane %v3428, %v3435
        %v3438 = vunpack.c.l.s4 1983009808
        %v3439 = vunpack.c.0.s8 %v3438
        %v3440 = vlaneseq
        %v3441 = vshrl.u32 %v3440, 7
        %v3442 = vsub.s32 %v3439, %v3441
        %v3443 = vrot.slane %v3429, %v3442
        %v3444 = vcombine.low %v3411, %v3423
        %v3445 = vcombine.high %v3411, %v3423
        %v3447 = vunpack.c.l.s4 1983009808
        %v3448 = vunpack.c.0.s8 %v3447
        %v3449 = vlaneseq
        %v3450 = vshrl.u32 %v3449, 7
        %v3451 = vsub.s32 %v3448, %v3450
        %v3452 = vrot.slane %v3444, %v3451
        %v3454 = vunpack.c.l.s4 1983009808
        %v3455 = vunpack.c.0.s8 %v3454
        %v3456 = vlaneseq
        %v3457 = vshrl.u32 %v3456, 7
        %v3458 = vsub.s32 %v3455, %v3457
        %v3459 = vrot.slane %v3445, %v3458
        %v3460 = vcombine.low %v3436, %v3452
        %v3461 = vcombine.high %v3436, %v3452
        %v3463 = vunpack.c.l.s4 1934713408
        %v3464 = vunpack.c.0.s8 %v3463
        %v3465 = vlaneseq
        %v3466 = vshrl.u32 %v3465, 7
        %v3467 = vsub.s32 %v3464, %v3466
        %v3468 = vrot.slane %v3460, %v3467
        %v3470 = vunpack.c.l.s4 1934713408
        %v3471 = vunpack.c.0.s8 %v3470
        %v3472 = vlaneseq
        %v3473 = vshrl.u32 %v3472, 7
        %v3474 = vsub.s32 %v3471, %v3473
        %v3475 = vrot.slane %v3461, %v3474
        %v3476 = vcombine.low %v3443, %v3459
        %v3477 = vcombine.high %v3443, %v3459
        %v3479 = vunpack.c.l.s4 1934713408
        %v3480 = vunpack.c.0.s8 %v3479
        %v3481 = vlaneseq
        %v3482 = vshrl.u32 %v3481, 7
        %v3483 = vsub.s32 %v3480, %v3482
        %v3484 = vrot.slane %v3476, %v3483
        %v3486 = vunpack.c.l.s4 1934713408
        %v3487 = vunpack.c.0.s8 %v3486
        %v3488 = vlaneseq
        %v3489 = vshrl.u32 %v3488, 7
        %v3490 = vsub.s32 %v3487, %v3489
        %v3491 = vrot.slane %v3477, %v3490
        %v3492 = vcombine.high %v3468, 0.0
        %v3493 = vcombine.high %v3475, 0.0
        %v3494 = vcombine.high %v3484, 0.0
        %v3495 = vcombine.high %v3491, 0.0
        %v3496 = vcombine.low %v3259, %v3419
        %v3498 = vunpack.c.l.s4 1983009808
        %v3499 = vunpack.c.0.s8 %v3498
        %v3500 = vlaneseq
        %v3501 = vshrl.u32 %v3500, 7
        %v3502 = vsub.s32 %v3499, %v3501
        %v3503 = vrot.slane %v3496, %v3502
        %v3504 = vcombine.low %v3413, %v3425
        %v3506 = vunpack.c.l.s4 1983009808
        %v3507 = vunpack.c.0.s8 %v3506
        %v3508 = vlaneseq
        %v3509 = vshrl.u32 %v3508, 7
        %v3510 = vsub.s32 %v3507, %v3509
        %v3511 = vrot.slane %v3504, %v3510
        %v3512 = vcombine.low %v3503, %v3511
        %v3513 = vcombine.high %v3503, %v3511
        %v3515 = vunpack.c.l.s4 1934713408
        %v3516 = vunpack.c.0.s8 %v3515
        %v3517 = vlaneseq
        %v3518 = vshrl.u32 %v3517, 7
        %v3519 = vsub.s32 %v3516, %v3518
        %v3520 = vrot.slane %v3512, %v3519
        %v3522 = vunpack.c.l.s4 1934713408
        %v3523 = vunpack.c.0.s8 %v3522
        %v3524 = vlaneseq
        %v3525 = vshrl.u32 %v3524, 7
        %v3526 = vsub.s32 %v3523, %v3525
        %v3527 = vrot.slane %v3513, %v3526
        %v3528 = vcombine.high %v3520, 0.0
        %v3529 = vcombine.high %v3527, 0.0
        %v3530 = vcombine.low %v3468, %v3475
        %v3532 = vunpack.c.l.s4 1983009808
        %v3533 = vunpack.c.0.s8 %v3532
        %v3534 = vlaneseq
        %v3535 = vshrl.u32 %v3534, 7
        %v3536 = vsub.s32 %v3533, %v3535
        %v3537 = vrot.slane %v3530, %v3536
        %v3538 = vcombine.low %v3492, %v3493
        %v3540 = vunpack.c.l.s4 1983009808
        %v3541 = vunpack.c.0.s8 %v3540
        %v3542 = vlaneseq
        %v3543 = vshrl.u32 %v3542, 7
        %v3544 = vsub.s32 %v3541, %v3543
        %v3545 = vrot.slane %v3538, %v3544
        %v3546 = vcombine.low %v3484, %v3491
        %v3548 = vunpack.c.l.s4 1983009808
        %v3549 = vunpack.c.0.s8 %v3548
        %v3550 = vlaneseq
        %v3551 = vshrl.u32 %v3550, 7
        %v3552 = vsub.s32 %v3549, %v3551
        %v3553 = vrot.slane %v3546, %v3552
        %v3554 = vcombine.low %v3494, %v3495
        %v3556 = vunpack.c.l.s4 1983009808
        %v3557 = vunpack.c.0.s8 %v3556
        %v3558 = vlaneseq
        %v3559 = vshrl.u32 %v3558, 7
        %v3560 = vsub.s32 %v3557, %v3559
        %v3561 = vrot.slane %v3554, %v3560
        %v3562 = vcombine.low %v3537, %v3545
        %v3563 = vcombine.high %v3537, %v3545
        %v3565 = vunpack.c.l.s4 1934713408
        %v3566 = vunpack.c.0.s8 %v3565
        %v3567 = vlaneseq
        %v3568 = vshrl.u32 %v3567, 7
        %v3569 = vsub.s32 %v3566, %v3568
        %v3570 = vrot.slane %v3562, %v3569
        %v3572 = vunpack.c.l.s4 1934713408
        %v3573 = vunpack.c.0.s8 %v3572
        %v3574 = vlaneseq
        %v3575 = vshrl.u32 %v3574, 7
        %v3576 = vsub.s32 %v3573, %v3575
        %v3577 = vrot.slane %v3563, %v3576
        %v3578 = vcombine.low %v3553, %v3561
        %v3579 = vcombine.high %v3553, %v3561
        %v3581 = vunpack.c.l.s4 1934713408
        %v3582 = vunpack.c.0.s8 %v3581
        %v3583 = vlaneseq
        %v3584 = vshrl.u32 %v3583, 7
        %v3585 = vsub.s32 %v3582, %v3584
        %v3586 = vrot.slane %v3578, %v3585
        %v3588 = vunpack.c.l.s4 1934713408
        %v3589 = vunpack.c.0.s8 %v3588
        %v3590 = vlaneseq
        %v3591 = vshrl.u32 %v3590, 7
        %v3592 = vsub.s32 %v3589, %v3591
        %v3593 = vrot.slane %v3579, %v3592
        %v3594 = vcombine.low %v3570, %v3586
        %v3595 = vcombine.high %v3570, %v3586
        %v3596 = vcombine.low %v3577, %v3593
        %v3597 = vcombine.high %v3577, %v3593
        %v3598 = vcombine.low %v3520, %v3527
        %v3600 = vunpack.c.l.s4 1983009808
        %v3601 = vunpack.c.0.s8 %v3600
        %v3602 = vlaneseq
        %v3603 = vshrl.u32 %v3602, 7
        %v3604 = vsub.s32 %v3601, %v3603
        %v3605 = vrot.slane %v3598, %v3604
        %v3606 = vcombine.low %v3528, %v3529
        %v3608 = vunpack.c.l.s4 1983009808
        %v3609 = vunpack.c.0.s8 %v3608
        %v3610 = vlaneseq
        %v3611 = vshrl.u32 %v3610, 7
        %v3612 = vsub.s32 %v3609, %v3611
        %v3613 = vrot.slane %v3606, %v3612
        %v3614 = vcombine.low %v3605, %v3613
        %v3615 = vcombine.high %v3605, %v3613
        %v3617 = vunpack.c.l.s4 1934713408
        %v3618 = vunpack.c.0.s8 %v3617
        %v3619 = vlaneseq
        %v3620 = vshrl.u32 %v3619, 7
        %v3621 = vsub.s32 %v3618, %v3620
        %v3622 = vrot.slane %v3614, %v3621
        %v3624 = vunpack.c.l.s4 1934713408
        %v3625 = vunpack.c.0.s8 %v3624
        %v3626 = vlaneseq
        %v3627 = vshrl.u32 %v3626, 7
        %v3628 = vsub.s32 %v3625, %v3627
        %v3629 = vrot.slane %v3615, %v3628
        %v3630 = vcombine.high %v3622, 0.0
        %v3631 = vcombine.high %v3629, 0.0
        %3632 = vrot.lane.b32.xlu0 %v3254, 96
        %v3633 = vpop.permute.xlu0 %3632
        %3634 = vrot.lane.b32.xlu0 %v3259, 96
        %v3635 = vpop.permute.xlu0 %3634
        %3636 = vrot.lane.b32.xlu0 %v3411, 96
        %v3637 = vpop.permute.xlu0 %3636
        %3638 = vrot.lane.b32.xlu0 %v3413, 96
        %v3639 = vpop.permute.xlu0 %3638
        %3640 = vrot.lane.b32.xlu0 %v3417, 96
        %v3641 = vpop.permute.xlu0 %3640
        %3642 = vrot.lane.b32.xlu0 %v3419, 96
        %v3643 = vpop.permute.xlu0 %3642
        %3644 = vrot.lane.b32.xlu0 %v3423, 96
        %v3645 = vpop.permute.xlu0 %3644
        %3646 = vrot.lane.b32.xlu0 %v3425, 96
        %v3647 = vpop.permute.xlu0 %3646
        %v3656 = vcombine.low %v3633, %v3641
        %v3657 = vcombine.high %v3633, %v3641
        %v3659 = vunpack.c.l.s4 1983009808
        %v3660 = vunpack.c.0.s8 %v3659
        %v3661 = vlaneseq
        %v3662 = vshrl.u32 %v3661, 7
        %v3663 = vsub.s32 %v3660, %v3662
        %v3664 = vrot.slane %v3656, %v3663
        %v3666 = vunpack.c.l.s4 1983009808
        %v3667 = vunpack.c.0.s8 %v3666
        %v3668 = vlaneseq
        %v3669 = vshrl.u32 %v3668, 7
        %v3670 = vsub.s32 %v3667, %v3669
        %v3671 = vrot.slane %v3657, %v3670
        %v3672 = vcombine.low %v3637, %v3645
        %v3673 = vcombine.high %v3637, %v3645
        %v3675 = vunpack.c.l.s4 1983009808
        %v3676 = vunpack.c.0.s8 %v3675
        %v3677 = vlaneseq
        %v3678 = vshrl.u32 %v3677, 7
        %v3679 = vsub.s32 %v3676, %v3678
        %v3680 = vrot.slane %v3672, %v3679
        %v3682 = vunpack.c.l.s4 1983009808
        %v3683 = vunpack.c.0.s8 %v3682
        %v3684 = vlaneseq
        %v3685 = vshrl.u32 %v3684, 7
        %v3686 = vsub.s32 %v3683, %v3685
        %v3687 = vrot.slane %v3673, %v3686
        %v3688 = vcombine.low %v3664, %v3680
        %v3689 = vcombine.high %v3664, %v3680
        %v3691 = vunpack.c.l.s4 1934713408
        %v3692 = vunpack.c.0.s8 %v3691
        %v3693 = vlaneseq
        %v3694 = vshrl.u32 %v3693, 7
        %v3695 = vsub.s32 %v3692, %v3694
        %v3696 = vrot.slane %v3688, %v3695
        %v3698 = vunpack.c.l.s4 1934713408
        %v3699 = vunpack.c.0.s8 %v3698
        %v3700 = vlaneseq
        %v3701 = vshrl.u32 %v3700, 7
        %v3702 = vsub.s32 %v3699, %v3701
        %v3703 = vrot.slane %v3689, %v3702
        %v3704 = vcombine.low %v3671, %v3687
        %v3705 = vcombine.high %v3671, %v3687
        %v3707 = vunpack.c.l.s4 1934713408
        %v3708 = vunpack.c.0.s8 %v3707
        %v3709 = vlaneseq
        %v3710 = vshrl.u32 %v3709, 7
        %v3711 = vsub.s32 %v3708, %v3710
        %v3712 = vrot.slane %v3704, %v3711
        %v3714 = vunpack.c.l.s4 1934713408
        %v3715 = vunpack.c.0.s8 %v3714
        %v3716 = vlaneseq
        %v3717 = vshrl.u32 %v3716, 7
        %v3718 = vsub.s32 %v3715, %v3717
        %v3719 = vrot.slane %v3705, %v3718
        %v3720 = vcombine.high %v3696, 0.0
        %v3721 = vcombine.high %v3703, 0.0
        %v3722 = vcombine.high %v3712, 0.0
        %v3723 = vcombine.high %v3719, 0.0
        %v3724 = vcombine.low %v3635, %v3643
        %v3726 = vunpack.c.l.s4 1983009808
        %v3727 = vunpack.c.0.s8 %v3726
        %v3728 = vlaneseq
        %v3729 = vshrl.u32 %v3728, 7
        %v3730 = vsub.s32 %v3727, %v3729
        %v3731 = vrot.slane %v3724, %v3730
        %v3732 = vcombine.low %v3639, %v3647
        %v3734 = vunpack.c.l.s4 1983009808
        %v3735 = vunpack.c.0.s8 %v3734
        %v3736 = vlaneseq
        %v3737 = vshrl.u32 %v3736, 7
        %v3738 = vsub.s32 %v3735, %v3737
        %v3739 = vrot.slane %v3732, %v3738
        %v3740 = vcombine.low %v3731, %v3739
        %v3741 = vcombine.high %v3731, %v3739
        %v3743 = vunpack.c.l.s4 1934713408
        %v3744 = vunpack.c.0.s8 %v3743
        %v3745 = vlaneseq
        %v3746 = vshrl.u32 %v3745, 7
        %v3747 = vsub.s32 %v3744, %v3746
        %v3748 = vrot.slane %v3740, %v3747
        %v3750 = vunpack.c.l.s4 1934713408
        %v3751 = vunpack.c.0.s8 %v3750
        %v3752 = vlaneseq
        %v3753 = vshrl.u32 %v3752, 7
        %v3754 = vsub.s32 %v3751, %v3753
        %v3755 = vrot.slane %v3741, %v3754
        %v3756 = vcombine.high %v3748, 0.0
        %v3757 = vcombine.high %v3755, 0.0
        %v3758 = vcombine.low %v3696, %v3703
        %v3760 = vunpack.c.l.s4 1983009808
        %v3761 = vunpack.c.0.s8 %v3760
        %v3762 = vlaneseq
        %v3763 = vshrl.u32 %v3762, 7
        %v3764 = vsub.s32 %v3761, %v3763
        %v3765 = vrot.slane %v3758, %v3764
        %v3766 = vcombine.low %v3720, %v3721
        %v3768 = vunpack.c.l.s4 1983009808
        %v3769 = vunpack.c.0.s8 %v3768
        %v3770 = vlaneseq
        %v3771 = vshrl.u32 %v3770, 7
        %v3772 = vsub.s32 %v3769, %v3771
        %v3773 = vrot.slane %v3766, %v3772
        %v3774 = vcombine.low %v3712, %v3719
        %v3776 = vunpack.c.l.s4 1983009808
        %v3777 = vunpack.c.0.s8 %v3776
        %v3778 = vlaneseq
        %v3779 = vshrl.u32 %v3778, 7
        %v3780 = vsub.s32 %v3777, %v3779
        %v3781 = vrot.slane %v3774, %v3780
        %v3782 = vcombine.low %v3722, %v3723
        %v3784 = vunpack.c.l.s4 1983009808
        %v3785 = vunpack.c.0.s8 %v3784
        %v3786 = vlaneseq
        %v3787 = vshrl.u32 %v3786, 7
        %v3788 = vsub.s32 %v3785, %v3787
        %v3789 = vrot.slane %v3782, %v3788
        %v3790 = vcombine.low %v3765, %v3773
        %v3791 = vcombine.high %v3765, %v3773
        %v3793 = vunpack.c.l.s4 1934713408
        %v3794 = vunpack.c.0.s8 %v3793
        %v3795 = vlaneseq
        %v3796 = vshrl.u32 %v3795, 7
        %v3797 = vsub.s32 %v3794, %v3796
        %v3798 = vrot.slane %v3790, %v3797
        %v3800 = vunpack.c.l.s4 1934713408
        %v3801 = vunpack.c.0.s8 %v3800
        %v3802 = vlaneseq
        %v3803 = vshrl.u32 %v3802, 7
        %v3804 = vsub.s32 %v3801, %v3803
        %v3805 = vrot.slane %v3791, %v3804
        %v3806 = vcombine.low %v3781, %v3789
        %v3807 = vcombine.high %v3781, %v3789
        %v3809 = vunpack.c.l.s4 1934713408
        %v3810 = vunpack.c.0.s8 %v3809
        %v3811 = vlaneseq
        %v3812 = vshrl.u32 %v3811, 7
        %v3813 = vsub.s32 %v3810, %v3812
        %v3814 = vrot.slane %v3806, %v3813
        %v3816 = vunpack.c.l.s4 1934713408
        %v3817 = vunpack.c.0.s8 %v3816
        %v3818 = vlaneseq
        %v3819 = vshrl.u32 %v3818, 7
        %v3820 = vsub.s32 %v3817, %v3819
        %v3821 = vrot.slane %v3807, %v3820
        %v3822 = vcombine.low %v3798, %v3814
        %v3823 = vcombine.high %v3798, %v3814
        %v3824 = vcombine.low %v3805, %v3821
        %v3825 = vcombine.high %v3805, %v3821
        %v3826 = vcombine.low %v3748, %v3755
        %v3828 = vunpack.c.l.s4 1983009808
        %v3829 = vunpack.c.0.s8 %v3828
        %v3830 = vlaneseq
        %v3831 = vshrl.u32 %v3830, 7
        %v3832 = vsub.s32 %v3829, %v3831
        %v3833 = vrot.slane %v3826, %v3832
        %v3834 = vcombine.low %v3756, %v3757
        %v3836 = vunpack.c.l.s4 1983009808
        %v3837 = vunpack.c.0.s8 %v3836
        %v3838 = vlaneseq
        %v3839 = vshrl.u32 %v3838, 7
        %v3840 = vsub.s32 %v3837, %v3839
        %v3841 = vrot.slane %v3834, %v3840
        %v3842 = vcombine.low %v3833, %v3841
        %v3843 = vcombine.high %v3833, %v3841
        %v3845 = vunpack.c.l.s4 1934713408
        %v3846 = vunpack.c.0.s8 %v3845
        %v3847 = vlaneseq
        %v3848 = vshrl.u32 %v3847, 7
        %v3849 = vsub.s32 %v3846, %v3848
        %v3850 = vrot.slane %v3842, %v3849
        %v3852 = vunpack.c.l.s4 1934713408
        %v3853 = vunpack.c.0.s8 %v3852
        %v3854 = vlaneseq
        %v3855 = vshrl.u32 %v3854, 7
        %v3856 = vsub.s32 %v3853, %v3855
        %v3857 = vrot.slane %v3843, %v3856
        %v3858 = vcombine.high %v3850, 0.0
        %v3859 = vcombine.high %v3857, 0.0
        %v3861 = vlaneseq
        %v3862 = vshrl.u32 %v3861, 7
        %v3863 = vsub.s32 0, %v3862
        %v3864 = vrot.slane %v1360, %v3863
        %v3867 = vsel %vm1926, %v3404, 0
        %v3870 = vsel %vm1926, %v3594, 0
        %v3873 = vsel %vm1926, %v3622, 0
        %3875 = vmatprep.subr.mxu0 0.0
        %3876 = vmatpush1.xpose.msra.mxu0 %v3870
        %3877 = vmatprep.subr.mxu0 0.0
        %3878 = vmatpush1.xpose.msra.mxu0 %v3873
        %3879 = vmatprep.subr.mxu0 0.0
        %3880 = vmatpush1.xpose.msra.mxu0 0.0
        %3881 = vmatprep.subr.mxu0 0.0
        %3882 = vmatpush1.xpose.msra.mxu0 0.0
        %3883 = vmatprep.subr.mxu0 0.0
        %3884 = vmatpush1.xpose.msra.mxu0 0.0
        %3885 = vmatprep.subr.mxu0 0.0
        %3886 = vmatpush1.xpose.msra.mxu0 0.0
        %3887 = vmatprep.subr.mxu0 0.0
        %3888 = vmatpush1.xpose.msra.mxu0 0.0
        %3889 = vmatprep.subr.mxu0 0.0
        %3890 = vmatpush1.xpose.msra.mxu0 0.0
        %3891 = vmatprep.subr.mxu0 0.0
        %3892 = vmatpush1.xpose.msra.mxu0 0.0
        %3893 = vmatprep.subr.mxu0 0.0
        %3894 = vmatpush1.xpose.msra.mxu0 0.0
        %3895 = vmatprep.subr.mxu0 0.0
        %3896 = vmatpush1.xpose.msra.mxu0 0.0
        %3897 = vmatprep.subr.mxu0 0.0
        %3898 = vmatpush1.xpose.msra.mxu0 0.0
        %3899 = vmatprep.subr.mxu0 0.0
        %3900 = vmatpush1.xpose.msra.mxu0 0.0
        %3901 = vmatprep.subr.mxu0 0.0
        %3902 = vmatpush1.xpose.msra.mxu0 0.0
        %3903 = vmatprep.subr.mxu0 0.0
        %3904 = vmatpush1.xpose.msra.mxu0 0.0
        %3905 = vmatprep.subr.mxu0 0.0
        %3906 = vmatpush1.xpose.msra.mxu0 0.0
        %3907 = vmatprep.subr.mxu0 0.0
        %3908 = vmatpush1.xpose.msra.mxu0 0.0
        %3909 = vmatprep.subr.mxu0 0.0
        %3910 = vmatpush1.xpose.msra.mxu0 0.0
        %3911 = vmatprep.subr.mxu0 0.0
        %3912 = vmatpush1.xpose.msra.mxu0 0.0
        %3913 = vmatprep.subr.mxu0 0.0
        %3914 = vmatpush1.xpose.msra.mxu0 0.0
        %3915 = vmatprep.subr.mxu0 0.0
        %3916 = vmatpush1.xpose.msra.mxu0 0.0
        %3917 = vmatprep.subr.mxu0 0.0
        %3918 = vmatpush1.xpose.msra.mxu0 0.0
        %3919 = vmatprep.subr.mxu0 0.0
        %3920 = vmatpush1.xpose.msra.mxu0 0.0
        %3921 = vmatprep.subr.mxu0 0.0
        %3922 = vmatpush1.xpose.msra.mxu0 0.0
        %3923 = vmatprep.subr.mxu0 0.0
        %3924 = vmatpush1.xpose.msra.mxu0 0.0
        %3925 = vmatprep.subr.mxu0 0.0
        %3926 = vmatpush1.xpose.msra.mxu0 0.0
        %3927 = vmatprep.subr.mxu0 0.0
        %3928 = vmatpush1.xpose.msra.mxu0 0.0
        %3929 = vmatprep.subr.mxu0 0.0
        %3930 = vmatpush1.xpose.msra.mxu0 0.0
        %3931 = vmatprep.subr.mxu0 0.0
        %3932 = vmatpush1.xpose.msra.mxu0 0.0
        %3933 = vmatprep.subr.mxu0 0.0
        %3934 = vmatpush1.xpose.msra.mxu0 0.0
        %3935 = vmatprep.subr.mxu0 0.0
        %3936 = vmatpush1.xpose.msra.mxu0 0.0
        %3937 = vmatprep.subr.mxu0 0.0
        %3938 = vmatpush1.xpose.msra.mxu0 0.0
        %3939 = vmatprep.mubr.f32.mxu0 0.0
        %3940 = vmatmul.mubr.f32.gmra.mrb[0].mxu0 %v3867
        %v3941 = vpop.f32.mrb[0].mxu0
        %v3942 = vadd.f32 %v3864, %v3941
        %v3943 = vpop.f32.mrb[0].mxu0
        %3944 = vdwg.mxu0
        %v3946 = vsel %vm1926, %v3405, 0
        %v3949 = vsel %vm1926, %v3595, 0
        %v3952 = vsel %vm1926, %v3630, 0
        %3954 = vmatprep.subr.mxu0 0.0
        %3955 = vmatpush1.xpose.msra.mxu0 %v3949
        %3956 = vmatprep.subr.mxu0 0.0
        %3957 = vmatpush1.xpose.msra.mxu0 %v3952
        %3958 = vmatprep.subr.mxu0 0.0
        %3959 = vmatpush1.xpose.msra.mxu0 0.0
        %3960 = vmatprep.subr.mxu0 0.0
        %3961 = vmatpush1.xpose.msra.mxu0 0.0
        %3962 = vmatprep.subr.mxu0 0.0
        %3963 = vmatpush1.xpose.msra.mxu0 0.0
        %3964 = vmatprep.subr.mxu0 0.0
        %3965 = vmatpush1.xpose.msra.mxu0 0.0
        %3966 = vmatprep.subr.mxu0 0.0
        %3967 = vmatpush1.xpose.msra.mxu0 0.0
        %3968 = vmatprep.subr.mxu0 0.0
        %3969 = vmatpush1.xpose.msra.mxu0 0.0
        %3970 = vmatprep.subr.mxu0 0.0
        %3971 = vmatpush1.xpose.msra.mxu0 0.0
        %3972 = vmatprep.subr.mxu0 0.0
        %3973 = vmatpush1.xpose.msra.mxu0 0.0
        %3974 = vmatprep.subr.mxu0 0.0
        %3975 = vmatpush1.xpose.msra.mxu0 0.0
        %3976 = vmatprep.subr.mxu0 0.0
        %3977 = vmatpush1.xpose.msra.mxu0 0.0
        %3978 = vmatprep.subr.mxu0 0.0
        %3979 = vmatpush1.xpose.msra.mxu0 0.0
        %3980 = vmatprep.subr.mxu0 0.0
        %3981 = vmatpush1.xpose.msra.mxu0 0.0
        %3982 = vmatprep.subr.mxu0 0.0
        %3983 = vmatpush1.xpose.msra.mxu0 0.0
        %3984 = vmatprep.subr.mxu0 0.0
        %3985 = vmatpush1.xpose.msra.mxu0 0.0
        %3986 = vmatprep.subr.mxu0 0.0
        %3987 = vmatpush1.xpose.msra.mxu0 0.0
        %3988 = vmatprep.subr.mxu0 0.0
        %3989 = vmatpush1.xpose.msra.mxu0 0.0
        %3990 = vmatprep.subr.mxu0 0.0
        %3991 = vmatpush1.xpose.msra.mxu0 0.0
        %3992 = vmatprep.subr.mxu0 0.0
        %3993 = vmatpush1.xpose.msra.mxu0 0.0
        %3994 = vmatprep.subr.mxu0 0.0
        %3995 = vmatpush1.xpose.msra.mxu0 0.0
        %3996 = vmatprep.subr.mxu0 0.0
        %3997 = vmatpush1.xpose.msra.mxu0 0.0
        %3998 = vmatprep.subr.mxu0 0.0
        %3999 = vmatpush1.xpose.msra.mxu0 0.0
        %4000 = vmatprep.subr.mxu0 0.0
        %4001 = vmatpush1.xpose.msra.mxu0 0.0
        %4002 = vmatprep.subr.mxu0 0.0
        %4003 = vmatpush1.xpose.msra.mxu0 0.0
        %4004 = vmatprep.subr.mxu0 0.0
        %4005 = vmatpush1.xpose.msra.mxu0 0.0
        %4006 = vmatprep.subr.mxu0 0.0
        %4007 = vmatpush1.xpose.msra.mxu0 0.0
        %4008 = vmatprep.subr.mxu0 0.0
        %4009 = vmatpush1.xpose.msra.mxu0 0.0
        %4010 = vmatprep.subr.mxu0 0.0
        %4011 = vmatpush1.xpose.msra.mxu0 0.0
        %4012 = vmatprep.subr.mxu0 0.0
        %4013 = vmatpush1.xpose.msra.mxu0 0.0
        %4014 = vmatprep.subr.mxu0 0.0
        %4015 = vmatpush1.xpose.msra.mxu0 0.0
        %4016 = vmatprep.subr.mxu0 0.0
        %4017 = vmatpush1.xpose.msra.mxu0 0.0
        %4018 = vmatprep.mubr.f32.mxu0 0.0
        %4019 = vmatmul.mubr.f32.gmra.mrb[0].mxu0 %v3946
        %v4020 = vpop.f32.mrb[0].mxu0
        %v4021 = vadd.f32 %v3864, %v4020
        %v4022 = vpop.f32.mrb[0].mxu0
        %4023 = vdwg.mxu0
        %v4025 = vsel %vm1926, %v3406, 0
        %v4028 = vsel %vm1926, %v3596, 0
        %v4031 = vsel %vm1926, %v3629, 0
        %4033 = vmatprep.subr.mxu0 0.0
        %4034 = vmatpush1.xpose.msra.mxu0 %v4028
        %4035 = vmatprep.subr.mxu0 0.0
        %4036 = vmatpush1.xpose.msra.mxu0 %v4031
        %4037 = vmatprep.subr.mxu0 0.0
        %4038 = vmatpush1.xpose.msra.mxu0 0.0
        %4039 = vmatprep.subr.mxu0 0.0
        %4040 = vmatpush1.xpose.msra.mxu0 0.0
        %4041 = vmatprep.subr.mxu0 0.0
        %4042 = vmatpush1.xpose.msra.mxu0 0.0
        %4043 = vmatprep.subr.mxu0 0.0
        %4044 = vmatpush1.xpose.msra.mxu0 0.0
        %4045 = vmatprep.subr.mxu0 0.0
        %4046 = vmatpush1.xpose.msra.mxu0 0.0
        %4047 = vmatprep.subr.mxu0 0.0
        %4048 = vmatpush1.xpose.msra.mxu0 0.0
        %4049 = vmatprep.subr.mxu0 0.0
        %4050 = vmatpush1.xpose.msra.mxu0 0.0
        %4051 = vmatprep.subr.mxu0 0.0
        %4052 = vmatpush1.xpose.msra.mxu0 0.0
        %4053 = vmatprep.subr.mxu0 0.0
        %4054 = vmatpush1.xpose.msra.mxu0 0.0
        %4055 = vmatprep.subr.mxu0 0.0
        %4056 = vmatpush1.xpose.msra.mxu0 0.0
        %4057 = vmatprep.subr.mxu0 0.0
        %4058 = vmatpush1.xpose.msra.mxu0 0.0
        %4059 = vmatprep.subr.mxu0 0.0
        %4060 = vmatpush1.xpose.msra.mxu0 0.0
        %4061 = vmatprep.subr.mxu0 0.0
        %4062 = vmatpush1.xpose.msra.mxu0 0.0
        %4063 = vmatprep.subr.mxu0 0.0
        %4064 = vmatpush1.xpose.msra.mxu0 0.0
        %4065 = vmatprep.subr.mxu0 0.0
        %4066 = vmatpush1.xpose.msra.mxu0 0.0
        %4067 = vmatprep.subr.mxu0 0.0
        %4068 = vmatpush1.xpose.msra.mxu0 0.0
        %4069 = vmatprep.subr.mxu0 0.0
        %4070 = vmatpush1.xpose.msra.mxu0 0.0
        %4071 = vmatprep.subr.mxu0 0.0
        %4072 = vmatpush1.xpose.msra.mxu0 0.0
        %4073 = vmatprep.subr.mxu0 0.0
        %4074 = vmatpush1.xpose.msra.mxu0 0.0
        %4075 = vmatprep.subr.mxu0 0.0
        %4076 = vmatpush1.xpose.msra.mxu0 0.0
        %4077 = vmatprep.subr.mxu0 0.0
        %4078 = vmatpush1.xpose.msra.mxu0 0.0
        %4079 = vmatprep.subr.mxu0 0.0
        %4080 = vmatpush1.xpose.msra.mxu0 0.0
        %4081 = vmatprep.subr.mxu0 0.0
        %4082 = vmatpush1.xpose.msra.mxu0 0.0
        %4083 = vmatprep.subr.mxu0 0.0
        %4084 = vmatpush1.xpose.msra.mxu0 0.0
        %4085 = vmatprep.subr.mxu0 0.0
        %4086 = vmatpush1.xpose.msra.mxu0 0.0
        %4087 = vmatprep.subr.mxu0 0.0
        %4088 = vmatpush1.xpose.msra.mxu0 0.0
        %4089 = vmatprep.subr.mxu0 0.0
        %4090 = vmatpush1.xpose.msra.mxu0 0.0
        %4091 = vmatprep.subr.mxu0 0.0
        %4092 = vmatpush1.xpose.msra.mxu0 0.0
        %4093 = vmatprep.subr.mxu0 0.0
        %4094 = vmatpush1.xpose.msra.mxu0 0.0
        %4095 = vmatprep.subr.mxu0 0.0
        %4096 = vmatpush1.xpose.msra.mxu0 0.0
        %4097 = vmatprep.mubr.f32.mxu0 0.0
        %4098 = vmatmul.mubr.f32.gmra.mrb[0].mxu0 %v4025
        %v4099 = vpop.f32.mrb[0].mxu0
        %v4100 = vadd.f32 %v3864, %v4099
        %v4101 = vpop.f32.mrb[0].mxu0
        %4102 = vdwg.mxu0
        %v4104 = vsel %vm1926, %v3407, 0
        %v4107 = vsel %vm1926, %v3597, 0
        %v4110 = vsel %vm1926, %v3631, 0
        %4112 = vmatprep.subr.mxu0 0.0
        %4113 = vmatpush1.xpose.msra.mxu0 %v4107
        %4114 = vmatprep.subr.mxu0 0.0
        %4115 = vmatpush1.xpose.msra.mxu0 %v4110
        %4116 = vmatprep.subr.mxu0 0.0
        %4117 = vmatpush1.xpose.msra.mxu0 0.0
        %4118 = vmatprep.subr.mxu0 0.0
        %4119 = vmatpush1.xpose.msra.mxu0 0.0
        %4120 = vmatprep.subr.mxu0 0.0
        %4121 = vmatpush1.xpose.msra.mxu0 0.0
        %4122 = vmatprep.subr.mxu0 0.0
        %4123 = vmatpush1.xpose.msra.mxu0 0.0
        %4124 = vmatprep.subr.mxu0 0.0
        %4125 = vmatpush1.xpose.msra.mxu0 0.0
        %4126 = vmatprep.subr.mxu0 0.0
        %4127 = vmatpush1.xpose.msra.mxu0 0.0
        %4128 = vmatprep.subr.mxu0 0.0
        %4129 = vmatpush1.xpose.msra.mxu0 0.0
        %4130 = vmatprep.subr.mxu0 0.0
        %4131 = vmatpush1.xpose.msra.mxu0 0.0
        %4132 = vmatprep.subr.mxu0 0.0
        %4133 = vmatpush1.xpose.msra.mxu0 0.0
        %4134 = vmatprep.subr.mxu0 0.0
        %4135 = vmatpush1.xpose.msra.mxu0 0.0
        %4136 = vmatprep.subr.mxu0 0.0
        %4137 = vmatpush1.xpose.msra.mxu0 0.0
        %4138 = vmatprep.subr.mxu0 0.0
        %4139 = vmatpush1.xpose.msra.mxu0 0.0
        %4140 = vmatprep.subr.mxu0 0.0
        %4141 = vmatpush1.xpose.msra.mxu0 0.0
        %4142 = vmatprep.subr.mxu0 0.0
        %4143 = vmatpush1.xpose.msra.mxu0 0.0
        %4144 = vmatprep.subr.mxu0 0.0
        %4145 = vmatpush1.xpose.msra.mxu0 0.0
        %4146 = vmatprep.subr.mxu0 0.0
        %4147 = vmatpush1.xpose.msra.mxu0 0.0
        %4148 = vmatprep.subr.mxu0 0.0
        %4149 = vmatpush1.xpose.msra.mxu0 0.0
        %4150 = vmatprep.subr.mxu0 0.0
        %4151 = vmatpush1.xpose.msra.mxu0 0.0
        %4152 = vmatprep.subr.mxu0 0.0
        %4153 = vmatpush1.xpose.msra.mxu0 0.0
        %4154 = vmatprep.subr.mxu0 0.0
        %4155 = vmatpush1.xpose.msra.mxu0 0.0
        %4156 = vmatprep.subr.mxu0 0.0
        %4157 = vmatpush1.xpose.msra.mxu0 0.0
        %4158 = vmatprep.subr.mxu0 0.0
        %4159 = vmatpush1.xpose.msra.mxu0 0.0
        %4160 = vmatprep.subr.mxu0 0.0
        %4161 = vmatpush1.xpose.msra.mxu0 0.0
        %4162 = vmatprep.subr.mxu0 0.0
        %4163 = vmatpush1.xpose.msra.mxu0 0.0
        %4164 = vmatprep.subr.mxu0 0.0
        %4165 = vmatpush1.xpose.msra.mxu0 0.0
        %4166 = vmatprep.subr.mxu0 0.0
        %4167 = vmatpush1.xpose.msra.mxu0 0.0
        %4168 = vmatprep.subr.mxu0 0.0
        %4169 = vmatpush1.xpose.msra.mxu0 0.0
        %4170 = vmatprep.subr.mxu0 0.0
        %4171 = vmatpush1.xpose.msra.mxu0 0.0
        %4172 = vmatprep.subr.mxu0 0.0
        %4173 = vmatpush1.xpose.msra.mxu0 0.0
        %4174 = vmatprep.subr.mxu0 0.0
        %4175 = vmatpush1.xpose.msra.mxu0 0.0
        %4176 = vmatprep.mubr.f32.mxu0 0.0
        %4177 = vmatmul.mubr.f32.gmra.mrb[0].mxu0 %v4104
        %v4178 = vpop.f32.mrb[0].mxu0
        %v4179 = vadd.f32 %v3864, %v4178
        %v4180 = vpop.f32.mrb[0].mxu0
        %4181 = vdwg.mxu0
        %vm4182 = vcmask 97280
        %v4183 = vsel %vm4182, %v3942, -inf
        %4184 = vmax.xlane.f32.xlu0 %v4183
        %v4185 = vpop.xlane.xlu0 %4184
        %v4186 = vsel %vm4182, %v4021, -inf
        %4187 = vmax.xlane.f32.xlu0 %v4186
        %v4188 = vpop.xlane.xlu0 %4187
        %v4189 = vsel %vm4182, %v4100, -inf
        %4190 = vmax.xlane.f32.xlu0 %v4189
        %v4191 = vpop.xlane.xlu0 %4190
        %v4192 = vsel %vm4182, %v4179, -inf
        %4193 = vmax.xlane.f32.xlu0 %v4192
        %v4194 = vpop.xlane.xlu0 %4193
        %v4195 = vsub.f32 %v3942, %v4185
        %v4196 = vsub.f32 %v4021, %v4188
        %v4197 = vsub.f32 %v4100, %v4191
        %v4198 = vsub.f32 %v4179, %v4194
        %v4199 = vmul.f32 %v4195, 1.442695
        %v4200 = vpow.pop %v4199
        %v4201 = vmul.f32 %v4196, 1.442695
        %v4202 = vpow.pop %v4201
        %v4203 = vmul.f32 %v4197, 1.442695
        %v4204 = vpow.pop %v4203
        %v4205 = vmul.f32 %v4198, 1.442695
        %v4206 = vpow.pop %v4205
        %v4207 = vsel %vm4182, %v4200, 0.0
        %4208 = vadd.xlane.f32.xlu0 %v4207
        %v4209 = vpop.xlane.xlu0 %4208
        %v4210 = vsel %vm4182, %v4202, 0.0
        %4211 = vadd.xlane.f32.xlu0 %v4210
        %v4212 = vpop.xlane.xlu0 %4211
        %v4213 = vsel %vm4182, %v4204, 0.0
        %4214 = vadd.xlane.f32.xlu0 %v4213
        %v4215 = vpop.xlane.xlu0 %4214
        %v4216 = vsel %vm4182, %v4206, 0.0
        %4217 = vadd.xlane.f32.xlu0 %v4216
        %v4218 = vpop.xlane.xlu0 %4217
        %v4219 = vrcp.pop %v4209
        %v4220 = vrcp.pop %v4212
        %v4221 = vrcp.pop %v4215
        %v4222 = vrcp.pop %v4218
        %v4223 = vmul.f32 %v4200, %v4219
        %v4224 = vmul.f32 %v4202, %v4220
        %v4225 = vmul.f32 %v4204, %v4221
        %v4226 = vmul.f32 %v4206, %v4222
        %4227 = vxpose.xlu0.b32.start [1/16] %v3822, 128
        %4228 = vxpose.xlu0.b32.cont [2/16] %v3850, 128
        %4229 = vxpose.xlu0.b32.cont [3/16] 0.0, 128
        %4230 = vxpose.xlu0.b32.cont [4/16] 0.0, 128
        %4231 = vxpose.xlu0.b32.cont [5/16] 0.0, 128
        %4232 = vxpose.xlu0.b32.cont [6/16] 0.0, 128
        %4233 = vxpose.xlu0.b32.cont [7/16] 0.0, 128
        %4234 = vxpose.xlu0.b32.cont [8/16] 0.0, 128
        %4235 = vxpose.xlu0.b32.cont [9/16] 0.0, 128
        %4236 = vxpose.xlu0.b32.cont [10/16] 0.0, 128
        %4237 = vxpose.xlu0.b32.cont [11/16] 0.0, 128
        %4238 = vxpose.xlu0.b32.cont [12/16] 0.0, 128
        %4239 = vxpose.xlu0.b32.cont [13/16] 0.0, 128
        %4240 = vxpose.xlu0.b32.cont [14/16] 0.0, 128
        %4241 = vxpose.xlu0.b32.cont [15/16] 0.0, 128
        %4242 = vxpose.xlu0.b32.end [16/16] 0.0, 128
        %v4243 = vpop.trf.xlu0
        %v4244 = vpop.trf.xlu0
        %v4245 = vpop.trf.xlu0
        %v4246 = vpop.trf.xlu0
        %v4247 = vpop.trf.xlu0
        %v4248 = vpop.trf.xlu0
        %v4249 = vpop.trf.xlu0
        %v4250 = vpop.trf.xlu0
        %v4251 = vpop.trf.xlu0
        %v4252 = vpop.trf.xlu0
        %v4253 = vpop.trf.xlu0
        %v4254 = vpop.trf.xlu0
        %v4255 = vpop.trf.xlu0
        %v4256 = vpop.trf.xlu0
        %v4257 = vpop.trf.xlu0
        %v4258 = vpop.trf.xlu0
        %v4260 = vsel %vm4182, %v4243, 0
        %v4263 = vsel %vm4182, %v4223, 0
        %4265 = vmatprep.subr.mxu0 0.0
        %4266 = vmatpush1.xpose.msra.mxu0 %v4263
        %4267 = vmatprep.subr.mxu0 0.0
        %4268 = vmatpush1.xpose.msra.mxu0 0.0
        %4269 = vmatprep.subr.mxu0 0.0
        %4270 = vmatpush1.xpose.msra.mxu0 0.0
        %4271 = vmatprep.subr.mxu0 0.0
        %4272 = vmatpush1.xpose.msra.mxu0 0.0
        %4273 = vmatprep.subr.mxu0 0.0
        %4274 = vmatpush1.xpose.msra.mxu0 0.0
        %4275 = vmatprep.subr.mxu0 0.0
        %4276 = vmatpush1.xpose.msra.mxu0 0.0
        %4277 = vmatprep.subr.mxu0 0.0
        %4278 = vmatpush1.xpose.msra.mxu0 0.0
        %4279 = vmatprep.subr.mxu0 0.0
        %4280 = vmatpush1.xpose.msra.mxu0 0.0
        %4281 = vmatprep.subr.mxu0 0.0
        %4282 = vmatpush1.xpose.msra.mxu0 0.0
        %4283 = vmatprep.subr.mxu0 0.0
        %4284 = vmatpush1.xpose.msra.mxu0 0.0
        %4285 = vmatprep.subr.mxu0 0.0
        %4286 = vmatpush1.xpose.msra.mxu0 0.0
        %4287 = vmatprep.subr.mxu0 0.0
        %4288 = vmatpush1.xpose.msra.mxu0 0.0
        %4289 = vmatprep.subr.mxu0 0.0
        %4290 = vmatpush1.xpose.msra.mxu0 0.0
        %4291 = vmatprep.subr.mxu0 0.0
        %4292 = vmatpush1.xpose.msra.mxu0 0.0
        %4293 = vmatprep.subr.mxu0 0.0
        %4294 = vmatpush1.xpose.msra.mxu0 0.0
        %4295 = vmatprep.subr.mxu0 0.0
        %4296 = vmatpush1.xpose.msra.mxu0 0.0
        %4297 = vmatprep.subr.mxu0 0.0
        %4298 = vmatpush1.xpose.msra.mxu0 0.0
        %4299 = vmatprep.subr.mxu0 0.0
        %4300 = vmatpush1.xpose.msra.mxu0 0.0
        %4301 = vmatprep.subr.mxu0 0.0
        %4302 = vmatpush1.xpose.msra.mxu0 0.0
        %4303 = vmatprep.subr.mxu0 0.0
        %4304 = vmatpush1.xpose.msra.mxu0 0.0
        %4305 = vmatprep.subr.mxu0 0.0
        %4306 = vmatpush1.xpose.msra.mxu0 0.0
        %4307 = vmatprep.subr.mxu0 0.0
        %4308 = vmatpush1.xpose.msra.mxu0 0.0
        %4309 = vmatprep.subr.mxu0 0.0
        %4310 = vmatpush1.xpose.msra.mxu0 0.0
        %4311 = vmatprep.subr.mxu0 0.0
        %4312 = vmatpush1.xpose.msra.mxu0 0.0
        %4313 = vmatprep.subr.mxu0 0.0
        %4314 = vmatpush1.xpose.msra.mxu0 0.0
        %4315 = vmatprep.subr.mxu0 0.0
        %4316 = vmatpush1.xpose.msra.mxu0 0.0
        %4317 = vmatprep.subr.mxu0 0.0
        %4318 = vmatpush1.xpose.msra.mxu0 0.0
        %4319 = vmatprep.subr.mxu0 0.0
        %4320 = vmatpush1.xpose.msra.mxu0 0.0
        %4321 = vmatprep.subr.mxu0 0.0
        %4322 = vmatpush1.xpose.msra.mxu0 0.0
        %4323 = vmatprep.subr.mxu0 0.0
        %4324 = vmatpush1.xpose.msra.mxu0 0.0
        %4325 = vmatprep.subr.mxu0 0.0
        %4326 = vmatpush1.xpose.msra.mxu0 0.0
        %4327 = vmatprep.subr.mxu0 0.0
        %4328 = vmatpush1.xpose.msra.mxu0 0.0
        %4329 = vmatprep.mubr.f32.mxu0 0.0
        %4330 = vmatmul.mubr.f32.gmra.mrb[0].mxu0 %v4260
        %v4331 = vpop.f32.mrb[0].mxu0
        %v4332 = vadd.f32 0.0, %v4331
        %v4333 = vpop.f32.mrb[0].mxu0
        %4334 = vdwg.mxu0
        %4335 = vxpose.xlu0.b32.start [1/16] %v3823, 128
        %4336 = vxpose.xlu0.b32.cont [2/16] %v3858, 128
        %4337 = vxpose.xlu0.b32.cont [3/16] 0.0, 128
        %4338 = vxpose.xlu0.b32.cont [4/16] 0.0, 128
        %4339 = vxpose.xlu0.b32.cont [5/16] 0.0, 128
        %4340 = vxpose.xlu0.b32.cont [6/16] 0.0, 128
        %4341 = vxpose.xlu0.b32.cont [7/16] 0.0, 128
        %4342 = vxpose.xlu0.b32.cont [8/16] 0.0, 128
        %4343 = vxpose.xlu0.b32.cont [9/16] 0.0, 128
        %4344 = vxpose.xlu0.b32.cont [10/16] 0.0, 128
        %4345 = vxpose.xlu0.b32.cont [11/16] 0.0, 128
        %4346 = vxpose.xlu0.b32.cont [12/16] 0.0, 128
        %4347 = vxpose.xlu0.b32.cont [13/16] 0.0, 128
        %4348 = vxpose.xlu0.b32.cont [14/16] 0.0, 128
        %4349 = vxpose.xlu0.b32.cont [15/16] 0.0, 128
        %4350 = vxpose.xlu0.b32.end [16/16] 0.0, 128
        %v4351 = vpop.trf.xlu0
        %v4352 = vpop.trf.xlu0
        %v4353 = vpop.trf.xlu0
        %v4354 = vpop.trf.xlu0
        %v4355 = vpop.trf.xlu0
        %v4356 = vpop.trf.xlu0
        %v4357 = vpop.trf.xlu0
        %v4358 = vpop.trf.xlu0
        %v4359 = vpop.trf.xlu0
        %v4360 = vpop.trf.xlu0
        %v4361 = vpop.trf.xlu0
        %v4362 = vpop.trf.xlu0
        %v4363 = vpop.trf.xlu0
        %v4364 = vpop.trf.xlu0
        %v4365 = vpop.trf.xlu0
        %v4366 = vpop.trf.xlu0
        %v4368 = vsel %vm4182, %v4351, 0
        %v4371 = vsel %vm4182, %v4224, 0
        %4373 = vmatprep.subr.mxu0 0.0
        %4374 = vmatpush1.xpose.msra.mxu0 %v4371
        %4375 = vmatprep.subr.mxu0 0.0
        %4376 = vmatpush1.xpose.msra.mxu0 0.0
        %4377 = vmatprep.subr.mxu0 0.0
        %4378 = vmatpush1.xpose.msra.mxu0 0.0
        %4379 = vmatprep.subr.mxu0 0.0
        %4380 = vmatpush1.xpose.msra.mxu0 0.0
        %4381 = vmatprep.subr.mxu0 0.0
        %4382 = vmatpush1.xpose.msra.mxu0 0.0
        %4383 = vmatprep.subr.mxu0 0.0
        %4384 = vmatpush1.xpose.msra.mxu0 0.0
        %4385 = vmatprep.subr.mxu0 0.0
        %4386 = vmatpush1.xpose.msra.mxu0 0.0
        %4387 = vmatprep.subr.mxu0 0.0
        %4388 = vmatpush1.xpose.msra.mxu0 0.0
        %4389 = vmatprep.subr.mxu0 0.0
        %4390 = vmatpush1.xpose.msra.mxu0 0.0
        %4391 = vmatprep.subr.mxu0 0.0
        %4392 = vmatpush1.xpose.msra.mxu0 0.0
        %4393 = vmatprep.subr.mxu0 0.0
        %4394 = vmatpush1.xpose.msra.mxu0 0.0
        %4395 = vmatprep.subr.mxu0 0.0
        %4396 = vmatpush1.xpose.msra.mxu0 0.0
        %4397 = vmatprep.subr.mxu0 0.0
        %4398 = vmatpush1.xpose.msra.mxu0 0.0
        %4399 = vmatprep.subr.mxu0 0.0
        %4400 = vmatpush1.xpose.msra.mxu0 0.0
        %4401 = vmatprep.subr.mxu0 0.0
        %4402 = vmatpush1.xpose.msra.mxu0 0.0
        %4403 = vmatprep.subr.mxu0 0.0
        %4404 = vmatpush1.xpose.msra.mxu0 0.0
        %4405 = vmatprep.subr.mxu0 0.0
        %4406 = vmatpush1.xpose.msra.mxu0 0.0
        %4407 = vmatprep.subr.mxu0 0.0
        %4408 = vmatpush1.xpose.msra.mxu0 0.0
        %4409 = vmatprep.subr.mxu0 0.0
        %4410 = vmatpush1.xpose.msra.mxu0 0.0
        %4411 = vmatprep.subr.mxu0 0.0
        %4412 = vmatpush1.xpose.msra.mxu0 0.0
        %4413 = vmatprep.subr.mxu0 0.0
        %4414 = vmatpush1.xpose.msra.mxu0 0.0
        %4415 = vmatprep.subr.mxu0 0.0
        %4416 = vmatpush1.xpose.msra.mxu0 0.0
        %4417 = vmatprep.subr.mxu0 0.0
        %4418 = vmatpush1.xpose.msra.mxu0 0.0
        %4419 = vmatprep.subr.mxu0 0.0
        %4420 = vmatpush1.xpose.msra.mxu0 0.0
        %4421 = vmatprep.subr.mxu0 0.0
        %4422 = vmatpush1.xpose.msra.mxu0 0.0
        %4423 = vmatprep.subr.mxu0 0.0
        %4424 = vmatpush1.xpose.msra.mxu0 0.0
        %4425 = vmatprep.subr.mxu0 0.0
        %4426 = vmatpush1.xpose.msra.mxu0 0.0
        %4427 = vmatprep.subr.mxu0 0.0
        %4428 = vmatpush1.xpose.msra.mxu0 0.0
        %4429 = vmatprep.subr.mxu0 0.0
        %4430 = vmatpush1.xpose.msra.mxu0 0.0
        %4431 = vmatprep.subr.mxu0 0.0
        %4432 = vmatpush1.xpose.msra.mxu0 0.0
        %4433 = vmatprep.subr.mxu0 0.0
        %4434 = vmatpush1.xpose.msra.mxu0 0.0
        %4435 = vmatprep.subr.mxu0 0.0
        %4436 = vmatpush1.xpose.msra.mxu0 0.0
        %4437 = vmatprep.mubr.f32.mxu0 0.0
        %4438 = vmatmul.mubr.f32.gmra.mrb[0].mxu0 %v4368
        %v4439 = vpop.f32.mrb[0].mxu0
        %v4440 = vadd.f32 0.0, %v4439
        %v4441 = vpop.f32.mrb[0].mxu0
        %4442 = vdwg.mxu0
        %4443 = vxpose.xlu0.b32.start [1/16] %v3824, 128
        %4444 = vxpose.xlu0.b32.cont [2/16] %v3857, 128
        %4445 = vxpose.xlu0.b32.cont [3/16] 0.0, 128
        %4446 = vxpose.xlu0.b32.cont [4/16] 0.0, 128
        %4447 = vxpose.xlu0.b32.cont [5/16] 0.0, 128
        %4448 = vxpose.xlu0.b32.cont [6/16] 0.0, 128
        %4449 = vxpose.xlu0.b32.cont [7/16] 0.0, 128
        %4450 = vxpose.xlu0.b32.cont [8/16] 0.0, 128
        %4451 = vxpose.xlu0.b32.cont [9/16] 0.0, 128
        %4452 = vxpose.xlu0.b32.cont [10/16] 0.0, 128
        %4453 = vxpose.xlu0.b32.cont [11/16] 0.0, 128
        %4454 = vxpose.xlu0.b32.cont [12/16] 0.0, 128
        %4455 = vxpose.xlu0.b32.cont [13/16] 0.0, 128
        %4456 = vxpose.xlu0.b32.cont [14/16] 0.0, 128
        %4457 = vxpose.xlu0.b32.cont [15/16] 0.0, 128
        %4458 = vxpose.xlu0.b32.end [16/16] 0.0, 128
        %v4459 = vpop.trf.xlu0
        %v4460 = vpop.trf.xlu0
        %v4461 = vpop.trf.xlu0
        %v4462 = vpop.trf.xlu0
        %v4463 = vpop.trf.xlu0
        %v4464 = vpop.trf.xlu0
        %v4465 = vpop.trf.xlu0
        %v4466 = vpop.trf.xlu0
        %v4467 = vpop.trf.xlu0
        %v4468 = vpop.trf.xlu0
        %v4469 = vpop.trf.xlu0
        %v4470 = vpop.trf.xlu0
        %v4471 = vpop.trf.xlu0
        %v4472 = vpop.trf.xlu0
        %v4473 = vpop.trf.xlu0
        %v4474 = vpop.trf.xlu0
        %v4476 = vsel %vm4182, %v4459, 0
        %v4479 = vsel %vm4182, %v4225, 0
        %4481 = vmatprep.subr.mxu0 0.0
        %4482 = vmatpush1.xpose.msra.mxu0 %v4479
        %4483 = vmatprep.subr.mxu0 0.0
        %4484 = vmatpush1.xpose.msra.mxu0 0.0
        %4485 = vmatprep.subr.mxu0 0.0
        %4486 = vmatpush1.xpose.msra.mxu0 0.0
        %4487 = vmatprep.subr.mxu0 0.0
        %4488 = vmatpush1.xpose.msra.mxu0 0.0
        %4489 = vmatprep.subr.mxu0 0.0
        %4490 = vmatpush1.xpose.msra.mxu0 0.0
        %4491 = vmatprep.subr.mxu0 0.0
        %4492 = vmatpush1.xpose.msra.mxu0 0.0
        %4493 = vmatprep.subr.mxu0 0.0
        %4494 = vmatpush1.xpose.msra.mxu0 0.0
        %4495 = vmatprep.subr.mxu0 0.0
        %4496 = vmatpush1.xpose.msra.mxu0 0.0
        %4497 = vmatprep.subr.mxu0 0.0
        %4498 = vmatpush1.xpose.msra.mxu0 0.0
        %4499 = vmatprep.subr.mxu0 0.0
        %4500 = vmatpush1.xpose.msra.mxu0 0.0
        %4501 = vmatprep.subr.mxu0 0.0
        %4502 = vmatpush1.xpose.msra.mxu0 0.0
        %4503 = vmatprep.subr.mxu0 0.0
        %4504 = vmatpush1.xpose.msra.mxu0 0.0
        %4505 = vmatprep.subr.mxu0 0.0
        %4506 = vmatpush1.xpose.msra.mxu0 0.0
        %4507 = vmatprep.subr.mxu0 0.0
        %4508 = vmatpush1.xpose.msra.mxu0 0.0
        %4509 = vmatprep.subr.mxu0 0.0
        %4510 = vmatpush1.xpose.msra.mxu0 0.0
        %4511 = vmatprep.subr.mxu0 0.0
        %4512 = vmatpush1.xpose.msra.mxu0 0.0
        %4513 = vmatprep.subr.mxu0 0.0
        %4514 = vmatpush1.xpose.msra.mxu0 0.0
        %4515 = vmatprep.subr.mxu0 0.0
        %4516 = vmatpush1.xpose.msra.mxu0 0.0
        %4517 = vmatprep.subr.mxu0 0.0
        %4518 = vmatpush1.xpose.msra.mxu0 0.0
        %4519 = vmatprep.subr.mxu0 0.0
        %4520 = vmatpush1.xpose.msra.mxu0 0.0
        %4521 = vmatprep.subr.mxu0 0.0
        %4522 = vmatpush1.xpose.msra.mxu0 0.0
        %4523 = vmatprep.subr.mxu0 0.0
        %4524 = vmatpush1.xpose.msra.mxu0 0.0
        %4525 = vmatprep.subr.mxu0 0.0
        %4526 = vmatpush1.xpose.msra.mxu0 0.0
        %4527 = vmatprep.subr.mxu0 0.0
        %4528 = vmatpush1.xpose.msra.mxu0 0.0
        %4529 = vmatprep.subr.mxu0 0.0
        %4530 = vmatpush1.xpose.msra.mxu0 0.0
        %4531 = vmatprep.subr.mxu0 0.0
        %4532 = vmatpush1.xpose.msra.mxu0 0.0
        %4533 = vmatprep.subr.mxu0 0.0
        %4534 = vmatpush1.xpose.msra.mxu0 0.0
        %4535 = vmatprep.subr.mxu0 0.0
        %4536 = vmatpush1.xpose.msra.mxu0 0.0
        %4537 = vmatprep.subr.mxu0 0.0
        %4538 = vmatpush1.xpose.msra.mxu0 0.0
        %4539 = vmatprep.subr.mxu0 0.0
        %4540 = vmatpush1.xpose.msra.mxu0 0.0
        %4541 = vmatprep.subr.mxu0 0.0
        %4542 = vmatpush1.xpose.msra.mxu0 0.0
        %4543 = vmatprep.subr.mxu0 0.0
        %4544 = vmatpush1.xpose.msra.mxu0 0.0
        %4545 = vmatprep.mubr.f32.mxu0 0.0
        %4546 = vmatmul.mubr.f32.gmra.mrb[0].mxu0 %v4476
        %v4547 = vpop.f32.mrb[0].mxu0
        %v4548 = vadd.f32 0.0, %v4547
        %v4549 = vpop.f32.mrb[0].mxu0
        %4550 = vdwg.mxu0
        %4551 = vxpose.xlu0.b32.start [1/16] %v3825, 128
        %4552 = vxpose.xlu0.b32.cont [2/16] %v3859, 128
        %4553 = vxpose.xlu0.b32.cont [3/16] 0.0, 128
        %4554 = vxpose.xlu0.b32.cont [4/16] 0.0, 128
        %4555 = vxpose.xlu0.b32.cont [5/16] 0.0, 128
        %4556 = vxpose.xlu0.b32.cont [6/16] 0.0, 128
        %4557 = vxpose.xlu0.b32.cont [7/16] 0.0, 128
        %4558 = vxpose.xlu0.b32.cont [8/16] 0.0, 128
        %4559 = vxpose.xlu0.b32.cont [9/16] 0.0, 128
        %4560 = vxpose.xlu0.b32.cont [10/16] 0.0, 128
        %4561 = vxpose.xlu0.b32.cont [11/16] 0.0, 128
        %4562 = vxpose.xlu0.b32.cont [12/16] 0.0, 128
        %4563 = vxpose.xlu0.b32.cont [13/16] 0.0, 128
        %4564 = vxpose.xlu0.b32.cont [14/16] 0.0, 128
        %4565 = vxpose.xlu0.b32.cont [15/16] 0.0, 128
        %4566 = vxpose.xlu0.b32.end [16/16] 0.0, 128
        %v4567 = vpop.trf.xlu0
        %v4568 = vpop.trf.xlu0
        %v4569 = vpop.trf.xlu0
        %v4570 = vpop.trf.xlu0
        %v4571 = vpop.trf.xlu0
        %v4572 = vpop.trf.xlu0
        %v4573 = vpop.trf.xlu0
        %v4574 = vpop.trf.xlu0
        %v4575 = vpop.trf.xlu0
        %v4576 = vpop.trf.xlu0
        %v4577 = vpop.trf.xlu0
        %v4578 = vpop.trf.xlu0
        %v4579 = vpop.trf.xlu0
        %v4580 = vpop.trf.xlu0
        %v4581 = vpop.trf.xlu0
        %v4582 = vpop.trf.xlu0
        %v4584 = vsel %vm4182, %v4567, 0
        %v4587 = vsel %vm4182, %v4226, 0
        %4589 = vmatprep.subr.mxu0 0.0
        %4590 = vmatpush1.xpose.msra.mxu0 %v4587
        %4591 = vmatprep.subr.mxu0 0.0
        %4592 = vmatpush1.xpose.msra.mxu0 0.0
        %4593 = vmatprep.subr.mxu0 0.0
        %4594 = vmatpush1.xpose.msra.mxu0 0.0
        %4595 = vmatprep.subr.mxu0 0.0
        %4596 = vmatpush1.xpose.msra.mxu0 0.0
        %4597 = vmatprep.subr.mxu0 0.0
        %4598 = vmatpush1.xpose.msra.mxu0 0.0
        %4599 = vmatprep.subr.mxu0 0.0
        %4600 = vmatpush1.xpose.msra.mxu0 0.0
        %4601 = vmatprep.subr.mxu0 0.0
        %4602 = vmatpush1.xpose.msra.mxu0 0.0
        %4603 = vmatprep.subr.mxu0 0.0
        %4604 = vmatpush1.xpose.msra.mxu0 0.0
        %4605 = vmatprep.subr.mxu0 0.0
        %4606 = vmatpush1.xpose.msra.mxu0 0.0
        %4607 = vmatprep.subr.mxu0 0.0
        %4608 = vmatpush1.xpose.msra.mxu0 0.0
        %4609 = vmatprep.subr.mxu0 0.0
        %4610 = vmatpush1.xpose.msra.mxu0 0.0
        %4611 = vmatprep.subr.mxu0 0.0
        %4612 = vmatpush1.xpose.msra.mxu0 0.0
        %4613 = vmatprep.subr.mxu0 0.0
        %4614 = vmatpush1.xpose.msra.mxu0 0.0
        %4615 = vmatprep.subr.mxu0 0.0
        %4616 = vmatpush1.xpose.msra.mxu0 0.0
        %4617 = vmatprep.subr.mxu0 0.0
        %4618 = vmatpush1.xpose.msra.mxu0 0.0
        %4619 = vmatprep.subr.mxu0 0.0
        %4620 = vmatpush1.xpose.msra.mxu0 0.0
        %4621 = vmatprep.subr.mxu0 0.0
        %4622 = vmatpush1.xpose.msra.mxu0 0.0
        %4623 = vmatprep.subr.mxu0 0.0
        %4624 = vmatpush1.xpose.msra.mxu0 0.0
        %4625 = vmatprep.subr.mxu0 0.0
        %4626 = vmatpush1.xpose.msra.mxu0 0.0
        %4627 = vmatprep.subr.mxu0 0.0
        %4628 = vmatpush1.xpose.msra.mxu0 0.0
        %4629 = vmatprep.subr.mxu0 0.0
        %4630 = vmatpush1.xpose.msra.mxu0 0.0
        %4631 = vmatprep.subr.mxu0 0.0
        %4632 = vmatpush1.xpose.msra.mxu0 0.0
        %4633 = vmatprep.subr.mxu0 0.0
        %4634 = vmatpush1.xpose.msra.mxu0 0.0
        %4635 = vmatprep.subr.mxu0 0.0
        %4636 = vmatpush1.xpose.msra.mxu0 0.0
        %4637 = vmatprep.subr.mxu0 0.0
        %4638 = vmatpush1.xpose.msra.mxu0 0.0
        %4639 = vmatprep.subr.mxu0 0.0
        %4640 = vmatpush1.xpose.msra.mxu0 0.0
        %4641 = vmatprep.subr.mxu0 0.0
        %4642 = vmatpush1.xpose.msra.mxu0 0.0
        %4643 = vmatprep.subr.mxu0 0.0
        %4644 = vmatpush1.xpose.msra.mxu0 0.0
        %4645 = vmatprep.subr.mxu0 0.0
        %4646 = vmatpush1.xpose.msra.mxu0 0.0
        %4647 = vmatprep.subr.mxu0 0.0
        %4648 = vmatpush1.xpose.msra.mxu0 0.0
        %4649 = vmatprep.subr.mxu0 0.0
        %4650 = vmatpush1.xpose.msra.mxu0 0.0
        %4651 = vmatprep.subr.mxu0 0.0
        %4652 = vmatpush1.xpose.msra.mxu0 0.0
        %4653 = vmatprep.mubr.f32.mxu0 0.0
        %4654 = vmatmul.mubr.f32.gmra.mrb[0].mxu0 %v4584
        %v4655 = vpop.f32.mrb[0].mxu0
        %v4656 = vadd.f32 0.0, %v4655
        %v4657 = vpop.f32.mrb[0].mxu0
        %4658 = vdwg.mxu0
        %4659 = vxpose.xlu0.b32.start [1/16] %v4332, 128
        %4660 = vxpose.xlu0.b32.cont [2/16] 0.0, 128
        %4661 = vxpose.xlu0.b32.cont [3/16] 0.0, 128
        %4662 = vxpose.xlu0.b32.cont [4/16] 0.0, 128
        %4663 = vxpose.xlu0.b32.cont [5/16] 0.0, 128
        %4664 = vxpose.xlu0.b32.cont [6/16] 0.0, 128
        %4665 = vxpose.xlu0.b32.cont [7/16] 0.0, 128
        %4666 = vxpose.xlu0.b32.cont [8/16] 0.0, 128
        %4667 = vxpose.xlu0.b32.cont [9/16] 0.0, 128
        %4668 = vxpose.xlu0.b32.cont [10/16] 0.0, 128
        %4669 = vxpose.xlu0.b32.cont [11/16] 0.0, 128
        %4670 = vxpose.xlu0.b32.cont [12/16] 0.0, 128
        %4671 = vxpose.xlu0.b32.cont [13/16] 0.0, 128
        %4672 = vxpose.xlu0.b32.cont [14/16] 0.0, 128
        %4673 = vxpose.xlu0.b32.cont [15/16] 0.0, 128
        %4674 = vxpose.xlu0.b32.end [16/16] 0.0, 128
        %v4675 = vpop.trf.xlu0
        %v4676 = vpop.trf.xlu0
        %v4677 = vpop.trf.xlu0
        %v4678 = vpop.trf.xlu0
        %v4679 = vpop.trf.xlu0
        %v4680 = vpop.trf.xlu0
        %v4681 = vpop.trf.xlu0
        %v4682 = vpop.trf.xlu0
        %v4683 = vpop.trf.xlu0
        %v4684 = vpop.trf.xlu0
        %v4685 = vpop.trf.xlu0
        %v4686 = vpop.trf.xlu0
        %v4687 = vpop.trf.xlu0
        %v4688 = vpop.trf.xlu0
        %v4689 = vpop.trf.xlu0
        %v4690 = vpop.trf.xlu0
        %4691 = vxpose.xlu0.b32.start [1/16] %v4440, 128
        %4692 = vxpose.xlu0.b32.cont [2/16] 0.0, 128
        %4693 = vxpose.xlu0.b32.cont [3/16] 0.0, 128
        %4694 = vxpose.xlu0.b32.cont [4/16] 0.0, 128
        %4695 = vxpose.xlu0.b32.cont [5/16] 0.0, 128
        %4696 = vxpose.xlu0.b32.cont [6/16] 0.0, 128
        %4697 = vxpose.xlu0.b32.cont [7/16] 0.0, 128
        %4698 = vxpose.xlu0.b32.cont [8/16] 0.0, 128
        %4699 = vxpose.xlu0.b32.cont [9/16] 0.0, 128
        %4700 = vxpose.xlu0.b32.cont [10/16] 0.0, 128
        %4701 = vxpose.xlu0.b32.cont [11/16] 0.0, 128
        %4702 = vxpose.xlu0.b32.cont [12/16] 0.0, 128
        %4703 = vxpose.xlu0.b32.cont [13/16] 0.0, 128
        %4704 = vxpose.xlu0.b32.cont [14/16] 0.0, 128
        %4705 = vxpose.xlu0.b32.cont [15/16] 0.0, 128
        %4706 = vxpose.xlu0.b32.end [16/16] 0.0, 128
        %v4707 = vpop.trf.xlu0
        %v4708 = vpop.trf.xlu0
        %v4709 = vpop.trf.xlu0
        %v4710 = vpop.trf.xlu0
        %v4711 = vpop.trf.xlu0
        %v4712 = vpop.trf.xlu0
        %v4713 = vpop.trf.xlu0
        %v4714 = vpop.trf.xlu0
        %v4715 = vpop.trf.xlu0
        %v4716 = vpop.trf.xlu0
        %v4717 = vpop.trf.xlu0
        %v4718 = vpop.trf.xlu0
        %v4719 = vpop.trf.xlu0
        %v4720 = vpop.trf.xlu0
        %v4721 = vpop.trf.xlu0
        %v4722 = vpop.trf.xlu0
        %4723 = vxpose.xlu0.b32.start [1/16] %v4548, 128
        %4724 = vxpose.xlu0.b32.cont [2/16] 0.0, 128
        %4725 = vxpose.xlu0.b32.cont [3/16] 0.0, 128
        %4726 = vxpose.xlu0.b32.cont [4/16] 0.0, 128
        %4727 = vxpose.xlu0.b32.cont [5/16] 0.0, 128
        %4728 = vxpose.xlu0.b32.cont [6/16] 0.0, 128
        %4729 = vxpose.xlu0.b32.cont [7/16] 0.0, 128
        %4730 = vxpose.xlu0.b32.cont [8/16] 0.0, 128
        %4731 = vxpose.xlu0.b32.cont [9/16] 0.0, 128
        %4732 = vxpose.xlu0.b32.cont [10/16] 0.0, 128
        %4733 = vxpose.xlu0.b32.cont [11/16] 0.0, 128
        %4734 = vxpose.xlu0.b32.cont [12/16] 0.0, 128
        %4735 = vxpose.xlu0.b32.cont [13/16] 0.0, 128
        %4736 = vxpose.xlu0.b32.cont [14/16] 0.0, 128
        %4737 = vxpose.xlu0.b32.cont [15/16] 0.0, 128
        %4738 = vxpose.xlu0.b32.end [16/16] 0.0, 128
        %v4739 = vpop.trf.xlu0
        %v4740 = vpop.trf.xlu0
        %v4741 = vpop.trf.xlu0
        %v4742 = vpop.trf.xlu0
        %v4743 = vpop.trf.xlu0
        %v4744 = vpop.trf.xlu0
        %v4745 = vpop.trf.xlu0
        %v4746 = vpop.trf.xlu0
        %v4747 = vpop.trf.xlu0
        %v4748 = vpop.trf.xlu0
        %v4749 = vpop.trf.xlu0
        %v4750 = vpop.trf.xlu0
        %v4751 = vpop.trf.xlu0
        %v4752 = vpop.trf.xlu0
        %v4753 = vpop.trf.xlu0
        %v4754 = vpop.trf.xlu0
        %4755 = vxpose.xlu0.b32.start [1/16] %v4656, 128
        %4756 = vxpose.xlu0.b32.cont [2/16] 0.0, 128
        %4757 = vxpose.xlu0.b32.cont [3/16] 0.0, 128
        %4758 = vxpose.xlu0.b32.cont [4/16] 0.0, 128
        %4759 = vxpose.xlu0.b32.cont [5/16] 0.0, 128
        %4760 = vxpose.xlu0.b32.cont [6/16] 0.0, 128
        %4761 = vxpose.xlu0.b32.cont [7/16] 0.0, 128
        %4762 = vxpose.xlu0.b32.cont [8/16] 0.0, 128
        %4763 = vxpose.xlu0.b32.cont [9/16] 0.0, 128
        %4764 = vxpose.xlu0.b32.cont [10/16] 0.0, 128
        %4765 = vxpose.xlu0.b32.cont [11/16] 0.0, 128
        %4766 = vxpose.xlu0.b32.cont [12/16] 0.0, 128
        %4767 = vxpose.xlu0.b32.cont [13/16] 0.0, 128
        %4768 = vxpose.xlu0.b32.cont [14/16] 0.0, 128
        %4769 = vxpose.xlu0.b32.cont [15/16] 0.0, 128
        %4770 = vxpose.xlu0.b32.end [16/16] 0.0, 128
        %v4771 = vpop.trf.xlu0
        %v4772 = vpop.trf.xlu0
        %v4773 = vpop.trf.xlu0
        %v4774 = vpop.trf.xlu0
        %v4775 = vpop.trf.xlu0
        %v4776 = vpop.trf.xlu0
        %v4777 = vpop.trf.xlu0
        %v4778 = vpop.trf.xlu0
        %v4779 = vpop.trf.xlu0
        %v4780 = vpop.trf.xlu0
        %v4781 = vpop.trf.xlu0
        %v4782 = vpop.trf.xlu0
        %v4783 = vpop.trf.xlu0
        %v4784 = vpop.trf.xlu0
        %v4785 = vpop.trf.xlu0
        %v4786 = vpop.trf.xlu0
        %v4787 = vcombine.low %v4675, %v4739
        %v4788 = vcombine.high %v4675, %v4739
        %v4790 = vunpack.c.l.s4 1983009808
        %v4791 = vunpack.c.0.s8 %v4790
        %v4792 = vlaneseq
        %v4793 = vshrl.u32 %v4792, 7
        %v4794 = vsub.s32 %v4791, %v4793
        %v4795 = vrot.slane %v4787, %v4794
        %v4797 = vunpack.c.l.s4 1983009808
        %v4798 = vunpack.c.0.s8 %v4797
        %v4799 = vlaneseq
        %v4800 = vshrl.u32 %v4799, 7
        %v4801 = vsub.s32 %v4798, %v4800
        %v4802 = vrot.slane %v4788, %v4801
        %v4803 = vcombine.low %v4707, %v4771
        %v4804 = vcombine.high %v4707, %v4771
        %v4806 = vunpack.c.l.s4 1983009808
        %v4807 = vunpack.c.0.s8 %v4806
        %v4808 = vlaneseq
        %v4809 = vshrl.u32 %v4808, 7
        %v4810 = vsub.s32 %v4807, %v4809
        %v4811 = vrot.slane %v4803, %v4810
        %v4813 = vunpack.c.l.s4 1983009808
        %v4814 = vunpack.c.0.s8 %v4813
        %v4815 = vlaneseq
        %v4816 = vshrl.u32 %v4815, 7
        %v4817 = vsub.s32 %v4814, %v4816
        %v4818 = vrot.slane %v4804, %v4817
        %v4819 = vcombine.low %v4795, %v4811
        %v4820 = vcombine.high %v4795, %v4811
        %v4822 = vunpack.c.l.s4 1934713408
        %v4823 = vunpack.c.0.s8 %v4822
        %v4824 = vlaneseq
        %v4825 = vshrl.u32 %v4824, 7
        %v4826 = vsub.s32 %v4823, %v4825
        %v4827 = vrot.slane %v4819, %v4826
        %v4829 = vunpack.c.l.s4 1934713408
        %v4830 = vunpack.c.0.s8 %v4829
        %v4831 = vlaneseq
        %v4832 = vshrl.u32 %v4831, 7
        %v4833 = vsub.s32 %v4830, %v4832
        %v4834 = vrot.slane %v4820, %v4833
        %v4835 = vcombine.low %v4802, %v4818
        %v4836 = vcombine.high %v4802, %v4818
        %v4838 = vunpack.c.l.s4 1934713408
        %v4839 = vunpack.c.0.s8 %v4838
        %v4840 = vlaneseq
        %v4841 = vshrl.u32 %v4840, 7
        %v4842 = vsub.s32 %v4839, %v4841
        %v4843 = vrot.slane %v4835, %v4842
        %v4845 = vunpack.c.l.s4 1934713408
        %v4846 = vunpack.c.0.s8 %v4845
        %v4847 = vlaneseq
        %v4848 = vshrl.u32 %v4847, 7
        %v4849 = vsub.s32 %v4846, %v4848
        %v4850 = vrot.slane %v4836, %v4849
        %v4851 = vcombine.high %v4827, 0.0
        %v4852 = vcombine.high %v4834, 0.0
        %v4853 = vcombine.high %v4843, 0.0
        %v4854 = vcombine.high %v4850, 0.0
        %v4855 = vcombine.low %v4827, %v4834
        %v4857 = vunpack.c.l.s4 1983009808
        %v4858 = vunpack.c.0.s8 %v4857
        %v4859 = vlaneseq
        %v4860 = vshrl.u32 %v4859, 7
        %v4861 = vsub.s32 %v4858, %v4860
        %v4862 = vrot.slane %v4855, %v4861
        %v4863 = vcombine.low %v4851, %v4852
        %v4865 = vunpack.c.l.s4 1983009808
        %v4866 = vunpack.c.0.s8 %v4865
        %v4867 = vlaneseq
        %v4868 = vshrl.u32 %v4867, 7
        %v4869 = vsub.s32 %v4866, %v4868
        %v4870 = vrot.slane %v4863, %v4869
        %v4871 = vcombine.low %v4843, %v4850
        %v4873 = vunpack.c.l.s4 1983009808
        %v4874 = vunpack.c.0.s8 %v4873
        %v4875 = vlaneseq
        %v4876 = vshrl.u32 %v4875, 7
        %v4877 = vsub.s32 %v4874, %v4876
        %v4878 = vrot.slane %v4871, %v4877
        %v4879 = vcombine.low %v4853, %v4854
        %v4881 = vunpack.c.l.s4 1983009808
        %v4882 = vunpack.c.0.s8 %v4881
        %v4883 = vlaneseq
        %v4884 = vshrl.u32 %v4883, 7
        %v4885 = vsub.s32 %v4882, %v4884
        %v4886 = vrot.slane %v4879, %v4885
        %v4887 = vcombine.low %v4862, %v4870
        %v4888 = vcombine.high %v4862, %v4870
        %v4890 = vunpack.c.l.s4 1934713408
        %v4891 = vunpack.c.0.s8 %v4890
        %v4892 = vlaneseq
        %v4893 = vshrl.u32 %v4892, 7
        %v4894 = vsub.s32 %v4891, %v4893
        %v4895 = vrot.slane %v4887, %v4894
        %v4897 = vunpack.c.l.s4 1934713408
        %v4898 = vunpack.c.0.s8 %v4897
        %v4899 = vlaneseq
        %v4900 = vshrl.u32 %v4899, 7
        %v4901 = vsub.s32 %v4898, %v4900
        %v4902 = vrot.slane %v4888, %v4901
        %v4903 = vcombine.low %v4878, %v4886
        %v4904 = vcombine.high %v4878, %v4886
        %v4906 = vunpack.c.l.s4 1934713408
        %v4907 = vunpack.c.0.s8 %v4906
        %v4908 = vlaneseq
        %v4909 = vshrl.u32 %v4908, 7
        %v4910 = vsub.s32 %v4907, %v4909
        %v4911 = vrot.slane %v4903, %v4910
        %v4913 = vunpack.c.l.s4 1934713408
        %v4914 = vunpack.c.0.s8 %v4913
        %v4915 = vlaneseq
        %v4916 = vshrl.u32 %v4915, 7
        %v4917 = vsub.s32 %v4914, %v4916
        %v4918 = vrot.slane %v4904, %v4917
        %v4919 = vcombine.low %v4895, %v4911
        %v4920 = vcombine.high %v4895, %v4911
        %v4921 = vcombine.low %v4902, %v4918
        %v4922 = vcombine.high %v4902, %v4918
        %4924 = vrot.lane.b32.xlu0 %v4920, 8
        %v4925 = vpop.permute.xlu0 %4924
        %4928 = vrot.lane.b32.xlu0 %v4921, 16
        %v4929 = vpop.permute.xlu0 %4928
        %4932 = vrot.lane.b32.xlu0 %v4922, 24
        %v4933 = vpop.permute.xlu0 %4932
        %v4935 = vsel %vm1926, %v4919, %v4925
        %v4936 = vsel %vm2984, %v4935, %v4929
        %v4937 = vsel %vm2986, %v4936, %v4933
        %v4939 = vlaneseq
        %v4940 = vshrl.u32 %v4939, 7
        %v4941 = vsub.s32 0, %v4940
        %v4942 = vrot.slane %v1385, %v4941
        %v4945 = vsel %vm1410, %v4937, 0
        %4947 = vmatprep.subr.mxu0 0.0
        %4948 = vmatpush1.msra.mxu0 %v1381
        %4949 = vmatprep.subr.mxu0 0.0
        %4950 = vmatpush1.msra.mxu0 %v1382
        %4951 = vmatprep.subr.mxu0 0.0
        %4952 = vmatpush1.msra.mxu0 %v1383
        %4953 = vmatprep.subr.mxu0 0.0
        %4954 = vmatpush1.msra.mxu0 %v1384
        %4955 = vmatprep.subr.mxu0 0.0
        %4956 = vmatpush1.msra.mxu0 0.0
        %4957 = vmatprep.subr.mxu0 0.0
        %4958 = vmatpush1.msra.mxu0 0.0
        %4959 = vmatprep.subr.mxu0 0.0
        %4960 = vmatpush1.msra.mxu0 0.0
        %4961 = vmatprep.subr.mxu0 0.0
        %4962 = vmatpush1.msra.mxu0 0.0
        %4963 = vmatprep.subr.mxu0 0.0
        %4964 = vmatpush1.msra.mxu0 0.0
        %4965 = vmatprep.subr.mxu0 0.0
        %4966 = vmatpush1.msra.mxu0 0.0
        %4967 = vmatprep.subr.mxu0 0.0
        %4968 = vmatpush1.msra.mxu0 0.0
        %4969 = vmatprep.subr.mxu0 0.0
        %4970 = vmatpush1.msra.mxu0 0.0
        %4971 = vmatprep.subr.mxu0 0.0
        %4972 = vmatpush1.msra.mxu0 0.0
        %4973 = vmatprep.subr.mxu0 0.0
        %4974 = vmatpush1.msra.mxu0 0.0
        %4975 = vmatprep.subr.mxu0 0.0
        %4976 = vmatpush1.msra.mxu0 0.0
        %4977 = vmatprep.subr.mxu0 0.0
        %4978 = vmatpush1.msra.mxu0 0.0
        %4979 = vmatprep.subr.mxu0 0.0
        %4980 = vmatpush1.msra.mxu0 0.0
        %4981 = vmatprep.subr.mxu0 0.0
        %4982 = vmatpush1.msra.mxu0 0.0
        %4983 = vmatprep.subr.mxu0 0.0
        %4984 = vmatpush1.msra.mxu0 0.0
        %4985 = vmatprep.subr.mxu0 0.0
        %4986 = vmatpush1.msra.mxu0 0.0
        %4987 = vmatprep.subr.mxu0 0.0
        %4988 = vmatpush1.msra.mxu0 0.0
        %4989 = vmatprep.subr.mxu0 0.0
        %4990 = vmatpush1.msra.mxu0 0.0
        %4991 = vmatprep.subr.mxu0 0.0
        %4992 = vmatpush1.msra.mxu0 0.0
        %4993 = vmatprep.subr.mxu0 0.0
        %4994 = vmatpush1.msra.mxu0 0.0
        %4995 = vmatprep.subr.mxu0 0.0
        %4996 = vmatpush1.msra.mxu0 0.0
        %4997 = vmatprep.subr.mxu0 0.0
        %4998 = vmatpush1.msra.mxu0 0.0
        %4999 = vmatprep.subr.mxu0 0.0
        %5000 = vmatpush1.msra.mxu0 0.0
        %5001 = vmatprep.subr.mxu0 0.0
        %5002 = vmatpush1.msra.mxu0 0.0
        %5003 = vmatprep.subr.mxu0 0.0
        %5004 = vmatpush1.msra.mxu0 0.0
        %5005 = vmatprep.subr.mxu0 0.0
        %5006 = vmatpush1.msra.mxu0 0.0
        %5007 = vmatprep.subr.mxu0 0.0
        %5008 = vmatpush1.msra.mxu0 0.0
        %5009 = vmatprep.subr.mxu0 0.0
        %5010 = vmatpush1.msra.mxu0 0.0
        %5011 = vmatprep.mubr.f32.mxu0 0.0
        %5012 = vmatmul.mubr.f32.gmra.mrb[0].mxu0 %v4945
        %v5013 = vpop.f32.mrb[0].mxu0
        %v5014 = vadd.f32 %v4942, %v5013
        %v5015 = vpop.f32.mrb[0].mxu0
        %5016 = vdwg.mxu0
        %v5017 = vadd.f32 %v3095, %v5014
        %v5018 = vsel %vm1410, %v5017, 0.0
        %5019 = vadd.xlane.f32.xlu0 %v5018
        %v5020 = vpop.xlane.xlu0 %5019
        %v5021 = vmul.f32 %v5020, %v3071
        %v5022 = vsub.f32 %v5017, %v5021
        %v5023 = vmul.f32 %v5022, %v5022
        %v5024 = vsel %vm1410, %v5023, 0.0
        %5025 = vadd.xlane.f32.xlu0 %v5024
        %v5026 = vpop.xlane.xlu0 %5025
        %v5027 = vmul.f32 %v5026, %v3071
        %v5028 = vadd.f32 %v5027, 1e-05
        %v5029 = vrsqrt.pop %v5028
        %v5030 = vmul.f32 %v5022, %v5029
        %v5031 = vmul.f32 %v5030, %v3086
        %v5032 = vadd.f32 %v5031, %v3093
        %v5034 = vlaneseq
        %v5035 = vshrl.u32 %v5034, 7
        %v5036 = vsub.s32 0, %v5035
        %v5037 = vrot.slane %v1392, %v5036
        %v5040 = vsel %vm1410, %v5032, 0
        %5042 = vmatprep.subr.mxu0 0.0
        %5043 = vmatpush1.msra.mxu0 %v1388
        %5044 = vmatprep.subr.mxu0 0.0
        %5045 = vmatpush1.msra.mxu0 %v1389
        %5046 = vmatprep.subr.mxu0 0.0
        %5047 = vmatpush1.msra.mxu0 %v1390
        %5048 = vmatprep.subr.mxu0 0.0
        %5049 = vmatpush1.msra.mxu0 %v1391
        %5050 = vmatprep.subr.mxu0 0.0
        %5051 = vmatpush1.msra.mxu0 0.0
        %5052 = vmatprep.subr.mxu0 0.0
        %5053 = vmatpush1.msra.mxu0 0.0
        %5054 = vmatprep.subr.mxu0 0.0
        %5055 = vmatpush1.msra.mxu0 0.0
        %5056 = vmatprep.subr.mxu0 0.0
        %5057 = vmatpush1.msra.mxu0 0.0
        %5058 = vmatprep.subr.mxu0 0.0
        %5059 = vmatpush1.msra.mxu0 0.0
        %5060 = vmatprep.subr.mxu0 0.0
        %5061 = vmatpush1.msra.mxu0 0.0
        %5062 = vmatprep.subr.mxu0 0.0
        %5063 = vmatpush1.msra.mxu0 0.0
        %5064 = vmatprep.subr.mxu0 0.0
        %5065 = vmatpush1.msra.mxu0 0.0
        %5066 = vmatprep.subr.mxu0 0.0
        %5067 = vmatpush1.msra.mxu0 0.0
        %5068 = vmatprep.subr.mxu0 0.0
        %5069 = vmatpush1.msra.mxu0 0.0
        %5070 = vmatprep.subr.mxu0 0.0
        %5071 = vmatpush1.msra.mxu0 0.0
        %5072 = vmatprep.subr.mxu0 0.0
        %5073 = vmatpush1.msra.mxu0 0.0
        %5074 = vmatprep.subr.mxu0 0.0
        %5075 = vmatpush1.msra.mxu0 0.0
        %5076 = vmatprep.subr.mxu0 0.0
        %5077 = vmatpush1.msra.mxu0 0.0
        %5078 = vmatprep.subr.mxu0 0.0
        %5079 = vmatpush1.msra.mxu0 0.0
        %5080 = vmatprep.subr.mxu0 0.0
        %5081 = vmatpush1.msra.mxu0 0.0
        %5082 = vmatprep.subr.mxu0 0.0
        %5083 = vmatpush1.msra.mxu0 0.0
        %5084 = vmatprep.subr.mxu0 0.0
        %5085 = vmatpush1.msra.mxu0 0.0
        %5086 = vmatprep.subr.mxu0 0.0
        %5087 = vmatpush1.msra.mxu0 0.0
        %5088 = vmatprep.subr.mxu0 0.0
        %5089 = vmatpush1.msra.mxu0 0.0
        %5090 = vmatprep.subr.mxu0 0.0
        %5091 = vmatpush1.msra.mxu0 0.0
        %5092 = vmatprep.subr.mxu0 0.0
        %5093 = vmatpush1.msra.mxu0 0.0
        %5094 = vmatprep.subr.mxu0 0.0
        %5095 = vmatpush1.msra.mxu0 0.0
        %5096 = vmatprep.subr.mxu0 0.0
        %5097 = vmatpush1.msra.mxu0 0.0
        %5098 = vmatprep.subr.mxu0 0.0
        %5099 = vmatpush1.msra.mxu0 0.0
        %5100 = vmatprep.subr.mxu0 0.0
        %5101 = vmatpush1.msra.mxu0 0.0
        %5102 = vmatprep.subr.mxu0 0.0
        %5103 = vmatpush1.msra.mxu0 0.0
        %5104 = vmatprep.subr.mxu0 0.0
        %5105 = vmatpush1.msra.mxu0 0.0
        %5106 = vmatprep.mubr.f32.mxu0 0.0
        %5107 = vmatmul.mubr.f32.gmra.mrb[0].mxu0 %v5040
        %v5108 = vpop.f32.mrb[0].mxu0
        %v5109 = vadd.f32 %v5037, %v5108
        %v5110 = vpop.f32.mrb[0].mxu0
        %5111 = vdwg.mxu0
        %v5112 = vmax.f32 %v5109, 0.0
        %v5114 = vlaneseq
        %v5115 = vshrl.u32 %v5114, 7
        %v5116 = vsub.s32 0, %v5115
        %v5117 = vrot.slane %v1401, %v5116
        %vm5119 = vcmask 523264
        %v5121 = vsel %vm5119, %v5112, 0
        %5123 = vmatprep.subr.mxu0 0.0
        %5124 = vmatpush1.msra.mxu0 %v1393
        %5125 = vmatprep.subr.mxu0 0.0
        %5126 = vmatpush1.msra.mxu0 %v1394
        %5127 = vmatprep.subr.mxu0 0.0
        %5128 = vmatpush1.msra.mxu0 %v1395
        %5129 = vmatprep.subr.mxu0 0.0
        %5130 = vmatpush1.msra.mxu0 %v1396
        %5131 = vmatprep.subr.mxu0 0.0
        %5132 = vmatpush1.msra.mxu0 %v1397
        %5133 = vmatprep.subr.mxu0 0.0
        %5134 = vmatpush1.msra.mxu0 %v1398
        %5135 = vmatprep.subr.mxu0 0.0
        %5136 = vmatpush1.msra.mxu0 %v1399
        %5137 = vmatprep.subr.mxu0 0.0
        %5138 = vmatpush1.msra.mxu0 %v1400
        %5139 = vmatprep.subr.mxu0 0.0
        %5140 = vmatpush1.msra.mxu0 0.0
        %5141 = vmatprep.subr.mxu0 0.0
        %5142 = vmatpush1.msra.mxu0 0.0
        %5143 = vmatprep.subr.mxu0 0.0
        %5144 = vmatpush1.msra.mxu0 0.0
        %5145 = vmatprep.subr.mxu0 0.0
        %5146 = vmatpush1.msra.mxu0 0.0
        %5147 = vmatprep.subr.mxu0 0.0
        %5148 = vmatpush1.msra.mxu0 0.0
        %5149 = vmatprep.subr.mxu0 0.0
        %5150 = vmatpush1.msra.mxu0 0.0
        %5151 = vmatprep.subr.mxu0 0.0
        %5152 = vmatpush1.msra.mxu0 0.0
        %5153 = vmatprep.subr.mxu0 0.0
        %5154 = vmatpush1.msra.mxu0 0.0
        %5155 = vmatprep.subr.mxu0 0.0
        %5156 = vmatpush1.msra.mxu0 0.0
        %5157 = vmatprep.subr.mxu0 0.0
        %5158 = vmatpush1.msra.mxu0 0.0
        %5159 = vmatprep.subr.mxu0 0.0
        %5160 = vmatpush1.msra.mxu0 0.0
        %5161 = vmatprep.subr.mxu0 0.0
        %5162 = vmatpush1.msra.mxu0 0.0
        %5163 = vmatprep.subr.mxu0 0.0
        %5164 = vmatpush1.msra.mxu0 0.0
        %5165 = vmatprep.subr.mxu0 0.0
        %5166 = vmatpush1.msra.mxu0 0.0
        %5167 = vmatprep.subr.mxu0 0.0
        %5168 = vmatpush1.msra.mxu0 0.0
        %5169 = vmatprep.subr.mxu0 0.0
        %5170 = vmatpush1.msra.mxu0 0.0
        %5171 = vmatprep.subr.mxu0 0.0
        %5172 = vmatpush1.msra.mxu0 0.0
        %5173 = vmatprep.subr.mxu0 0.0
        %5174 = vmatpush1.msra.mxu0 0.0
        %5175 = vmatprep.subr.mxu0 0.0
        %5176 = vmatpush1.msra.mxu0 0.0
        %5177 = vmatprep.subr.mxu0 0.0
        %5178 = vmatpush1.msra.mxu0 0.0
        %5179 = vmatprep.subr.mxu0 0.0
        %5180 = vmatpush1.msra.mxu0 0.0
        %5181 = vmatprep.subr.mxu0 0.0
        %5182 = vmatpush1.msra.mxu0 0.0
        %5183 = vmatprep.subr.mxu0 0.0
        %5184 = vmatpush1.msra.mxu0 0.0
        %5185 = vmatprep.subr.mxu0 0.0
        %5186 = vmatpush1.msra.mxu0 0.0
        %5187 = vmatprep.mubr.f32.mxu0 0.0
        %5188 = vmatmul.mubr.f32.gmra.mrb[0].mxu0 %v5121
        %v5189 = vpop.f32.mrb[0].mxu0
        %v5190 = vadd.f32 %v5117, %v5189
        %v5191 = vpop.f32.mrb[0].mxu0
        %5192 = vdwg.mxu0
        %v5193 = vadd.f32 %v5032, %v5190
        %v5194 = vsel %vm1410, %v5193, 0.0
        %5195 = vadd.xlane.f32.xlu0 %v5194
        %v5196 = vpop.xlane.xlu0 %5195
        %v5197 = vmul.f32 %v5196, %v3071
        %v5198 = vsub.f32 %v5193, %v5197
        %v5199 = vmul.f32 %v5198, %v5198
        %v5200 = vsel %vm1410, %v5199, 0.0
        %5201 = vadd.xlane.f32.xlu0 %v5200
        %v5202 = vpop.xlane.xlu0 %5201
        %v5203 = vmul.f32 %v5202, %v3071
        %v5204 = vadd.f32 %v5203, 1e-05
        %v5205 = vrsqrt.pop %v5204
        %v5206 = vmul.f32 %v5198, %v5205
        %v5208 = vlaneseq
        %v5209 = vshrl.u32 %v5208, 7
        %v5210 = vsub.s32 0, %v5209
        %v5211 = vrot.slane %v1402, %v5210
        %v5213 = vmul.f32 %v5206, %v5211
        %v5215 = vlaneseq
        %v5216 = vshrl.u32 %v5215, 7
        %v5217 = vsub.s32 0, %v5216
        %v5218 = vrot.slane %v1403, %v5217
        %v5220 = vadd.f32 %v5213, %v5218
        %v5221 = vld [vmem:[%s45] sm:$0xff]
        %v5222 = vld [vmem:[%s45 + $0x8] sm:$0xff]
        %v5223 = vld [vmem:[%s45 + $0x10] sm:$0xff]
        %v5224 = vld [vmem:[%s45 + $0x18] sm:$0xff]
        %v5225 = vld [vmem:[%s47] sm:$0x1]
        %v5226 = vld [vmem:[%s49] sm:$0xff]
        %v5227 = vld [vmem:[%s49 + $0x8] sm:$0xff]
        %v5228 = vld [vmem:[%s49 + $0x10] sm:$0xff]
        %v5229 = vld [vmem:[%s49 + $0x18] sm:$0xff]
        %v5230 = vld [vmem:[%s51] sm:$0x1]
        %v5231 = vld [vmem:[%s53] sm:$0xff]
        %v5232 = vld [vmem:[%s53 + $0x8] sm:$0xff]
        %v5233 = vld [vmem:[%s53 + $0x10] sm:$0xff]
        %v5234 = vld [vmem:[%s53 + $0x18] sm:$0xff]
        %v5235 = vld [vmem:[%s55] sm:$0x1]
        %v5236 = vld [vmem:[%s57] sm:$0xff]
        %v5237 = vld [vmem:[%s57 + $0x8] sm:$0xff]
        %v5238 = vld [vmem:[%s57 + $0x10] sm:$0xff]
        %v5239 = vld [vmem:[%s57 + $0x18] sm:$0xff]
        %v5240 = vld [vmem:[%s59] sm:$0x1]
        %v5241 = vld [vmem:[%s61] sm:$0xff]
        %v5242 = vld [vmem:[%s61 + $0x8] sm:$0xff]
        %v5243 = vld [vmem:[%s61 + $0x10] sm:$0xff]
        %v5244 = vld [vmem:[%s61 + $0x18] sm:$0xff]
        %v5245 = vld [vmem:[%s63] sm:$0x1]
        %v5246 = vld [vmem:[%s65] sm:$0x1]
        %v5247 = vld [vmem:[%s67] sm:$0x1]
        %v5248 = vld [vmem:[%s69] sm:$0xff]
        %v5249 = vld [vmem:[%s69 + $0x8] sm:$0xff]
        %v5250 = vld [vmem:[%s69 + $0x10] sm:$0xff]
        %v5251 = vld [vmem:[%s69 + $0x18] sm:$0xff]
        %v5252 = vld [vmem:[%s71] sm:$0x1]
        %v5253 = vld [vmem:[%s73] sm:$0xff]
        %v5254 = vld [vmem:[%s73 + $0x8] sm:$0xff]
        %v5255 = vld [vmem:[%s73 + $0x10] sm:$0xff]
        %v5256 = vld [vmem:[%s73 + $0x18] sm:$0xff]
        %v5257 = vld [vmem:[%s73 + $0x20] sm:$0xff]
        %v5258 = vld [vmem:[%s73 + $0x28] sm:$0xff]
        %v5259 = vld [vmem:[%s73 + $0x30] sm:$0xff]
        %v5260 = vld [vmem:[%s73 + $0x38] sm:$0xff]
        %v5261 = vld [vmem:[%s75] sm:$0x1]
        %v5262 = vld [vmem:[%s77] sm:$0x1]
        %v5263 = vld [vmem:[%s79] sm:$0x1]
        %v5265 = vlaneseq
        %v5266 = vshrl.u32 %v5265, 7
        %v5267 = vsub.s32 0, %v5266
        %v5268 = vrot.slane %v5225, %v5267
        %v5271 = vsel %vm1410, %v5220, 0
        %5273 = vmatprep.subr.mxu0 0.0
        %5274 = vmatpush1.msra.mxu0 %v5221
        %5275 = vmatprep.subr.mxu0 0.0
        %5276 = vmatpush1.msra.mxu0 %v5222
        %5277 = vmatprep.subr.mxu0 0.0
        %5278 = vmatpush1.msra.mxu0 %v5223
        %5279 = vmatprep.subr.mxu0 0.0
        %5280 = vmatpush1.msra.mxu0 %v5224
        %5281 = vmatprep.subr.mxu0 0.0
        %5282 = vmatpush1.msra.mxu0 0.0
        %5283 = vmatprep.subr.mxu0 0.0
        %5284 = vmatpush1.msra.mxu0 0.0
        %5285 = vmatprep.subr.mxu0 0.0
        %5286 = vmatpush1.msra.mxu0 0.0
        %5287 = vmatprep.subr.mxu0 0.0
        %5288 = vmatpush1.msra.mxu0 0.0
        %5289 = vmatprep.subr.mxu0 0.0
        %5290 = vmatpush1.msra.mxu0 0.0
        %5291 = vmatprep.subr.mxu0 0.0
        %5292 = vmatpush1.msra.mxu0 0.0
        %5293 = vmatprep.subr.mxu0 0.0
        %5294 = vmatpush1.msra.mxu0 0.0
        %5295 = vmatprep.subr.mxu0 0.0
        %5296 = vmatpush1.msra.mxu0 0.0
        %5297 = vmatprep.subr.mxu0 0.0
        %5298 = vmatpush1.msra.mxu0 0.0
        %5299 = vmatprep.subr.mxu0 0.0
        %5300 = vmatpush1.msra.mxu0 0.0
        %5301 = vmatprep.subr.mxu0 0.0
        %5302 = vmatpush1.msra.mxu0 0.0
        %5303 = vmatprep.subr.mxu0 0.0
        %5304 = vmatpush1.msra.mxu0 0.0
        %5305 = vmatprep.subr.mxu0 0.0
        %5306 = vmatpush1.msra.mxu0 0.0
        %5307 = vmatprep.subr.mxu0 0.0
        %5308 = vmatpush1.msra.mxu0 0.0
        %5309 = vmatprep.subr.mxu0 0.0
        %5310 = vmatpush1.msra.mxu0 0.0
        %5311 = vmatprep.subr.mxu0 0.0
        %5312 = vmatpush1.msra.mxu0 0.0
        %5313 = vmatprep.subr.mxu0 0.0
        %5314 = vmatpush1.msra.mxu0 0.0
        %5315 = vmatprep.subr.mxu0 0.0
        %5316 = vmatpush1.msra.mxu0 0.0
        %5317 = vmatprep.subr.mxu0 0.0
        %5318 = vmatpush1.msra.mxu0 0.0
        %5319 = vmatprep.subr.mxu0 0.0
        %5320 = vmatpush1.msra.mxu0 0.0
        %5321 = vmatprep.subr.mxu0 0.0
        %5322 = vmatpush1.msra.mxu0 0.0
        %5323 = vmatprep.subr.mxu0 0.0
        %5324 = vmatpush1.msra.mxu0 0.0
        %5325 = vmatprep.subr.mxu0 0.0
        %5326 = vmatpush1.msra.mxu0 0.0
        %5327 = vmatprep.subr.mxu0 0.0
        %5328 = vmatpush1.msra.mxu0 0.0
        %5329 = vmatprep.subr.mxu0 0.0
        %5330 = vmatpush1.msra.mxu0 0.0
        %5331 = vmatprep.subr.mxu0 0.0
        %5332 = vmatpush1.msra.mxu0 0.0
        %5333 = vmatprep.subr.mxu0 0.0
        %5334 = vmatpush1.msra.mxu0 0.0
        %5335 = vmatprep.subr.mxu0 0.0
        %5336 = vmatpush1.msra.mxu0 0.0
        %5337 = vmatprep.mubr.f32.mxu0 0.0
        %5338 = vmatmul.mubr.f32.gmra.mrb[0].mxu0 %v5271
        %v5339 = vpop.f32.mrb[0].mxu0
        %v5340 = vadd.f32 %v5268, %v5339
        %v5341 = vpop.f32.mrb[0].mxu0
        %5342 = vdwg.mxu0
        %5344 = vrot.lane.b32.xlu0 %v5340, 120
        %v5345 = vpop.permute.xlu0 %5344
        %5347 = vrot.lane.b32.xlu0 %v5340, 112
        %v5348 = vpop.permute.xlu0 %5347
        %5350 = vrot.lane.b32.xlu0 %v5340, 104
        %v5351 = vpop.permute.xlu0 %5350
        %v5353 = vcombine.low %v5340, %v5348
        %v5354 = vcombine.high %v5340, %v5348
        %v5356 = vunpack.c.l.s4 1983009808
        %v5357 = vunpack.c.0.s8 %v5356
        %v5358 = vlaneseq
        %v5359 = vshrl.u32 %v5358, 7
        %v5360 = vsub.s32 %v5357, %v5359
        %v5361 = vrot.slane %v5353, %v5360
        %v5363 = vunpack.c.l.s4 1983009808
        %v5364 = vunpack.c.0.s8 %v5363
        %v5365 = vlaneseq
        %v5366 = vshrl.u32 %v5365, 7
        %v5367 = vsub.s32 %v5364, %v5366
        %v5368 = vrot.slane %v5354, %v5367
        %v5369 = vcombine.low %v5345, %v5351
        %v5370 = vcombine.high %v5345, %v5351
        %v5372 = vunpack.c.l.s4 1983009808
        %v5373 = vunpack.c.0.s8 %v5372
        %v5374 = vlaneseq
        %v5375 = vshrl.u32 %v5374, 7
        %v5376 = vsub.s32 %v5373, %v5375
        %v5377 = vrot.slane %v5369, %v5376
        %v5379 = vunpack.c.l.s4 1983009808
        %v5380 = vunpack.c.0.s8 %v5379
        %v5381 = vlaneseq
        %v5382 = vshrl.u32 %v5381, 7
        %v5383 = vsub.s32 %v5380, %v5382
        %v5384 = vrot.slane %v5370, %v5383
        %v5385 = vcombine.low %v5361, %v5377
        %v5386 = vcombine.high %v5361, %v5377
        %v5388 = vunpack.c.l.s4 1934713408
        %v5389 = vunpack.c.0.s8 %v5388
        %v5390 = vlaneseq
        %v5391 = vshrl.u32 %v5390, 7
        %v5392 = vsub.s32 %v5389, %v5391
        %v5393 = vrot.slane %v5385, %v5392
        %v5395 = vunpack.c.l.s4 1934713408
        %v5396 = vunpack.c.0.s8 %v5395
        %v5397 = vlaneseq
        %v5398 = vshrl.u32 %v5397, 7
        %v5399 = vsub.s32 %v5396, %v5398
        %v5400 = vrot.slane %v5386, %v5399
        %v5401 = vcombine.low %v5368, %v5384
        %v5402 = vcombine.high %v5368, %v5384
        %v5404 = vunpack.c.l.s4 1934713408
        %v5405 = vunpack.c.0.s8 %v5404
        %v5406 = vlaneseq
        %v5407 = vshrl.u32 %v5406, 7
        %v5408 = vsub.s32 %v5405, %v5407
        %v5409 = vrot.slane %v5401, %v5408
        %v5411 = vunpack.c.l.s4 1934713408
        %v5412 = vunpack.c.0.s8 %v5411
        %v5413 = vlaneseq
        %v5414 = vshrl.u32 %v5413, 7
        %v5415 = vsub.s32 %v5412, %v5414
        %v5416 = vrot.slane %v5402, %v5415
        %v5417 = vcombine.high %v5393, 0.0
        %v5418 = vcombine.high %v5400, 0.0
        %v5419 = vcombine.high %v5409, 0.0
        %v5420 = vcombine.high %v5416, 0.0
        %v5421 = vcombine.low %v5393, %v5400
        %v5423 = vunpack.c.l.s4 1983009808
        %v5424 = vunpack.c.0.s8 %v5423
        %v5425 = vlaneseq
        %v5426 = vshrl.u32 %v5425, 7
        %v5427 = vsub.s32 %v5424, %v5426
        %v5428 = vrot.slane %v5421, %v5427
        %v5429 = vcombine.low %v5417, %v5418
        %v5431 = vunpack.c.l.s4 1983009808
        %v5432 = vunpack.c.0.s8 %v5431
        %v5433 = vlaneseq
        %v5434 = vshrl.u32 %v5433, 7
        %v5435 = vsub.s32 %v5432, %v5434
        %v5436 = vrot.slane %v5429, %v5435
        %v5437 = vcombine.low %v5409, %v5416
        %v5439 = vunpack.c.l.s4 1983009808
        %v5440 = vunpack.c.0.s8 %v5439
        %v5441 = vlaneseq
        %v5442 = vshrl.u32 %v5441, 7
        %v5443 = vsub.s32 %v5440, %v5442
        %v5444 = vrot.slane %v5437, %v5443
        %v5445 = vcombine.low %v5419, %v5420
        %v5447 = vunpack.c.l.s4 1983009808
        %v5448 = vunpack.c.0.s8 %v5447
        %v5449 = vlaneseq
        %v5450 = vshrl.u32 %v5449, 7
        %v5451 = vsub.s32 %v5448, %v5450
        %v5452 = vrot.slane %v5445, %v5451
        %v5453 = vcombine.low %v5428, %v5436
        %v5454 = vcombine.high %v5428, %v5436
        %v5456 = vunpack.c.l.s4 1934713408
        %v5457 = vunpack.c.0.s8 %v5456
        %v5458 = vlaneseq
        %v5459 = vshrl.u32 %v5458, 7
        %v5460 = vsub.s32 %v5457, %v5459
        %v5461 = vrot.slane %v5453, %v5460
        %v5463 = vunpack.c.l.s4 1934713408
        %v5464 = vunpack.c.0.s8 %v5463
        %v5465 = vlaneseq
        %v5466 = vshrl.u32 %v5465, 7
        %v5467 = vsub.s32 %v5464, %v5466
        %v5468 = vrot.slane %v5454, %v5467
        %v5469 = vcombine.low %v5444, %v5452
        %v5470 = vcombine.high %v5444, %v5452
        %v5472 = vunpack.c.l.s4 1934713408
        %v5473 = vunpack.c.0.s8 %v5472
        %v5474 = vlaneseq
        %v5475 = vshrl.u32 %v5474, 7
        %v5476 = vsub.s32 %v5473, %v5475
        %v5477 = vrot.slane %v5469, %v5476
        %v5479 = vunpack.c.l.s4 1934713408
        %v5480 = vunpack.c.0.s8 %v5479
        %v5481 = vlaneseq
        %v5482 = vshrl.u32 %v5481, 7
        %v5483 = vsub.s32 %v5480, %v5482
        %v5484 = vrot.slane %v5470, %v5483
        %v5485 = vcombine.low %v5461, %v5477
        %v5486 = vcombine.high %v5461, %v5477
        %v5487 = vcombine.low %v5468, %v5484
        %v5488 = vcombine.high %v5468, %v5484
        %5489 = vrot.lane.b32.xlu0 %v5340, 96
        %v5490 = vpop.permute.xlu0 %5489
        %5491 = vrot.lane.b32.xlu0 %v5345, 96
        %v5492 = vpop.permute.xlu0 %5491
        %5493 = vrot.lane.b32.xlu0 %v5348, 96
        %v5494 = vpop.permute.xlu0 %5493
        %5495 = vrot.lane.b32.xlu0 %v5351, 96
        %v5496 = vpop.permute.xlu0 %5495
        %v5501 = vcombine.low %v5490, %v5494
        %v5502 = vcombine.high %v5490, %v5494
        %v5504 = vunpack.c.l.s4 1983009808
        %v5505 = vunpack.c.0.s8 %v5504
        %v5506 = vlaneseq
        %v5507 = vshrl.u32 %v5506, 7
        %v5508 = vsub.s32 %v5505, %v5507
        %v5509 = vrot.slane %v5501, %v5508
        %v5511 = vunpack.c.l.s4 1983009808
        %v5512 = vunpack.c.0.s8 %v5511
        %v5513 = vlaneseq
        %v5514 = vshrl.u32 %v5513, 7
        %v5515 = vsub.s32 %v5512, %v5514
        %v5516 = vrot.slane %v5502, %v5515
        %v5517 = vcombine.low %v5492, %v5496
        %v5518 = vcombine.high %v5492, %v5496
        %v5520 = vunpack.c.l.s4 1983009808
        %v5521 = vunpack.c.0.s8 %v5520
        %v5522 = vlaneseq
        %v5523 = vshrl.u32 %v5522, 7
        %v5524 = vsub.s32 %v5521, %v5523
        %v5525 = vrot.slane %v5517, %v5524
        %v5527 = vunpack.c.l.s4 1983009808
        %v5528 = vunpack.c.0.s8 %v5527
        %v5529 = vlaneseq
        %v5530 = vshrl.u32 %v5529, 7
        %v5531 = vsub.s32 %v5528, %v5530
        %v5532 = vrot.slane %v5518, %v5531
        %v5533 = vcombine.low %v5509, %v5525
        %v5534 = vcombine.high %v5509, %v5525
        %v5536 = vunpack.c.l.s4 1934713408
        %v5537 = vunpack.c.0.s8 %v5536
        %v5538 = vlaneseq
        %v5539 = vshrl.u32 %v5538, 7
        %v5540 = vsub.s32 %v5537, %v5539
        %v5541 = vrot.slane %v5533, %v5540
        %v5543 = vunpack.c.l.s4 1934713408
        %v5544 = vunpack.c.0.s8 %v5543
        %v5545 = vlaneseq
        %v5546 = vshrl.u32 %v5545, 7
        %v5547 = vsub.s32 %v5544, %v5546
        %v5548 = vrot.slane %v5534, %v5547
        %v5549 = vcombine.low %v5516, %v5532
        %v5550 = vcombine.high %v5516, %v5532
        %v5552 = vunpack.c.l.s4 1934713408
        %v5553 = vunpack.c.0.s8 %v5552
        %v5554 = vlaneseq
        %v5555 = vshrl.u32 %v5554, 7
        %v5556 = vsub.s32 %v5553, %v5555
        %v5557 = vrot.slane %v5549, %v5556
        %v5559 = vunpack.c.l.s4 1934713408
        %v5560 = vunpack.c.0.s8 %v5559
        %v5561 = vlaneseq
        %v5562 = vshrl.u32 %v5561, 7
        %v5563 = vsub.s32 %v5560, %v5562
        %v5564 = vrot.slane %v5550, %v5563
        %v5565 = vcombine.high %v5541, 0.0
        %v5566 = vcombine.high %v5548, 0.0
        %v5567 = vcombine.high %v5557, 0.0
        %v5568 = vcombine.high %v5564, 0.0
        %v5569 = vcombine.low %v5541, %v5548
        %v5571 = vunpack.c.l.s4 1983009808
        %v5572 = vunpack.c.0.s8 %v5571
        %v5573 = vlaneseq
        %v5574 = vshrl.u32 %v5573, 7
        %v5575 = vsub.s32 %v5572, %v5574
        %v5576 = vrot.slane %v5569, %v5575
        %v5577 = vcombine.low %v5565, %v5566
        %v5579 = vunpack.c.l.s4 1983009808
        %v5580 = vunpack.c.0.s8 %v5579
        %v5581 = vlaneseq
        %v5582 = vshrl.u32 %v5581, 7
        %v5583 = vsub.s32 %v5580, %v5582
        %v5584 = vrot.slane %v5577, %v5583
        %v5585 = vcombine.low %v5557, %v5564
        %v5587 = vunpack.c.l.s4 1983009808
        %v5588 = vunpack.c.0.s8 %v5587
        %v5589 = vlaneseq
        %v5590 = vshrl.u32 %v5589, 7
        %v5591 = vsub.s32 %v5588, %v5590
        %v5592 = vrot.slane %v5585, %v5591
        %v5593 = vcombine.low %v5567, %v5568
        %v5595 = vunpack.c.l.s4 1983009808
        %v5596 = vunpack.c.0.s8 %v5595
        %v5597 = vlaneseq
        %v5598 = vshrl.u32 %v5597, 7
        %v5599 = vsub.s32 %v5596, %v5598
        %v5600 = vrot.slane %v5593, %v5599
        %v5601 = vcombine.low %v5576, %v5584
        %v5602 = vcombine.high %v5576, %v5584
        %v5604 = vunpack.c.l.s4 1934713408
        %v5605 = vunpack.c.0.s8 %v5604
        %v5606 = vlaneseq
        %v5607 = vshrl.u32 %v5606, 7
        %v5608 = vsub.s32 %v5605, %v5607
        %v5609 = vrot.slane %v5601, %v5608
        %v5611 = vunpack.c.l.s4 1934713408
        %v5612 = vunpack.c.0.s8 %v5611
        %v5613 = vlaneseq
        %v5614 = vshrl.u32 %v5613, 7
        %v5615 = vsub.s32 %v5612, %v5614
        %v5616 = vrot.slane %v5602, %v5615
        %v5617 = vcombine.low %v5592, %v5600
        %v5618 = vcombine.high %v5592, %v5600
        %v5620 = vunpack.c.l.s4 1934713408
        %v5621 = vunpack.c.0.s8 %v5620
        %v5622 = vlaneseq
        %v5623 = vshrl.u32 %v5622, 7
        %v5624 = vsub.s32 %v5621, %v5623
        %v5625 = vrot.slane %v5617, %v5624
        %v5627 = vunpack.c.l.s4 1934713408
        %v5628 = vunpack.c.0.s8 %v5627
        %v5629 = vlaneseq
        %v5630 = vshrl.u32 %v5629, 7
        %v5631 = vsub.s32 %v5628, %v5630
        %v5632 = vrot.slane %v5618, %v5631
        %v5633 = vcombine.low %v5609, %v5625
        %v5634 = vcombine.high %v5609, %v5625
        %v5635 = vcombine.low %v5616, %v5632
        %v5636 = vcombine.high %v5616, %v5632
        %5637 = vrot.lane.b32.xlu0 %v5340, 64
        %v5638 = vpop.permute.xlu0 %5637
        %5639 = vrot.lane.b32.xlu0 %v5345, 64
        %v5640 = vpop.permute.xlu0 %5639
        %5641 = vrot.lane.b32.xlu0 %v5348, 64
        %v5642 = vpop.permute.xlu0 %5641
        %5643 = vrot.lane.b32.xlu0 %v5351, 64
        %v5644 = vpop.permute.xlu0 %5643
        %v5649 = vcombine.low %v5638, %v5642
        %v5650 = vcombine.high %v5638, %v5642
        %v5652 = vunpack.c.l.s4 1983009808
        %v5653 = vunpack.c.0.s8 %v5652
        %v5654 = vlaneseq
        %v5655 = vshrl.u32 %v5654, 7
        %v5656 = vsub.s32 %v5653, %v5655
        %v5657 = vrot.slane %v5649, %v5656
        %v5659 = vunpack.c.l.s4 1983009808
        %v5660 = vunpack.c.0.s8 %v5659
        %v5661 = vlaneseq
        %v5662 = vshrl.u32 %v5661, 7
        %v5663 = vsub.s32 %v5660, %v5662
        %v5664 = vrot.slane %v5650, %v5663
        %v5665 = vcombine.low %v5640, %v5644
        %v5666 = vcombine.high %v5640, %v5644
        %v5668 = vunpack.c.l.s4 1983009808
        %v5669 = vunpack.c.0.s8 %v5668
        %v5670 = vlaneseq
        %v5671 = vshrl.u32 %v5670, 7
        %v5672 = vsub.s32 %v5669, %v5671
        %v5673 = vrot.slane %v5665, %v5672
        %v5675 = vunpack.c.l.s4 1983009808
        %v5676 = vunpack.c.0.s8 %v5675
        %v5677 = vlaneseq
        %v5678 = vshrl.u32 %v5677, 7
        %v5679 = vsub.s32 %v5676, %v5678
        %v5680 = vrot.slane %v5666, %v5679
        %v5681 = vcombine.low %v5657, %v5673
        %v5682 = vcombine.high %v5657, %v5673
        %v5684 = vunpack.c.l.s4 1934713408
        %v5685 = vunpack.c.0.s8 %v5684
        %v5686 = vlaneseq
        %v5687 = vshrl.u32 %v5686, 7
        %v5688 = vsub.s32 %v5685, %v5687
        %v5689 = vrot.slane %v5681, %v5688
        %v5691 = vunpack.c.l.s4 1934713408
        %v5692 = vunpack.c.0.s8 %v5691
        %v5693 = vlaneseq
        %v5694 = vshrl.u32 %v5693, 7
        %v5695 = vsub.s32 %v5692, %v5694
        %v5696 = vrot.slane %v5682, %v5695
        %v5697 = vcombine.low %v5664, %v5680
        %v5698 = vcombine.high %v5664, %v5680
        %v5700 = vunpack.c.l.s4 1934713408
        %v5701 = vunpack.c.0.s8 %v5700
        %v5702 = vlaneseq
        %v5703 = vshrl.u32 %v5702, 7
        %v5704 = vsub.s32 %v5701, %v5703
        %v5705 = vrot.slane %v5697, %v5704
        %v5707 = vunpack.c.l.s4 1934713408
        %v5708 = vunpack.c.0.s8 %v5707
        %v5709 = vlaneseq
        %v5710 = vshrl.u32 %v5709, 7
        %v5711 = vsub.s32 %v5708, %v5710
        %v5712 = vrot.slane %v5698, %v5711
        %v5713 = vcombine.high %v5689, 0.0
        %v5714 = vcombine.high %v5696, 0.0
        %v5715 = vcombine.high %v5705, 0.0
        %v5716 = vcombine.high %v5712, 0.0
        %v5717 = vcombine.low %v5689, %v5696
        %v5719 = vunpack.c.l.s4 1983009808
        %v5720 = vunpack.c.0.s8 %v5719
        %v5721 = vlaneseq
        %v5722 = vshrl.u32 %v5721, 7
        %v5723 = vsub.s32 %v5720, %v5722
        %v5724 = vrot.slane %v5717, %v5723
        %v5725 = vcombine.low %v5713, %v5714
        %v5727 = vunpack.c.l.s4 1983009808
        %v5728 = vunpack.c.0.s8 %v5727
        %v5729 = vlaneseq
        %v5730 = vshrl.u32 %v5729, 7
        %v5731 = vsub.s32 %v5728, %v5730
        %v5732 = vrot.slane %v5725, %v5731
        %v5733 = vcombine.low %v5705, %v5712
        %v5735 = vunpack.c.l.s4 1983009808
        %v5736 = vunpack.c.0.s8 %v5735
        %v5737 = vlaneseq
        %v5738 = vshrl.u32 %v5737, 7
        %v5739 = vsub.s32 %v5736, %v5738
        %v5740 = vrot.slane %v5733, %v5739
        %v5741 = vcombine.low %v5715, %v5716
        %v5743 = vunpack.c.l.s4 1983009808
        %v5744 = vunpack.c.0.s8 %v5743
        %v5745 = vlaneseq
        %v5746 = vshrl.u32 %v5745, 7
        %v5747 = vsub.s32 %v5744, %v5746
        %v5748 = vrot.slane %v5741, %v5747
        %v5749 = vcombine.low %v5724, %v5732
        %v5750 = vcombine.high %v5724, %v5732
        %v5752 = vunpack.c.l.s4 1934713408
        %v5753 = vunpack.c.0.s8 %v5752
        %v5754 = vlaneseq
        %v5755 = vshrl.u32 %v5754, 7
        %v5756 = vsub.s32 %v5753, %v5755
        %v5757 = vrot.slane %v5749, %v5756
        %v5759 = vunpack.c.l.s4 1934713408
        %v5760 = vunpack.c.0.s8 %v5759
        %v5761 = vlaneseq
        %v5762 = vshrl.u32 %v5761, 7
        %v5763 = vsub.s32 %v5760, %v5762
        %v5764 = vrot.slane %v5750, %v5763
        %v5765 = vcombine.low %v5740, %v5748
        %v5766 = vcombine.high %v5740, %v5748
        %v5768 = vunpack.c.l.s4 1934713408
        %v5769 = vunpack.c.0.s8 %v5768
        %v5770 = vlaneseq
        %v5771 = vshrl.u32 %v5770, 7
        %v5772 = vsub.s32 %v5769, %v5771
        %v5773 = vrot.slane %v5765, %v5772
        %v5775 = vunpack.c.l.s4 1934713408
        %v5776 = vunpack.c.0.s8 %v5775
        %v5777 = vlaneseq
        %v5778 = vshrl.u32 %v5777, 7
        %v5779 = vsub.s32 %v5776, %v5778
        %v5780 = vrot.slane %v5766, %v5779
        %v5781 = vcombine.low %v5757, %v5773
        %v5782 = vcombine.high %v5757, %v5773
        %v5783 = vcombine.low %v5764, %v5780
        %v5784 = vcombine.high %v5764, %v5780
        %v5786 = vsel %vm1926, %v5485, 0
        %v5789 = vsel %vm1926, %v5633, 0
        %5791 = vmatprep.subr.mxu0 0.0
        %5792 = vmatpush1.xpose.msra.mxu0 %v5789
        %5793 = vmatprep.subr.mxu0 0.0
        %5794 = vmatpush1.xpose.msra.mxu0 0.0
        %5795 = vmatprep.subr.mxu0 0.0
        %5796 = vmatpush1.xpose.msra.mxu0 0.0
        %5797 = vmatprep.subr.mxu0 0.0
        %5798 = vmatpush1.xpose.msra.mxu0 0.0
        %5799 = vmatprep.subr.mxu0 0.0
        %5800 = vmatpush1.xpose.msra.mxu0 0.0
        %5801 = vmatprep.subr.mxu0 0.0
        %5802 = vmatpush1.xpose.msra.mxu0 0.0
        %5803 = vmatprep.subr.mxu0 0.0
        %5804 = vmatpush1.xpose.msra.mxu0 0.0
        %5805 = vmatprep.subr.mxu0 0.0
        %5806 = vmatpush1.xpose.msra.mxu0 0.0
        %5807 = vmatprep.subr.mxu0 0.0
        %5808 = vmatpush1.xpose.msra.mxu0 0.0
        %5809 = vmatprep.subr.mxu0 0.0
        %5810 = vmatpush1.xpose.msra.mxu0 0.0
        %5811 = vmatprep.subr.mxu0 0.0
        %5812 = vmatpush1.xpose.msra.mxu0 0.0
        %5813 = vmatprep.subr.mxu0 0.0
        %5814 = vmatpush1.xpose.msra.mxu0 0.0
        %5815 = vmatprep.subr.mxu0 0.0
        %5816 = vmatpush1.xpose.msra.mxu0 0.0
        %5817 = vmatprep.subr.mxu0 0.0
        %5818 = vmatpush1.xpose.msra.mxu0 0.0
        %5819 = vmatprep.subr.mxu0 0.0
        %5820 = vmatpush1.xpose.msra.mxu0 0.0
        %5821 = vmatprep.subr.mxu0 0.0
        %5822 = vmatpush1.xpose.msra.mxu0 0.0
        %5823 = vmatprep.subr.mxu0 0.0
        %5824 = vmatpush1.xpose.msra.mxu0 0.0
        %5825 = vmatprep.subr.mxu0 0.0
        %5826 = vmatpush1.xpose.msra.mxu0 0.0
        %5827 = vmatprep.subr.mxu0 0.0
        %5828 = vmatpush1.xpose.msra.mxu0 0.0
        %5829 = vmatprep.subr.mxu0 0.0
        %5830 = vmatpush1.xpose.msra.mxu0 0.0
        %5831 = vmatprep.subr.mxu0 0.0
        %5832 = vmatpush1.xpose.msra.mxu0 0.0
        %5833 = vmatprep.subr.mxu0 0.0
        %5834 = vmatpush1.xpose.msra.mxu0 0.0
        %5835 = vmatprep.subr.mxu0 0.0
        %5836 = vmatpush1.xpose.msra.mxu0 0.0
        %5837 = vmatprep.subr.mxu0 0.0
        %5838 = vmatpush1.xpose.msra.mxu0 0.0
        %5839 = vmatprep.subr.mxu0 0.0
        %5840 = vmatpush1.xpose.msra.mxu0 0.0
        %5841 = vmatprep.subr.mxu0 0.0
        %5842 = vmatpush1.xpose.msra.mxu0 0.0
        %5843 = vmatprep.subr.mxu0 0.0
        %5844 = vmatpush1.xpose.msra.mxu0 0.0
        %5845 = vmatprep.subr.mxu0 0.0
        %5846 = vmatpush1.xpose.msra.mxu0 0.0
        %5847 = vmatprep.subr.mxu0 0.0
        %5848 = vmatpush1.xpose.msra.mxu0 0.0
        %5849 = vmatprep.subr.mxu0 0.0
        %5850 = vmatpush1.xpose.msra.mxu0 0.0
        %5851 = vmatprep.subr.mxu0 0.0
        %5852 = vmatpush1.xpose.msra.mxu0 0.0
        %5853 = vmatprep.subr.mxu0 0.0
        %5854 = vmatpush1.xpose.msra.mxu0 0.0
        %5855 = vmatprep.mubr.f32.mxu0 0.0
        %5856 = vmatmul.mubr.f32.gmra.mrb[0].mxu0 %v5786
        %v5857 = vpop.f32.mrb[0].mxu0
        %v5858 = vadd.f32 %v1357, %v5857
        %v5859 = vpop.f32.mrb[0].mxu0
        %5860 = vdwg.mxu0
        %v5862 = vsel %vm1926, %v5486, 0
        %v5865 = vsel %vm1926, %v5634, 0
        %5867 = vmatprep.subr.mxu0 0.0
        %5868 = vmatpush1.xpose.msra.mxu0 %v5865
        %5869 = vmatprep.subr.mxu0 0.0
        %5870 = vmatpush1.xpose.msra.mxu0 0.0
        %5871 = vmatprep.subr.mxu0 0.0
        %5872 = vmatpush1.xpose.msra.mxu0 0.0
        %5873 = vmatprep.subr.mxu0 0.0
        %5874 = vmatpush1.xpose.msra.mxu0 0.0
        %5875 = vmatprep.subr.mxu0 0.0
        %5876 = vmatpush1.xpose.msra.mxu0 0.0
        %5877 = vmatprep.subr.mxu0 0.0
        %5878 = vmatpush1.xpose.msra.mxu0 0.0
        %5879 = vmatprep.subr.mxu0 0.0
        %5880 = vmatpush1.xpose.msra.mxu0 0.0
        %5881 = vmatprep.subr.mxu0 0.0
        %5882 = vmatpush1.xpose.msra.mxu0 0.0
        %5883 = vmatprep.subr.mxu0 0.0
        %5884 = vmatpush1.xpose.msra.mxu0 0.0
        %5885 = vmatprep.subr.mxu0 0.0
        %5886 = vmatpush1.xpose.msra.mxu0 0.0
        %5887 = vmatprep.subr.mxu0 0.0
        %5888 = vmatpush1.xpose.msra.mxu0 0.0
        %5889 = vmatprep.subr.mxu0 0.0
        %5890 = vmatpush1.xpose.msra.mxu0 0.0
        %5891 = vmatprep.subr.mxu0 0.0
        %5892 = vmatpush1.xpose.msra.mxu0 0.0
        %5893 = vmatprep.subr.mxu0 0.0
        %5894 = vmatpush1.xpose.msra.mxu0 0.0
        %5895 = vmatprep.subr.mxu0 0.0
        %5896 = vmatpush1.xpose.msra.mxu0 0.0
        %5897 = vmatprep.subr.mxu0 0.0
        %5898 = vmatpush1.xpose.msra.mxu0 0.0
        %5899 = vmatprep.subr.mxu0 0.0
        %5900 = vmatpush1.xpose.msra.mxu0 0.0
        %5901 = vmatprep.subr.mxu0 0.0
        %5902 = vmatpush1.xpose.msra.mxu0 0.0
        %5903 = vmatprep.subr.mxu0 0.0
        %5904 = vmatpush1.xpose.msra.mxu0 0.0
        %5905 = vmatprep.subr.mxu0 0.0
        %5906 = vmatpush1.xpose.msra.mxu0 0.0
        %5907 = vmatprep.subr.mxu0 0.0
        %5908 = vmatpush1.xpose.msra.mxu0 0.0
        %5909 = vmatprep.subr.mxu0 0.0
        %5910 = vmatpush1.xpose.msra.mxu0 0.0
        %5911 = vmatprep.subr.mxu0 0.0
        %5912 = vmatpush1.xpose.msra.mxu0 0.0
        %5913 = vmatprep.subr.mxu0 0.0
        %5914 = vmatpush1.xpose.msra.mxu0 0.0
        %5915 = vmatprep.subr.mxu0 0.0
        %5916 = vmatpush1.xpose.msra.mxu0 0.0
        %5917 = vmatprep.subr.mxu0 0.0
        %5918 = vmatpush1.xpose.msra.mxu0 0.0
        %5919 = vmatprep.subr.mxu0 0.0
        %5920 = vmatpush1.xpose.msra.mxu0 0.0
        %5921 = vmatprep.subr.mxu0 0.0
        %5922 = vmatpush1.xpose.msra.mxu0 0.0
        %5923 = vmatprep.subr.mxu0 0.0
        %5924 = vmatpush1.xpose.msra.mxu0 0.0
        %5925 = vmatprep.subr.mxu0 0.0
        %5926 = vmatpush1.xpose.msra.mxu0 0.0
        %5927 = vmatprep.subr.mxu0 0.0
        %5928 = vmatpush1.xpose.msra.mxu0 0.0
        %5929 = vmatprep.subr.mxu0 0.0
        %5930 = vmatpush1.xpose.msra.mxu0 0.0
        %5931 = vmatprep.mubr.f32.mxu0 0.0
        %5932 = vmatmul.mubr.f32.gmra.mrb[0].mxu0 %v5862
        %v5933 = vpop.f32.mrb[0].mxu0
        %v5934 = vadd.f32 %v1357, %v5933
        %v5935 = vpop.f32.mrb[0].mxu0
        %5936 = vdwg.mxu0
        %v5938 = vsel %vm1926, %v5487, 0
        %v5941 = vsel %vm1926, %v5635, 0
        %5943 = vmatprep.subr.mxu0 0.0
        %5944 = vmatpush1.xpose.msra.mxu0 %v5941
        %5945 = vmatprep.subr.mxu0 0.0
        %5946 = vmatpush1.xpose.msra.mxu0 0.0
        %5947 = vmatprep.subr.mxu0 0.0
        %5948 = vmatpush1.xpose.msra.mxu0 0.0
        %5949 = vmatprep.subr.mxu0 0.0
        %5950 = vmatpush1.xpose.msra.mxu0 0.0
        %5951 = vmatprep.subr.mxu0 0.0
        %5952 = vmatpush1.xpose.msra.mxu0 0.0
        %5953 = vmatprep.subr.mxu0 0.0
        %5954 = vmatpush1.xpose.msra.mxu0 0.0
        %5955 = vmatprep.subr.mxu0 0.0
        %5956 = vmatpush1.xpose.msra.mxu0 0.0
        %5957 = vmatprep.subr.mxu0 0.0
        %5958 = vmatpush1.xpose.msra.mxu0 0.0
        %5959 = vmatprep.subr.mxu0 0.0
        %5960 = vmatpush1.xpose.msra.mxu0 0.0
        %5961 = vmatprep.subr.mxu0 0.0
        %5962 = vmatpush1.xpose.msra.mxu0 0.0
        %5963 = vmatprep.subr.mxu0 0.0
        %5964 = vmatpush1.xpose.msra.mxu0 0.0
        %5965 = vmatprep.subr.mxu0 0.0
        %5966 = vmatpush1.xpose.msra.mxu0 0.0
        %5967 = vmatprep.subr.mxu0 0.0
        %5968 = vmatpush1.xpose.msra.mxu0 0.0
        %5969 = vmatprep.subr.mxu0 0.0
        %5970 = vmatpush1.xpose.msra.mxu0 0.0
        %5971 = vmatprep.subr.mxu0 0.0
        %5972 = vmatpush1.xpose.msra.mxu0 0.0
        %5973 = vmatprep.subr.mxu0 0.0
        %5974 = vmatpush1.xpose.msra.mxu0 0.0
        %5975 = vmatprep.subr.mxu0 0.0
        %5976 = vmatpush1.xpose.msra.mxu0 0.0
        %5977 = vmatprep.subr.mxu0 0.0
        %5978 = vmatpush1.xpose.msra.mxu0 0.0
        %5979 = vmatprep.subr.mxu0 0.0
        %5980 = vmatpush1.xpose.msra.mxu0 0.0
        %5981 = vmatprep.subr.mxu0 0.0
        %5982 = vmatpush1.xpose.msra.mxu0 0.0
        %5983 = vmatprep.subr.mxu0 0.0
        %5984 = vmatpush1.xpose.msra.mxu0 0.0
        %5985 = vmatprep.subr.mxu0 0.0
        %5986 = vmatpush1.xpose.msra.mxu0 0.0
        %5987 = vmatprep.subr.mxu0 0.0
        %5988 = vmatpush1.xpose.msra.mxu0 0.0
        %5989 = vmatprep.subr.mxu0 0.0
        %5990 = vmatpush1.xpose.msra.mxu0 0.0
        %5991 = vmatprep.subr.mxu0 0.0
        %5992 = vmatpush1.xpose.msra.mxu0 0.0
        %5993 = vmatprep.subr.mxu0 0.0
        %5994 = vmatpush1.xpose.msra.mxu0 0.0
        %5995 = vmatprep.subr.mxu0 0.0
        %5996 = vmatpush1.xpose.msra.mxu0 0.0
        %5997 = vmatprep.subr.mxu0 0.0
        %5998 = vmatpush1.xpose.msra.mxu0 0.0
        %5999 = vmatprep.subr.mxu0 0.0
        %6000 = vmatpush1.xpose.msra.mxu0 0.0
        %6001 = vmatprep.subr.mxu0 0.0
        %6002 = vmatpush1.xpose.msra.mxu0 0.0
        %6003 = vmatprep.subr.mxu0 0.0
        %6004 = vmatpush1.xpose.msra.mxu0 0.0
        %6005 = vmatprep.subr.mxu0 0.0
        %6006 = vmatpush1.xpose.msra.mxu0 0.0
        %6007 = vmatprep.mubr.f32.mxu0 0.0
        %6008 = vmatmul.mubr.f32.gmra.mrb[0].mxu0 %v5938
        %v6009 = vpop.f32.mrb[0].mxu0
        %v6010 = vadd.f32 %v1357, %v6009
        %v6011 = vpop.f32.mrb[0].mxu0
        %6012 = vdwg.mxu0
        %v6014 = vsel %vm1926, %v5488, 0
        %v6017 = vsel %vm1926, %v5636, 0
        %6019 = vmatprep.subr.mxu0 0.0
        %6020 = vmatpush1.xpose.msra.mxu0 %v6017
        %6021 = vmatprep.subr.mxu0 0.0
        %6022 = vmatpush1.xpose.msra.mxu0 0.0
        %6023 = vmatprep.subr.mxu0 0.0
        %6024 = vmatpush1.xpose.msra.mxu0 0.0
        %6025 = vmatprep.subr.mxu0 0.0
        %6026 = vmatpush1.xpose.msra.mxu0 0.0
        %6027 = vmatprep.subr.mxu0 0.0
        %6028 = vmatpush1.xpose.msra.mxu0 0.0
        %6029 = vmatprep.subr.mxu0 0.0
        %6030 = vmatpush1.xpose.msra.mxu0 0.0
        %6031 = vmatprep.subr.mxu0 0.0
        %6032 = vmatpush1.xpose.msra.mxu0 0.0
        %6033 = vmatprep.subr.mxu0 0.0
        %6034 = vmatpush1.xpose.msra.mxu0 0.0
        %6035 = vmatprep.subr.mxu0 0.0
        %6036 = vmatpush1.xpose.msra.mxu0 0.0
        %6037 = vmatprep.subr.mxu0 0.0
        %6038 = vmatpush1.xpose.msra.mxu0 0.0
        %6039 = vmatprep.subr.mxu0 0.0
        %6040 = vmatpush1.xpose.msra.mxu0 0.0
        %6041 = vmatprep.subr.mxu0 0.0
        %6042 = vmatpush1.xpose.msra.mxu0 0.0
        %6043 = vmatprep.subr.mxu0 0.0
        %6044 = vmatpush1.xpose.msra.mxu0 0.0
        %6045 = vmatprep.subr.mxu0 0.0
        %6046 = vmatpush1.xpose.msra.mxu0 0.0
        %6047 = vmatprep.subr.mxu0 0.0
        %6048 = vmatpush1.xpose.msra.mxu0 0.0
        %6049 = vmatprep.subr.mxu0 0.0
        %6050 = vmatpush1.xpose.msra.mxu0 0.0
        %6051 = vmatprep.subr.mxu0 0.0
        %6052 = vmatpush1.xpose.msra.mxu0 0.0
        %6053 = vmatprep.subr.mxu0 0.0
        %6054 = vmatpush1.xpose.msra.mxu0 0.0
        %6055 = vmatprep.subr.mxu0 0.0
        %6056 = vmatpush1.xpose.msra.mxu0 0.0
        %6057 = vmatprep.subr.mxu0 0.0
        %6058 = vmatpush1.xpose.msra.mxu0 0.0
        %6059 = vmatprep.subr.mxu0 0.0
        %6060 = vmatpush1.xpose.msra.mxu0 0.0
        %6061 = vmatprep.subr.mxu0 0.0
        %6062 = vmatpush1.xpose.msra.mxu0 0.0
        %6063 = vmatprep.subr.mxu0 0.0
        %6064 = vmatpush1.xpose.msra.mxu0 0.0
        %6065 = vmatprep.subr.mxu0 0.0
        %6066 = vmatpush1.xpose.msra.mxu0 0.0
        %6067 = vmatprep.subr.mxu0 0.0
        %6068 = vmatpush1.xpose.msra.mxu0 0.0
        %6069 = vmatprep.subr.mxu0 0.0
        %6070 = vmatpush1.xpose.msra.mxu0 0.0
        %6071 = vmatprep.subr.mxu0 0.0
        %6072 = vmatpush1.xpose.msra.mxu0 0.0
        %6073 = vmatprep.subr.mxu0 0.0
        %6074 = vmatpush1.xpose.msra.mxu0 0.0
        %6075 = vmatprep.subr.mxu0 0.0
        %6076 = vmatpush1.xpose.msra.mxu0 0.0
        %6077 = vmatprep.subr.mxu0 0.0
        %6078 = vmatpush1.xpose.msra.mxu0 0.0
        %6079 = vmatprep.subr.mxu0 0.0
        %6080 = vmatpush1.xpose.msra.mxu0 0.0
        %6081 = vmatprep.subr.mxu0 0.0
        %6082 = vmatpush1.xpose.msra.mxu0 0.0
        %6083 = vmatprep.mubr.f32.mxu0 0.0
        %6084 = vmatmul.mubr.f32.gmra.mrb[0].mxu0 %v6014
        %v6085 = vpop.f32.mrb[0].mxu0
        %v6086 = vadd.f32 %v1357, %v6085
        %v6087 = vpop.f32.mrb[0].mxu0
        %6088 = vdwg.mxu0
        %v6089 = vsel %vm1926, %v5858, -inf
        %6090 = vmax.xlane.f32.xlu0 %v6089
        %v6091 = vpop.xlane.xlu0 %6090
        %v6092 = vsel %vm1926, %v5934, -inf
        %6093 = vmax.xlane.f32.xlu0 %v6092
        %v6094 = vpop.xlane.xlu0 %6093
        %v6095 = vsel %vm1926, %v6010, -inf
        %6096 = vmax.xlane.f32.xlu0 %v6095
        %v6097 = vpop.xlane.xlu0 %6096
        %v6098 = vsel %vm1926, %v6086, -inf
        %6099 = vmax.xlane.f32.xlu0 %v6098
        %v6100 = vpop.xlane.xlu0 %6099
        %v6101 = vsub.f32 %v5858, %v6091
        %v6102 = vsub.f32 %v5934, %v6094
        %v6103 = vsub.f32 %v6010, %v6097
        %v6104 = vsub.f32 %v6086, %v6100
        %v6105 = vmul.f32 %v6101, 1.442695
        %v6106 = vpow.pop %v6105
        %v6107 = vmul.f32 %v6102, 1.442695
        %v6108 = vpow.pop %v6107
        %v6109 = vmul.f32 %v6103, 1.442695
        %v6110 = vpow.pop %v6109
        %v6111 = vmul.f32 %v6104, 1.442695
        %v6112 = vpow.pop %v6111
        %v6113 = vsel %vm1926, %v6106, 0.0
        %6114 = vadd.xlane.f32.xlu0 %v6113
        %v6115 = vpop.xlane.xlu0 %6114
        %v6116 = vsel %vm1926, %v6108, 0.0
        %6117 = vadd.xlane.f32.xlu0 %v6116
        %v6118 = vpop.xlane.xlu0 %6117
        %v6119 = vsel %vm1926, %v6110, 0.0
        %6120 = vadd.xlane.f32.xlu0 %v6119
        %v6121 = vpop.xlane.xlu0 %6120
        %v6122 = vsel %vm1926, %v6112, 0.0
        %6123 = vadd.xlane.f32.xlu0 %v6122
        %v6124 = vpop.xlane.xlu0 %6123
        %v6125 = vrcp.pop %v6115
        %v6126 = vrcp.pop %v6118
        %v6127 = vrcp.pop %v6121
        %v6128 = vrcp.pop %v6124
        %v6129 = vmul.f32 %v6106, %v6125
        %v6130 = vmul.f32 %v6108, %v6126
        %v6131 = vmul.f32 %v6110, %v6127
        %v6132 = vmul.f32 %v6112, %v6128
        %6133 = vxpose.xlu0.b32.start [1/16] %v5781, 128
        %6134 = vxpose.xlu0.b32.cont [2/16] 0.0, 128
        %6135 = vxpose.xlu0.b32.cont [3/16] 0.0, 128
        %6136 = vxpose.xlu0.b32.cont [4/16] 0.0, 128
        %6137 = vxpose.xlu0.b32.cont [5/16] 0.0, 128
        %6138 = vxpose.xlu0.b32.cont [6/16] 0.0, 128
        %6139 = vxpose.xlu0.b32.cont [7/16] 0.0, 128
        %6140 = vxpose.xlu0.b32.cont [8/16] 0.0, 128
        %6141 = vxpose.xlu0.b32.cont [9/16] 0.0, 128
        %6142 = vxpose.xlu0.b32.cont [10/16] 0.0, 128
        %6143 = vxpose.xlu0.b32.cont [11/16] 0.0, 128
        %6144 = vxpose.xlu0.b32.cont [12/16] 0.0, 128
        %6145 = vxpose.xlu0.b32.cont [13/16] 0.0, 128
        %6146 = vxpose.xlu0.b32.cont [14/16] 0.0, 128
        %6147 = vxpose.xlu0.b32.cont [15/16] 0.0, 128
        %6148 = vxpose.xlu0.b32.end [16/16] 0.0, 128
        %v6149 = vpop.trf.xlu0
        %v6150 = vpop.trf.xlu0
        %v6151 = vpop.trf.xlu0
        %v6152 = vpop.trf.xlu0
        %v6153 = vpop.trf.xlu0
        %v6154 = vpop.trf.xlu0
        %v6155 = vpop.trf.xlu0
        %v6156 = vpop.trf.xlu0
        %v6157 = vpop.trf.xlu0
        %v6158 = vpop.trf.xlu0
        %v6159 = vpop.trf.xlu0
        %v6160 = vpop.trf.xlu0
        %v6161 = vpop.trf.xlu0
        %v6162 = vpop.trf.xlu0
        %v6163 = vpop.trf.xlu0
        %v6164 = vpop.trf.xlu0
        %v6166 = vsel %vm1926, %v6149, 0
        %v6169 = vsel %vm1926, %v6129, 0
        %6171 = vmatprep.subr.mxu0 0.0
        %6172 = vmatpush1.xpose.msra.mxu0 %v6169
        %6173 = vmatprep.subr.mxu0 0.0
        %6174 = vmatpush1.xpose.msra.mxu0 0.0
        %6175 = vmatprep.subr.mxu0 0.0
        %6176 = vmatpush1.xpose.msra.mxu0 0.0
        %6177 = vmatprep.subr.mxu0 0.0
        %6178 = vmatpush1.xpose.msra.mxu0 0.0
        %6179 = vmatprep.subr.mxu0 0.0
        %6180 = vmatpush1.xpose.msra.mxu0 0.0
        %6181 = vmatprep.subr.mxu0 0.0
        %6182 = vmatpush1.xpose.msra.mxu0 0.0
        %6183 = vmatprep.subr.mxu0 0.0
        %6184 = vmatpush1.xpose.msra.mxu0 0.0
        %6185 = vmatprep.subr.mxu0 0.0
        %6186 = vmatpush1.xpose.msra.mxu0 0.0
        %6187 = vmatprep.subr.mxu0 0.0
        %6188 = vmatpush1.xpose.msra.mxu0 0.0
        %6189 = vmatprep.subr.mxu0 0.0
        %6190 = vmatpush1.xpose.msra.mxu0 0.0
        %6191 = vmatprep.subr.mxu0 0.0
        %6192 = vmatpush1.xpose.msra.mxu0 0.0
        %6193 = vmatprep.subr.mxu0 0.0
        %6194 = vmatpush1.xpose.msra.mxu0 0.0
        %6195 = vmatprep.subr.mxu0 0.0
        %6196 = vmatpush1.xpose.msra.mxu0 0.0
        %6197 = vmatprep.subr.mxu0 0.0
        %6198 = vmatpush1.xpose.msra.mxu0 0.0
        %6199 = vmatprep.subr.mxu0 0.0
        %6200 = vmatpush1.xpose.msra.mxu0 0.0
        %6201 = vmatprep.subr.mxu0 0.0
        %6202 = vmatpush1.xpose.msra.mxu0 0.0
        %6203 = vmatprep.subr.mxu0 0.0
        %6204 = vmatpush1.xpose.msra.mxu0 0.0
        %6205 = vmatprep.subr.mxu0 0.0
        %6206 = vmatpush1.xpose.msra.mxu0 0.0
        %6207 = vmatprep.subr.mxu0 0.0
        %6208 = vmatpush1.xpose.msra.mxu0 0.0
        %6209 = vmatprep.subr.mxu0 0.0
        %6210 = vmatpush1.xpose.msra.mxu0 0.0
        %6211 = vmatprep.subr.mxu0 0.0
        %6212 = vmatpush1.xpose.msra.mxu0 0.0
        %6213 = vmatprep.subr.mxu0 0.0
        %6214 = vmatpush1.xpose.msra.mxu0 0.0
        %6215 = vmatprep.subr.mxu0 0.0
        %6216 = vmatpush1.xpose.msra.mxu0 0.0
        %6217 = vmatprep.subr.mxu0 0.0
        %6218 = vmatpush1.xpose.msra.mxu0 0.0
        %6219 = vmatprep.subr.mxu0 0.0
        %6220 = vmatpush1.xpose.msra.mxu0 0.0
        %6221 = vmatprep.subr.mxu0 0.0
        %6222 = vmatpush1.xpose.msra.mxu0 0.0
        %6223 = vmatprep.subr.mxu0 0.0
        %6224 = vmatpush1.xpose.msra.mxu0 0.0
        %6225 = vmatprep.subr.mxu0 0.0
        %6226 = vmatpush1.xpose.msra.mxu0 0.0
        %6227 = vmatprep.subr.mxu0 0.0
        %6228 = vmatpush1.xpose.msra.mxu0 0.0
        %6229 = vmatprep.subr.mxu0 0.0
        %6230 = vmatpush1.xpose.msra.mxu0 0.0
        %6231 = vmatprep.subr.mxu0 0.0
        %6232 = vmatpush1.xpose.msra.mxu0 0.0
        %6233 = vmatprep.subr.mxu0 0.0
        %6234 = vmatpush1.xpose.msra.mxu0 0.0
        %6235 = vmatprep.mubr.f32.mxu0 0.0
        %6236 = vmatmul.mubr.f32.gmra.mrb[0].mxu0 %v6166
        %v6237 = vpop.f32.mrb[0].mxu0
        %v6238 = vadd.f32 0.0, %v6237
        %v6239 = vpop.f32.mrb[0].mxu0
        %6240 = vdwg.mxu0
        %6241 = vxpose.xlu0.b32.start [1/16] %v5782, 128
        %6242 = vxpose.xlu0.b32.cont [2/16] 0.0, 128
        %6243 = vxpose.xlu0.b32.cont [3/16] 0.0, 128
        %6244 = vxpose.xlu0.b32.cont [4/16] 0.0, 128
        %6245 = vxpose.xlu0.b32.cont [5/16] 0.0, 128
        %6246 = vxpose.xlu0.b32.cont [6/16] 0.0, 128
        %6247 = vxpose.xlu0.b32.cont [7/16] 0.0, 128
        %6248 = vxpose.xlu0.b32.cont [8/16] 0.0, 128
        %6249 = vxpose.xlu0.b32.cont [9/16] 0.0, 128
        %6250 = vxpose.xlu0.b32.cont [10/16] 0.0, 128
        %6251 = vxpose.xlu0.b32.cont [11/16] 0.0, 128
        %6252 = vxpose.xlu0.b32.cont [12/16] 0.0, 128
        %6253 = vxpose.xlu0.b32.cont [13/16] 0.0, 128
        %6254 = vxpose.xlu0.b32.cont [14/16] 0.0, 128
        %6255 = vxpose.xlu0.b32.cont [15/16] 0.0, 128
        %6256 = vxpose.xlu0.b32.end [16/16] 0.0, 128
        %v6257 = vpop.trf.xlu0
        %v6258 = vpop.trf.xlu0
        %v6259 = vpop.trf.xlu0
        %v6260 = vpop.trf.xlu0
        %v6261 = vpop.trf.xlu0
        %v6262 = vpop.trf.xlu0
        %v6263 = vpop.trf.xlu0
        %v6264 = vpop.trf.xlu0
        %v6265 = vpop.trf.xlu0
        %v6266 = vpop.trf.xlu0
        %v6267 = vpop.trf.xlu0
        %v6268 = vpop.trf.xlu0
        %v6269 = vpop.trf.xlu0
        %v6270 = vpop.trf.xlu0
        %v6271 = vpop.trf.xlu0
        %v6272 = vpop.trf.xlu0
        %v6274 = vsel %vm1926, %v6257, 0
        %v6277 = vsel %vm1926, %v6130, 0
        %6279 = vmatprep.subr.mxu0 0.0
        %6280 = vmatpush1.xpose.msra.mxu0 %v6277
        %6281 = vmatprep.subr.mxu0 0.0
        %6282 = vmatpush1.xpose.msra.mxu0 0.0
        %6283 = vmatprep.subr.mxu0 0.0
        %6284 = vmatpush1.xpose.msra.mxu0 0.0
        %6285 = vmatprep.subr.mxu0 0.0
        %6286 = vmatpush1.xpose.msra.mxu0 0.0
        %6287 = vmatprep.subr.mxu0 0.0
        %6288 = vmatpush1.xpose.msra.mxu0 0.0
        %6289 = vmatprep.subr.mxu0 0.0
        %6290 = vmatpush1.xpose.msra.mxu0 0.0
        %6291 = vmatprep.subr.mxu0 0.0
        %6292 = vmatpush1.xpose.msra.mxu0 0.0
        %6293 = vmatprep.subr.mxu0 0.0
        %6294 = vmatpush1.xpose.msra.mxu0 0.0
        %6295 = vmatprep.subr.mxu0 0.0
        %6296 = vmatpush1.xpose.msra.mxu0 0.0
        %6297 = vmatprep.subr.mxu0 0.0
        %6298 = vmatpush1.xpose.msra.mxu0 0.0
        %6299 = vmatprep.subr.mxu0 0.0
        %6300 = vmatpush1.xpose.msra.mxu0 0.0
        %6301 = vmatprep.subr.mxu0 0.0
        %6302 = vmatpush1.xpose.msra.mxu0 0.0
        %6303 = vmatprep.subr.mxu0 0.0
        %6304 = vmatpush1.xpose.msra.mxu0 0.0
        %6305 = vmatprep.subr.mxu0 0.0
        %6306 = vmatpush1.xpose.msra.mxu0 0.0
        %6307 = vmatprep.subr.mxu0 0.0
        %6308 = vmatpush1.xpose.msra.mxu0 0.0
        %6309 = vmatprep.subr.mxu0 0.0
        %6310 = vmatpush1.xpose.msra.mxu0 0.0
        %6311 = vmatprep.subr.mxu0 0.0
        %6312 = vmatpush1.xpose.msra.mxu0 0.0
        %6313 = vmatprep.subr.mxu0 0.0
        %6314 = vmatpush1.xpose.msra.mxu0 0.0
        %6315 = vmatprep.subr.mxu0 0.0
        %6316 = vmatpush1.xpose.msra.mxu0 0.0
        %6317 = vmatprep.subr.mxu0 0.0
        %6318 = vmatpush1.xpose.msra.mxu0 0.0
        %6319 = vmatprep.subr.mxu0 0.0
        %6320 = vmatpush1.xpose.msra.mxu0 0.0
        %6321 = vmatprep.subr.mxu0 0.0
        %6322 = vmatpush1.xpose.msra.mxu0 0.0
        %6323 = vmatprep.subr.mxu0 0.0
        %6324 = vmatpush1.xpose.msra.mxu0 0.0
        %6325 = vmatprep.subr.mxu0 0.0
        %6326 = vmatpush1.xpose.msra.mxu0 0.0
        %6327 = vmatprep.subr.mxu0 0.0
        %6328 = vmatpush1.xpose.msra.mxu0 0.0
        %6329 = vmatprep.subr.mxu0 0.0
        %6330 = vmatpush1.xpose.msra.mxu0 0.0
        %6331 = vmatprep.subr.mxu0 0.0
        %6332 = vmatpush1.xpose.msra.mxu0 0.0
        %6333 = vmatprep.subr.mxu0 0.0
        %6334 = vmatpush1.xpose.msra.mxu0 0.0
        %6335 = vmatprep.subr.mxu0 0.0
        %6336 = vmatpush1.xpose.msra.mxu0 0.0
        %6337 = vmatprep.subr.mxu0 0.0
        %6338 = vmatpush1.xpose.msra.mxu0 0.0
        %6339 = vmatprep.subr.mxu0 0.0
        %6340 = vmatpush1.xpose.msra.mxu0 0.0
        %6341 = vmatprep.subr.mxu0 0.0
        %6342 = vmatpush1.xpose.msra.mxu0 0.0
        %6343 = vmatprep.mubr.f32.mxu0 0.0
        %6344 = vmatmul.mubr.f32.gmra.mrb[0].mxu0 %v6274
        %v6345 = vpop.f32.mrb[0].mxu0
        %v6346 = vadd.f32 0.0, %v6345
        %v6347 = vpop.f32.mrb[0].mxu0
        %6348 = vdwg.mxu0
        %6349 = vxpose.xlu0.b32.start [1/16] %v5783, 128
        %6350 = vxpose.xlu0.b32.cont [2/16] 0.0, 128
        %6351 = vxpose.xlu0.b32.cont [3/16] 0.0, 128
        %6352 = vxpose.xlu0.b32.cont [4/16] 0.0, 128
        %6353 = vxpose.xlu0.b32.cont [5/16] 0.0, 128
        %6354 = vxpose.xlu0.b32.cont [6/16] 0.0, 128
        %6355 = vxpose.xlu0.b32.cont [7/16] 0.0, 128
        %6356 = vxpose.xlu0.b32.cont [8/16] 0.0, 128
        %6357 = vxpose.xlu0.b32.cont [9/16] 0.0, 128
        %6358 = vxpose.xlu0.b32.cont [10/16] 0.0, 128
        %6359 = vxpose.xlu0.b32.cont [11/16] 0.0, 128
        %6360 = vxpose.xlu0.b32.cont [12/16] 0.0, 128
        %6361 = vxpose.xlu0.b32.cont [13/16] 0.0, 128
        %6362 = vxpose.xlu0.b32.cont [14/16] 0.0, 128
        %6363 = vxpose.xlu0.b32.cont [15/16] 0.0, 128
        %6364 = vxpose.xlu0.b32.end [16/16] 0.0, 128
        %v6365 = vpop.trf.xlu0
        %v6366 = vpop.trf.xlu0
        %v6367 = vpop.trf.xlu0
        %v6368 = vpop.trf.xlu0
        %v6369 = vpop.trf.xlu0
        %v6370 = vpop.trf.xlu0
        %v6371 = vpop.trf.xlu0
        %v6372 = vpop.trf.xlu0
        %v6373 = vpop.trf.xlu0
        %v6374 = vpop.trf.xlu0
        %v6375 = vpop.trf.xlu0
        %v6376 = vpop.trf.xlu0
        %v6377 = vpop.trf.xlu0
        %v6378 = vpop.trf.xlu0
        %v6379 = vpop.trf.xlu0
        %v6380 = vpop.trf.xlu0
        %v6382 = vsel %vm1926, %v6365, 0
        %v6385 = vsel %vm1926, %v6131, 0
        %6387 = vmatprep.subr.mxu0 0.0
        %6388 = vmatpush1.xpose.msra.mxu0 %v6385
        %6389 = vmatprep.subr.mxu0 0.0
        %6390 = vmatpush1.xpose.msra.mxu0 0.0
        %6391 = vmatprep.subr.mxu0 0.0
        %6392 = vmatpush1.xpose.msra.mxu0 0.0
        %6393 = vmatprep.subr.mxu0 0.0
        %6394 = vmatpush1.xpose.msra.mxu0 0.0
        %6395 = vmatprep.subr.mxu0 0.0
        %6396 = vmatpush1.xpose.msra.mxu0 0.0
        %6397 = vmatprep.subr.mxu0 0.0
        %6398 = vmatpush1.xpose.msra.mxu0 0.0
        %6399 = vmatprep.subr.mxu0 0.0
        %6400 = vmatpush1.xpose.msra.mxu0 0.0
        %6401 = vmatprep.subr.mxu0 0.0
        %6402 = vmatpush1.xpose.msra.mxu0 0.0
        %6403 = vmatprep.subr.mxu0 0.0
        %6404 = vmatpush1.xpose.msra.mxu0 0.0
        %6405 = vmatprep.subr.mxu0 0.0
        %6406 = vmatpush1.xpose.msra.mxu0 0.0
        %6407 = vmatprep.subr.mxu0 0.0
        %6408 = vmatpush1.xpose.msra.mxu0 0.0
        %6409 = vmatprep.subr.mxu0 0.0
        %6410 = vmatpush1.xpose.msra.mxu0 0.0
        %6411 = vmatprep.subr.mxu0 0.0
        %6412 = vmatpush1.xpose.msra.mxu0 0.0
        %6413 = vmatprep.subr.mxu0 0.0
        %6414 = vmatpush1.xpose.msra.mxu0 0.0
        %6415 = vmatprep.subr.mxu0 0.0
        %6416 = vmatpush1.xpose.msra.mxu0 0.0
        %6417 = vmatprep.subr.mxu0 0.0
        %6418 = vmatpush1.xpose.msra.mxu0 0.0
        %6419 = vmatprep.subr.mxu0 0.0
        %6420 = vmatpush1.xpose.msra.mxu0 0.0
        %6421 = vmatprep.subr.mxu0 0.0
        %6422 = vmatpush1.xpose.msra.mxu0 0.0
        %6423 = vmatprep.subr.mxu0 0.0
        %6424 = vmatpush1.xpose.msra.mxu0 0.0
        %6425 = vmatprep.subr.mxu0 0.0
        %6426 = vmatpush1.xpose.msra.mxu0 0.0
        %6427 = vmatprep.subr.mxu0 0.0
        %6428 = vmatpush1.xpose.msra.mxu0 0.0
        %6429 = vmatprep.subr.mxu0 0.0
        %6430 = vmatpush1.xpose.msra.mxu0 0.0
        %6431 = vmatprep.subr.mxu0 0.0
        %6432 = vmatpush1.xpose.msra.mxu0 0.0
        %6433 = vmatprep.subr.mxu0 0.0
        %6434 = vmatpush1.xpose.msra.mxu0 0.0
        %6435 = vmatprep.subr.mxu0 0.0
        %6436 = vmatpush1.xpose.msra.mxu0 0.0
        %6437 = vmatprep.subr.mxu0 0.0
        %6438 = vmatpush1.xpose.msra.mxu0 0.0
        %6439 = vmatprep.subr.mxu0 0.0
        %6440 = vmatpush1.xpose.msra.mxu0 0.0
        %6441 = vmatprep.subr.mxu0 0.0
        %6442 = vmatpush1.xpose.msra.mxu0 0.0
        %6443 = vmatprep.subr.mxu0 0.0
        %6444 = vmatpush1.xpose.msra.mxu0 0.0
        %6445 = vmatprep.subr.mxu0 0.0
        %6446 = vmatpush1.xpose.msra.mxu0 0.0
        %6447 = vmatprep.subr.mxu0 0.0
        %6448 = vmatpush1.xpose.msra.mxu0 0.0
        %6449 = vmatprep.subr.mxu0 0.0
        %6450 = vmatpush1.xpose.msra.mxu0 0.0
        %6451 = vmatprep.mubr.f32.mxu0 0.0
        %6452 = vmatmul.mubr.f32.gmra.mrb[0].mxu0 %v6382
        %v6453 = vpop.f32.mrb[0].mxu0
        %v6454 = vadd.f32 0.0, %v6453
        %v6455 = vpop.f32.mrb[0].mxu0
        %6456 = vdwg.mxu0
        %6457 = vxpose.xlu0.b32.start [1/16] %v5784, 128
        %6458 = vxpose.xlu0.b32.cont [2/16] 0.0, 128
        %6459 = vxpose.xlu0.b32.cont [3/16] 0.0, 128
        %6460 = vxpose.xlu0.b32.cont [4/16] 0.0, 128
        %6461 = vxpose.xlu0.b32.cont [5/16] 0.0, 128
        %6462 = vxpose.xlu0.b32.cont [6/16] 0.0, 128
        %6463 = vxpose.xlu0.b32.cont [7/16] 0.0, 128
        %6464 = vxpose.xlu0.b32.cont [8/16] 0.0, 128
        %6465 = vxpose.xlu0.b32.cont [9/16] 0.0, 128
        %6466 = vxpose.xlu0.b32.cont [10/16] 0.0, 128
        %6467 = vxpose.xlu0.b32.cont [11/16] 0.0, 128
        %6468 = vxpose.xlu0.b32.cont [12/16] 0.0, 128
        %6469 = vxpose.xlu0.b32.cont [13/16] 0.0, 128
        %6470 = vxpose.xlu0.b32.cont [14/16] 0.0, 128
        %6471 = vxpose.xlu0.b32.cont [15/16] 0.0, 128
        %6472 = vxpose.xlu0.b32.end [16/16] 0.0, 128
        %v6473 = vpop.trf.xlu0
        %v6474 = vpop.trf.xlu0
        %v6475 = vpop.trf.xlu0
        %v6476 = vpop.trf.xlu0
        %v6477 = vpop.trf.xlu0
        %v6478 = vpop.trf.xlu0
        %v6479 = vpop.trf.xlu0
        %v6480 = vpop.trf.xlu0
        %v6481 = vpop.trf.xlu0
        %v6482 = vpop.trf.xlu0
        %v6483 = vpop.trf.xlu0
        %v6484 = vpop.trf.xlu0
        %v6485 = vpop.trf.xlu0
        %v6486 = vpop.trf.xlu0
        %v6487 = vpop.trf.xlu0
        %v6488 = vpop.trf.xlu0
        %v6490 = vsel %vm1926, %v6473, 0
        %v6493 = vsel %vm1926, %v6132, 0
        %6495 = vmatprep.subr.mxu0 0.0
        %6496 = vmatpush1.xpose.msra.mxu0 %v6493
        %6497 = vmatprep.subr.mxu0 0.0
        %6498 = vmatpush1.xpose.msra.mxu0 0.0
        %6499 = vmatprep.subr.mxu0 0.0
        %6500 = vmatpush1.xpose.msra.mxu0 0.0
        %6501 = vmatprep.subr.mxu0 0.0
        %6502 = vmatpush1.xpose.msra.mxu0 0.0
        %6503 = vmatprep.subr.mxu0 0.0
        %6504 = vmatpush1.xpose.msra.mxu0 0.0
        %6505 = vmatprep.subr.mxu0 0.0
        %6506 = vmatpush1.xpose.msra.mxu0 0.0
        %6507 = vmatprep.subr.mxu0 0.0
        %6508 = vmatpush1.xpose.msra.mxu0 0.0
        %6509 = vmatprep.subr.mxu0 0.0
        %6510 = vmatpush1.xpose.msra.mxu0 0.0
        %6511 = vmatprep.subr.mxu0 0.0
        %6512 = vmatpush1.xpose.msra.mxu0 0.0
        %6513 = vmatprep.subr.mxu0 0.0
        %6514 = vmatpush1.xpose.msra.mxu0 0.0
        %6515 = vmatprep.subr.mxu0 0.0
        %6516 = vmatpush1.xpose.msra.mxu0 0.0
        %6517 = vmatprep.subr.mxu0 0.0
        %6518 = vmatpush1.xpose.msra.mxu0 0.0
        %6519 = vmatprep.subr.mxu0 0.0
        %6520 = vmatpush1.xpose.msra.mxu0 0.0
        %6521 = vmatprep.subr.mxu0 0.0
        %6522 = vmatpush1.xpose.msra.mxu0 0.0
        %6523 = vmatprep.subr.mxu0 0.0
        %6524 = vmatpush1.xpose.msra.mxu0 0.0
        %6525 = vmatprep.subr.mxu0 0.0
        %6526 = vmatpush1.xpose.msra.mxu0 0.0
        %6527 = vmatprep.subr.mxu0 0.0
        %6528 = vmatpush1.xpose.msra.mxu0 0.0
        %6529 = vmatprep.subr.mxu0 0.0
        %6530 = vmatpush1.xpose.msra.mxu0 0.0
        %6531 = vmatprep.subr.mxu0 0.0
        %6532 = vmatpush1.xpose.msra.mxu0 0.0
        %6533 = vmatprep.subr.mxu0 0.0
        %6534 = vmatpush1.xpose.msra.mxu0 0.0
        %6535 = vmatprep.subr.mxu0 0.0
        %6536 = vmatpush1.xpose.msra.mxu0 0.0
        %6537 = vmatprep.subr.mxu0 0.0
        %6538 = vmatpush1.xpose.msra.mxu0 0.0
        %6539 = vmatprep.subr.mxu0 0.0
        %6540 = vmatpush1.xpose.msra.mxu0 0.0
        %6541 = vmatprep.subr.mxu0 0.0
        %6542 = vmatpush1.xpose.msra.mxu0 0.0
        %6543 = vmatprep.subr.mxu0 0.0
        %6544 = vmatpush1.xpose.msra.mxu0 0.0
        %6545 = vmatprep.subr.mxu0 0.0
        %6546 = vmatpush1.xpose.msra.mxu0 0.0
        %6547 = vmatprep.subr.mxu0 0.0
        %6548 = vmatpush1.xpose.msra.mxu0 0.0
        %6549 = vmatprep.subr.mxu0 0.0
        %6550 = vmatpush1.xpose.msra.mxu0 0.0
        %6551 = vmatprep.subr.mxu0 0.0
        %6552 = vmatpush1.xpose.msra.mxu0 0.0
        %6553 = vmatprep.subr.mxu0 0.0
        %6554 = vmatpush1.xpose.msra.mxu0 0.0
        %6555 = vmatprep.subr.mxu0 0.0
        %6556 = vmatpush1.xpose.msra.mxu0 0.0
        %6557 = vmatprep.subr.mxu0 0.0
        %6558 = vmatpush1.xpose.msra.mxu0 0.0
        %6559 = vmatprep.mubr.f32.mxu0 0.0
        %6560 = vmatmul.mubr.f32.gmra.mrb[0].mxu0 %v6490
        %v6561 = vpop.f32.mrb[0].mxu0
        %v6562 = vadd.f32 0.0, %v6561
        %v6563 = vpop.f32.mrb[0].mxu0
        %6564 = vdwg.mxu0
        %6565 = vxpose.xlu0.b32.start [1/16] %v6238, 128
        %6566 = vxpose.xlu0.b32.cont [2/16] 0.0, 128
        %6567 = vxpose.xlu0.b32.cont [3/16] 0.0, 128
        %6568 = vxpose.xlu0.b32.cont [4/16] 0.0, 128
        %6569 = vxpose.xlu0.b32.cont [5/16] 0.0, 128
        %6570 = vxpose.xlu0.b32.cont [6/16] 0.0, 128
        %6571 = vxpose.xlu0.b32.cont [7/16] 0.0, 128
        %6572 = vxpose.xlu0.b32.cont [8/16] 0.0, 128
        %6573 = vxpose.xlu0.b32.cont [9/16] 0.0, 128
        %6574 = vxpose.xlu0.b32.cont [10/16] 0.0, 128
        %6575 = vxpose.xlu0.b32.cont [11/16] 0.0, 128
        %6576 = vxpose.xlu0.b32.cont [12/16] 0.0, 128
        %6577 = vxpose.xlu0.b32.cont [13/16] 0.0, 128
        %6578 = vxpose.xlu0.b32.cont [14/16] 0.0, 128
        %6579 = vxpose.xlu0.b32.cont [15/16] 0.0, 128
        %6580 = vxpose.xlu0.b32.end [16/16] 0.0, 128
        %v6581 = vpop.trf.xlu0
        %v6582 = vpop.trf.xlu0
        %v6583 = vpop.trf.xlu0
        %v6584 = vpop.trf.xlu0
        %v6585 = vpop.trf.xlu0
        %v6586 = vpop.trf.xlu0
        %v6587 = vpop.trf.xlu0
        %v6588 = vpop.trf.xlu0
        %v6589 = vpop.trf.xlu0
        %v6590 = vpop.trf.xlu0
        %v6591 = vpop.trf.xlu0
        %v6592 = vpop.trf.xlu0
        %v6593 = vpop.trf.xlu0
        %v6594 = vpop.trf.xlu0
        %v6595 = vpop.trf.xlu0
        %v6596 = vpop.trf.xlu0
        %6597 = vxpose.xlu0.b32.start [1/16] %v6346, 128
        %6598 = vxpose.xlu0.b32.cont [2/16] 0.0, 128
        %6599 = vxpose.xlu0.b32.cont [3/16] 0.0, 128
        %6600 = vxpose.xlu0.b32.cont [4/16] 0.0, 128
        %6601 = vxpose.xlu0.b32.cont [5/16] 0.0, 128
        %6602 = vxpose.xlu0.b32.cont [6/16] 0.0, 128
        %6603 = vxpose.xlu0.b32.cont [7/16] 0.0, 128
        %6604 = vxpose.xlu0.b32.cont [8/16] 0.0, 128
        %6605 = vxpose.xlu0.b32.cont [9/16] 0.0, 128
        %6606 = vxpose.xlu0.b32.cont [10/16] 0.0, 128
        %6607 = vxpose.xlu0.b32.cont [11/16] 0.0, 128
        %6608 = vxpose.xlu0.b32.cont [12/16] 0.0, 128
        %6609 = vxpose.xlu0.b32.cont [13/16] 0.0, 128
        %6610 = vxpose.xlu0.b32.cont [14/16] 0.0, 128
        %6611 = vxpose.xlu0.b32.cont [15/16] 0.0, 128
        %6612 = vxpose.xlu0.b32.end [16/16] 0.0, 128
        %v6613 = vpop.trf.xlu0
        %v6614 = vpop.trf.xlu0
        %v6615 = vpop.trf.xlu0
        %v6616 = vpop.trf.xlu0
        %v6617 = vpop.trf.xlu0
        %v6618 = vpop.trf.xlu0
        %v6619 = vpop.trf.xlu0
        %v6620 = vpop.trf.xlu0
        %v6621 = vpop.trf.xlu0
        %v6622 = vpop.trf.xlu0
        %v6623 = vpop.trf.xlu0
        %v6624 = vpop.trf.xlu0
        %v6625 = vpop.trf.xlu0
        %v6626 = vpop.trf.xlu0
        %v6627 = vpop.trf.xlu0
        %v6628 = vpop.trf.xlu0
        %6629 = vxpose.xlu0.b32.start [1/16] %v6454, 128
        %6630 = vxpose.xlu0.b32.cont [2/16] 0.0, 128
        %6631 = vxpose.xlu0.b32.cont [3/16] 0.0, 128
        %6632 = vxpose.xlu0.b32.cont [4/16] 0.0, 128
        %6633 = vxpose.xlu0.b32.cont [5/16] 0.0, 128
        %6634 = vxpose.xlu0.b32.cont [6/16] 0.0, 128
        %6635 = vxpose.xlu0.b32.cont [7/16] 0.0, 128
        %6636 = vxpose.xlu0.b32.cont [8/16] 0.0, 128
        %6637 = vxpose.xlu0.b32.cont [9/16] 0.0, 128
        %6638 = vxpose.xlu0.b32.cont [10/16] 0.0, 128
        %6639 = vxpose.xlu0.b32.cont [11/16] 0.0, 128
        %6640 = vxpose.xlu0.b32.cont [12/16] 0.0, 128
        %6641 = vxpose.xlu0.b32.cont [13/16] 0.0, 128
        %6642 = vxpose.xlu0.b32.cont [14/16] 0.0, 128
        %6643 = vxpose.xlu0.b32.cont [15/16] 0.0, 128
        %6644 = vxpose.xlu0.b32.end [16/16] 0.0, 128
        %v6645 = vpop.trf.xlu0
        %v6646 = vpop.trf.xlu0
        %v6647 = vpop.trf.xlu0
        %v6648 = vpop.trf.xlu0
        %v6649 = vpop.trf.xlu0
        %v6650 = vpop.trf.xlu0
        %v6651 = vpop.trf.xlu0
        %v6652 = vpop.trf.xlu0
        %v6653 = vpop.trf.xlu0
        %v6654 = vpop.trf.xlu0
        %v6655 = vpop.trf.xlu0
        %v6656 = vpop.trf.xlu0
        %v6657 = vpop.trf.xlu0
        %v6658 = vpop.trf.xlu0
        %v6659 = vpop.trf.xlu0
        %v6660 = vpop.trf.xlu0
        %6661 = vxpose.xlu0.b32.start [1/16] %v6562, 128
        %6662 = vxpose.xlu0.b32.cont [2/16] 0.0, 128
        %6663 = vxpose.xlu0.b32.cont [3/16] 0.0, 128
        %6664 = vxpose.xlu0.b32.cont [4/16] 0.0, 128
        %6665 = vxpose.xlu0.b32.cont [5/16] 0.0, 128
        %6666 = vxpose.xlu0.b32.cont [6/16] 0.0, 128
        %6667 = vxpose.xlu0.b32.cont [7/16] 0.0, 128
        %6668 = vxpose.xlu0.b32.cont [8/16] 0.0, 128
        %6669 = vxpose.xlu0.b32.cont [9/16] 0.0, 128
        %6670 = vxpose.xlu0.b32.cont [10/16] 0.0, 128
        %6671 = vxpose.xlu0.b32.cont [11/16] 0.0, 128
        %6672 = vxpose.xlu0.b32.cont [12/16] 0.0, 128
        %6673 = vxpose.xlu0.b32.cont [13/16] 0.0, 128
        %6674 = vxpose.xlu0.b32.cont [14/16] 0.0, 128
        %6675 = vxpose.xlu0.b32.cont [15/16] 0.0, 128
        %6676 = vxpose.xlu0.b32.end [16/16] 0.0, 128
        %v6677 = vpop.trf.xlu0
        %v6678 = vpop.trf.xlu0
        %v6679 = vpop.trf.xlu0
        %v6680 = vpop.trf.xlu0
        %v6681 = vpop.trf.xlu0
        %v6682 = vpop.trf.xlu0
        %v6683 = vpop.trf.xlu0
        %v6684 = vpop.trf.xlu0
        %v6685 = vpop.trf.xlu0
        %v6686 = vpop.trf.xlu0
        %v6687 = vpop.trf.xlu0
        %v6688 = vpop.trf.xlu0
        %v6689 = vpop.trf.xlu0
        %v6690 = vpop.trf.xlu0
        %v6691 = vpop.trf.xlu0
        %v6692 = vpop.trf.xlu0
        %v6693 = vcombine.low %v6581, %v6645
        %v6694 = vcombine.high %v6581, %v6645
        %v6696 = vunpack.c.l.s4 1983009808
        %v6697 = vunpack.c.0.s8 %v6696
        %v6698 = vlaneseq
        %v6699 = vshrl.u32 %v6698, 7
        %v6700 = vsub.s32 %v6697, %v6699
        %v6701 = vrot.slane %v6693, %v6700
        %v6703 = vunpack.c.l.s4 1983009808
        %v6704 = vunpack.c.0.s8 %v6703
        %v6705 = vlaneseq
        %v6706 = vshrl.u32 %v6705, 7
        %v6707 = vsub.s32 %v6704, %v6706
        %v6708 = vrot.slane %v6694, %v6707
        %v6709 = vcombine.low %v6613, %v6677
        %v6710 = vcombine.high %v6613, %v6677
        %v6712 = vunpack.c.l.s4 1983009808
        %v6713 = vunpack.c.0.s8 %v6712
        %v6714 = vlaneseq
        %v6715 = vshrl.u32 %v6714, 7
        %v6716 = vsub.s32 %v6713, %v6715
        %v6717 = vrot.slane %v6709, %v6716
        %v6719 = vunpack.c.l.s4 1983009808
        %v6720 = vunpack.c.0.s8 %v6719
        %v6721 = vlaneseq
        %v6722 = vshrl.u32 %v6721, 7
        %v6723 = vsub.s32 %v6720, %v6722
        %v6724 = vrot.slane %v6710, %v6723
        %v6725 = vcombine.low %v6701, %v6717
        %v6726 = vcombine.high %v6701, %v6717
        %v6728 = vunpack.c.l.s4 1934713408
        %v6729 = vunpack.c.0.s8 %v6728
        %v6730 = vlaneseq
        %v6731 = vshrl.u32 %v6730, 7
        %v6732 = vsub.s32 %v6729, %v6731
        %v6733 = vrot.slane %v6725, %v6732
        %v6735 = vunpack.c.l.s4 1934713408
        %v6736 = vunpack.c.0.s8 %v6735
        %v6737 = vlaneseq
        %v6738 = vshrl.u32 %v6737, 7
        %v6739 = vsub.s32 %v6736, %v6738
        %v6740 = vrot.slane %v6726, %v6739
        %v6741 = vcombine.low %v6708, %v6724
        %v6742 = vcombine.high %v6708, %v6724
        %v6744 = vunpack.c.l.s4 1934713408
        %v6745 = vunpack.c.0.s8 %v6744
        %v6746 = vlaneseq
        %v6747 = vshrl.u32 %v6746, 7
        %v6748 = vsub.s32 %v6745, %v6747
        %v6749 = vrot.slane %v6741, %v6748
        %v6751 = vunpack.c.l.s4 1934713408
        %v6752 = vunpack.c.0.s8 %v6751
        %v6753 = vlaneseq
        %v6754 = vshrl.u32 %v6753, 7
        %v6755 = vsub.s32 %v6752, %v6754
        %v6756 = vrot.slane %v6742, %v6755
        %v6757 = vcombine.high %v6733, 0.0
        %v6758 = vcombine.high %v6740, 0.0
        %v6759 = vcombine.high %v6749, 0.0
        %v6760 = vcombine.high %v6756, 0.0
        %v6761 = vcombine.low %v6733, %v6740
        %v6763 = vunpack.c.l.s4 1983009808
        %v6764 = vunpack.c.0.s8 %v6763
        %v6765 = vlaneseq
        %v6766 = vshrl.u32 %v6765, 7
        %v6767 = vsub.s32 %v6764, %v6766
        %v6768 = vrot.slane %v6761, %v6767
        %v6769 = vcombine.low %v6757, %v6758
        %v6771 = vunpack.c.l.s4 1983009808
        %v6772 = vunpack.c.0.s8 %v6771
        %v6773 = vlaneseq
        %v6774 = vshrl.u32 %v6773, 7
        %v6775 = vsub.s32 %v6772, %v6774
        %v6776 = vrot.slane %v6769, %v6775
        %v6777 = vcombine.low %v6749, %v6756
        %v6779 = vunpack.c.l.s4 1983009808
        %v6780 = vunpack.c.0.s8 %v6779
        %v6781 = vlaneseq
        %v6782 = vshrl.u32 %v6781, 7
        %v6783 = vsub.s32 %v6780, %v6782
        %v6784 = vrot.slane %v6777, %v6783
        %v6785 = vcombine.low %v6759, %v6760
        %v6787 = vunpack.c.l.s4 1983009808
        %v6788 = vunpack.c.0.s8 %v6787
        %v6789 = vlaneseq
        %v6790 = vshrl.u32 %v6789, 7
        %v6791 = vsub.s32 %v6788, %v6790
        %v6792 = vrot.slane %v6785, %v6791
        %v6793 = vcombine.low %v6768, %v6776
        %v6794 = vcombine.high %v6768, %v6776
        %v6796 = vunpack.c.l.s4 1934713408
        %v6797 = vunpack.c.0.s8 %v6796
        %v6798 = vlaneseq
        %v6799 = vshrl.u32 %v6798, 7
        %v6800 = vsub.s32 %v6797, %v6799
        %v6801 = vrot.slane %v6793, %v6800
        %v6803 = vunpack.c.l.s4 1934713408
        %v6804 = vunpack.c.0.s8 %v6803
        %v6805 = vlaneseq
        %v6806 = vshrl.u32 %v6805, 7
        %v6807 = vsub.s32 %v6804, %v6806
        %v6808 = vrot.slane %v6794, %v6807
        %v6809 = vcombine.low %v6784, %v6792
        %v6810 = vcombine.high %v6784, %v6792
        %v6812 = vunpack.c.l.s4 1934713408
        %v6813 = vunpack.c.0.s8 %v6812
        %v6814 = vlaneseq
        %v6815 = vshrl.u32 %v6814, 7
        %v6816 = vsub.s32 %v6813, %v6815
        %v6817 = vrot.slane %v6809, %v6816
        %v6819 = vunpack.c.l.s4 1934713408
        %v6820 = vunpack.c.0.s8 %v6819
        %v6821 = vlaneseq
        %v6822 = vshrl.u32 %v6821, 7
        %v6823 = vsub.s32 %v6820, %v6822
        %v6824 = vrot.slane %v6810, %v6823
        %v6825 = vcombine.low %v6801, %v6817
        %v6826 = vcombine.high %v6801, %v6817
        %v6827 = vcombine.low %v6808, %v6824
        %v6828 = vcombine.high %v6808, %v6824
        %6830 = vrot.lane.b32.xlu0 %v6826, 8
        %v6831 = vpop.permute.xlu0 %6830
        %6834 = vrot.lane.b32.xlu0 %v6827, 16
        %v6835 = vpop.permute.xlu0 %6834
        %6838 = vrot.lane.b32.xlu0 %v6828, 24
        %v6839 = vpop.permute.xlu0 %6838
        %v6841 = vsel %vm1926, %v6825, %v6831
        %v6842 = vsel %vm2984, %v6841, %v6835
        %v6843 = vsel %vm2986, %v6842, %v6839
        %v6845 = vlaneseq
        %v6846 = vshrl.u32 %v6845, 7
        %v6847 = vsub.s32 0, %v6846
        %v6848 = vrot.slane %v5230, %v6847
        %v6851 = vsel %vm1410, %v6843, 0
        %6853 = vmatprep.subr.mxu0 0.0
        %6854 = vmatpush1.msra.mxu0 %v5226
        %6855 = vmatprep.subr.mxu0 0.0
        %6856 = vmatpush1.msra.mxu0 %v5227
        %6857 = vmatprep.subr.mxu0 0.0
        %6858 = vmatpush1.msra.mxu0 %v5228
        %6859 = vmatprep.subr.mxu0 0.0
        %6860 = vmatpush1.msra.mxu0 %v5229
        %6861 = vmatprep.subr.mxu0 0.0
        %6862 = vmatpush1.msra.mxu0 0.0
        %6863 = vmatprep.subr.mxu0 0.0
        %6864 = vmatpush1.msra.mxu0 0.0
        %6865 = vmatprep.subr.mxu0 0.0
        %6866 = vmatpush1.msra.mxu0 0.0
        %6867 = vmatprep.subr.mxu0 0.0
        %6868 = vmatpush1.msra.mxu0 0.0
        %6869 = vmatprep.subr.mxu0 0.0
        %6870 = vmatpush1.msra.mxu0 0.0
        %6871 = vmatprep.subr.mxu0 0.0
        %6872 = vmatpush1.msra.mxu0 0.0
        %6873 = vmatprep.subr.mxu0 0.0
        %6874 = vmatpush1.msra.mxu0 0.0
        %6875 = vmatprep.subr.mxu0 0.0
        %6876 = vmatpush1.msra.mxu0 0.0
        %6877 = vmatprep.subr.mxu0 0.0
        %6878 = vmatpush1.msra.mxu0 0.0
        %6879 = vmatprep.subr.mxu0 0.0
        %6880 = vmatpush1.msra.mxu0 0.0
        %6881 = vmatprep.subr.mxu0 0.0
        %6882 = vmatpush1.msra.mxu0 0.0
        %6883 = vmatprep.subr.mxu0 0.0
        %6884 = vmatpush1.msra.mxu0 0.0
        %6885 = vmatprep.subr.mxu0 0.0
        %6886 = vmatpush1.msra.mxu0 0.0
        %6887 = vmatprep.subr.mxu0 0.0
        %6888 = vmatpush1.msra.mxu0 0.0
        %6889 = vmatprep.subr.mxu0 0.0
        %6890 = vmatpush1.msra.mxu0 0.0
        %6891 = vmatprep.subr.mxu0 0.0
        %6892 = vmatpush1.msra.mxu0 0.0
        %6893 = vmatprep.subr.mxu0 0.0
        %6894 = vmatpush1.msra.mxu0 0.0
        %6895 = vmatprep.subr.mxu0 0.0
        %6896 = vmatpush1.msra.mxu0 0.0
        %6897 = vmatprep.subr.mxu0 0.0
        %6898 = vmatpush1.msra.mxu0 0.0
        %6899 = vmatprep.subr.mxu0 0.0
        %6900 = vmatpush1.msra.mxu0 0.0
        %6901 = vmatprep.subr.mxu0 0.0
        %6902 = vmatpush1.msra.mxu0 0.0
        %6903 = vmatprep.subr.mxu0 0.0
        %6904 = vmatpush1.msra.mxu0 0.0
        %6905 = vmatprep.subr.mxu0 0.0
        %6906 = vmatpush1.msra.mxu0 0.0
        %6907 = vmatprep.subr.mxu0 0.0
        %6908 = vmatpush1.msra.mxu0 0.0
        %6909 = vmatprep.subr.mxu0 0.0
        %6910 = vmatpush1.msra.mxu0 0.0
        %6911 = vmatprep.subr.mxu0 0.0
        %6912 = vmatpush1.msra.mxu0 0.0
        %6913 = vmatprep.subr.mxu0 0.0
        %6914 = vmatpush1.msra.mxu0 0.0
        %6915 = vmatprep.subr.mxu0 0.0
        %6916 = vmatpush1.msra.mxu0 0.0
        %6917 = vmatprep.mubr.f32.mxu0 0.0
        %6918 = vmatmul.mubr.f32.gmra.mrb[0].mxu0 %v6851
        %v6919 = vpop.f32.mrb[0].mxu0
        %v6920 = vadd.f32 %v6848, %v6919
        %v6921 = vpop.f32.mrb[0].mxu0
        %6922 = vdwg.mxu0
        %v6923 = vadd.f32 %v5220, %v6920
        %v6924 = vsel %vm1410, %v6923, 0.0
        %6925 = vadd.xlane.f32.xlu0 %v6924
        %v6926 = vpop.xlane.xlu0 %6925
        %v6927 = vmul.f32 %v6926, %v3071
        %v6928 = vsub.f32 %v6923, %v6927
        %v6929 = vmul.f32 %v6928, %v6928
        %v6930 = vsel %vm1410, %v6929, 0.0
        %6931 = vadd.xlane.f32.xlu0 %v6930
        %v6932 = vpop.xlane.xlu0 %6931
        %v6933 = vmul.f32 %v6932, %v3071
        %v6934 = vadd.f32 %v6933, 1e-05
        %v6935 = vrsqrt.pop %v6934
        %v6936 = vmul.f32 %v6928, %v6935
        %v6938 = vlaneseq
        %v6939 = vshrl.u32 %v6938, 7
        %v6940 = vsub.s32 0, %v6939
        %v6941 = vrot.slane %v5246, %v6940
        %v6943 = vmul.f32 %v6936, %v6941
        %v6945 = vlaneseq
        %v6946 = vshrl.u32 %v6945, 7
        %v6947 = vsub.s32 0, %v6946
        %v6948 = vrot.slane %v5247, %v6947
        %v6950 = vadd.f32 %v6943, %v6948
        %v6952 = vlaneseq
        %v6953 = vshrl.u32 %v6952, 7
        %v6954 = vsub.s32 0, %v6953
        %v6955 = vrot.slane %v5235, %v6954
        %v6958 = vsel %vm1410, %v6950, 0
        %6960 = vmatprep.subr.mxu0 0.0
        %6961 = vmatpush1.msra.mxu0 %v5231
        %6962 = vmatprep.subr.mxu0 0.0
        %6963 = vmatpush1.msra.mxu0 %v5232
        %6964 = vmatprep.subr.mxu0 0.0
        %6965 = vmatpush1.msra.mxu0 %v5233
        %6966 = vmatprep.subr.mxu0 0.0
        %6967 = vmatpush1.msra.mxu0 %v5234
        %6968 = vmatprep.subr.mxu0 0.0
        %6969 = vmatpush1.msra.mxu0 0.0
        %6970 = vmatprep.subr.mxu0 0.0
        %6971 = vmatpush1.msra.mxu0 0.0
        %6972 = vmatprep.subr.mxu0 0.0
        %6973 = vmatpush1.msra.mxu0 0.0
        %6974 = vmatprep.subr.mxu0 0.0
        %6975 = vmatpush1.msra.mxu0 0.0
        %6976 = vmatprep.subr.mxu0 0.0
        %6977 = vmatpush1.msra.mxu0 0.0
        %6978 = vmatprep.subr.mxu0 0.0
        %6979 = vmatpush1.msra.mxu0 0.0
        %6980 = vmatprep.subr.mxu0 0.0
        %6981 = vmatpush1.msra.mxu0 0.0
        %6982 = vmatprep.subr.mxu0 0.0
        %6983 = vmatpush1.msra.mxu0 0.0
        %6984 = vmatprep.subr.mxu0 0.0
        %6985 = vmatpush1.msra.mxu0 0.0
        %6986 = vmatprep.subr.mxu0 0.0
        %6987 = vmatpush1.msra.mxu0 0.0
        %6988 = vmatprep.subr.mxu0 0.0
        %6989 = vmatpush1.msra.mxu0 0.0
        %6990 = vmatprep.subr.mxu0 0.0
        %6991 = vmatpush1.msra.mxu0 0.0
        %6992 = vmatprep.subr.mxu0 0.0
        %6993 = vmatpush1.msra.mxu0 0.0
        %6994 = vmatprep.subr.mxu0 0.0
        %6995 = vmatpush1.msra.mxu0 0.0
        %6996 = vmatprep.subr.mxu0 0.0
        %6997 = vmatpush1.msra.mxu0 0.0
        %6998 = vmatprep.subr.mxu0 0.0
        %6999 = vmatpush1.msra.mxu0 0.0
        %7000 = vmatprep.subr.mxu0 0.0
        %7001 = vmatpush1.msra.mxu0 0.0
        %7002 = vmatprep.subr.mxu0 0.0
        %7003 = vmatpush1.msra.mxu0 0.0
        %7004 = vmatprep.subr.mxu0 0.0
        %7005 = vmatpush1.msra.mxu0 0.0
        %7006 = vmatprep.subr.mxu0 0.0
        %7007 = vmatpush1.msra.mxu0 0.0
        %7008 = vmatprep.subr.mxu0 0.0
        %7009 = vmatpush1.msra.mxu0 0.0
        %7010 = vmatprep.subr.mxu0 0.0
        %7011 = vmatpush1.msra.mxu0 0.0
        %7012 = vmatprep.subr.mxu0 0.0
        %7013 = vmatpush1.msra.mxu0 0.0
        %7014 = vmatprep.subr.mxu0 0.0
        %7015 = vmatpush1.msra.mxu0 0.0
        %7016 = vmatprep.subr.mxu0 0.0
        %7017 = vmatpush1.msra.mxu0 0.0
        %7018 = vmatprep.subr.mxu0 0.0
        %7019 = vmatpush1.msra.mxu0 0.0
        %7020 = vmatprep.subr.mxu0 0.0
        %7021 = vmatpush1.msra.mxu0 0.0
        %7022 = vmatprep.subr.mxu0 0.0
        %7023 = vmatpush1.msra.mxu0 0.0
        %7024 = vmatprep.mubr.f32.mxu0 0.0
        %7025 = vmatmul.mubr.f32.gmra.mrb[0].mxu0 %v6958
        %v7026 = vpop.f32.mrb[0].mxu0
        %v7027 = vadd.f32 %v6955, %v7026
        %v7028 = vpop.f32.mrb[0].mxu0
        %7029 = vdwg.mxu0
        %v7031 = vlaneseq
        %v7032 = vshrl.u32 %v7031, 7
        %v7033 = vsub.s32 0, %v7032
        %v7034 = vrot.slane %v5240, %v7033
        %7036 = vmatprep.subr.mxu0 0.0
        %7037 = vmatpush1.msra.mxu0 %v5236
        %7038 = vmatprep.subr.mxu0 0.0
        %7039 = vmatpush1.msra.mxu0 %v5237
        %7040 = vmatprep.subr.mxu0 0.0
        %7041 = vmatpush1.msra.mxu0 %v5238
        %7042 = vmatprep.subr.mxu0 0.0
        %7043 = vmatpush1.msra.mxu0 %v5239
        %7044 = vmatprep.subr.mxu0 0.0
        %7045 = vmatpush1.msra.mxu0 0.0
        %7046 = vmatprep.subr.mxu0 0.0
        %7047 = vmatpush1.msra.mxu0 0.0
        %7048 = vmatprep.subr.mxu0 0.0
        %7049 = vmatpush1.msra.mxu0 0.0
        %7050 = vmatprep.subr.mxu0 0.0
        %7051 = vmatpush1.msra.mxu0 0.0
        %7052 = vmatprep.subr.mxu0 0.0
        %7053 = vmatpush1.msra.mxu0 0.0
        %7054 = vmatprep.subr.mxu0 0.0
        %7055 = vmatpush1.msra.mxu0 0.0
        %7056 = vmatprep.subr.mxu0 0.0
        %7057 = vmatpush1.msra.mxu0 0.0
        %7058 = vmatprep.subr.mxu0 0.0
        %7059 = vmatpush1.msra.mxu0 0.0
        %7060 = vmatprep.subr.mxu0 0.0
        %7061 = vmatpush1.msra.mxu0 0.0
        %7062 = vmatprep.subr.mxu0 0.0
        %7063 = vmatpush1.msra.mxu0 0.0
        %7064 = vmatprep.subr.mxu0 0.0
        %7065 = vmatpush1.msra.mxu0 0.0
        %7066 = vmatprep.subr.mxu0 0.0
        %7067 = vmatpush1.msra.mxu0 0.0
        %7068 = vmatprep.subr.mxu0 0.0
        %7069 = vmatpush1.msra.mxu0 0.0
        %7070 = vmatprep.subr.mxu0 0.0
        %7071 = vmatpush1.msra.mxu0 0.0
        %7072 = vmatprep.subr.mxu0 0.0
        %7073 = vmatpush1.msra.mxu0 0.0
        %7074 = vmatprep.subr.mxu0 0.0
        %7075 = vmatpush1.msra.mxu0 0.0
        %7076 = vmatprep.subr.mxu0 0.0
        %7077 = vmatpush1.msra.mxu0 0.0
        %7078 = vmatprep.subr.mxu0 0.0
        %7079 = vmatpush1.msra.mxu0 0.0
        %7080 = vmatprep.subr.mxu0 0.0
        %7081 = vmatpush1.msra.mxu0 0.0
        %7082 = vmatprep.subr.mxu0 0.0
        %7083 = vmatpush1.msra.mxu0 0.0
        %7084 = vmatprep.subr.mxu0 0.0
        %7085 = vmatpush1.msra.mxu0 0.0
        %7086 = vmatprep.subr.mxu0 0.0
        %7087 = vmatpush1.msra.mxu0 0.0
        %7088 = vmatprep.subr.mxu0 0.0
        %7089 = vmatpush1.msra.mxu0 0.0
        %7090 = vmatprep.subr.mxu0 0.0
        %7091 = vmatpush1.msra.mxu0 0.0
        %7092 = vmatprep.subr.mxu0 0.0
        %7093 = vmatpush1.msra.mxu0 0.0
        %7094 = vmatprep.subr.mxu0 0.0
        %7095 = vmatpush1.msra.mxu0 0.0
        %7096 = vmatprep.subr.mxu0 0.0
        %7097 = vmatpush1.msra.mxu0 0.0
        %7098 = vmatprep.subr.mxu0 0.0
        %7099 = vmatpush1.msra.mxu0 0.0
        %7100 = vmatprep.mubr.f32.mxu0 0.0
        %7101 = vmatmul.mubr.f32.gmra.mrb[0].mxu0 %v3182
        %v7102 = vpop.f32.mrb[0].mxu0
        %v7103 = vadd.f32 %v7034, %v7102
        %v7104 = vpop.f32.mrb[0].mxu0
        %7105 = vmatprep.mubr.f32.mxu0 0.0
        %7106 = vmatmul.mubr.f32.gmra.mrb[0].mxu0 %v3185
        %v7107 = vpop.f32.mrb[0].mxu0
        %v7108 = vadd.f32 %v7034, %v7107
        %v7109 = vpop.f32.mrb[0].mxu0
        %7110 = vdwg.mxu0
        %7112 = vrot.lane.b32.xlu0 %v7027, 120
        %v7113 = vpop.permute.xlu0 %7112
        %7115 = vrot.lane.b32.xlu0 %v7027, 112
        %v7116 = vpop.permute.xlu0 %7115
        %7118 = vrot.lane.b32.xlu0 %v7027, 104
        %v7119 = vpop.permute.xlu0 %7118
        %v7121 = vcombine.low %v7027, %v7116
        %v7122 = vcombine.high %v7027, %v7116
        %v7124 = vunpack.c.l.s4 1983009808
        %v7125 = vunpack.c.0.s8 %v7124
        %v7126 = vlaneseq
        %v7127 = vshrl.u32 %v7126, 7
        %v7128 = vsub.s32 %v7125, %v7127
        %v7129 = vrot.slane %v7121, %v7128
        %v7131 = vunpack.c.l.s4 1983009808
        %v7132 = vunpack.c.0.s8 %v7131
        %v7133 = vlaneseq
        %v7134 = vshrl.u32 %v7133, 7
        %v7135 = vsub.s32 %v7132, %v7134
        %v7136 = vrot.slane %v7122, %v7135
        %v7137 = vcombine.low %v7113, %v7119
        %v7138 = vcombine.high %v7113, %v7119
        %v7140 = vunpack.c.l.s4 1983009808
        %v7141 = vunpack.c.0.s8 %v7140
        %v7142 = vlaneseq
        %v7143 = vshrl.u32 %v7142, 7
        %v7144 = vsub.s32 %v7141, %v7143
        %v7145 = vrot.slane %v7137, %v7144
        %v7147 = vunpack.c.l.s4 1983009808
        %v7148 = vunpack.c.0.s8 %v7147
        %v7149 = vlaneseq
        %v7150 = vshrl.u32 %v7149, 7
        %v7151 = vsub.s32 %v7148, %v7150
        %v7152 = vrot.slane %v7138, %v7151
        %v7153 = vcombine.low %v7129, %v7145
        %v7154 = vcombine.high %v7129, %v7145
        %v7156 = vunpack.c.l.s4 1934713408
        %v7157 = vunpack.c.0.s8 %v7156
        %v7158 = vlaneseq
        %v7159 = vshrl.u32 %v7158, 7
        %v7160 = vsub.s32 %v7157, %v7159
        %v7161 = vrot.slane %v7153, %v7160
        %v7163 = vunpack.c.l.s4 1934713408
        %v7164 = vunpack.c.0.s8 %v7163
        %v7165 = vlaneseq
        %v7166 = vshrl.u32 %v7165, 7
        %v7167 = vsub.s32 %v7164, %v7166
        %v7168 = vrot.slane %v7154, %v7167
        %v7169 = vcombine.low %v7136, %v7152
        %v7170 = vcombine.high %v7136, %v7152
        %v7172 = vunpack.c.l.s4 1934713408
        %v7173 = vunpack.c.0.s8 %v7172
        %v7174 = vlaneseq
        %v7175 = vshrl.u32 %v7174, 7
        %v7176 = vsub.s32 %v7173, %v7175
        %v7177 = vrot.slane %v7169, %v7176
        %v7179 = vunpack.c.l.s4 1934713408
        %v7180 = vunpack.c.0.s8 %v7179
        %v7181 = vlaneseq
        %v7182 = vshrl.u32 %v7181, 7
        %v7183 = vsub.s32 %v7180, %v7182
        %v7184 = vrot.slane %v7170, %v7183
        %v7185 = vcombine.high %v7161, 0.0
        %v7186 = vcombine.high %v7168, 0.0
        %v7187 = vcombine.high %v7177, 0.0
        %v7188 = vcombine.high %v7184, 0.0
        %v7189 = vcombine.low %v7161, %v7168
        %v7191 = vunpack.c.l.s4 1983009808
        %v7192 = vunpack.c.0.s8 %v7191
        %v7193 = vlaneseq
        %v7194 = vshrl.u32 %v7193, 7
        %v7195 = vsub.s32 %v7192, %v7194
        %v7196 = vrot.slane %v7189, %v7195
        %v7197 = vcombine.low %v7185, %v7186
        %v7199 = vunpack.c.l.s4 1983009808
        %v7200 = vunpack.c.0.s8 %v7199
        %v7201 = vlaneseq
        %v7202 = vshrl.u32 %v7201, 7
        %v7203 = vsub.s32 %v7200, %v7202
        %v7204 = vrot.slane %v7197, %v7203
        %v7205 = vcombine.low %v7177, %v7184
        %v7207 = vunpack.c.l.s4 1983009808
        %v7208 = vunpack.c.0.s8 %v7207
        %v7209 = vlaneseq
        %v7210 = vshrl.u32 %v7209, 7
        %v7211 = vsub.s32 %v7208, %v7210
        %v7212 = vrot.slane %v7205, %v7211
        %v7213 = vcombine.low %v7187, %v7188
        %v7215 = vunpack.c.l.s4 1983009808
        %v7216 = vunpack.c.0.s8 %v7215
        %v7217 = vlaneseq
        %v7218 = vshrl.u32 %v7217, 7
        %v7219 = vsub.s32 %v7216, %v7218
        %v7220 = vrot.slane %v7213, %v7219
        %v7221 = vcombine.low %v7196, %v7204
        %v7222 = vcombine.high %v7196, %v7204
        %v7224 = vunpack.c.l.s4 1934713408
        %v7225 = vunpack.c.0.s8 %v7224
        %v7226 = vlaneseq
        %v7227 = vshrl.u32 %v7226, 7
        %v7228 = vsub.s32 %v7225, %v7227
        %v7229 = vrot.slane %v7221, %v7228
        %v7231 = vunpack.c.l.s4 1934713408
        %v7232 = vunpack.c.0.s8 %v7231
        %v7233 = vlaneseq
        %v7234 = vshrl.u32 %v7233, 7
        %v7235 = vsub.s32 %v7232, %v7234
        %v7236 = vrot.slane %v7222, %v7235
        %v7237 = vcombine.low %v7212, %v7220
        %v7238 = vcombine.high %v7212, %v7220
        %v7240 = vunpack.c.l.s4 1934713408
        %v7241 = vunpack.c.0.s8 %v7240
        %v7242 = vlaneseq
        %v7243 = vshrl.u32 %v7242, 7
        %v7244 = vsub.s32 %v7241, %v7243
        %v7245 = vrot.slane %v7237, %v7244
        %v7247 = vunpack.c.l.s4 1934713408
        %v7248 = vunpack.c.0.s8 %v7247
        %v7249 = vlaneseq
        %v7250 = vshrl.u32 %v7249, 7
        %v7251 = vsub.s32 %v7248, %v7250
        %v7252 = vrot.slane %v7238, %v7251
        %v7253 = vcombine.low %v7229, %v7245
        %v7254 = vcombine.high %v7229, %v7245
        %v7255 = vcombine.low %v7236, %v7252
        %v7256 = vcombine.high %v7236, %v7252
        %7259 = vrot.lane.b32.xlu0 %v7103, 120
        %v7260 = vpop.permute.xlu0 %7259
        %7261 = vrot.lane.b32.xlu0 %v7108, 120
        %v7262 = vpop.permute.xlu0 %7261
        %7265 = vrot.lane.b32.xlu0 %v7103, 112
        %v7266 = vpop.permute.xlu0 %7265
        %7267 = vrot.lane.b32.xlu0 %v7108, 112
        %v7268 = vpop.permute.xlu0 %7267
        %7271 = vrot.lane.b32.xlu0 %v7103, 104
        %v7272 = vpop.permute.xlu0 %7271
        %7273 = vrot.lane.b32.xlu0 %v7108, 104
        %v7274 = vpop.permute.xlu0 %7273
        %v7277 = vcombine.low %v7103, %v7266
        %v7278 = vcombine.high %v7103, %v7266
        %v7280 = vunpack.c.l.s4 1983009808
        %v7281 = vunpack.c.0.s8 %v7280
        %v7282 = vlaneseq
        %v7283 = vshrl.u32 %v7282, 7
        %v7284 = vsub.s32 %v7281, %v7283
        %v7285 = vrot.slane %v7277, %v7284
        %v7287 = vunpack.c.l.s4 1983009808
        %v7288 = vunpack.c.0.s8 %v7287
        %v7289 = vlaneseq
        %v7290 = vshrl.u32 %v7289, 7
        %v7291 = vsub.s32 %v7288, %v7290
        %v7292 = vrot.slane %v7278, %v7291
        %v7293 = vcombine.low %v7260, %v7272
        %v7294 = vcombine.high %v7260, %v7272
        %v7296 = vunpack.c.l.s4 1983009808
        %v7297 = vunpack.c.0.s8 %v7296
        %v7298 = vlaneseq
        %v7299 = vshrl.u32 %v7298, 7
        %v7300 = vsub.s32 %v7297, %v7299
        %v7301 = vrot.slane %v7293, %v7300
        %v7303 = vunpack.c.l.s4 1983009808
        %v7304 = vunpack.c.0.s8 %v7303
        %v7305 = vlaneseq
        %v7306 = vshrl.u32 %v7305, 7
        %v7307 = vsub.s32 %v7304, %v7306
        %v7308 = vrot.slane %v7294, %v7307
        %v7309 = vcombine.low %v7285, %v7301
        %v7310 = vcombine.high %v7285, %v7301
        %v7312 = vunpack.c.l.s4 1934713408
        %v7313 = vunpack.c.0.s8 %v7312
        %v7314 = vlaneseq
        %v7315 = vshrl.u32 %v7314, 7
        %v7316 = vsub.s32 %v7313, %v7315
        %v7317 = vrot.slane %v7309, %v7316
        %v7319 = vunpack.c.l.s4 1934713408
        %v7320 = vunpack.c.0.s8 %v7319
        %v7321 = vlaneseq
        %v7322 = vshrl.u32 %v7321, 7
        %v7323 = vsub.s32 %v7320, %v7322
        %v7324 = vrot.slane %v7310, %v7323
        %v7325 = vcombine.low %v7292, %v7308
        %v7326 = vcombine.high %v7292, %v7308
        %v7328 = vunpack.c.l.s4 1934713408
        %v7329 = vunpack.c.0.s8 %v7328
        %v7330 = vlaneseq
        %v7331 = vshrl.u32 %v7330, 7
        %v7332 = vsub.s32 %v7329, %v7331
        %v7333 = vrot.slane %v7325, %v7332
        %v7335 = vunpack.c.l.s4 1934713408
        %v7336 = vunpack.c.0.s8 %v7335
        %v7337 = vlaneseq
        %v7338 = vshrl.u32 %v7337, 7
        %v7339 = vsub.s32 %v7336, %v7338
        %v7340 = vrot.slane %v7326, %v7339
        %v7341 = vcombine.high %v7317, 0.0
        %v7342 = vcombine.high %v7324, 0.0
        %v7343 = vcombine.high %v7333, 0.0
        %v7344 = vcombine.high %v7340, 0.0
        %v7345 = vcombine.low %v7108, %v7268
        %v7347 = vunpack.c.l.s4 1983009808
        %v7348 = vunpack.c.0.s8 %v7347
        %v7349 = vlaneseq
        %v7350 = vshrl.u32 %v7349, 7
        %v7351 = vsub.s32 %v7348, %v7350
        %v7352 = vrot.slane %v7345, %v7351
        %v7353 = vcombine.low %v7262, %v7274
        %v7355 = vunpack.c.l.s4 1983009808
        %v7356 = vunpack.c.0.s8 %v7355
        %v7357 = vlaneseq
        %v7358 = vshrl.u32 %v7357, 7
        %v7359 = vsub.s32 %v7356, %v7358
        %v7360 = vrot.slane %v7353, %v7359
        %v7361 = vcombine.low %v7352, %v7360
        %v7362 = vcombine.high %v7352, %v7360
        %v7364 = vunpack.c.l.s4 1934713408
        %v7365 = vunpack.c.0.s8 %v7364
        %v7366 = vlaneseq
        %v7367 = vshrl.u32 %v7366, 7
        %v7368 = vsub.s32 %v7365, %v7367
        %v7369 = vrot.slane %v7361, %v7368
        %v7371 = vunpack.c.l.s4 1934713408
        %v7372 = vunpack.c.0.s8 %v7371
        %v7373 = vlaneseq
        %v7374 = vshrl.u32 %v7373, 7
        %v7375 = vsub.s32 %v7372, %v7374
        %v7376 = vrot.slane %v7362, %v7375
        %v7377 = vcombine.high %v7369, 0.0
        %v7378 = vcombine.high %v7376, 0.0
        %v7379 = vcombine.low %v7317, %v7324
        %v7381 = vunpack.c.l.s4 1983009808
        %v7382 = vunpack.c.0.s8 %v7381
        %v7383 = vlaneseq
        %v7384 = vshrl.u32 %v7383, 7
        %v7385 = vsub.s32 %v7382, %v7384
        %v7386 = vrot.slane %v7379, %v7385
        %v7387 = vcombine.low %v7341, %v7342
        %v7389 = vunpack.c.l.s4 1983009808
        %v7390 = vunpack.c.0.s8 %v7389
        %v7391 = vlaneseq
        %v7392 = vshrl.u32 %v7391, 7
        %v7393 = vsub.s32 %v7390, %v7392
        %v7394 = vrot.slane %v7387, %v7393
        %v7395 = vcombine.low %v7333, %v7340
        %v7397 = vunpack.c.l.s4 1983009808
        %v7398 = vunpack.c.0.s8 %v7397
        %v7399 = vlaneseq
        %v7400 = vshrl.u32 %v7399, 7
        %v7401 = vsub.s32 %v7398, %v7400
        %v7402 = vrot.slane %v7395, %v7401
        %v7403 = vcombine.low %v7343, %v7344
        %v7405 = vunpack.c.l.s4 1983009808
        %v7406 = vunpack.c.0.s8 %v7405
        %v7407 = vlaneseq
        %v7408 = vshrl.u32 %v7407, 7
        %v7409 = vsub.s32 %v7406, %v7408
        %v7410 = vrot.slane %v7403, %v7409
        %v7411 = vcombine.low %v7386, %v7394
        %v7412 = vcombine.high %v7386, %v7394
        %v7414 = vunpack.c.l.s4 1934713408
        %v7415 = vunpack.c.0.s8 %v7414
        %v7416 = vlaneseq
        %v7417 = vshrl.u32 %v7416, 7
        %v7418 = vsub.s32 %v7415, %v7417
        %v7419 = vrot.slane %v7411, %v7418
        %v7421 = vunpack.c.l.s4 1934713408
        %v7422 = vunpack.c.0.s8 %v7421
        %v7423 = vlaneseq
        %v7424 = vshrl.u32 %v7423, 7
        %v7425 = vsub.s32 %v7422, %v7424
        %v7426 = vrot.slane %v7412, %v7425
        %v7427 = vcombine.low %v7402, %v7410
        %v7428 = vcombine.high %v7402, %v7410
        %v7430 = vunpack.c.l.s4 1934713408
        %v7431 = vunpack.c.0.s8 %v7430
        %v7432 = vlaneseq
        %v7433 = vshrl.u32 %v7432, 7
        %v7434 = vsub.s32 %v7431, %v7433
        %v7435 = vrot.slane %v7427, %v7434
        %v7437 = vunpack.c.l.s4 1934713408
        %v7438 = vunpack.c.0.s8 %v7437
        %v7439 = vlaneseq
        %v7440 = vshrl.u32 %v7439, 7
        %v7441 = vsub.s32 %v7438, %v7440
        %v7442 = vrot.slane %v7428, %v7441
        %v7443 = vcombine.low %v7419, %v7435
        %v7444 = vcombine.high %v7419, %v7435
        %v7445 = vcombine.low %v7426, %v7442
        %v7446 = vcombine.high %v7426, %v7442
        %v7447 = vcombine.low %v7369, %v7376
        %v7449 = vunpack.c.l.s4 1983009808
        %v7450 = vunpack.c.0.s8 %v7449
        %v7451 = vlaneseq
        %v7452 = vshrl.u32 %v7451, 7
        %v7453 = vsub.s32 %v7450, %v7452
        %v7454 = vrot.slane %v7447, %v7453
        %v7455 = vcombine.low %v7377, %v7378
        %v7457 = vunpack.c.l.s4 1983009808
        %v7458 = vunpack.c.0.s8 %v7457
        %v7459 = vlaneseq
        %v7460 = vshrl.u32 %v7459, 7
        %v7461 = vsub.s32 %v7458, %v7460
        %v7462 = vrot.slane %v7455, %v7461
        %v7463 = vcombine.low %v7454, %v7462
        %v7464 = vcombine.high %v7454, %v7462
        %v7466 = vunpack.c.l.s4 1934713408
        %v7467 = vunpack.c.0.s8 %v7466
        %v7468 = vlaneseq
        %v7469 = vshrl.u32 %v7468, 7
        %v7470 = vsub.s32 %v7467, %v7469
        %v7471 = vrot.slane %v7463, %v7470
        %v7473 = vunpack.c.l.s4 1934713408
        %v7474 = vunpack.c.0.s8 %v7473
        %v7475 = vlaneseq
        %v7476 = vshrl.u32 %v7475, 7
        %v7477 = vsub.s32 %v7474, %v7476
        %v7478 = vrot.slane %v7464, %v7477
        %v7479 = vcombine.high %v7471, 0.0
        %v7480 = vcombine.high %v7478, 0.0
        %7481 = vrot.lane.b32.xlu0 %v7103, 96
        %v7482 = vpop.permute.xlu0 %7481
        %7483 = vrot.lane.b32.xlu0 %v7108, 96
        %v7484 = vpop.permute.xlu0 %7483
        %7485 = vrot.lane.b32.xlu0 %v7260, 96
        %v7486 = vpop.permute.xlu0 %7485
        %7487 = vrot.lane.b32.xlu0 %v7262, 96
        %v7488 = vpop.permute.xlu0 %7487
        %7489 = vrot.lane.b32.xlu0 %v7266, 96
        %v7490 = vpop.permute.xlu0 %7489
        %7491 = vrot.lane.b32.xlu0 %v7268, 96
        %v7492 = vpop.permute.xlu0 %7491
        %7493 = vrot.lane.b32.xlu0 %v7272, 96
        %v7494 = vpop.permute.xlu0 %7493
        %7495 = vrot.lane.b32.xlu0 %v7274, 96
        %v7496 = vpop.permute.xlu0 %7495
        %v7505 = vcombine.low %v7482, %v7490
        %v7506 = vcombine.high %v7482, %v7490
        %v7508 = vunpack.c.l.s4 1983009808
        %v7509 = vunpack.c.0.s8 %v7508
        %v7510 = vlaneseq
        %v7511 = vshrl.u32 %v7510, 7
        %v7512 = vsub.s32 %v7509, %v7511
        %v7513 = vrot.slane %v7505, %v7512
        %v7515 = vunpack.c.l.s4 1983009808
        %v7516 = vunpack.c.0.s8 %v7515
        %v7517 = vlaneseq
        %v7518 = vshrl.u32 %v7517, 7
        %v7519 = vsub.s32 %v7516, %v7518
        %v7520 = vrot.slane %v7506, %v7519
        %v7521 = vcombine.low %v7486, %v7494
        %v7522 = vcombine.high %v7486, %v7494
        %v7524 = vunpack.c.l.s4 1983009808
        %v7525 = vunpack.c.0.s8 %v7524
        %v7526 = vlaneseq
        %v7527 = vshrl.u32 %v7526, 7
        %v7528 = vsub.s32 %v7525, %v7527
        %v7529 = vrot.slane %v7521, %v7528
        %v7531 = vunpack.c.l.s4 1983009808
        %v7532 = vunpack.c.0.s8 %v7531
        %v7533 = vlaneseq
        %v7534 = vshrl.u32 %v7533, 7
        %v7535 = vsub.s32 %v7532, %v7534
        %v7536 = vrot.slane %v7522, %v7535
        %v7537 = vcombine.low %v7513, %v7529
        %v7538 = vcombine.high %v7513, %v7529
        %v7540 = vunpack.c.l.s4 1934713408
        %v7541 = vunpack.c.0.s8 %v7540
        %v7542 = vlaneseq
        %v7543 = vshrl.u32 %v7542, 7
        %v7544 = vsub.s32 %v7541, %v7543
        %v7545 = vrot.slane %v7537, %v7544
        %v7547 = vunpack.c.l.s4 1934713408
        %v7548 = vunpack.c.0.s8 %v7547
        %v7549 = vlaneseq
        %v7550 = vshrl.u32 %v7549, 7
        %v7551 = vsub.s32 %v7548, %v7550
        %v7552 = vrot.slane %v7538, %v7551
        %v7553 = vcombine.low %v7520, %v7536
        %v7554 = vcombine.high %v7520, %v7536
        %v7556 = vunpack.c.l.s4 1934713408
        %v7557 = vunpack.c.0.s8 %v7556
        %v7558 = vlaneseq
        %v7559 = vshrl.u32 %v7558, 7
        %v7560 = vsub.s32 %v7557, %v7559
        %v7561 = vrot.slane %v7553, %v7560
        %v7563 = vunpack.c.l.s4 1934713408
        %v7564 = vunpack.c.0.s8 %v7563
        %v7565 = vlaneseq
        %v7566 = vshrl.u32 %v7565, 7
        %v7567 = vsub.s32 %v7564, %v7566
        %v7568 = vrot.slane %v7554, %v7567
        %v7569 = vcombine.high %v7545, 0.0
        %v7570 = vcombine.high %v7552, 0.0
        %v7571 = vcombine.high %v7561, 0.0
        %v7572 = vcombine.high %v7568, 0.0
        %v7573 = vcombine.low %v7484, %v7492
        %v7575 = vunpack.c.l.s4 1983009808
        %v7576 = vunpack.c.0.s8 %v7575
        %v7577 = vlaneseq
        %v7578 = vshrl.u32 %v7577, 7
        %v7579 = vsub.s32 %v7576, %v7578
        %v7580 = vrot.slane %v7573, %v7579
        %v7581 = vcombine.low %v7488, %v7496
        %v7583 = vunpack.c.l.s4 1983009808
        %v7584 = vunpack.c.0.s8 %v7583
        %v7585 = vlaneseq
        %v7586 = vshrl.u32 %v7585, 7
        %v7587 = vsub.s32 %v7584, %v7586
        %v7588 = vrot.slane %v7581, %v7587
        %v7589 = vcombine.low %v7580, %v7588
        %v7590 = vcombine.high %v7580, %v7588
        %v7592 = vunpack.c.l.s4 1934713408
        %v7593 = vunpack.c.0.s8 %v7592
        %v7594 = vlaneseq
        %v7595 = vshrl.u32 %v7594, 7
        %v7596 = vsub.s32 %v7593, %v7595
        %v7597 = vrot.slane %v7589, %v7596
        %v7599 = vunpack.c.l.s4 1934713408
        %v7600 = vunpack.c.0.s8 %v7599
        %v7601 = vlaneseq
        %v7602 = vshrl.u32 %v7601, 7
        %v7603 = vsub.s32 %v7600, %v7602
        %v7604 = vrot.slane %v7590, %v7603
        %v7605 = vcombine.high %v7597, 0.0
        %v7606 = vcombine.high %v7604, 0.0
        %v7607 = vcombine.low %v7545, %v7552
        %v7609 = vunpack.c.l.s4 1983009808
        %v7610 = vunpack.c.0.s8 %v7609
        %v7611 = vlaneseq
        %v7612 = vshrl.u32 %v7611, 7
        %v7613 = vsub.s32 %v7610, %v7612
        %v7614 = vrot.slane %v7607, %v7613
        %v7615 = vcombine.low %v7569, %v7570
        %v7617 = vunpack.c.l.s4 1983009808
        %v7618 = vunpack.c.0.s8 %v7617
        %v7619 = vlaneseq
        %v7620 = vshrl.u32 %v7619, 7
        %v7621 = vsub.s32 %v7618, %v7620
        %v7622 = vrot.slane %v7615, %v7621
        %v7623 = vcombine.low %v7561, %v7568
        %v7625 = vunpack.c.l.s4 1983009808
        %v7626 = vunpack.c.0.s8 %v7625
        %v7627 = vlaneseq
        %v7628 = vshrl.u32 %v7627, 7
        %v7629 = vsub.s32 %v7626, %v7628
        %v7630 = vrot.slane %v7623, %v7629
        %v7631 = vcombine.low %v7571, %v7572
        %v7633 = vunpack.c.l.s4 1983009808
        %v7634 = vunpack.c.0.s8 %v7633
        %v7635 = vlaneseq
        %v7636 = vshrl.u32 %v7635, 7
        %v7637 = vsub.s32 %v7634, %v7636
        %v7638 = vrot.slane %v7631, %v7637
        %v7639 = vcombine.low %v7614, %v7622
        %v7640 = vcombine.high %v7614, %v7622
        %v7642 = vunpack.c.l.s4 1934713408
        %v7643 = vunpack.c.0.s8 %v7642
        %v7644 = vlaneseq
        %v7645 = vshrl.u32 %v7644, 7
        %v7646 = vsub.s32 %v7643, %v7645
        %v7647 = vrot.slane %v7639, %v7646
        %v7649 = vunpack.c.l.s4 1934713408
        %v7650 = vunpack.c.0.s8 %v7649
        %v7651 = vlaneseq
        %v7652 = vshrl.u32 %v7651, 7
        %v7653 = vsub.s32 %v7650, %v7652
        %v7654 = vrot.slane %v7640, %v7653
        %v7655 = vcombine.low %v7630, %v7638
        %v7656 = vcombine.high %v7630, %v7638
        %v7658 = vunpack.c.l.s4 1934713408
        %v7659 = vunpack.c.0.s8 %v7658
        %v7660 = vlaneseq
        %v7661 = vshrl.u32 %v7660, 7
        %v7662 = vsub.s32 %v7659, %v7661
        %v7663 = vrot.slane %v7655, %v7662
        %v7665 = vunpack.c.l.s4 1934713408
        %v7666 = vunpack.c.0.s8 %v7665
        %v7667 = vlaneseq
        %v7668 = vshrl.u32 %v7667, 7
        %v7669 = vsub.s32 %v7666, %v7668
        %v7670 = vrot.slane %v7656, %v7669
        %v7671 = vcombine.low %v7647, %v7663
        %v7672 = vcombine.high %v7647, %v7663
        %v7673 = vcombine.low %v7654, %v7670
        %v7674 = vcombine.high %v7654, %v7670
        %v7675 = vcombine.low %v7597, %v7604
        %v7677 = vunpack.c.l.s4 1983009808
        %v7678 = vunpack.c.0.s8 %v7677
        %v7679 = vlaneseq
        %v7680 = vshrl.u32 %v7679, 7
        %v7681 = vsub.s32 %v7678, %v7680
        %v7682 = vrot.slane %v7675, %v7681
        %v7683 = vcombine.low %v7605, %v7606
        %v7685 = vunpack.c.l.s4 1983009808
        %v7686 = vunpack.c.0.s8 %v7685
        %v7687 = vlaneseq
        %v7688 = vshrl.u32 %v7687, 7
        %v7689 = vsub.s32 %v7686, %v7688
        %v7690 = vrot.slane %v7683, %v7689
        %v7691 = vcombine.low %v7682, %v7690
        %v7692 = vcombine.high %v7682, %v7690
        %v7694 = vunpack.c.l.s4 1934713408
        %v7695 = vunpack.c.0.s8 %v7694
        %v7696 = vlaneseq
        %v7697 = vshrl.u32 %v7696, 7
        %v7698 = vsub.s32 %v7695, %v7697
        %v7699 = vrot.slane %v7691, %v7698
        %v7701 = vunpack.c.l.s4 1934713408
        %v7702 = vunpack.c.0.s8 %v7701
        %v7703 = vlaneseq
        %v7704 = vshrl.u32 %v7703, 7
        %v7705 = vsub.s32 %v7702, %v7704
        %v7706 = vrot.slane %v7692, %v7705
        %v7707 = vcombine.high %v7699, 0.0
        %v7708 = vcombine.high %v7706, 0.0
        %v7710 = vsel %vm1926, %v7253, 0
        %v7713 = vsel %vm1926, %v7443, 0
        %v7716 = vsel %vm1926, %v7471, 0
        %7718 = vmatprep.subr.mxu0 0.0
        %7719 = vmatpush1.xpose.msra.mxu0 %v7713
        %7720 = vmatprep.subr.mxu0 0.0
        %7721 = vmatpush1.xpose.msra.mxu0 %v7716
        %7722 = vmatprep.subr.mxu0 0.0
        %7723 = vmatpush1.xpose.msra.mxu0 0.0
        %7724 = vmatprep.subr.mxu0 0.0
        %7725 = vmatpush1.xpose.msra.mxu0 0.0
        %7726 = vmatprep.subr.mxu0 0.0
        %7727 = vmatpush1.xpose.msra.mxu0 0.0
        %7728 = vmatprep.subr.mxu0 0.0
        %7729 = vmatpush1.xpose.msra.mxu0 0.0
        %7730 = vmatprep.subr.mxu0 0.0
        %7731 = vmatpush1.xpose.msra.mxu0 0.0
        %7732 = vmatprep.subr.mxu0 0.0
        %7733 = vmatpush1.xpose.msra.mxu0 0.0
        %7734 = vmatprep.subr.mxu0 0.0
        %7735 = vmatpush1.xpose.msra.mxu0 0.0
        %7736 = vmatprep.subr.mxu0 0.0
        %7737 = vmatpush1.xpose.msra.mxu0 0.0
        %7738 = vmatprep.subr.mxu0 0.0
        %7739 = vmatpush1.xpose.msra.mxu0 0.0
        %7740 = vmatprep.subr.mxu0 0.0
        %7741 = vmatpush1.xpose.msra.mxu0 0.0
        %7742 = vmatprep.subr.mxu0 0.0
        %7743 = vmatpush1.xpose.msra.mxu0 0.0
        %7744 = vmatprep.subr.mxu0 0.0
        %7745 = vmatpush1.xpose.msra.mxu0 0.0
        %7746 = vmatprep.subr.mxu0 0.0
        %7747 = vmatpush1.xpose.msra.mxu0 0.0
        %7748 = vmatprep.subr.mxu0 0.0
        %7749 = vmatpush1.xpose.msra.mxu0 0.0
        %7750 = vmatprep.subr.mxu0 0.0
        %7751 = vmatpush1.xpose.msra.mxu0 0.0
        %7752 = vmatprep.subr.mxu0 0.0
        %7753 = vmatpush1.xpose.msra.mxu0 0.0
        %7754 = vmatprep.subr.mxu0 0.0
        %7755 = vmatpush1.xpose.msra.mxu0 0.0
        %7756 = vmatprep.subr.mxu0 0.0
        %7757 = vmatpush1.xpose.msra.mxu0 0.0
        %7758 = vmatprep.subr.mxu0 0.0
        %7759 = vmatpush1.xpose.msra.mxu0 0.0
        %7760 = vmatprep.subr.mxu0 0.0
        %7761 = vmatpush1.xpose.msra.mxu0 0.0
        %7762 = vmatprep.subr.mxu0 0.0
        %7763 = vmatpush1.xpose.msra.mxu0 0.0
        %7764 = vmatprep.subr.mxu0 0.0
        %7765 = vmatpush1.xpose.msra.mxu0 0.0
        %7766 = vmatprep.subr.mxu0 0.0
        %7767 = vmatpush1.xpose.msra.mxu0 0.0
        %7768 = vmatprep.subr.mxu0 0.0
        %7769 = vmatpush1.xpose.msra.mxu0 0.0
        %7770 = vmatprep.subr.mxu0 0.0
        %7771 = vmatpush1.xpose.msra.mxu0 0.0
        %7772 = vmatprep.subr.mxu0 0.0
        %7773 = vmatpush1.xpose.msra.mxu0 0.0
        %7774 = vmatprep.subr.mxu0 0.0
        %7775 = vmatpush1.xpose.msra.mxu0 0.0
        %7776 = vmatprep.subr.mxu0 0.0
        %7777 = vmatpush1.xpose.msra.mxu0 0.0
        %7778 = vmatprep.subr.mxu0 0.0
        %7779 = vmatpush1.xpose.msra.mxu0 0.0
        %7780 = vmatprep.subr.mxu0 0.0
        %7781 = vmatpush1.xpose.msra.mxu0 0.0
        %7782 = vmatprep.mubr.f32.mxu0 0.0
        %7783 = vmatmul.mubr.f32.gmra.mrb[0].mxu0 %v7710
        %v7784 = vpop.f32.mrb[0].mxu0
        %v7785 = vadd.f32 %v3864, %v7784
        %v7786 = vpop.f32.mrb[0].mxu0
        %7787 = vdwg.mxu0
        %v7789 = vsel %vm1926, %v7254, 0
        %v7792 = vsel %vm1926, %v7444, 0
        %v7795 = vsel %vm1926, %v7479, 0
        %7797 = vmatprep.subr.mxu0 0.0
        %7798 = vmatpush1.xpose.msra.mxu0 %v7792
        %7799 = vmatprep.subr.mxu0 0.0
        %7800 = vmatpush1.xpose.msra.mxu0 %v7795
        %7801 = vmatprep.subr.mxu0 0.0
        %7802 = vmatpush1.xpose.msra.mxu0 0.0
        %7803 = vmatprep.subr.mxu0 0.0
        %7804 = vmatpush1.xpose.msra.mxu0 0.0
        %7805 = vmatprep.subr.mxu0 0.0
        %7806 = vmatpush1.xpose.msra.mxu0 0.0
        %7807 = vmatprep.subr.mxu0 0.0
        %7808 = vmatpush1.xpose.msra.mxu0 0.0
        %7809 = vmatprep.subr.mxu0 0.0
        %7810 = vmatpush1.xpose.msra.mxu0 0.0
        %7811 = vmatprep.subr.mxu0 0.0
        %7812 = vmatpush1.xpose.msra.mxu0 0.0
        %7813 = vmatprep.subr.mxu0 0.0
        %7814 = vmatpush1.xpose.msra.mxu0 0.0
        %7815 = vmatprep.subr.mxu0 0.0
        %7816 = vmatpush1.xpose.msra.mxu0 0.0
        %7817 = vmatprep.subr.mxu0 0.0
        %7818 = vmatpush1.xpose.msra.mxu0 0.0
        %7819 = vmatprep.subr.mxu0 0.0
        %7820 = vmatpush1.xpose.msra.mxu0 0.0
        %7821 = vmatprep.subr.mxu0 0.0
        %7822 = vmatpush1.xpose.msra.mxu0 0.0
        %7823 = vmatprep.subr.mxu0 0.0
        %7824 = vmatpush1.xpose.msra.mxu0 0.0
        %7825 = vmatprep.subr.mxu0 0.0
        %7826 = vmatpush1.xpose.msra.mxu0 0.0
        %7827 = vmatprep.subr.mxu0 0.0
        %7828 = vmatpush1.xpose.msra.mxu0 0.0
        %7829 = vmatprep.subr.mxu0 0.0
        %7830 = vmatpush1.xpose.msra.mxu0 0.0
        %7831 = vmatprep.subr.mxu0 0.0
        %7832 = vmatpush1.xpose.msra.mxu0 0.0
        %7833 = vmatprep.subr.mxu0 0.0
        %7834 = vmatpush1.xpose.msra.mxu0 0.0
        %7835 = vmatprep.subr.mxu0 0.0
        %7836 = vmatpush1.xpose.msra.mxu0 0.0
        %7837 = vmatprep.subr.mxu0 0.0
        %7838 = vmatpush1.xpose.msra.mxu0 0.0
        %7839 = vmatprep.subr.mxu0 0.0
        %7840 = vmatpush1.xpose.msra.mxu0 0.0
        %7841 = vmatprep.subr.mxu0 0.0
        %7842 = vmatpush1.xpose.msra.mxu0 0.0
        %7843 = vmatprep.subr.mxu0 0.0
        %7844 = vmatpush1.xpose.msra.mxu0 0.0
        %7845 = vmatprep.subr.mxu0 0.0
        %7846 = vmatpush1.xpose.msra.mxu0 0.0
        %7847 = vmatprep.subr.mxu0 0.0
        %7848 = vmatpush1.xpose.msra.mxu0 0.0
        %7849 = vmatprep.subr.mxu0 0.0
        %7850 = vmatpush1.xpose.msra.mxu0 0.0
        %7851 = vmatprep.subr.mxu0 0.0
        %7852 = vmatpush1.xpose.msra.mxu0 0.0
        %7853 = vmatprep.subr.mxu0 0.0
        %7854 = vmatpush1.xpose.msra.mxu0 0.0
        %7855 = vmatprep.subr.mxu0 0.0
        %7856 = vmatpush1.xpose.msra.mxu0 0.0
        %7857 = vmatprep.subr.mxu0 0.0
        %7858 = vmatpush1.xpose.msra.mxu0 0.0
        %7859 = vmatprep.subr.mxu0 0.0
        %7860 = vmatpush1.xpose.msra.mxu0 0.0
        %7861 = vmatprep.mubr.f32.mxu0 0.0
        %7862 = vmatmul.mubr.f32.gmra.mrb[0].mxu0 %v7789
        %v7863 = vpop.f32.mrb[0].mxu0
        %v7864 = vadd.f32 %v3864, %v7863
        %v7865 = vpop.f32.mrb[0].mxu0
        %7866 = vdwg.mxu0
        %v7868 = vsel %vm1926, %v7255, 0
        %v7871 = vsel %vm1926, %v7445, 0
        %v7874 = vsel %vm1926, %v7478, 0
        %7876 = vmatprep.subr.mxu0 0.0
        %7877 = vmatpush1.xpose.msra.mxu0 %v7871
        %7878 = vmatprep.subr.mxu0 0.0
        %7879 = vmatpush1.xpose.msra.mxu0 %v7874
        %7880 = vmatprep.subr.mxu0 0.0
        %7881 = vmatpush1.xpose.msra.mxu0 0.0
        %7882 = vmatprep.subr.mxu0 0.0
        %7883 = vmatpush1.xpose.msra.mxu0 0.0
        %7884 = vmatprep.subr.mxu0 0.0
        %7885 = vmatpush1.xpose.msra.mxu0 0.0
        %7886 = vmatprep.subr.mxu0 0.0
        %7887 = vmatpush1.xpose.msra.mxu0 0.0
        %7888 = vmatprep.subr.mxu0 0.0
        %7889 = vmatpush1.xpose.msra.mxu0 0.0
        %7890 = vmatprep.subr.mxu0 0.0
        %7891 = vmatpush1.xpose.msra.mxu0 0.0
        %7892 = vmatprep.subr.mxu0 0.0
        %7893 = vmatpush1.xpose.msra.mxu0 0.0
        %7894 = vmatprep.subr.mxu0 0.0
        %7895 = vmatpush1.xpose.msra.mxu0 0.0
        %7896 = vmatprep.subr.mxu0 0.0
        %7897 = vmatpush1.xpose.msra.mxu0 0.0
        %7898 = vmatprep.subr.mxu0 0.0
        %7899 = vmatpush1.xpose.msra.mxu0 0.0
        %7900 = vmatprep.subr.mxu0 0.0
        %7901 = vmatpush1.xpose.msra.mxu0 0.0
        %7902 = vmatprep.subr.mxu0 0.0
        %7903 = vmatpush1.xpose.msra.mxu0 0.0
        %7904 = vmatprep.subr.mxu0 0.0
        %7905 = vmatpush1.xpose.msra.mxu0 0.0
        %7906 = vmatprep.subr.mxu0 0.0
        %7907 = vmatpush1.xpose.msra.mxu0 0.0
        %7908 = vmatprep.subr.mxu0 0.0
        %7909 = vmatpush1.xpose.msra.mxu0 0.0
        %7910 = vmatprep.subr.mxu0 0.0
        %7911 = vmatpush1.xpose.msra.mxu0 0.0
        %7912 = vmatprep.subr.mxu0 0.0
        %7913 = vmatpush1.xpose.msra.mxu0 0.0
        %7914 = vmatprep.subr.mxu0 0.0
        %7915 = vmatpush1.xpose.msra.mxu0 0.0
        %7916 = vmatprep.subr.mxu0 0.0
        %7917 = vmatpush1.xpose.msra.mxu0 0.0
        %7918 = vmatprep.subr.mxu0 0.0
        %7919 = vmatpush1.xpose.msra.mxu0 0.0
        %7920 = vmatprep.subr.mxu0 0.0
        %7921 = vmatpush1.xpose.msra.mxu0 0.0
        %7922 = vmatprep.subr.mxu0 0.0
        %7923 = vmatpush1.xpose.msra.mxu0 0.0
        %7924 = vmatprep.subr.mxu0 0.0
        %7925 = vmatpush1.xpose.msra.mxu0 0.0
        %7926 = vmatprep.subr.mxu0 0.0
        %7927 = vmatpush1.xpose.msra.mxu0 0.0
        %7928 = vmatprep.subr.mxu0 0.0
        %7929 = vmatpush1.xpose.msra.mxu0 0.0
        %7930 = vmatprep.subr.mxu0 0.0
        %7931 = vmatpush1.xpose.msra.mxu0 0.0
        %7932 = vmatprep.subr.mxu0 0.0
        %7933 = vmatpush1.xpose.msra.mxu0 0.0
        %7934 = vmatprep.subr.mxu0 0.0
        %7935 = vmatpush1.xpose.msra.mxu0 0.0
        %7936 = vmatprep.subr.mxu0 0.0
        %7937 = vmatpush1.xpose.msra.mxu0 0.0
        %7938 = vmatprep.subr.mxu0 0.0
        %7939 = vmatpush1.xpose.msra.mxu0 0.0
        %7940 = vmatprep.mubr.f32.mxu0 0.0
        %7941 = vmatmul.mubr.f32.gmra.mrb[0].mxu0 %v7868
        %v7942 = vpop.f32.mrb[0].mxu0
        %v7943 = vadd.f32 %v3864, %v7942
        %v7944 = vpop.f32.mrb[0].mxu0
        %7945 = vdwg.mxu0
        %v7947 = vsel %vm1926, %v7256, 0
        %v7950 = vsel %vm1926, %v7446, 0
        %v7953 = vsel %vm1926, %v7480, 0
        %7955 = vmatprep.subr.mxu0 0.0
        %7956 = vmatpush1.xpose.msra.mxu0 %v7950
        %7957 = vmatprep.subr.mxu0 0.0
        %7958 = vmatpush1.xpose.msra.mxu0 %v7953
        %7959 = vmatprep.subr.mxu0 0.0
        %7960 = vmatpush1.xpose.msra.mxu0 0.0
        %7961 = vmatprep.subr.mxu0 0.0
        %7962 = vmatpush1.xpose.msra.mxu0 0.0
        %7963 = vmatprep.subr.mxu0 0.0
        %7964 = vmatpush1.xpose.msra.mxu0 0.0
        %7965 = vmatprep.subr.mxu0 0.0
        %7966 = vmatpush1.xpose.msra.mxu0 0.0
        %7967 = vmatprep.subr.mxu0 0.0
        %7968 = vmatpush1.xpose.msra.mxu0 0.0
        %7969 = vmatprep.subr.mxu0 0.0
        %7970 = vmatpush1.xpose.msra.mxu0 0.0
        %7971 = vmatprep.subr.mxu0 0.0
        %7972 = vmatpush1.xpose.msra.mxu0 0.0
        %7973 = vmatprep.subr.mxu0 0.0
        %7974 = vmatpush1.xpose.msra.mxu0 0.0
        %7975 = vmatprep.subr.mxu0 0.0
        %7976 = vmatpush1.xpose.msra.mxu0 0.0
        %7977 = vmatprep.subr.mxu0 0.0
        %7978 = vmatpush1.xpose.msra.mxu0 0.0
        %7979 = vmatprep.subr.mxu0 0.0
        %7980 = vmatpush1.xpose.msra.mxu0 0.0
        %7981 = vmatprep.subr.mxu0 0.0
        %7982 = vmatpush1.xpose.msra.mxu0 0.0
        %7983 = vmatprep.subr.mxu0 0.0
        %7984 = vmatpush1.xpose.msra.mxu0 0.0
        %7985 = vmatprep.subr.mxu0 0.0
        %7986 = vmatpush1.xpose.msra.mxu0 0.0
        %7987 = vmatprep.subr.mxu0 0.0
        %7988 = vmatpush1.xpose.msra.mxu0 0.0
        %7989 = vmatprep.subr.mxu0 0.0
        %7990 = vmatpush1.xpose.msra.mxu0 0.0
        %7991 = vmatprep.subr.mxu0 0.0
        %7992 = vmatpush1.xpose.msra.mxu0 0.0
        %7993 = vmatprep.subr.mxu0 0.0
        %7994 = vmatpush1.xpose.msra.mxu0 0.0
        %7995 = vmatprep.subr.mxu0 0.0
        %7996 = vmatpush1.xpose.msra.mxu0 0.0
        %7997 = vmatprep.subr.mxu0 0.0
        %7998 = vmatpush1.xpose.msra.mxu0 0.0
        %7999 = vmatprep.subr.mxu0 0.0
        %8000 = vmatpush1.xpose.msra.mxu0 0.0
        %8001 = vmatprep.subr.mxu0 0.0
        %8002 = vmatpush1.xpose.msra.mxu0 0.0
        %8003 = vmatprep.subr.mxu0 0.0
        %8004 = vmatpush1.xpose.msra.mxu0 0.0
        %8005 = vmatprep.subr.mxu0 0.0
        %8006 = vmatpush1.xpose.msra.mxu0 0.0
        %8007 = vmatprep.subr.mxu0 0.0
        %8008 = vmatpush1.xpose.msra.mxu0 0.0
        %8009 = vmatprep.subr.mxu0 0.0
        %8010 = vmatpush1.xpose.msra.mxu0 0.0
        %8011 = vmatprep.subr.mxu0 0.0
        %8012 = vmatpush1.xpose.msra.mxu0 0.0
        %8013 = vmatprep.subr.mxu0 0.0
        %8014 = vmatpush1.xpose.msra.mxu0 0.0
        %8015 = vmatprep.subr.mxu0 0.0
        %8016 = vmatpush1.xpose.msra.mxu0 0.0
        %8017 = vmatprep.subr.mxu0 0.0
        %8018 = vmatpush1.xpose.msra.mxu0 0.0
        %8019 = vmatprep.mubr.f32.mxu0 0.0
        %8020 = vmatmul.mubr.f32.gmra.mrb[0].mxu0 %v7947
        %v8021 = vpop.f32.mrb[0].mxu0
        %v8022 = vadd.f32 %v3864, %v8021
        %v8023 = vpop.f32.mrb[0].mxu0
        %8024 = vdwg.mxu0
        %v8025 = vsel %vm4182, %v7785, -inf
        %8026 = vmax.xlane.f32.xlu0 %v8025
        %v8027 = vpop.xlane.xlu0 %8026
        %v8028 = vsel %vm4182, %v7864, -inf
        %8029 = vmax.xlane.f32.xlu0 %v8028
        %v8030 = vpop.xlane.xlu0 %8029
        %v8031 = vsel %vm4182, %v7943, -inf
        %8032 = vmax.xlane.f32.xlu0 %v8031
        %v8033 = vpop.xlane.xlu0 %8032
        %v8034 = vsel %vm4182, %v8022, -inf
        %8035 = vmax.xlane.f32.xlu0 %v8034
        %v8036 = vpop.xlane.xlu0 %8035
        %v8037 = vsub.f32 %v7785, %v8027
        %v8038 = vsub.f32 %v7864, %v8030
        %v8039 = vsub.f32 %v7943, %v8033
        %v8040 = vsub.f32 %v8022, %v8036
        %v8041 = vmul.f32 %v8037, 1.442695
        %v8042 = vpow.pop %v8041
        %v8043 = vmul.f32 %v8038, 1.442695
        %v8044 = vpow.pop %v8043
        %v8045 = vmul.f32 %v8039, 1.442695
        %v8046 = vpow.pop %v8045
        %v8047 = vmul.f32 %v8040, 1.442695
        %v8048 = vpow.pop %v8047
        %v8049 = vsel %vm4182, %v8042, 0.0
        %8050 = vadd.xlane.f32.xlu0 %v8049
        %v8051 = vpop.xlane.xlu0 %8050
        %v8052 = vsel %vm4182, %v8044, 0.0
        %8053 = vadd.xlane.f32.xlu0 %v8052
        %v8054 = vpop.xlane.xlu0 %8053
        %v8055 = vsel %vm4182, %v8046, 0.0
        %8056 = vadd.xlane.f32.xlu0 %v8055
        %v8057 = vpop.xlane.xlu0 %8056
        %v8058 = vsel %vm4182, %v8048, 0.0
        %8059 = vadd.xlane.f32.xlu0 %v8058
        %v8060 = vpop.xlane.xlu0 %8059
        %v8061 = vrcp.pop %v8051
        %v8062 = vrcp.pop %v8054
        %v8063 = vrcp.pop %v8057
        %v8064 = vrcp.pop %v8060
        %v8065 = vmul.f32 %v8042, %v8061
        %v8066 = vmul.f32 %v8044, %v8062
        %v8067 = vmul.f32 %v8046, %v8063
        %v8068 = vmul.f32 %v8048, %v8064
        %8069 = vxpose.xlu0.b32.start [1/16] %v7671, 128
        %8070 = vxpose.xlu0.b32.cont [2/16] %v7699, 128
        %8071 = vxpose.xlu0.b32.cont [3/16] 0.0, 128
        %8072 = vxpose.xlu0.b32.cont [4/16] 0.0, 128
        %8073 = vxpose.xlu0.b32.cont [5/16] 0.0, 128
        %8074 = vxpose.xlu0.b32.cont [6/16] 0.0, 128
        %8075 = vxpose.xlu0.b32.cont [7/16] 0.0, 128
        %8076 = vxpose.xlu0.b32.cont [8/16] 0.0, 128
        %8077 = vxpose.xlu0.b32.cont [9/16] 0.0, 128
        %8078 = vxpose.xlu0.b32.cont [10/16] 0.0, 128
        %8079 = vxpose.xlu0.b32.cont [11/16] 0.0, 128
        %8080 = vxpose.xlu0.b32.cont [12/16] 0.0, 128
        %8081 = vxpose.xlu0.b32.cont [13/16] 0.0, 128
        %8082 = vxpose.xlu0.b32.cont [14/16] 0.0, 128
        %8083 = vxpose.xlu0.b32.cont [15/16] 0.0, 128
        %8084 = vxpose.xlu0.b32.end [16/16] 0.0, 128
        %v8085 = vpop.trf.xlu0
        %v8086 = vpop.trf.xlu0
        %v8087 = vpop.trf.xlu0
        %v8088 = vpop.trf.xlu0
        %v8089 = vpop.trf.xlu0
        %v8090 = vpop.trf.xlu0
        %v8091 = vpop.trf.xlu0
        %v8092 = vpop.trf.xlu0
        %v8093 = vpop.trf.xlu0
        %v8094 = vpop.trf.xlu0
        %v8095 = vpop.trf.xlu0
        %v8096 = vpop.trf.xlu0
        %v8097 = vpop.trf.xlu0
        %v8098 = vpop.trf.xlu0
        %v8099 = vpop.trf.xlu0
        %v8100 = vpop.trf.xlu0
        %v8102 = vsel %vm4182, %v8085, 0
        %v8105 = vsel %vm4182, %v8065, 0
        %8107 = vmatprep.subr.mxu0 0.0
        %8108 = vmatpush1.xpose.msra.mxu0 %v8105
        %8109 = vmatprep.subr.mxu0 0.0
        %8110 = vmatpush1.xpose.msra.mxu0 0.0
        %8111 = vmatprep.subr.mxu0 0.0
        %8112 = vmatpush1.xpose.msra.mxu0 0.0
        %8113 = vmatprep.subr.mxu0 0.0
        %8114 = vmatpush1.xpose.msra.mxu0 0.0
        %8115 = vmatprep.subr.mxu0 0.0
        %8116 = vmatpush1.xpose.msra.mxu0 0.0
        %8117 = vmatprep.subr.mxu0 0.0
        %8118 = vmatpush1.xpose.msra.mxu0 0.0
        %8119 = vmatprep.subr.mxu0 0.0
        %8120 = vmatpush1.xpose.msra.mxu0 0.0
        %8121 = vmatprep.subr.mxu0 0.0
        %8122 = vmatpush1.xpose.msra.mxu0 0.0
        %8123 = vmatprep.subr.mxu0 0.0
        %8124 = vmatpush1.xpose.msra.mxu0 0.0
        %8125 = vmatprep.subr.mxu0 0.0
        %8126 = vmatpush1.xpose.msra.mxu0 0.0
        %8127 = vmatprep.subr.mxu0 0.0
        %8128 = vmatpush1.xpose.msra.mxu0 0.0
        %8129 = vmatprep.subr.mxu0 0.0
        %8130 = vmatpush1.xpose.msra.mxu0 0.0
        %8131 = vmatprep.subr.mxu0 0.0
        %8132 = vmatpush1.xpose.msra.mxu0 0.0
        %8133 = vmatprep.subr.mxu0 0.0
        %8134 = vmatpush1.xpose.msra.mxu0 0.0
        %8135 = vmatprep.subr.mxu0 0.0
        %8136 = vmatpush1.xpose.msra.mxu0 0.0
        %8137 = vmatprep.subr.mxu0 0.0
        %8138 = vmatpush1.xpose.msra.mxu0 0.0
        %8139 = vmatprep.subr.mxu0 0.0
        %8140 = vmatpush1.xpose.msra.mxu0 0.0
        %8141 = vmatprep.subr.mxu0 0.0
        %8142 = vmatpush1.xpose.msra.mxu0 0.0
        %8143 = vmatprep.subr.mxu0 0.0
        %8144 = vmatpush1.xpose.msra.mxu0 0.0
        %8145 = vmatprep.subr.mxu0 0.0
        %8146 = vmatpush1.xpose.msra.mxu0 0.0
        %8147 = vmatprep.subr.mxu0 0.0
        %8148 = vmatpush1.xpose.msra.mxu0 0.0
        %8149 = vmatprep.subr.mxu0 0.0
        %8150 = vmatpush1.xpose.msra.mxu0 0.0
        %8151 = vmatprep.subr.mxu0 0.0
        %8152 = vmatpush1.xpose.msra.mxu0 0.0
        %8153 = vmatprep.subr.mxu0 0.0
        %8154 = vmatpush1.xpose.msra.mxu0 0.0
        %8155 = vmatprep.subr.mxu0 0.0
        %8156 = vmatpush1.xpose.msra.mxu0 0.0
        %8157 = vmatprep.subr.mxu0 0.0
        %8158 = vmatpush1.xpose.msra.mxu0 0.0
        %8159 = vmatprep.subr.mxu0 0.0
        %8160 = vmatpush1.xpose.msra.mxu0 0.0
        %8161 = vmatprep.subr.mxu0 0.0
        %8162 = vmatpush1.xpose.msra.mxu0 0.0
        %8163 = vmatprep.subr.mxu0 0.0
        %8164 = vmatpush1.xpose.msra.mxu0 0.0
        %8165 = vmatprep.subr.mxu0 0.0
        %8166 = vmatpush1.xpose.msra.mxu0 0.0
        %8167 = vmatprep.subr.mxu0 0.0
        %8168 = vmatpush1.xpose.msra.mxu0 0.0
        %8169 = vmatprep.subr.mxu0 0.0
        %8170 = vmatpush1.xpose.msra.mxu0 0.0
        %8171 = vmatprep.mubr.f32.mxu0 0.0
        %8172 = vmatmul.mubr.f32.gmra.mrb[0].mxu0 %v8102
        %v8173 = vpop.f32.mrb[0].mxu0
        %v8174 = vadd.f32 0.0, %v8173
        %v8175 = vpop.f32.mrb[0].mxu0
        %8176 = vdwg.mxu0
        %8177 = vxpose.xlu0.b32.start [1/16] %v7672, 128
        %8178 = vxpose.xlu0.b32.cont [2/16] %v7707, 128
        %8179 = vxpose.xlu0.b32.cont [3/16] 0.0, 128
        %8180 = vxpose.xlu0.b32.cont [4/16] 0.0, 128
        %8181 = vxpose.xlu0.b32.cont [5/16] 0.0, 128
        %8182 = vxpose.xlu0.b32.cont [6/16] 0.0, 128
        %8183 = vxpose.xlu0.b32.cont [7/16] 0.0, 128
        %8184 = vxpose.xlu0.b32.cont [8/16] 0.0, 128
        %8185 = vxpose.xlu0.b32.cont [9/16] 0.0, 128
        %8186 = vxpose.xlu0.b32.cont [10/16] 0.0, 128
        %8187 = vxpose.xlu0.b32.cont [11/16] 0.0, 128
        %8188 = vxpose.xlu0.b32.cont [12/16] 0.0, 128
        %8189 = vxpose.xlu0.b32.cont [13/16] 0.0, 128
        %8190 = vxpose.xlu0.b32.cont [14/16] 0.0, 128
        %8191 = vxpose.xlu0.b32.cont [15/16] 0.0, 128
        %8192 = vxpose.xlu0.b32.end [16/16] 0.0, 128
        %v8193 = vpop.trf.xlu0
        %v8194 = vpop.trf.xlu0
        %v8195 = vpop.trf.xlu0
        %v8196 = vpop.trf.xlu0
        %v8197 = vpop.trf.xlu0
        %v8198 = vpop.trf.xlu0
        %v8199 = vpop.trf.xlu0
        %v8200 = vpop.trf.xlu0
        %v8201 = vpop.trf.xlu0
        %v8202 = vpop.trf.xlu0
        %v8203 = vpop.trf.xlu0
        %v8204 = vpop.trf.xlu0
        %v8205 = vpop.trf.xlu0
        %v8206 = vpop.trf.xlu0
        %v8207 = vpop.trf.xlu0
        %v8208 = vpop.trf.xlu0
        %v8210 = vsel %vm4182, %v8193, 0
        %v8213 = vsel %vm4182, %v8066, 0
        %8215 = vmatprep.subr.mxu0 0.0
        %8216 = vmatpush1.xpose.msra.mxu0 %v8213
        %8217 = vmatprep.subr.mxu0 0.0
        %8218 = vmatpush1.xpose.msra.mxu0 0.0
        %8219 = vmatprep.subr.mxu0 0.0
        %8220 = vmatpush1.xpose.msra.mxu0 0.0
        %8221 = vmatprep.subr.mxu0 0.0
        %8222 = vmatpush1.xpose.msra.mxu0 0.0
        %8223 = vmatprep.subr.mxu0 0.0
        %8224 = vmatpush1.xpose.msra.mxu0 0.0
        %8225 = vmatprep.subr.mxu0 0.0
        %8226 = vmatpush1.xpose.msra.mxu0 0.0
        %8227 = vmatprep.subr.mxu0 0.0
        %8228 = vmatpush1.xpose.msra.mxu0 0.0
        %8229 = vmatprep.subr.mxu0 0.0
        %8230 = vmatpush1.xpose.msra.mxu0 0.0
        %8231 = vmatprep.subr.mxu0 0.0
        %8232 = vmatpush1.xpose.msra.mxu0 0.0
        %8233 = vmatprep.subr.mxu0 0.0
        %8234 = vmatpush1.xpose.msra.mxu0 0.0
        %8235 = vmatprep.subr.mxu0 0.0
        %8236 = vmatpush1.xpose.msra.mxu0 0.0
        %8237 = vmatprep.subr.mxu0 0.0
        %8238 = vmatpush1.xpose.msra.mxu0 0.0
        %8239 = vmatprep.subr.mxu0 0.0
        %8240 = vmatpush1.xpose.msra.mxu0 0.0
        %8241 = vmatprep.subr.mxu0 0.0
        %8242 = vmatpush1.xpose.msra.mxu0 0.0
        %8243 = vmatprep.subr.mxu0 0.0
        %8244 = vmatpush1.xpose.msra.mxu0 0.0
        %8245 = vmatprep.subr.mxu0 0.0
        %8246 = vmatpush1.xpose.msra.mxu0 0.0
        %8247 = vmatprep.subr.mxu0 0.0
        %8248 = vmatpush1.xpose.msra.mxu0 0.0
        %8249 = vmatprep.subr.mxu0 0.0
        %8250 = vmatpush1.xpose.msra.mxu0 0.0
        %8251 = vmatprep.subr.mxu0 0.0
        %8252 = vmatpush1.xpose.msra.mxu0 0.0
        %8253 = vmatprep.subr.mxu0 0.0
        %8254 = vmatpush1.xpose.msra.mxu0 0.0
        %8255 = vmatprep.subr.mxu0 0.0
        %8256 = vmatpush1.xpose.msra.mxu0 0.0
        %8257 = vmatprep.subr.mxu0 0.0
        %8258 = vmatpush1.xpose.msra.mxu0 0.0
        %8259 = vmatprep.subr.mxu0 0.0
        %8260 = vmatpush1.xpose.msra.mxu0 0.0
        %8261 = vmatprep.subr.mxu0 0.0
        %8262 = vmatpush1.xpose.msra.mxu0 0.0
        %8263 = vmatprep.subr.mxu0 0.0
        %8264 = vmatpush1.xpose.msra.mxu0 0.0
        %8265 = vmatprep.subr.mxu0 0.0
        %8266 = vmatpush1.xpose.msra.mxu0 0.0
        %8267 = vmatprep.subr.mxu0 0.0
        %8268 = vmatpush1.xpose.msra.mxu0 0.0
        %8269 = vmatprep.subr.mxu0 0.0
        %8270 = vmatpush1.xpose.msra.mxu0 0.0
        %8271 = vmatprep.subr.mxu0 0.0
        %8272 = vmatpush1.xpose.msra.mxu0 0.0
        %8273 = vmatprep.subr.mxu0 0.0
        %8274 = vmatpush1.xpose.msra.mxu0 0.0
        %8275 = vmatprep.subr.mxu0 0.0
        %8276 = vmatpush1.xpose.msra.mxu0 0.0
        %8277 = vmatprep.subr.mxu0 0.0
        %8278 = vmatpush1.xpose.msra.mxu0 0.0
        %8279 = vmatprep.mubr.f32.mxu0 0.0
        %8280 = vmatmul.mubr.f32.gmra.mrb[0].mxu0 %v8210
        %v8281 = vpop.f32.mrb[0].mxu0
        %v8282 = vadd.f32 0.0, %v8281
        %v8283 = vpop.f32.mrb[0].mxu0
        %8284 = vdwg.mxu0
        %8285 = vxpose.xlu0.b32.start [1/16] %v7673, 128
        %8286 = vxpose.xlu0.b32.cont [2/16] %v7706, 128
        %8287 = vxpose.xlu0.b32.cont [3/16] 0.0, 128
        %8288 = vxpose.xlu0.b32.cont [4/16] 0.0, 128
        %8289 = vxpose.xlu0.b32.cont [5/16] 0.0, 128
        %8290 = vxpose.xlu0.b32.cont [6/16] 0.0, 128
        %8291 = vxpose.xlu0.b32.cont [7/16] 0.0, 128
        %8292 = vxpose.xlu0.b32.cont [8/16] 0.0, 128
        %8293 = vxpose.xlu0.b32.cont [9/16] 0.0, 128
        %8294 = vxpose.xlu0.b32.cont [10/16] 0.0, 128
        %8295 = vxpose.xlu0.b32.cont [11/16] 0.0, 128
        %8296 = vxpose.xlu0.b32.cont [12/16] 0.0, 128
        %8297 = vxpose.xlu0.b32.cont [13/16] 0.0, 128
        %8298 = vxpose.xlu0.b32.cont [14/16] 0.0, 128
        %8299 = vxpose.xlu0.b32.cont [15/16] 0.0, 128
        %8300 = vxpose.xlu0.b32.end [16/16] 0.0, 128
        %v8301 = vpop.trf.xlu0
        %v8302 = vpop.trf.xlu0
        %v8303 = vpop.trf.xlu0
        %v8304 = vpop.trf.xlu0
        %v8305 = vpop.trf.xlu0
        %v8306 = vpop.trf.xlu0
        %v8307 = vpop.trf.xlu0
        %v8308 = vpop.trf.xlu0
        %v8309 = vpop.trf.xlu0
        %v8310 = vpop.trf.xlu0
        %v8311 = vpop.trf.xlu0
        %v8312 = vpop.trf.xlu0
        %v8313 = vpop.trf.xlu0
        %v8314 = vpop.trf.xlu0
        %v8315 = vpop.trf.xlu0
        %v8316 = vpop.trf.xlu0
        %v8318 = vsel %vm4182, %v8301, 0
        %v8321 = vsel %vm4182, %v8067, 0
        %8323 = vmatprep.subr.mxu0 0.0
        %8324 = vmatpush1.xpose.msra.mxu0 %v8321
        %8325 = vmatprep.subr.mxu0 0.0
        %8326 = vmatpush1.xpose.msra.mxu0 0.0
        %8327 = vmatprep.subr.mxu0 0.0
        %8328 = vmatpush1.xpose.msra.mxu0 0.0
        %8329 = vmatprep.subr.mxu0 0.0
        %8330 = vmatpush1.xpose.msra.mxu0 0.0
        %8331 = vmatprep.subr.mxu0 0.0
        %8332 = vmatpush1.xpose.msra.mxu0 0.0
        %8333 = vmatprep.subr.mxu0 0.0
        %8334 = vmatpush1.xpose.msra.mxu0 0.0
        %8335 = vmatprep.subr.mxu0 0.0
        %8336 = vmatpush1.xpose.msra.mxu0 0.0
        %8337 = vmatprep.subr.mxu0 0.0
        %8338 = vmatpush1.xpose.msra.mxu0 0.0
        %8339 = vmatprep.subr.mxu0 0.0
        %8340 = vmatpush1.xpose.msra.mxu0 0.0
        %8341 = vmatprep.subr.mxu0 0.0
        %8342 = vmatpush1.xpose.msra.mxu0 0.0
        %8343 = vmatprep.subr.mxu0 0.0
        %8344 = vmatpush1.xpose.msra.mxu0 0.0
        %8345 = vmatprep.subr.mxu0 0.0
        %8346 = vmatpush1.xpose.msra.mxu0 0.0
        %8347 = vmatprep.subr.mxu0 0.0
        %8348 = vmatpush1.xpose.msra.mxu0 0.0
        %8349 = vmatprep.subr.mxu0 0.0
        %8350 = vmatpush1.xpose.msra.mxu0 0.0
        %8351 = vmatprep.subr.mxu0 0.0
        %8352 = vmatpush1.xpose.msra.mxu0 0.0
        %8353 = vmatprep.subr.mxu0 0.0
        %8354 = vmatpush1.xpose.msra.mxu0 0.0
        %8355 = vmatprep.subr.mxu0 0.0
        %8356 = vmatpush1.xpose.msra.mxu0 0.0
        %8357 = vmatprep.subr.mxu0 0.0
        %8358 = vmatpush1.xpose.msra.mxu0 0.0
        %8359 = vmatprep.subr.mxu0 0.0
        %8360 = vmatpush1.xpose.msra.mxu0 0.0
        %8361 = vmatprep.subr.mxu0 0.0
        %8362 = vmatpush1.xpose.msra.mxu0 0.0
        %8363 = vmatprep.subr.mxu0 0.0
        %8364 = vmatpush1.xpose.msra.mxu0 0.0
        %8365 = vmatprep.subr.mxu0 0.0
        %8366 = vmatpush1.xpose.msra.mxu0 0.0
        %8367 = vmatprep.subr.mxu0 0.0
        %8368 = vmatpush1.xpose.msra.mxu0 0.0
        %8369 = vmatprep.subr.mxu0 0.0
        %8370 = vmatpush1.xpose.msra.mxu0 0.0
        %8371 = vmatprep.subr.mxu0 0.0
        %8372 = vmatpush1.xpose.msra.mxu0 0.0
        %8373 = vmatprep.subr.mxu0 0.0
        %8374 = vmatpush1.xpose.msra.mxu0 0.0
        %8375 = vmatprep.subr.mxu0 0.0
        %8376 = vmatpush1.xpose.msra.mxu0 0.0
        %8377 = vmatprep.subr.mxu0 0.0
        %8378 = vmatpush1.xpose.msra.mxu0 0.0
        %8379 = vmatprep.subr.mxu0 0.0
        %8380 = vmatpush1.xpose.msra.mxu0 0.0
        %8381 = vmatprep.subr.mxu0 0.0
        %8382 = vmatpush1.xpose.msra.mxu0 0.0
        %8383 = vmatprep.subr.mxu0 0.0
        %8384 = vmatpush1.xpose.msra.mxu0 0.0
        %8385 = vmatprep.subr.mxu0 0.0
        %8386 = vmatpush1.xpose.msra.mxu0 0.0
        %8387 = vmatprep.mubr.f32.mxu0 0.0
        %8388 = vmatmul.mubr.f32.gmra.mrb[0].mxu0 %v8318
        %v8389 = vpop.f32.mrb[0].mxu0
        %v8390 = vadd.f32 0.0, %v8389
        %v8391 = vpop.f32.mrb[0].mxu0
        %8392 = vdwg.mxu0
        %8393 = vxpose.xlu0.b32.start [1/16] %v7674, 128
        %8394 = vxpose.xlu0.b32.cont [2/16] %v7708, 128
        %8395 = vxpose.xlu0.b32.cont [3/16] 0.0, 128
        %8396 = vxpose.xlu0.b32.cont [4/16] 0.0, 128
        %8397 = vxpose.xlu0.b32.cont [5/16] 0.0, 128
        %8398 = vxpose.xlu0.b32.cont [6/16] 0.0, 128
        %8399 = vxpose.xlu0.b32.cont [7/16] 0.0, 128
        %8400 = vxpose.xlu0.b32.cont [8/16] 0.0, 128
        %8401 = vxpose.xlu0.b32.cont [9/16] 0.0, 128
        %8402 = vxpose.xlu0.b32.cont [10/16] 0.0, 128
        %8403 = vxpose.xlu0.b32.cont [11/16] 0.0, 128
        %8404 = vxpose.xlu0.b32.cont [12/16] 0.0, 128
        %8405 = vxpose.xlu0.b32.cont [13/16] 0.0, 128
        %8406 = vxpose.xlu0.b32.cont [14/16] 0.0, 128
        %8407 = vxpose.xlu0.b32.cont [15/16] 0.0, 128
        %8408 = vxpose.xlu0.b32.end [16/16] 0.0, 128
        %v8409 = vpop.trf.xlu0
        %v8410 = vpop.trf.xlu0
        %v8411 = vpop.trf.xlu0
        %v8412 = vpop.trf.xlu0
        %v8413 = vpop.trf.xlu0
        %v8414 = vpop.trf.xlu0
        %v8415 = vpop.trf.xlu0
        %v8416 = vpop.trf.xlu0
        %v8417 = vpop.trf.xlu0
        %v8418 = vpop.trf.xlu0
        %v8419 = vpop.trf.xlu0
        %v8420 = vpop.trf.xlu0
        %v8421 = vpop.trf.xlu0
        %v8422 = vpop.trf.xlu0
        %v8423 = vpop.trf.xlu0
        %v8424 = vpop.trf.xlu0
        %v8426 = vsel %vm4182, %v8409, 0
        %v8429 = vsel %vm4182, %v8068, 0
        %8431 = vmatprep.subr.mxu0 0.0
        %8432 = vmatpush1.xpose.msra.mxu0 %v8429
        %8433 = vmatprep.subr.mxu0 0.0
        %8434 = vmatpush1.xpose.msra.mxu0 0.0
        %8435 = vmatprep.subr.mxu0 0.0
        %8436 = vmatpush1.xpose.msra.mxu0 0.0
        %8437 = vmatprep.subr.mxu0 0.0
        %8438 = vmatpush1.xpose.msra.mxu0 0.0
        %8439 = vmatprep.subr.mxu0 0.0
        %8440 = vmatpush1.xpose.msra.mxu0 0.0
        %8441 = vmatprep.subr.mxu0 0.0
        %8442 = vmatpush1.xpose.msra.mxu0 0.0
        %8443 = vmatprep.subr.mxu0 0.0
        %8444 = vmatpush1.xpose.msra.mxu0 0.0
        %8445 = vmatprep.subr.mxu0 0.0
        %8446 = vmatpush1.xpose.msra.mxu0 0.0
        %8447 = vmatprep.subr.mxu0 0.0
        %8448 = vmatpush1.xpose.msra.mxu0 0.0
        %8449 = vmatprep.subr.mxu0 0.0
        %8450 = vmatpush1.xpose.msra.mxu0 0.0
        %8451 = vmatprep.subr.mxu0 0.0
        %8452 = vmatpush1.xpose.msra.mxu0 0.0
        %8453 = vmatprep.subr.mxu0 0.0
        %8454 = vmatpush1.xpose.msra.mxu0 0.0
        %8455 = vmatprep.subr.mxu0 0.0
        %8456 = vmatpush1.xpose.msra.mxu0 0.0
        %8457 = vmatprep.subr.mxu0 0.0
        %8458 = vmatpush1.xpose.msra.mxu0 0.0
        %8459 = vmatprep.subr.mxu0 0.0
        %8460 = vmatpush1.xpose.msra.mxu0 0.0
        %8461 = vmatprep.subr.mxu0 0.0
        %8462 = vmatpush1.xpose.msra.mxu0 0.0
        %8463 = vmatprep.subr.mxu0 0.0
        %8464 = vmatpush1.xpose.msra.mxu0 0.0
        %8465 = vmatprep.subr.mxu0 0.0
        %8466 = vmatpush1.xpose.msra.mxu0 0.0
        %8467 = vmatprep.subr.mxu0 0.0
        %8468 = vmatpush1.xpose.msra.mxu0 0.0
        %8469 = vmatprep.subr.mxu0 0.0
        %8470 = vmatpush1.xpose.msra.mxu0 0.0
        %8471 = vmatprep.subr.mxu0 0.0
        %8472 = vmatpush1.xpose.msra.mxu0 0.0
        %8473 = vmatprep.subr.mxu0 0.0
        %8474 = vmatpush1.xpose.msra.mxu0 0.0
        %8475 = vmatprep.subr.mxu0 0.0
        %8476 = vmatpush1.xpose.msra.mxu0 0.0
        %8477 = vmatprep.subr.mxu0 0.0
        %8478 = vmatpush1.xpose.msra.mxu0 0.0
        %8479 = vmatprep.subr.mxu0 0.0
        %8480 = vmatpush1.xpose.msra.mxu0 0.0
        %8481 = vmatprep.subr.mxu0 0.0
        %8482 = vmatpush1.xpose.msra.mxu0 0.0
        %8483 = vmatprep.subr.mxu0 0.0
        %8484 = vmatpush1.xpose.msra.mxu0 0.0
        %8485 = vmatprep.subr.mxu0 0.0
        %8486 = vmatpush1.xpose.msra.mxu0 0.0
        %8487 = vmatprep.subr.mxu0 0.0
        %8488 = vmatpush1.xpose.msra.mxu0 0.0
        %8489 = vmatprep.subr.mxu0 0.0
        %8490 = vmatpush1.xpose.msra.mxu0 0.0
        %8491 = vmatprep.subr.mxu0 0.0
        %8492 = vmatpush1.xpose.msra.mxu0 0.0
        %8493 = vmatprep.subr.mxu0 0.0
        %8494 = vmatpush1.xpose.msra.mxu0 0.0
        %8495 = vmatprep.mubr.f32.mxu0 0.0
        %8496 = vmatmul.mubr.f32.gmra.mrb[0].mxu0 %v8426
        %v8497 = vpop.f32.mrb[0].mxu0
        %v8498 = vadd.f32 0.0, %v8497
        %v8499 = vpop.f32.mrb[0].mxu0
        %8500 = vdwg.mxu0
        %8501 = vxpose.xlu0.b32.start [1/16] %v8174, 128
        %8502 = vxpose.xlu0.b32.cont [2/16] 0.0, 128
        %8503 = vxpose.xlu0.b32.cont [3/16] 0.0, 128
        %8504 = vxpose.xlu0.b32.cont [4/16] 0.0, 128
        %8505 = vxpose.xlu0.b32.cont [5/16] 0.0, 128
        %8506 = vxpose.xlu0.b32.cont [6/16] 0.0, 128
        %8507 = vxpose.xlu0.b32.cont [7/16] 0.0, 128
        %8508 = vxpose.xlu0.b32.cont [8/16] 0.0, 128
        %8509 = vxpose.xlu0.b32.cont [9/16] 0.0, 128
        %8510 = vxpose.xlu0.b32.cont [10/16] 0.0, 128
        %8511 = vxpose.xlu0.b32.cont [11/16] 0.0, 128
        %8512 = vxpose.xlu0.b32.cont [12/16] 0.0, 128
        %8513 = vxpose.xlu0.b32.cont [13/16] 0.0, 128
        %8514 = vxpose.xlu0.b32.cont [14/16] 0.0, 128
        %8515 = vxpose.xlu0.b32.cont [15/16] 0.0, 128
        %8516 = vxpose.xlu0.b32.end [16/16] 0.0, 128
        %v8517 = vpop.trf.xlu0
        %v8518 = vpop.trf.xlu0
        %v8519 = vpop.trf.xlu0
        %v8520 = vpop.trf.xlu0
        %v8521 = vpop.trf.xlu0
        %v8522 = vpop.trf.xlu0
        %v8523 = vpop.trf.xlu0
        %v8524 = vpop.trf.xlu0
        %v8525 = vpop.trf.xlu0
        %v8526 = vpop.trf.xlu0
        %v8527 = vpop.trf.xlu0
        %v8528 = vpop.trf.xlu0
        %v8529 = vpop.trf.xlu0
        %v8530 = vpop.trf.xlu0
        %v8531 = vpop.trf.xlu0
        %v8532 = vpop.trf.xlu0
        %8533 = vxpose.xlu0.b32.start [1/16] %v8282, 128
        %8534 = vxpose.xlu0.b32.cont [2/16] 0.0, 128
        %8535 = vxpose.xlu0.b32.cont [3/16] 0.0, 128
        %8536 = vxpose.xlu0.b32.cont [4/16] 0.0, 128
        %8537 = vxpose.xlu0.b32.cont [5/16] 0.0, 128
        %8538 = vxpose.xlu0.b32.cont [6/16] 0.0, 128
        %8539 = vxpose.xlu0.b32.cont [7/16] 0.0, 128
        %8540 = vxpose.xlu0.b32.cont [8/16] 0.0, 128
        %8541 = vxpose.xlu0.b32.cont [9/16] 0.0, 128
        %8542 = vxpose.xlu0.b32.cont [10/16] 0.0, 128
        %8543 = vxpose.xlu0.b32.cont [11/16] 0.0, 128
        %8544 = vxpose.xlu0.b32.cont [12/16] 0.0, 128
        %8545 = vxpose.xlu0.b32.cont [13/16] 0.0, 128
        %8546 = vxpose.xlu0.b32.cont [14/16] 0.0, 128
        %8547 = vxpose.xlu0.b32.cont [15/16] 0.0, 128
        %8548 = vxpose.xlu0.b32.end [16/16] 0.0, 128
        %v8549 = vpop.trf.xlu0
        %v8550 = vpop.trf.xlu0
        %v8551 = vpop.trf.xlu0
        %v8552 = vpop.trf.xlu0
        %v8553 = vpop.trf.xlu0
        %v8554 = vpop.trf.xlu0
        %v8555 = vpop.trf.xlu0
        %v8556 = vpop.trf.xlu0
        %v8557 = vpop.trf.xlu0
        %v8558 = vpop.trf.xlu0
        %v8559 = vpop.trf.xlu0
        %v8560 = vpop.trf.xlu0
        %v8561 = vpop.trf.xlu0
        %v8562 = vpop.trf.xlu0
        %v8563 = vpop.trf.xlu0
        %v8564 = vpop.trf.xlu0
        %8565 = vxpose.xlu0.b32.start [1/16] %v8390, 128
        %8566 = vxpose.xlu0.b32.cont [2/16] 0.0, 128
        %8567 = vxpose.xlu0.b32.cont [3/16] 0.0, 128
        %8568 = vxpose.xlu0.b32.cont [4/16] 0.0, 128
        %8569 = vxpose.xlu0.b32.cont [5/16] 0.0, 128
        %8570 = vxpose.xlu0.b32.cont [6/16] 0.0, 128
        %8571 = vxpose.xlu0.b32.cont [7/16] 0.0, 128
        %8572 = vxpose.xlu0.b32.cont [8/16] 0.0, 128
        %8573 = vxpose.xlu0.b32.cont [9/16] 0.0, 128
        %8574 = vxpose.xlu0.b32.cont [10/16] 0.0, 128
        %8575 = vxpose.xlu0.b32.cont [11/16] 0.0, 128
        %8576 = vxpose.xlu0.b32.cont [12/16] 0.0, 128
        %8577 = vxpose.xlu0.b32.cont [13/16] 0.0, 128
        %8578 = vxpose.xlu0.b32.cont [14/16] 0.0, 128
        %8579 = vxpose.xlu0.b32.cont [15/16] 0.0, 128
        %8580 = vxpose.xlu0.b32.end [16/16] 0.0, 128
        %v8581 = vpop.trf.xlu0
        %v8582 = vpop.trf.xlu0
        %v8583 = vpop.trf.xlu0
        %v8584 = vpop.trf.xlu0
        %v8585 = vpop.trf.xlu0
        %v8586 = vpop.trf.xlu0
        %v8587 = vpop.trf.xlu0
        %v8588 = vpop.trf.xlu0
        %v8589 = vpop.trf.xlu0
        %v8590 = vpop.trf.xlu0
        %v8591 = vpop.trf.xlu0
        %v8592 = vpop.trf.xlu0
        %v8593 = vpop.trf.xlu0
        %v8594 = vpop.trf.xlu0
        %v8595 = vpop.trf.xlu0
        %v8596 = vpop.trf.xlu0
        %8597 = vxpose.xlu0.b32.start [1/16] %v8498, 128
        %8598 = vxpose.xlu0.b32.cont [2/16] 0.0, 128
        %8599 = vxpose.xlu0.b32.cont [3/16] 0.0, 128
        %8600 = vxpose.xlu0.b32.cont [4/16] 0.0, 128
        %8601 = vxpose.xlu0.b32.cont [5/16] 0.0, 128
        %8602 = vxpose.xlu0.b32.cont [6/16] 0.0, 128
        %8603 = vxpose.xlu0.b32.cont [7/16] 0.0, 128
        %8604 = vxpose.xlu0.b32.cont [8/16] 0.0, 128
        %8605 = vxpose.xlu0.b32.cont [9/16] 0.0, 128
        %8606 = vxpose.xlu0.b32.cont [10/16] 0.0, 128
        %8607 = vxpose.xlu0.b32.cont [11/16] 0.0, 128
        %8608 = vxpose.xlu0.b32.cont [12/16] 0.0, 128
        %8609 = vxpose.xlu0.b32.cont [13/16] 0.0, 128
        %8610 = vxpose.xlu0.b32.cont [14/16] 0.0, 128
        %8611 = vxpose.xlu0.b32.cont [15/16] 0.0, 128
        %8612 = vxpose.xlu0.b32.end [16/16] 0.0, 128
        %v8613 = vpop.trf.xlu0
        %v8614 = vpop.trf.xlu0
        %v8615 = vpop.trf.xlu0
        %v8616 = vpop.trf.xlu0
        %v8617 = vpop.trf.xlu0
        %v8618 = vpop.trf.xlu0
        %v8619 = vpop.trf.xlu0
        %v8620 = vpop.trf.xlu0
        %v8621 = vpop.trf.xlu0
        %v8622 = vpop.trf.xlu0
        %v8623 = vpop.trf.xlu0
        %v8624 = vpop.trf.xlu0
        %v8625 = vpop.trf.xlu0
        %v8626 = vpop.trf.xlu0
        %v8627 = vpop.trf.xlu0
        %v8628 = vpop.trf.xlu0
        %v8629 = vcombine.low %v8517, %v8581
        %v8630 = vcombine.high %v8517, %v8581
        %v8632 = vunpack.c.l.s4 1983009808
        %v8633 = vunpack.c.0.s8 %v8632
        %v8634 = vlaneseq
        %v8635 = vshrl.u32 %v8634, 7
        %v8636 = vsub.s32 %v8633, %v8635
        %v8637 = vrot.slane %v8629, %v8636
        %v8639 = vunpack.c.l.s4 1983009808
        %v8640 = vunpack.c.0.s8 %v8639
        %v8641 = vlaneseq
        %v8642 = vshrl.u32 %v8641, 7
        %v8643 = vsub.s32 %v8640, %v8642
        %v8644 = vrot.slane %v8630, %v8643
        %v8645 = vcombine.low %v8549, %v8613
        %v8646 = vcombine.high %v8549, %v8613
        %v8648 = vunpack.c.l.s4 1983009808
        %v8649 = vunpack.c.0.s8 %v8648
        %v8650 = vlaneseq
        %v8651 = vshrl.u32 %v8650, 7
        %v8652 = vsub.s32 %v8649, %v8651
        %v8653 = vrot.slane %v8645, %v8652
        %v8655 = vunpack.c.l.s4 1983009808
        %v8656 = vunpack.c.0.s8 %v8655
        %v8657 = vlaneseq
        %v8658 = vshrl.u32 %v8657, 7
        %v8659 = vsub.s32 %v8656, %v8658
        %v8660 = vrot.slane %v8646, %v8659
        %v8661 = vcombine.low %v8637, %v8653
        %v8662 = vcombine.high %v8637, %v8653
        %v8664 = vunpack.c.l.s4 1934713408
        %v8665 = vunpack.c.0.s8 %v8664
        %v8666 = vlaneseq
        %v8667 = vshrl.u32 %v8666, 7
        %v8668 = vsub.s32 %v8665, %v8667
        %v8669 = vrot.slane %v8661, %v8668
        %v8671 = vunpack.c.l.s4 1934713408
        %v8672 = vunpack.c.0.s8 %v8671
        %v8673 = vlaneseq
        %v8674 = vshrl.u32 %v8673, 7
        %v8675 = vsub.s32 %v8672, %v8674
        %v8676 = vrot.slane %v8662, %v8675
        %v8677 = vcombine.low %v8644, %v8660
        %v8678 = vcombine.high %v8644, %v8660
        %v8680 = vunpack.c.l.s4 1934713408
        %v8681 = vunpack.c.0.s8 %v8680
        %v8682 = vlaneseq
        %v8683 = vshrl.u32 %v8682, 7
        %v8684 = vsub.s32 %v8681, %v8683
        %v8685 = vrot.slane %v8677, %v8684
        %v8687 = vunpack.c.l.s4 1934713408
        %v8688 = vunpack.c.0.s8 %v8687
        %v8689 = vlaneseq
        %v8690 = vshrl.u32 %v8689, 7
        %v8691 = vsub.s32 %v8688, %v8690
        %v8692 = vrot.slane %v8678, %v8691
        %v8693 = vcombine.high %v8669, 0.0
        %v8694 = vcombine.high %v8676, 0.0
        %v8695 = vcombine.high %v8685, 0.0
        %v8696 = vcombine.high %v8692, 0.0
        %v8697 = vcombine.low %v8669, %v8676
        %v8699 = vunpack.c.l.s4 1983009808
        %v8700 = vunpack.c.0.s8 %v8699
        %v8701 = vlaneseq
        %v8702 = vshrl.u32 %v8701, 7
        %v8703 = vsub.s32 %v8700, %v8702
        %v8704 = vrot.slane %v8697, %v8703
        %v8705 = vcombine.low %v8693, %v8694
        %v8707 = vunpack.c.l.s4 1983009808
        %v8708 = vunpack.c.0.s8 %v8707
        %v8709 = vlaneseq
        %v8710 = vshrl.u32 %v8709, 7
        %v8711 = vsub.s32 %v8708, %v8710
        %v8712 = vrot.slane %v8705, %v8711
        %v8713 = vcombine.low %v8685, %v8692
        %v8715 = vunpack.c.l.s4 1983009808
        %v8716 = vunpack.c.0.s8 %v8715
        %v8717 = vlaneseq
        %v8718 = vshrl.u32 %v8717, 7
        %v8719 = vsub.s32 %v8716, %v8718
        %v8720 = vrot.slane %v8713, %v8719
        %v8721 = vcombine.low %v8695, %v8696
        %v8723 = vunpack.c.l.s4 1983009808
        %v8724 = vunpack.c.0.s8 %v8723
        %v8725 = vlaneseq
        %v8726 = vshrl.u32 %v8725, 7
        %v8727 = vsub.s32 %v8724, %v8726
        %v8728 = vrot.slane %v8721, %v8727
        %v8729 = vcombine.low %v8704, %v8712
        %v8730 = vcombine.high %v8704, %v8712
        %v8732 = vunpack.c.l.s4 1934713408
        %v8733 = vunpack.c.0.s8 %v8732
        %v8734 = vlaneseq
        %v8735 = vshrl.u32 %v8734, 7
        %v8736 = vsub.s32 %v8733, %v8735
        %v8737 = vrot.slane %v8729, %v8736
        %v8739 = vunpack.c.l.s4 1934713408
        %v8740 = vunpack.c.0.s8 %v8739
        %v8741 = vlaneseq
        %v8742 = vshrl.u32 %v8741, 7
        %v8743 = vsub.s32 %v8740, %v8742
        %v8744 = vrot.slane %v8730, %v8743
        %v8745 = vcombine.low %v8720, %v8728
        %v8746 = vcombine.high %v8720, %v8728
        %v8748 = vunpack.c.l.s4 1934713408
        %v8749 = vunpack.c.0.s8 %v8748
        %v8750 = vlaneseq
        %v8751 = vshrl.u32 %v8750, 7
        %v8752 = vsub.s32 %v8749, %v8751
        %v8753 = vrot.slane %v8745, %v8752
        %v8755 = vunpack.c.l.s4 1934713408
        %v8756 = vunpack.c.0.s8 %v8755
        %v8757 = vlaneseq
        %v8758 = vshrl.u32 %v8757, 7
        %v8759 = vsub.s32 %v8756, %v8758
        %v8760 = vrot.slane %v8746, %v8759
        %v8761 = vcombine.low %v8737, %v8753
        %v8762 = vcombine.high %v8737, %v8753
        %v8763 = vcombine.low %v8744, %v8760
        %v8764 = vcombine.high %v8744, %v8760
        %8766 = vrot.lane.b32.xlu0 %v8762, 8
        %v8767 = vpop.permute.xlu0 %8766
        %8770 = vrot.lane.b32.xlu0 %v8763, 16
        %v8771 = vpop.permute.xlu0 %8770
        %8774 = vrot.lane.b32.xlu0 %v8764, 24
        %v8775 = vpop.permute.xlu0 %8774
        %v8777 = vsel %vm1926, %v8761, %v8767
        %v8778 = vsel %vm2984, %v8777, %v8771
        %v8779 = vsel %vm2986, %v8778, %v8775
        %8780 = vst.msk [vmem:[%s1335] sm:$0xff] %vm4182, %v8065
        %8781 = vst.msk [vmem:[%s1335 + $0x8] sm:$0xff] %vm4182, %v8066
        %8782 = vst.msk [vmem:[%s1335 + $0x10] sm:$0xff] %vm4182, %v8067
        %8783 = vst.msk [vmem:[%s1335 + $0x18] sm:$0xff] %vm4182, %v8068
        %v8785 = vlaneseq
        %v8786 = vshrl.u32 %v8785, 7
        %v8787 = vsub.s32 0, %v8786
        %v8788 = vrot.slane %v5245, %v8787
        %v8791 = vsel %vm1410, %v8779, 0
        %8793 = vmatprep.subr.mxu0 0.0
        %8794 = vmatpush1.msra.mxu0 %v5241
        %8795 = vmatprep.subr.mxu0 0.0
        %8796 = vmatpush1.msra.mxu0 %v5242
        %8797 = vmatprep.subr.mxu0 0.0
        %8798 = vmatpush1.msra.mxu0 %v5243
        %8799 = vmatprep.subr.mxu0 0.0
        %8800 = vmatpush1.msra.mxu0 %v5244
        %8801 = vmatprep.subr.mxu0 0.0
        %8802 = vmatpush1.msra.mxu0 0.0
        %8803 = vmatprep.subr.mxu0 0.0
        %8804 = vmatpush1.msra.mxu0 0.0
        %8805 = vmatprep.subr.mxu0 0.0
        %8806 = vmatpush1.msra.mxu0 0.0
        %8807 = vmatprep.subr.mxu0 0.0
        %8808 = vmatpush1.msra.mxu0 0.0
        %8809 = vmatprep.subr.mxu0 0.0
        %8810 = vmatpush1.msra.mxu0 0.0
        %8811 = vmatprep.subr.mxu0 0.0
        %8812 = vmatpush1.msra.mxu0 0.0
        %8813 = vmatprep.subr.mxu0 0.0
        %8814 = vmatpush1.msra.mxu0 0.0
        %8815 = vmatprep.subr.mxu0 0.0
        %8816 = vmatpush1.msra.mxu0 0.0
        %8817 = vmatprep.subr.mxu0 0.0
        %8818 = vmatpush1.msra.mxu0 0.0
        %8819 = vmatprep.subr.mxu0 0.0
        %8820 = vmatpush1.msra.mxu0 0.0
        %8821 = vmatprep.subr.mxu0 0.0
        %8822 = vmatpush1.msra.mxu0 0.0
        %8823 = vmatprep.subr.mxu0 0.0
        %8824 = vmatpush1.msra.mxu0 0.0
        %8825 = vmatprep.subr.mxu0 0.0
        %8826 = vmatpush1.msra.mxu0 0.0
        %8827 = vmatprep.subr.mxu0 0.0
        %8828 = vmatpush1.msra.mxu0 0.0
        %8829 = vmatprep.subr.mxu0 0.0
        %8830 = vmatpush1.msra.mxu0 0.0
        %8831 = vmatprep.subr.mxu0 0.0
        %8832 = vmatpush1.msra.mxu0 0.0
        %8833 = vmatprep.subr.mxu0 0.0
        %8834 = vmatpush1.msra.mxu0 0.0
        %8835 = vmatprep.subr.mxu0 0.0
        %8836 = vmatpush1.msra.mxu0 0.0
        %8837 = vmatprep.subr.mxu0 0.0
        %8838 = vmatpush1.msra.mxu0 0.0
        %8839 = vmatprep.subr.mxu0 0.0
        %8840 = vmatpush1.msra.mxu0 0.0
        %8841 = vmatprep.subr.mxu0 0.0
        %8842 = vmatpush1.msra.mxu0 0.0
        %8843 = vmatprep.subr.mxu0 0.0
        %8844 = vmatpush1.msra.mxu0 0.0
        %8845 = vmatprep.subr.mxu0 0.0
        %8846 = vmatpush1.msra.mxu0 0.0
        %8847 = vmatprep.subr.mxu0 0.0
        %8848 = vmatpush1.msra.mxu0 0.0
        %8849 = vmatprep.subr.mxu0 0.0
        %8850 = vmatpush1.msra.mxu0 0.0
        %8851 = vmatprep.subr.mxu0 0.0
        %8852 = vmatpush1.msra.mxu0 0.0
        %8853 = vmatprep.subr.mxu0 0.0
        %8854 = vmatpush1.msra.mxu0 0.0
        %8855 = vmatprep.subr.mxu0 0.0
        %8856 = vmatpush1.msra.mxu0 0.0
        %8857 = vmatprep.mubr.f32.mxu0 0.0
        %8858 = vmatmul.mubr.f32.gmra.mrb[0].mxu0 %v8791
        %v8859 = vpop.f32.mrb[0].mxu0
        %v8860 = vadd.f32 %v8788, %v8859
        %v8861 = vpop.f32.mrb[0].mxu0
        %8862 = vdwg.mxu0
        %v8863 = vadd.f32 %v6950, %v8860
        %v8864 = vsel %vm1410, %v8863, 0.0
        %8865 = vadd.xlane.f32.xlu0 %v8864
        %v8866 = vpop.xlane.xlu0 %8865
        %v8867 = vmul.f32 %v8866, %v3071
        %v8868 = vsub.f32 %v8863, %v8867
        %v8869 = vmul.f32 %v8868, %v8868
        %v8870 = vsel %vm1410, %v8869, 0.0
        %8871 = vadd.xlane.f32.xlu0 %v8870
        %v8872 = vpop.xlane.xlu0 %8871
        %v8873 = vmul.f32 %v8872, %v3071
        %v8874 = vadd.f32 %v8873, 1e-05
        %v8875 = vrsqrt.pop %v8874
        %v8876 = vmul.f32 %v8868, %v8875
        %v8877 = vmul.f32 %v8876, %v6941
        %v8878 = vadd.f32 %v8877, %v6948
        %v8880 = vlaneseq
        %v8881 = vshrl.u32 %v8880, 7
        %v8882 = vsub.s32 0, %v8881
        %v8883 = vrot.slane %v5252, %v8882
        %v8886 = vsel %vm1410, %v8878, 0
        %8888 = vmatprep.subr.mxu0 0.0
        %8889 = vmatpush1.msra.mxu0 %v5248
        %8890 = vmatprep.subr.mxu0 0.0
        %8891 = vmatpush1.msra.mxu0 %v5249
        %8892 = vmatprep.subr.mxu0 0.0
        %8893 = vmatpush1.msra.mxu0 %v5250
        %8894 = vmatprep.subr.mxu0 0.0
        %8895 = vmatpush1.msra.mxu0 %v5251
        %8896 = vmatprep.subr.mxu0 0.0
        %8897 = vmatpush1.msra.mxu0 0.0
        %8898 = vmatprep.subr.mxu0 0.0
        %8899 = vmatpush1.msra.mxu0 0.0
        %8900 = vmatprep.subr.mxu0 0.0
        %8901 = vmatpush1.msra.mxu0 0.0
        %8902 = vmatprep.subr.mxu0 0.0
        %8903 = vmatpush1.msra.mxu0 0.0
        %8904 = vmatprep.subr.mxu0 0.0
        %8905 = vmatpush1.msra.mxu0 0.0
        %8906 = vmatprep.subr.mxu0 0.0
        %8907 = vmatpush1.msra.mxu0 0.0
        %8908 = vmatprep.subr.mxu0 0.0
        %8909 = vmatpush1.msra.mxu0 0.0
        %8910 = vmatprep.subr.mxu0 0.0
        %8911 = vmatpush1.msra.mxu0 0.0
        %8912 = vmatprep.subr.mxu0 0.0
        %8913 = vmatpush1.msra.mxu0 0.0
        %8914 = vmatprep.subr.mxu0 0.0
        %8915 = vmatpush1.msra.mxu0 0.0
        %8916 = vmatprep.subr.mxu0 0.0
        %8917 = vmatpush1.msra.mxu0 0.0
        %8918 = vmatprep.subr.mxu0 0.0
        %8919 = vmatpush1.msra.mxu0 0.0
        %8920 = vmatprep.subr.mxu0 0.0
        %8921 = vmatpush1.msra.mxu0 0.0
        %8922 = vmatprep.subr.mxu0 0.0
        %8923 = vmatpush1.msra.mxu0 0.0
        %8924 = vmatprep.subr.mxu0 0.0
        %8925 = vmatpush1.msra.mxu0 0.0
        %8926 = vmatprep.subr.mxu0 0.0
        %8927 = vmatpush1.msra.mxu0 0.0
        %8928 = vmatprep.subr.mxu0 0.0
        %8929 = vmatpush1.msra.mxu0 0.0
        %8930 = vmatprep.subr.mxu0 0.0
        %8931 = vmatpush1.msra.mxu0 0.0
        %8932 = vmatprep.subr.mxu0 0.0
        %8933 = vmatpush1.msra.mxu0 0.0
        %8934 = vmatprep.subr.mxu0 0.0
        %8935 = vmatpush1.msra.mxu0 0.0
        %8936 = vmatprep.subr.mxu0 0.0
        %8937 = vmatpush1.msra.mxu0 0.0
        %8938 = vmatprep.subr.mxu0 0.0
        %8939 = vmatpush1.msra.mxu0 0.0
        %8940 = vmatprep.subr.mxu0 0.0
        %8941 = vmatpush1.msra.mxu0 0.0
        %8942 = vmatprep.subr.mxu0 0.0
        %8943 = vmatpush1.msra.mxu0 0.0
        %8944 = vmatprep.subr.mxu0 0.0
        %8945 = vmatpush1.msra.mxu0 0.0
        %8946 = vmatprep.subr.mxu0 0.0
        %8947 = vmatpush1.msra.mxu0 0.0
        %8948 = vmatprep.subr.mxu0 0.0
        %8949 = vmatpush1.msra.mxu0 0.0
        %8950 = vmatprep.subr.mxu0 0.0
        %8951 = vmatpush1.msra.mxu0 0.0
        %8952 = vmatprep.mubr.f32.mxu0 0.0
        %8953 = vmatmul.mubr.f32.gmra.mrb[0].mxu0 %v8886
        %v8954 = vpop.f32.mrb[0].mxu0
        %v8955 = vadd.f32 %v8883, %v8954
        %v8956 = vpop.f32.mrb[0].mxu0
        %8957 = vdwg.mxu0
        %v8958 = vmax.f32 %v8955, 0.0
        %v8960 = vlaneseq
        %v8961 = vshrl.u32 %v8960, 7
        %v8962 = vsub.s32 0, %v8961
        %v8963 = vrot.slane %v5261, %v8962
        %v8966 = vsel %vm5119, %v8958, 0
        %8968 = vmatprep.subr.mxu0 0.0
        %8969 = vmatpush1.msra.mxu0 %v5253
        %8970 = vmatprep.subr.mxu0 0.0
        %8971 = vmatpush1.msra.mxu0 %v5254
        %8972 = vmatprep.subr.mxu0 0.0
        %8973 = vmatpush1.msra.mxu0 %v5255
        %8974 = vmatprep.subr.mxu0 0.0
        %8975 = vmatpush1.msra.mxu0 %v5256
        %8976 = vmatprep.subr.mxu0 0.0
        %8977 = vmatpush1.msra.mxu0 %v5257
        %8978 = vmatprep.subr.mxu0 0.0
        %8979 = vmatpush1.msra.mxu0 %v5258
        %8980 = vmatprep.subr.mxu0 0.0
        %8981 = vmatpush1.msra.mxu0 %v5259
        %8982 = vmatprep.subr.mxu0 0.0
        %8983 = vmatpush1.msra.mxu0 %v5260
        %8984 = vmatprep.subr.mxu0 0.0
        %8985 = vmatpush1.msra.mxu0 0.0
        %8986 = vmatprep.subr.mxu0 0.0
        %8987 = vmatpush1.msra.mxu0 0.0
        %8988 = vmatprep.subr.mxu0 0.0
        %8989 = vmatpush1.msra.mxu0 0.0
        %8990 = vmatprep.subr.mxu0 0.0
        %8991 = vmatpush1.msra.mxu0 0.0
        %8992 = vmatprep.subr.mxu0 0.0
        %8993 = vmatpush1.msra.mxu0 0.0
        %8994 = vmatprep.subr.mxu0 0.0
        %8995 = vmatpush1.msra.mxu0 0.0
        %8996 = vmatprep.subr.mxu0 0.0
        %8997 = vmatpush1.msra.mxu0 0.0
        %8998 = vmatprep.subr.mxu0 0.0
        %8999 = vmatpush1.msra.mxu0 0.0
        %9000 = vmatprep.subr.mxu0 0.0
        %9001 = vmatpush1.msra.mxu0 0.0
        %9002 = vmatprep.subr.mxu0 0.0
        %9003 = vmatpush1.msra.mxu0 0.0
        %9004 = vmatprep.subr.mxu0 0.0
        %9005 = vmatpush1.msra.mxu0 0.0
        %9006 = vmatprep.subr.mxu0 0.0
        %9007 = vmatpush1.msra.mxu0 0.0
        %9008 = vmatprep.subr.mxu0 0.0
        %9009 = vmatpush1.msra.mxu0 0.0
        %9010 = vmatprep.subr.mxu0 0.0
        %9011 = vmatpush1.msra.mxu0 0.0
        %9012 = vmatprep.subr.mxu0 0.0
        %9013 = vmatpush1.msra.mxu0 0.0
        %9014 = vmatprep.subr.mxu0 0.0
        %9015 = vmatpush1.msra.mxu0 0.0
        %9016 = vmatprep.subr.mxu0 0.0
        %9017 = vmatpush1.msra.mxu0 0.0
        %9018 = vmatprep.subr.mxu0 0.0
        %9019 = vmatpush1.msra.mxu0 0.0
        %9020 = vmatprep.subr.mxu0 0.0
        %9021 = vmatpush1.msra.mxu0 0.0
        %9022 = vmatprep.subr.mxu0 0.0
        %9023 = vmatpush1.msra.mxu0 0.0
        %9024 = vmatprep.subr.mxu0 0.0
        %9025 = vmatpush1.msra.mxu0 0.0
        %9026 = vmatprep.subr.mxu0 0.0
        %9027 = vmatpush1.msra.mxu0 0.0
        %9028 = vmatprep.subr.mxu0 0.0
        %9029 = vmatpush1.msra.mxu0 0.0
        %9030 = vmatprep.subr.mxu0 0.0
        %9031 = vmatpush1.msra.mxu0 0.0
        %9032 = vmatprep.mubr.f32.mxu0 0.0
        %9033 = vmatmul.mubr.f32.gmra.mrb[0].mxu0 %v8966
        %v9034 = vpop.f32.mrb[0].mxu0
        %v9035 = vadd.f32 %v8963, %v9034
        %v9036 = vpop.f32.mrb[0].mxu0
        %9037 = vdwg.mxu0
        %v9038 = vadd.f32 %v8878, %v9035
        %v9039 = vsel %vm1410, %v9038, 0.0
        %9040 = vadd.xlane.f32.xlu0 %v9039
        %v9041 = vpop.xlane.xlu0 %9040
        %v9042 = vmul.f32 %v9041, %v3071
        %v9043 = vsub.f32 %v9038, %v9042
        %v9044 = vmul.f32 %v9043, %v9043
        %v9045 = vsel %vm1410, %v9044, 0.0
        %9046 = vadd.xlane.f32.xlu0 %v9045
        %v9047 = vpop.xlane.xlu0 %9046
        %v9048 = vmul.f32 %v9047, %v3071
        %v9049 = vadd.f32 %v9048, 1e-05
        %v9050 = vrsqrt.pop %v9049
        %v9051 = vmul.f32 %v9043, %v9050
        %v9053 = vlaneseq
        %v9054 = vshrl.u32 %v9053, 7
        %v9055 = vsub.s32 0, %v9054
        %v9056 = vrot.slane %v5262, %v9055
        %v9058 = vmul.f32 %v9051, %v9056
        %v9060 = vlaneseq
        %v9061 = vshrl.u32 %v9060, 7
        %v9062 = vsub.s32 0, %v9061
        %v9063 = vrot.slane %v5263, %v9062
        %v9065 = vadd.f32 %v9058, %v9063
        %v9066 = vld [vmem:[%s81] sm:$0xff]
        %v9067 = vld [vmem:[%s81 + $0x8] sm:$0xff]
        %v9068 = vld [vmem:[%s81 + $0x10] sm:$0xff]
        %v9069 = vld [vmem:[%s81 + $0x18] sm:$0xff]
        %v9070 = vld [vmem:[%s83] sm:$0x1]
        %v9072 = vlaneseq
        %v9073 = vshrl.u32 %v9072, 7
        %v9074 = vsub.s32 0, %v9073
        %v9075 = vrot.slane %v9070, %v9074
        %v9078 = vsel %vm1410, %v9065, 0
        %9080 = vmatprep.subr.mxu0 0.0
        %9081 = vmatpush1.msra.mxu0 %v9066
        %9082 = vmatprep.subr.mxu0 0.0
        %9083 = vmatpush1.msra.mxu0 %v9067
        %9084 = vmatprep.subr.mxu0 0.0
        %9085 = vmatpush1.msra.mxu0 %v9068
        %9086 = vmatprep.subr.mxu0 0.0
        %9087 = vmatpush1.msra.mxu0 %v9069
        %9088 = vmatprep.subr.mxu0 0.0
        %9089 = vmatpush1.msra.mxu0 0.0
        %9090 = vmatprep.subr.mxu0 0.0
        %9091 = vmatpush1.msra.mxu0 0.0
        %9092 = vmatprep.subr.mxu0 0.0
        %9093 = vmatpush1.msra.mxu0 0.0
        %9094 = vmatprep.subr.mxu0 0.0
        %9095 = vmatpush1.msra.mxu0 0.0
        %9096 = vmatprep.subr.mxu0 0.0
        %9097 = vmatpush1.msra.mxu0 0.0
        %9098 = vmatprep.subr.mxu0 0.0
        %9099 = vmatpush1.msra.mxu0 0.0
        %9100 = vmatprep.subr.mxu0 0.0
        %9101 = vmatpush1.msra.mxu0 0.0
        %9102 = vmatprep.subr.mxu0 0.0
        %9103 = vmatpush1.msra.mxu0 0.0
        %9104 = vmatprep.subr.mxu0 0.0
        %9105 = vmatpush1.msra.mxu0 0.0
        %9106 = vmatprep.subr.mxu0 0.0
        %9107 = vmatpush1.msra.mxu0 0.0
        %9108 = vmatprep.subr.mxu0 0.0
        %9109 = vmatpush1.msra.mxu0 0.0
        %9110 = vmatprep.subr.mxu0 0.0
        %9111 = vmatpush1.msra.mxu0 0.0
        %9112 = vmatprep.subr.mxu0 0.0
        %9113 = vmatpush1.msra.mxu0 0.0
        %9114 = vmatprep.subr.mxu0 0.0
        %9115 = vmatpush1.msra.mxu0 0.0
        %9116 = vmatprep.subr.mxu0 0.0
        %9117 = vmatpush1.msra.mxu0 0.0
        %9118 = vmatprep.subr.mxu0 0.0
        %9119 = vmatpush1.msra.mxu0 0.0
        %9120 = vmatprep.subr.mxu0 0.0
        %9121 = vmatpush1.msra.mxu0 0.0
        %9122 = vmatprep.subr.mxu0 0.0
        %9123 = vmatpush1.msra.mxu0 0.0
        %9124 = vmatprep.subr.mxu0 0.0
        %9125 = vmatpush1.msra.mxu0 0.0
        %9126 = vmatprep.subr.mxu0 0.0
        %9127 = vmatpush1.msra.mxu0 0.0
        %9128 = vmatprep.subr.mxu0 0.0
        %9129 = vmatpush1.msra.mxu0 0.0
        %9130 = vmatprep.subr.mxu0 0.0
        %9131 = vmatpush1.msra.mxu0 0.0
        %9132 = vmatprep.subr.mxu0 0.0
        %9133 = vmatpush1.msra.mxu0 0.0
        %9134 = vmatprep.subr.mxu0 0.0
        %9135 = vmatpush1.msra.mxu0 0.0
        %9136 = vmatprep.subr.mxu0 0.0
        %9137 = vmatpush1.msra.mxu0 0.0
        %9138 = vmatprep.subr.mxu0 0.0
        %9139 = vmatpush1.msra.mxu0 0.0
        %9140 = vmatprep.subr.mxu0 0.0
        %9141 = vmatpush1.msra.mxu0 0.0
        %9142 = vmatprep.subr.mxu0 0.0
        %9143 = vmatpush1.msra.mxu0 0.0
        %9144 = vmatprep.mubr.f32.mxu0 0.0
        %9145 = vmatmul.mubr.f32.gmra.mrb[0].mxu0 %v9078
        %v9146 = vpop.f32.mrb[0].mxu0
        %v9147 = vadd.f32 %v9075, %v9146
        %v9148 = vpop.f32.mrb[0].mxu0
        %9149 = vdwg.mxu0
        %vm9150 = vcmask 408576
        %9151 = vst.msk [vmem:[%s1328] sm:$0xff] %vm9150, %v9147
        %s9152 = sand.u32 %s1015, 1
        %s9153 = scalar_lea.sflag [#allocation3], %s9152
        %s9154 = sand.u32 %s1015, 1
        %s9155 = smul.addr %s9154, 8
        %s9156 = scalar_lea.vmem [#allocation2], %s9155
        %s9157 = sand.u32 %s1041, 1
        %s9158 = scalar_lea.sflag [#allocation5], %s9157
        %s9159 = sand.u32 %s1041, 1
        %s9160 = smul.addr %s9159, 32
        %s9161 = scalar_lea.vmem [#allocation4], %s9160
        // Predicated region
        $region189: #{decoder_forward.1} parent=187 // pred_check
          %p9162 = pneg %p1025
        $region190: #{decoder_forward.1} parent=187 // pred_check_branch
          %9164 = sbr.rel (%p9162) target = $region192
        $region191: #{decoder_forward.1} parent=187 // pred_region
          %s9166 = ssub.s32 128, 128
          %9167 = vsyncadd %s9153, %s9166
          %s9168 = smul.addr %s105, 128
          %s9169 = scalar_lea.hbm %s85, %s9168
          %s9171 = sshll.u32 %s9156, 4
          %s9172 = int_to_ptr.vmem [resolvable:$true] %s9171
          %9174 = dma.vmem_to_hbm [thread:$0]  %s9172, 128, %s9169, %s9153
        $region192: #{decoder_forward.1} parent=187 // pred_fallthru
          _
        // Predicated region
        $region193: #{decoder_forward.1} parent=187 // pred_check
          %p9175 = pneg %p1051
        $region194: #{decoder_forward.1} parent=187 // pred_check_branch
          %9177 = sbr.rel (%p9175) target = $region196
        $region195: #{decoder_forward.1} parent=187 // pred_region
          %s9179 = ssub.s32 512, 512
          %9180 = vsyncadd %s9158, %s9179
          %s9181 = smul.addr %s105, 4
          %s9182 = smul.addr %s9181, 128
          %s9183 = scalar_lea.hbm %s87, %s9182
          %s9184 = sshll.u32 %s9161, 4
          %s9185 = int_to_ptr.vmem [resolvable:$true] %s9184
          %9190 = dma.vmem_to_hbm [thread:$0]  %s9185, 512, %s9183, %s9158, 128, 128, 8
        $region196: #{decoder_forward.1} parent=187 // pred_fallthru
          _
      $region188: #{decoder_forward.1} parent=5 // pred_fallthru
        _
      %p9191 = scmp.le.s32.totalorder 2, %s100
      // Predicated region
      $region197: #{decoder_forward.1} parent=5 // pred_check
        %p9192 = pneg %p9191
      $region198: #{decoder_forward.1} parent=5 // pred_check_branch
        %9194 = sbr.rel (%p9192) target = $region200
      $region199: #{decoder_forward.1} parent=5 // pred_region
        %s9195 = ssub.s32 %s100, 2
        // Predicated region
        $region201: #{decoder_forward.1} parent=199 // pred_check
          %p9196 = pneg %p1031
        $region202: #{decoder_forward.1} parent=199 // pred_check_branch
          %9198 = sbr.rel (%p9196) target = $region204
        $region203: #{decoder_forward.1} parent=199 // pred_region
          %s9199 = sand.u32 %s1016, 1
          %s9200 = scalar_lea.sflag [#allocation3], %s9199
          %s9201 = sand.u32 %s1016, 1
          %s9202 = smul.addr %s9201, 8
          %s9203 = scalar_lea.vmem [#allocation2], %s9202
          %9204 = dma.done %s9200, 128
        $region204: #{decoder_forward.1} parent=199 // pred_fallthru
          _
        // Predicated region
        $region205: #{decoder_forward.1} parent=199 // pred_check
          %p9205 = pneg %p1057
        $region206: #{decoder_forward.1} parent=199 // pred_check_branch
          %9207 = sbr.rel (%p9205) target = $region208
        $region207: #{decoder_forward.1} parent=199 // pred_region
          %s9208 = sand.u32 %s1042, 1
          %s9209 = scalar_lea.sflag [#allocation5], %s9208
          %s9210 = sand.u32 %s1042, 1
          %s9211 = smul.addr %s9210, 32
          %s9212 = scalar_lea.vmem [#allocation4], %s9211
          %9213 = dma.done %s9209, 512
        $region208: #{decoder_forward.1} parent=199 // pred_fallthru
          _
      $region200: #{decoder_forward.1} parent=5 // pred_fallthru
        _
    $region6: #{decoder_forward.1} parent=1 // loop_footer
      %s104 = sadd.s32 1, %s100
    $region7: #{decoder_forward.1} parent=1 // loop_footer_branch
      %99 = sbr.rel target = $region3
    $region8: #{decoder_forward.1} parent=1 // loop_exit
      _
    %9214 = vsyncpa [#allocation3], 1
    %s9215 = scalar_lea.sflag [#allocation3], 1
    %9216 = vsyncpa %s9215, 1
    %9217 = vsyncpa [#allocation5], 1
    %s9218 = scalar_lea.sflag [#allocation5], 1
    %9219 = vsyncpa %s9218, 1

</llo_original>
